<compile_context>
chip_gen: v5e
topology: v5e:2x2
jax: 0.10.0
libtpu: 0.0.40
codegen_flags: <defaults>
</compile_context>

<pallas_src>
import functools

import jax
import jax.numpy as jnp
from jax.experimental import pallas as pl
from jax.experimental.pallas import tpu as pltpu

IN_DIM = 192          # logical input features (PyTorch Linear(192, 1024))
IN_PAD = 256          # lane-aligned K for layer 1 (zero-padded rows in w1)
H1, H2, H3 = 1024, 1024, 512
OUT_DIM = 1


def _round_up(n, m):
    return ((n + m - 1) // m) * m


def _default_max_tile():
    """Max batch-tile per chip generation (v5e keeps 256, v6e/v7x go to 1024)."""
    try:
        kind = jax.devices()[0].device_kind.lower()
    except Exception:
        kind = ""
    return 256 if "v5" in kind else 1024


def _mlp_kernel(x_ref, w1_ref, b1_ref, w2_ref, b2_ref,
                w3_ref, b3_ref, w4_ref, b4_ref, o_ref):
    # Layer 1: (TB,256)bf16 @ (256,1024)bf16 -> f32 acc; bias+ReLU in f32.
    h = jnp.dot(x_ref[...].astype(jnp.bfloat16), w1_ref[...],
                preferred_element_type=jnp.float32)
    h = jnp.maximum(h + b1_ref[...], 0.0)
    # Layer 2: (TB,1024) @ (1024,1024)
    h = jnp.dot(h.astype(jnp.bfloat16), w2_ref[...],
                preferred_element_type=jnp.float32)
    h = jnp.maximum(h + b2_ref[...], 0.0)
    # Layer 3: (TB,1024) @ (1024,512)
    h = jnp.dot(h.astype(jnp.bfloat16), w3_ref[...],
                preferred_element_type=jnp.float32)
    h = jnp.maximum(h + b3_ref[...], 0.0)
    # Layer 4 on the VPU/XLU: (TB,512) * (1,512) row, lane-reduce, then store
    # lane-dense as a (1, TB) row (unmasked vst's instead of (TB,1) masked).
    y = jnp.sum(h * w4_ref[...], axis=-1)            # (TB,)
    o_ref[...] = y.reshape(1, -1) + b4_ref[...]      # (1,TB) + (1,1)


@functools.partial(jax.jit, static_argnames=("tb",))
def _forward_impl(x, params, *, tb):
    B = x.shape[0]

    # Batch tile: multiple of 128 (bf16-friendly), at most `tb`, and capped
    # at ~half the padded batch so the grid keeps >= 2 parallel steps
    # (keeps both v7x TensorCores busy on mid-size batches).
    half = _round_up(pl.cdiv(B, 2), 128)
    TB = max(128, min(tb, half))
    B_pad = _round_up(B, TB)

    # Pad batch rows (sliced off at the end) and lane-align K: 192 -> 256.
    x = jnp.pad(x, ((0, B_pad - B), (0, IN_PAD - IN_DIM)))

    w1, b1 = params["w1"], params["b1"]
    w2, b2 = params["w2"], params["b2"]
    w3, b3 = params["w3"], params["b3"]
    w4, b4 = params["w4"], params["b4"]

    # Weights / biases: constant block index -> stay VMEM-resident across
    # the batch grid (revisit optimization skips the re-DMA).
    resident = lambda shape: pl.BlockSpec(shape, lambda i: (0, 0))

    out = pl.pallas_call(
        _mlp_kernel,
        # Lane-dense output: one (1, B_pad) row, tiled along the lane axis.
        out_shape=jax.ShapeDtypeStruct((1, B_pad), jnp.float32),
        grid_spec=pltpu.PrefetchScalarGridSpec(
            num_scalar_prefetch=0,
            grid=(B_pad // TB,),
            in_specs=[
                pl.BlockSpec((TB, IN_PAD), lambda i: (i, 0)),
                resident((IN_PAD, H1)), resident((1, H1)),
                resident((H1, H2)),     resident((1, H2)),
                resident((H2, H3)),     resident((1, H3)),
                resident((1, H3)),      resident((1, OUT_DIM)),
            ],
            out_specs=pl.BlockSpec((1, TB), lambda i: (0, i)),
        ),
        compiler_params=pltpu.CompilerParams(
            dimension_semantics=("parallel",),
            vmem_limit_bytes=32 << 20,
        ),
    )(x, w1, b1, w2, b2, w3, b3, w4, b4)

    return out[0, :B].reshape(B, OUT_DIM)


def binding_affinity_forward(x, params, *, tb=None):
    """x: (B, 192) float32. params: dict with bf16 weights, f32 biases."""
    if tb is None:
        tb = _default_max_tile()
    return _forward_impl(x, params, tb=tb)


def init_params(key):
    """Deterministic synthetic parameters (shapes match the nn.Linear layers).

    Weights stored as (in_features, out_features) in bf16 (transpose of
    PyTorch nn.Linear); biases as f32 (1, out) rows. w1 is zero-padded from
    192 to 256 input rows (matches the wrapper's x column padding; math is
    unchanged). The final layer weight is a (1, 512) f32 row for the VPU
    multiply + lane-reduce.
    """
    ks = jax.random.split(key, 8)
    scale = 0.02

    def w(k, i, o):
        return (scale * jax.random.normal(k, (i, o))).astype(jnp.bfloat16)

    def b(k, o):
        return (scale * jax.random.normal(k, (1, o))).astype(jnp.float32)

    w1 = w(ks[0], IN_DIM, H1)
    w1 = jnp.pad(w1, ((0, IN_PAD - IN_DIM), (0, 0)))   # zero rows: no-op math

    return {
        "w1": w1,                   "b1": b(ks[1], H1),
        "w2": w(ks[2], H1, H2),     "b2": b(ks[3], H2),
        "w3": w(ks[4], H2, H3),     "b3": b(ks[5], H3),
        # Layer-4 weight as a (1, 512) f32 row (used on the VPU, not MXU).
        "w4": (scale * jax.random.normal(ks[6], (1, H3))).astype(jnp.float32),
        "b4": b(ks[7], OUT_DIM),
    }


def reference_forward(x, p):
    """Pure-JAX reference with the same bf16-weight / f32-accumulate math."""
    xp = jnp.pad(x, ((0, 0), (0, IN_PAD - IN_DIM)))
    h = jnp.dot(xp.astype(jnp.bfloat16), p["w1"],
                preferred_element_type=jnp.float32)
    h = jnp.maximum(h + p["b1"], 0.0)
    h = jnp.dot(h.astype(jnp.bfloat16), p["w2"],
                preferred_element_type=jnp.float32)
    h = jnp.maximum(h + p["b2"], 0.0)
    h = jnp.dot(h.astype(jnp.bfloat16), p["w3"],
                preferred_element_type=jnp.float32)
    h = jnp.maximum(h + p["b3"], 0.0)
    return jnp.sum(h * p["w4"], axis=-1, keepdims=True) + p["b4"]


if __name__ == "__main__":
    key = jax.random.PRNGKey(0)
    k_x, k_p = jax.random.split(key)

    B = 8
    x = jax.random.normal(k_x, (B, IN_DIM), dtype=jnp.float32)
    params = init_params(k_p)

    out = binding_affinity_forward(x, params)
    out = jax.block_until_ready(out)

    ref = reference_forward(x, params)
    assert out.shape == (B, OUT_DIM)
    # bf16 weights -> tolerance loosened vs a pure-f32 path.
    assert jnp.allclose(out, ref, atol=1e-2, rtol=1e-2), "mismatch vs reference"

    print("KERNEL_OK")
</pallas_src>

<mosaic_0001>
module attributes {stable_mosaic.version = 11 : i64} {
  func.func @_mlp_kernel(%arg0: i32, %arg1: memref<128x256xf32, #tpu.memory_space<vmem>>, %arg2: memref<256x1024xbf16, #tpu.memory_space<vmem>>, %arg3: memref<1x1024xf32, #tpu.memory_space<vmem>>, %arg4: memref<1024x1024xbf16, #tpu.memory_space<vmem>>, %arg5: memref<1x1024xf32, #tpu.memory_space<vmem>>, %arg6: memref<1024x512xbf16, #tpu.memory_space<vmem>>, %arg7: memref<1x512xf32, #tpu.memory_space<vmem>>, %arg8: memref<1x512xf32, #tpu.memory_space<vmem>>, %arg9: memref<1x1xf32, #tpu.memory_space<vmem>>, %arg10: memref<1x128xf32, #tpu.memory_space<vmem>>) attributes {dimension_semantics = [#tpu.dimension_semantics<parallel>], iteration_bounds = array<i64: 1>, scalar_prefetch = 0 : i64, scratch_operands = 0 : i64, tpu.core_type = #tpu.core_type<tc>, window_params = [{transform_indices = @transform_0, window_bounds = array<i64: 128, 256>}, {pipeline_mode = #tpu.pipeline_mode<synchronous>, transform_indices = @transform_1, window_bounds = array<i64: 256, 1024>}, {pipeline_mode = #tpu.pipeline_mode<synchronous>, transform_indices = @transform_2, window_bounds = array<i64: 1, 1024>}, {pipeline_mode = #tpu.pipeline_mode<synchronous>, transform_indices = @transform_3, window_bounds = array<i64: 1024, 1024>}, {pipeline_mode = #tpu.pipeline_mode<synchronous>, transform_indices = @transform_4, window_bounds = array<i64: 1, 1024>}, {pipeline_mode = #tpu.pipeline_mode<synchronous>, transform_indices = @transform_5, window_bounds = array<i64: 1024, 512>}, {pipeline_mode = #tpu.pipeline_mode<synchronous>, transform_indices = @transform_6, window_bounds = array<i64: 1, 512>}, {pipeline_mode = #tpu.pipeline_mode<synchronous>, transform_indices = @transform_7, window_bounds = array<i64: 1, 512>}, {pipeline_mode = #tpu.pipeline_mode<synchronous>, transform_indices = @transform_8, window_bounds = array<i64: 1, 1>}, {transform_indices = @transform_9, window_bounds = array<i64: 1, 128>}]} {
    %c0 = arith.constant 0 : index
    %c0_0 = arith.constant 0 : index
    %0 = vector.load %arg1[%c0, %c0_0] : memref<128x256xf32, #tpu.memory_space<vmem>>, vector<128x256xf32>
    %1 = arith.truncf %0 : vector<128x256xf32> to vector<128x256xbf16>
    %c0_1 = arith.constant 0 : index
    %c0_2 = arith.constant 0 : index
    %2 = vector.load %arg2[%c0_1, %c0_2] : memref<256x1024xbf16, #tpu.memory_space<vmem>>, vector<256x1024xbf16>
    %cst = arith.constant dense<0.000000e+00> : vector<128x1024xf32>
    %3 = tpu.matmul %1, %2, %cst {dimension_numbers = #tpu.dot_dimension_numbers<[1], [0], [0], [1], [0, 0, 1, 1], [], []>} : vector<128x256xbf16>, vector<256x1024xbf16>, vector<128x1024xf32> -> vector<128x1024xf32>
    %c0_3 = arith.constant 0 : index
    %c0_4 = arith.constant 0 : index
    %4 = vector.load %arg3[%c0_3, %c0_4] : memref<1x1024xf32, #tpu.memory_space<vmem>>, vector<1x1024xf32>
    %5 = vector.broadcast %4 : vector<1x1024xf32> to vector<128x1024xf32>
    %6 = arith.addf %3, %5 : vector<128x1024xf32>
    %cst_5 = arith.constant 0.000000e+00 : f32
    %7 = vector.broadcast %cst_5 : f32 to vector<128x1024xf32>
    %8 = arith.maximumf %6, %7 : vector<128x1024xf32>
    %9 = arith.truncf %8 : vector<128x1024xf32> to vector<128x1024xbf16>
    %c0_6 = arith.constant 0 : index
    %c0_7 = arith.constant 0 : index
    %10 = vector.load %arg4[%c0_6, %c0_7] : memref<1024x1024xbf16, #tpu.memory_space<vmem>>, vector<1024x1024xbf16>
    %cst_8 = arith.constant dense<0.000000e+00> : vector<128x1024xf32>
    %11 = tpu.matmul %9, %10, %cst_8 {dimension_numbers = #tpu.dot_dimension_numbers<[1], [0], [0], [1], [0, 0, 1, 1], [], []>} : vector<128x1024xbf16>, vector<1024x1024xbf16>, vector<128x1024xf32> -> vector<128x1024xf32>
    %c0_9 = arith.constant 0 : index
    %c0_10 = arith.constant 0 : index
    %12 = vector.load %arg5[%c0_9, %c0_10] : memref<1x1024xf32, #tpu.memory_space<vmem>>, vector<1x1024xf32>
    %13 = vector.broadcast %12 : vector<1x1024xf32> to vector<128x1024xf32>
    %14 = arith.addf %11, %13 : vector<128x1024xf32>
    %cst_11 = arith.constant 0.000000e+00 : f32
    %15 = vector.broadcast %cst_11 : f32 to vector<128x1024xf32>
    %16 = arith.maximumf %14, %15 : vector<128x1024xf32>
    %17 = arith.truncf %16 : vector<128x1024xf32> to vector<128x1024xbf16>
    %c0_12 = arith.constant 0 : index
    %c0_13 = arith.constant 0 : index
    %18 = vector.load %arg6[%c0_12, %c0_13] : memref<1024x512xbf16, #tpu.memory_space<vmem>>, vector<1024x512xbf16>
    %cst_14 = arith.constant dense<0.000000e+00> : vector<128x512xf32>
    %19 = tpu.matmul %17, %18, %cst_14 {dimension_numbers = #tpu.dot_dimension_numbers<[1], [0], [0], [1], [0, 0, 1, 1], [], []>} : vector<128x1024xbf16>, vector<1024x512xbf16>, vector<128x512xf32> -> vector<128x512xf32>
    %c0_15 = arith.constant 0 : index
    %c0_16 = arith.constant 0 : index
    %20 = vector.load %arg7[%c0_15, %c0_16] : memref<1x512xf32, #tpu.memory_space<vmem>>, vector<1x512xf32>
    %21 = vector.broadcast %20 : vector<1x512xf32> to vector<128x512xf32>
    %22 = arith.addf %19, %21 : vector<128x512xf32>
    %cst_17 = arith.constant 0.000000e+00 : f32
    %23 = vector.broadcast %cst_17 : f32 to vector<128x512xf32>
    %24 = arith.maximumf %22, %23 : vector<128x512xf32>
    %c0_18 = arith.constant 0 : index
    %c0_19 = arith.constant 0 : index
    %25 = vector.load %arg8[%c0_18, %c0_19] : memref<1x512xf32, #tpu.memory_space<vmem>>, vector<1x512xf32>
    %26 = vector.broadcast %25 : vector<1x512xf32> to vector<128x512xf32>
    %27 = arith.mulf %24, %26 : vector<128x512xf32>
    %cst_20 = arith.constant dense<0.000000e+00> : vector<128xf32>
    %28 = vector.multi_reduction <add>, %27, %cst_20 [1] : vector<128x512xf32> to vector<128xf32>
    %29 = vector.shape_cast %28 : vector<128xf32> to vector<1x128xf32>
    %c0_21 = arith.constant 0 : index
    %c0_22 = arith.constant 0 : index
    %30 = vector.load %arg9[%c0_21, %c0_22] : memref<1x1xf32, #tpu.memory_space<vmem>>, vector<1x1xf32>
    %31 = vector.broadcast %30 : vector<1x1xf32> to vector<1x128xf32>
    %32 = arith.addf %29, %31 : vector<1x128xf32>
    %c0_23 = arith.constant 0 : index
    %c0_24 = arith.constant 0 : index
    %33 = vector.load %arg10[%c0_23, %c0_24] : memref<1x128xf32, #tpu.memory_space<vmem>>, vector<1x128xf32>
    tpu.vector_store %arg10[%c0_23, %c0_24], %32 {strides = array<i32>} : memref<1x128xf32, #tpu.memory_space<vmem>>, vector<1x128xf32>,
    return
  }
  func.func @transform_0(%arg0: i32) -> (i32, i32) {
    %c0_i32 = arith.constant 0 : i32
    %c0_i32_0 = arith.constant 0 : i32
    return %arg0, %c0_i32 : i32, i32
  }
  func.func @transform_1(%arg0: i32) -> (i32, i32) {
    %c0_i32 = arith.constant 0 : i32
    %c0_i32_0 = arith.constant 0 : i32
    %c0_i32_1 = arith.constant 0 : i32
    return %c0_i32, %c0_i32_0 : i32, i32
  }
  func.func @transform_2(%arg0: i32) -> (i32, i32) {
    %c0_i32 = arith.constant 0 : i32
    %c0_i32_0 = arith.constant 0 : i32
    %c0_i32_1 = arith.constant 0 : i32
    return %c0_i32, %c0_i32_0 : i32, i32
  }
  func.func @transform_3(%arg0: i32) -> (i32, i32) {
    %c0_i32 = arith.constant 0 : i32
    %c0_i32_0 = arith.constant 0 : i32
    %c0_i32_1 = arith.constant 0 : i32
    return %c0_i32, %c0_i32_0 : i32, i32
  }
  func.func @transform_4(%arg0: i32) -> (i32, i32) {
    %c0_i32 = arith.constant 0 : i32
    %c0_i32_0 = arith.constant 0 : i32
    %c0_i32_1 = arith.constant 0 : i32
    return %c0_i32, %c0_i32_0 : i32, i32
  }
  func.func @transform_5(%arg0: i32) -> (i32, i32) {
    %c0_i32 = arith.constant 0 : i32
    %c0_i32_0 = arith.constant 0 : i32
    %c0_i32_1 = arith.constant 0 : i32
    return %c0_i32, %c0_i32_0 : i32, i32
  }
  func.func @transform_6(%arg0: i32) -> (i32, i32) {
    %c0_i32 = arith.constant 0 : i32
    %c0_i32_0 = arith.constant 0 : i32
    %c0_i32_1 = arith.constant 0 : i32
    return %c0_i32, %c0_i32_0 : i32, i32
  }
  func.func @transform_7(%arg0: i32) -> (i32, i32) {
    %c0_i32 = arith.constant 0 : i32
    %c0_i32_0 = arith.constant 0 : i32
    %c0_i32_1 = arith.constant 0 : i32
    return %c0_i32, %c0_i32_0 : i32, i32
  }
  func.func @transform_8(%arg0: i32) -> (i32, i32) {
    %c0_i32 = arith.constant 0 : i32
    %c0_i32_0 = arith.constant 0 : i32
    %c0_i32_1 = arith.constant 0 : i32
    return %c0_i32, %c0_i32_0 : i32, i32
  }
  func.func @transform_9(%arg0: i32) -> (i32, i32) {
    %c0_i32 = arith.constant 0 : i32
    %c0_i32_0 = arith.constant 0 : i32
    return %c0_i32, %arg0 : i32, i32
  }
}

</mosaic_0001>

<llo_original>
// kernel: _forward_impl.1
$region0: #{_forward_impl.1}
  #allocation0 [shape = 'u32[]', space=smem, size = 0x4, offset = 0x4, fixed_abs, tag = 'smem constant byte address 0x4 - core index']
  #allocation1 [shape = 'u32[72,128]{1,0:T(1,128)}', space=vmem, size = 0x9000, scoped, tag = 'internal scratch']
  #allocation2 [shape = 'f32[1,1]{1,0:T(1,128)S(1)}', space=vmem, size = 0x200, scoped, tag = 'scoped memory for _forward_impl.1']
  %s0 = inlined_call_operand.vmem [shape: f32[128,256], index: 0, kind: input, shape index: {}]
  %s1 = inlined_call_operand.hbm [shape: bf16[256,1024], index: 1, kind: input, shape index: {}]
  %s2 = inlined_call_operand.hbm [shape: f32[1,1024], index: 2, kind: input, shape index: {}]
  %s3 = inlined_call_operand.hbm [shape: bf16[1024,1024], index: 3, kind: input, shape index: {}]
  %s4 = inlined_call_operand.hbm [shape: f32[1,1024], index: 4, kind: input, shape index: {}]
  %s5 = inlined_call_operand.hbm [shape: bf16[1024,512], index: 5, kind: input, shape index: {}]
  %s6 = inlined_call_operand.hbm [shape: f32[1,512], index: 6, kind: input, shape index: {}]
  %s7 = inlined_call_operand.hbm [shape: f32[1,512], index: 7, kind: input, shape index: {}]
  %s8 = inlined_call_operand.<no memory space> [shape: f32[1,1], index: 8, kind: input, shape index: {}]
  %s9 = inlined_call_operand.vmem [shape: f32[1,128], index: 9, kind: output, shape index: {}]
  %s10 = sld [smem:[#allocation0]]
  $region74: #{_forward_impl.1} parent=0
    _
  %s12 = ssub.s32 1, %s10
  %s13 = scalar_select 0, %s12, %s10
  %v14 = vstv %s8
  %15 = vst [vmem:[#allocation2] sm:$0x1] %v14
  $region1: #{_forward_impl.1} parent=0
    #allocation3 [shape = 'u8[524288]{0}', space=vmem, size = 0x80000, scoped, tag = 'input window, operand 1, single buffered']
    #allocation4 [shape = 's32[1]{0}', space=sflag, size = 0x4, scoped, tag = 'scoped memory for _forward_impl.1']
    #allocation5 [shape = 'u8[4096]{0}', space=vmem, size = 0x1000, scoped, tag = 'input window, operand 2, single buffered']
    #allocation6 [shape = 's32[1]{0}', space=sflag, size = 0x4, scoped, tag = 'scoped memory for _forward_impl.1']
    #allocation7 [shape = 'u8[2097152]{0}', space=vmem, size = 0x200000, scoped, tag = 'input window, operand 3, single buffered']
    #allocation8 [shape = 'u8[4096]{0}', space=vmem, size = 0x1000, scoped, tag = 'input window, operand 4, single buffered']
    #allocation9 [shape = 's32[1]{0}', space=sflag, size = 0x4, scoped, tag = 'scoped memory for _forward_impl.1']
    #allocation10 [shape = 'u8[1048576]{0}', space=vmem, size = 0x100000, scoped, tag = 'input window, operand 5, single buffered']
    #allocation11 [shape = 'u8[2048]{0}', space=vmem, size = 0x800, scoped, tag = 'input window, operand 6, single buffered']
    #allocation12 [shape = 's32[1]{0}', space=sflag, size = 0x4, scoped, tag = 'scoped memory for _forward_impl.1']
    #allocation13 [shape = 'u8[2048]{0}', space=vmem, size = 0x800, scoped, tag = 'input window, operand 7, single buffered']
    %16 = vsyncpa [#allocation4], 0
    %17 = vsyncpa [#allocation6], 0
    %18 = vsyncpa [#allocation9], 0
    %19 = vsyncpa [#allocation12], 0
    // Predicated region
    $region2: #{_forward_impl.1} parent=1 // pred_check
      _
    $region3: #{_forward_impl.1} parent=1 // pred_check_branch
      %21 = sbr.rel (0) target = $region5
    $region4: #{_forward_impl.1} parent=1 // pred_region
      _
    $region5: #{_forward_impl.1} parent=1 // pred_fallthru
      _
    // Predicated region
    $region6: #{_forward_impl.1} parent=1 // pred_check
      _
    $region7: #{_forward_impl.1} parent=1 // pred_check_branch
      %23 = sbr.rel (0) target = $region9
    $region8: #{_forward_impl.1} parent=1 // pred_region
      %25 = vsyncadd [#allocation4], 0
      %s26 = sshll.u32 %s1, 4
      %s27 = int_to_ptr.hbm [resolvable:$true] %s26
      %s28 = sshll.u32 [#allocation3], 4
      %s29 = int_to_ptr.vmem [resolvable:$true] %s28
      %34 = dma.hbm_to_vmem [thread:$0]  %s27, 16384, %s29, [#allocation4], 512, 512, 32
    $region9: #{_forward_impl.1} parent=1 // pred_fallthru
      _
    // Predicated region
    $region10: #{_forward_impl.1} parent=1 // pred_check
      _
    $region11: #{_forward_impl.1} parent=1 // pred_check_branch
      %36 = sbr.rel (0) target = $region13
    $region12: #{_forward_impl.1} parent=1 // pred_region
      %38 = vsyncadd [#allocation6], 0
      %s40 = sshll.u32 %s2, 4
      %s41 = int_to_ptr.hbm [resolvable:$true] %s40
      %s42 = sshll.u32 [#allocation5], 4
      %s43 = int_to_ptr.vmem [resolvable:$true] %s42
      %45 = dma.hbm_to_vmem [thread:$0]  %s41, 128, %s43, [#allocation6]
    $region13: #{_forward_impl.1} parent=1 // pred_fallthru
      _
    // Predicated region
    $region14: #{_forward_impl.1} parent=1 // pred_check
      _
    $region15: #{_forward_impl.1} parent=1 // pred_check_branch
      %47 = sbr.rel (0) target = $region17
    $region16: #{_forward_impl.1} parent=1 // pred_region
      %49 = vsyncadd [#allocation6], 0
      %s50 = sshll.u32 %s3, 4
      %s51 = int_to_ptr.hbm [resolvable:$true] %s50
      %s52 = sshll.u32 [#allocation7], 4
      %s53 = int_to_ptr.vmem [resolvable:$true] %s52
      %58 = dma.hbm_to_vmem [thread:$0]  %s51, 65536, %s53, [#allocation6], 512, 512, 32
    $region17: #{_forward_impl.1} parent=1 // pred_fallthru
      _
    // Predicated region
    $region18: #{_forward_impl.1} parent=1 // pred_check
      _
    $region19: #{_forward_impl.1} parent=1 // pred_check_branch
      %60 = sbr.rel (0) target = $region21
    $region20: #{_forward_impl.1} parent=1 // pred_region
      %62 = vsyncadd [#allocation9], 0
      %s64 = sshll.u32 %s4, 4
      %s65 = int_to_ptr.hbm [resolvable:$true] %s64
      %s66 = sshll.u32 [#allocation8], 4
      %s67 = int_to_ptr.vmem [resolvable:$true] %s66
      %69 = dma.hbm_to_vmem [thread:$0]  %s65, 128, %s67, [#allocation9]
    $region21: #{_forward_impl.1} parent=1 // pred_fallthru
      _
    // Predicated region
    $region22: #{_forward_impl.1} parent=1 // pred_check
      _
    $region23: #{_forward_impl.1} parent=1 // pred_check_branch
      %71 = sbr.rel (0) target = $region25
    $region24: #{_forward_impl.1} parent=1 // pred_region
      %73 = vsyncadd [#allocation9], 0
      %s74 = sshll.u32 %s5, 4
      %s75 = int_to_ptr.hbm [resolvable:$true] %s74
      %s76 = sshll.u32 [#allocation10], 4
      %s77 = int_to_ptr.vmem [resolvable:$true] %s76
      %82 = dma.hbm_to_vmem [thread:$0]  %s75, 32768, %s77, [#allocation9], 256, 256, 16
    $region25: #{_forward_impl.1} parent=1 // pred_fallthru
      _
    // Predicated region
    $region26: #{_forward_impl.1} parent=1 // pred_check
      _
    $region27: #{_forward_impl.1} parent=1 // pred_check_branch
      %84 = sbr.rel (0) target = $region29
    $region28: #{_forward_impl.1} parent=1 // pred_region
      %86 = vsyncadd [#allocation12], 0
      %s88 = sshll.u32 %s6, 4
      %s89 = int_to_ptr.hbm [resolvable:$true] %s88
      %s90 = sshll.u32 [#allocation11], 4
      %s91 = int_to_ptr.vmem [resolvable:$true] %s90
      %93 = dma.hbm_to_vmem [thread:$0]  %s89, 64, %s91, [#allocation12]
    $region29: #{_forward_impl.1} parent=1 // pred_fallthru
      _
    // Predicated region
    $region30: #{_forward_impl.1} parent=1 // pred_check
      _
    $region31: #{_forward_impl.1} parent=1 // pred_check_branch
      %95 = sbr.rel (0) target = $region33
    $region32: #{_forward_impl.1} parent=1 // pred_region
      %97 = vsyncadd [#allocation12], 0
      %s99 = sshll.u32 %s7, 4
      %s100 = int_to_ptr.hbm [resolvable:$true] %s99
      %s101 = sshll.u32 [#allocation13], 4
      %s102 = int_to_ptr.vmem [resolvable:$true] %s101
      %104 = dma.hbm_to_vmem [thread:$0]  %s100, 64, %s102, [#allocation12]
    $region33: #{_forward_impl.1} parent=1 // pred_fallthru
      _
    // Predicated region
    $region34: #{_forward_impl.1} parent=1 // pred_check
      _
    $region35: #{_forward_impl.1} parent=1 // pred_check_branch
      %106 = sbr.rel (0) target = $region37
    $region36: #{_forward_impl.1} parent=1 // pred_region
      _
    $region37: #{_forward_impl.1} parent=1 // pred_fallthru
      _
    // Predicated region
    $region38: #{_forward_impl.1} parent=1 // pred_check
      _
    $region39: #{_forward_impl.1} parent=1 // pred_check_branch
      %108 = sbr.rel (0) target = $region41
    $region40: #{_forward_impl.1} parent=1 // pred_region
      %110 = dma.done [#allocation4], 16384
    $region41: #{_forward_impl.1} parent=1 // pred_fallthru
      _
    // Predicated region
    $region42: #{_forward_impl.1} parent=1 // pred_check
      _
    $region43: #{_forward_impl.1} parent=1 // pred_check_branch
      %112 = sbr.rel (0) target = $region45
    $region44: #{_forward_impl.1} parent=1 // pred_region
      %114 = dma.done [#allocation6], 128
    $region45: #{_forward_impl.1} parent=1 // pred_fallthru
      _
    // Predicated region
    $region46: #{_forward_impl.1} parent=1 // pred_check
      _
    $region47: #{_forward_impl.1} parent=1 // pred_check_branch
      %116 = sbr.rel (0) target = $region49
    $region48: #{_forward_impl.1} parent=1 // pred_region
      %118 = dma.done [#allocation6], 65536
    $region49: #{_forward_impl.1} parent=1 // pred_fallthru
      _
    // Predicated region
    $region50: #{_forward_impl.1} parent=1 // pred_check
      _
    $region51: #{_forward_impl.1} parent=1 // pred_check_branch
      %120 = sbr.rel (0) target = $region53
    $region52: #{_forward_impl.1} parent=1 // pred_region
      %122 = dma.done [#allocation9], 128
    $region53: #{_forward_impl.1} parent=1 // pred_fallthru
      _
    // Predicated region
    $region54: #{_forward_impl.1} parent=1 // pred_check
      _
    $region55: #{_forward_impl.1} parent=1 // pred_check_branch
      %124 = sbr.rel (0) target = $region57
    $region56: #{_forward_impl.1} parent=1 // pred_region
      %126 = dma.done [#allocation9], 32768
    $region57: #{_forward_impl.1} parent=1 // pred_fallthru
      _
    // Predicated region
    $region58: #{_forward_impl.1} parent=1 // pred_check
      _
    $region59: #{_forward_impl.1} parent=1 // pred_check_branch
      %128 = sbr.rel (0) target = $region61
    $region60: #{_forward_impl.1} parent=1 // pred_region
      %130 = dma.done [#allocation12], 64
    $region61: #{_forward_impl.1} parent=1 // pred_fallthru
      _
    // Predicated region
    $region62: #{_forward_impl.1} parent=1 // pred_check
      _
    $region63: #{_forward_impl.1} parent=1 // pred_check_branch
      %132 = sbr.rel (0) target = $region65
    $region64: #{_forward_impl.1} parent=1 // pred_region
      %134 = dma.done [#allocation12], 64
    $region65: #{_forward_impl.1} parent=1 // pred_fallthru
      _
    %v135 = vld [vmem:[%s0] sm:$0xff]
    %v136 = vld [vmem:[%s0 + $0x8] sm:$0xff]
    %v137 = vld [vmem:[%s0 + $0x10] sm:$0xff]
    %v138 = vld [vmem:[%s0 + $0x18] sm:$0xff]
    %v139 = vld [vmem:[%s0 + $0x20] sm:$0xff]
    %v140 = vld [vmem:[%s0 + $0x28] sm:$0xff]
    %v141 = vld [vmem:[%s0 + $0x30] sm:$0xff]
    %v142 = vld [vmem:[%s0 + $0x38] sm:$0xff]
    %v143 = vld [vmem:[%s0 + $0x40] sm:$0xff]
    %v144 = vld [vmem:[%s0 + $0x48] sm:$0xff]
    %v145 = vld [vmem:[%s0 + $0x50] sm:$0xff]
    %v146 = vld [vmem:[%s0 + $0x58] sm:$0xff]
    %v147 = vld [vmem:[%s0 + $0x60] sm:$0xff]
    %v148 = vld [vmem:[%s0 + $0x68] sm:$0xff]
    %v149 = vld [vmem:[%s0 + $0x70] sm:$0xff]
    %v150 = vld [vmem:[%s0 + $0x78] sm:$0xff]
    %v151 = vld [vmem:[%s0 + $0x80] sm:$0xff]
    %v152 = vld [vmem:[%s0 + $0x88] sm:$0xff]
    %v153 = vld [vmem:[%s0 + $0x90] sm:$0xff]
    %v154 = vld [vmem:[%s0 + $0x98] sm:$0xff]
    %v155 = vld [vmem:[%s0 + $0xa0] sm:$0xff]
    %v156 = vld [vmem:[%s0 + $0xa8] sm:$0xff]
    %v157 = vld [vmem:[%s0 + $0xb0] sm:$0xff]
    %v158 = vld [vmem:[%s0 + $0xb8] sm:$0xff]
    %v159 = vld [vmem:[%s0 + $0xc0] sm:$0xff]
    %v160 = vld [vmem:[%s0 + $0xc8] sm:$0xff]
    %v161 = vld [vmem:[%s0 + $0xd0] sm:$0xff]
    %v162 = vld [vmem:[%s0 + $0xd8] sm:$0xff]
    %v163 = vld [vmem:[%s0 + $0xe0] sm:$0xff]
    %v164 = vld [vmem:[%s0 + $0xe8] sm:$0xff]
    %v165 = vld [vmem:[%s0 + $0xf0] sm:$0xff]
    %v166 = vld [vmem:[%s0 + $0xf8] sm:$0xff]
    %v167 = vpack.c.bf16 %v137, %v135
    %v168 = vpack.c.bf16 %v138, %v136
    %v169 = vpack.c.bf16 %v141, %v139
    %v170 = vpack.c.bf16 %v142, %v140
    %v171 = vpack.c.bf16 %v145, %v143
    %v172 = vpack.c.bf16 %v146, %v144
    %v173 = vpack.c.bf16 %v149, %v147
    %v174 = vpack.c.bf16 %v150, %v148
    %v175 = vpack.c.bf16 %v153, %v151
    %v176 = vpack.c.bf16 %v154, %v152
    %v177 = vpack.c.bf16 %v157, %v155
    %v178 = vpack.c.bf16 %v158, %v156
    %v179 = vpack.c.bf16 %v161, %v159
    %v180 = vpack.c.bf16 %v162, %v160
    %v181 = vpack.c.bf16 %v165, %v163
    %v182 = vpack.c.bf16 %v166, %v164
    %v183 = vld [vmem:[#allocation3] sm:$0xff]
    %v184 = vld [vmem:[#allocation3 + $0x8] sm:$0xff]
    %v185 = vld [vmem:[#allocation3 + $0x10] sm:$0xff]
    %v186 = vld [vmem:[#allocation3 + $0x18] sm:$0xff]
    %v187 = vld [vmem:[#allocation3 + $0x20] sm:$0xff]
    %v188 = vld [vmem:[#allocation3 + $0x28] sm:$0xff]
    %v189 = vld [vmem:[#allocation3 + $0x30] sm:$0xff]
    %v190 = vld [vmem:[#allocation3 + $0x38] sm:$0xff]
    %v191 = vld [vmem:[#allocation3 + $0x40] sm:$0xff]
    %v192 = vld [vmem:[#allocation3 + $0x48] sm:$0xff]
    %v193 = vld [vmem:[#allocation3 + $0x50] sm:$0xff]
    %v194 = vld [vmem:[#allocation3 + $0x58] sm:$0xff]
    %v195 = vld [vmem:[#allocation3 + $0x60] sm:$0xff]
    %v196 = vld [vmem:[#allocation3 + $0x68] sm:$0xff]
    %v197 = vld [vmem:[#allocation3 + $0x70] sm:$0xff]
    %v198 = vld [vmem:[#allocation3 + $0x78] sm:$0xff]
    %v199 = vld [vmem:[#allocation3 + $0x80] sm:$0xff]
    %v200 = vld [vmem:[#allocation3 + $0x88] sm:$0xff]
    %v201 = vld [vmem:[#allocation3 + $0x90] sm:$0xff]
    %v202 = vld [vmem:[#allocation3 + $0x98] sm:$0xff]
    %v203 = vld [vmem:[#allocation3 + $0xa0] sm:$0xff]
    %v204 = vld [vmem:[#allocation3 + $0xa8] sm:$0xff]
    %v205 = vld [vmem:[#allocation3 + $0xb0] sm:$0xff]
    %v206 = vld [vmem:[#allocation3 + $0xb8] sm:$0xff]
    %v207 = vld [vmem:[#allocation3 + $0xc0] sm:$0xff]
    %v208 = vld [vmem:[#allocation3 + $0xc8] sm:$0xff]
    %v209 = vld [vmem:[#allocation3 + $0xd0] sm:$0xff]
    %v210 = vld [vmem:[#allocation3 + $0xd8] sm:$0xff]
    %v211 = vld [vmem:[#allocation3 + $0xe0] sm:$0xff]
    %v212 = vld [vmem:[#allocation3 + $0xe8] sm:$0xff]
    %v213 = vld [vmem:[#allocation3 + $0xf0] sm:$0xff]
    %v214 = vld [vmem:[#allocation3 + $0xf8] sm:$0xff]
    %v215 = vld [vmem:[#allocation3 + $0x100] sm:$0xff]
    %v216 = vld [vmem:[#allocation3 + $0x108] sm:$0xff]
    %v217 = vld [vmem:[#allocation3 + $0x110] sm:$0xff]
    %v218 = vld [vmem:[#allocation3 + $0x118] sm:$0xff]
    %v219 = vld [vmem:[#allocation3 + $0x120] sm:$0xff]
    %v220 = vld [vmem:[#allocation3 + $0x128] sm:$0xff]
    %v221 = vld [vmem:[#allocation3 + $0x130] sm:$0xff]
    %v222 = vld [vmem:[#allocation3 + $0x138] sm:$0xff]
    %v223 = vld [vmem:[#allocation3 + $0x140] sm:$0xff]
    %v224 = vld [vmem:[#allocation3 + $0x148] sm:$0xff]
    %v225 = vld [vmem:[#allocation3 + $0x150] sm:$0xff]
    %v226 = vld [vmem:[#allocation3 + $0x158] sm:$0xff]
    %v227 = vld [vmem:[#allocation3 + $0x160] sm:$0xff]
    %v228 = vld [vmem:[#allocation3 + $0x168] sm:$0xff]
    %v229 = vld [vmem:[#allocation3 + $0x170] sm:$0xff]
    %v230 = vld [vmem:[#allocation3 + $0x178] sm:$0xff]
    %v231 = vld [vmem:[#allocation3 + $0x180] sm:$0xff]
    %v232 = vld [vmem:[#allocation3 + $0x188] sm:$0xff]
    %v233 = vld [vmem:[#allocation3 + $0x190] sm:$0xff]
    %v234 = vld [vmem:[#allocation3 + $0x198] sm:$0xff]
    %v235 = vld [vmem:[#allocation3 + $0x1a0] sm:$0xff]
    %v236 = vld [vmem:[#allocation3 + $0x1a8] sm:$0xff]
    %v237 = vld [vmem:[#allocation3 + $0x1b0] sm:$0xff]
    %v238 = vld [vmem:[#allocation3 + $0x1b8] sm:$0xff]
    %v239 = vld [vmem:[#allocation3 + $0x1c0] sm:$0xff]
    %v240 = vld [vmem:[#allocation3 + $0x1c8] sm:$0xff]
    %v241 = vld [vmem:[#allocation3 + $0x1d0] sm:$0xff]
    %v242 = vld [vmem:[#allocation3 + $0x1d8] sm:$0xff]
    %v243 = vld [vmem:[#allocation3 + $0x1e0] sm:$0xff]
    %v244 = vld [vmem:[#allocation3 + $0x1e8] sm:$0xff]
    %v245 = vld [vmem:[#allocation3 + $0x1f0] sm:$0xff]
    %v246 = vld [vmem:[#allocation3 + $0x1f8] sm:$0xff]
    %v247 = vld [vmem:[#allocation3 + $0x200] sm:$0xff]
    %v248 = vld [vmem:[#allocation3 + $0x208] sm:$0xff]
    %v249 = vld [vmem:[#allocation3 + $0x210] sm:$0xff]
    %v250 = vld [vmem:[#allocation3 + $0x218] sm:$0xff]
    %v251 = vld [vmem:[#allocation3 + $0x220] sm:$0xff]
    %v252 = vld [vmem:[#allocation3 + $0x228] sm:$0xff]
    %v253 = vld [vmem:[#allocation3 + $0x230] sm:$0xff]
    %v254 = vld [vmem:[#allocation3 + $0x238] sm:$0xff]
    %v255 = vld [vmem:[#allocation3 + $0x240] sm:$0xff]
    %v256 = vld [vmem:[#allocation3 + $0x248] sm:$0xff]
    %v257 = vld [vmem:[#allocation3 + $0x250] sm:$0xff]
    %v258 = vld [vmem:[#allocation3 + $0x258] sm:$0xff]
    %v259 = vld [vmem:[#allocation3 + $0x260] sm:$0xff]
    %v260 = vld [vmem:[#allocation3 + $0x268] sm:$0xff]
    %v261 = vld [vmem:[#allocation3 + $0x270] sm:$0xff]
    %v262 = vld [vmem:[#allocation3 + $0x278] sm:$0xff]
    %v263 = vld [vmem:[#allocation3 + $0x280] sm:$0xff]
    %v264 = vld [vmem:[#allocation3 + $0x288] sm:$0xff]
    %v265 = vld [vmem:[#allocation3 + $0x290] sm:$0xff]
    %v266 = vld [vmem:[#allocation3 + $0x298] sm:$0xff]
    %v267 = vld [vmem:[#allocation3 + $0x2a0] sm:$0xff]
    %v268 = vld [vmem:[#allocation3 + $0x2a8] sm:$0xff]
    %v269 = vld [vmem:[#allocation3 + $0x2b0] sm:$0xff]
    %v270 = vld [vmem:[#allocation3 + $0x2b8] sm:$0xff]
    %v271 = vld [vmem:[#allocation3 + $0x2c0] sm:$0xff]
    %v272 = vld [vmem:[#allocation3 + $0x2c8] sm:$0xff]
    %v273 = vld [vmem:[#allocation3 + $0x2d0] sm:$0xff]
    %v274 = vld [vmem:[#allocation3 + $0x2d8] sm:$0xff]
    %v275 = vld [vmem:[#allocation3 + $0x2e0] sm:$0xff]
    %v276 = vld [vmem:[#allocation3 + $0x2e8] sm:$0xff]
    %v277 = vld [vmem:[#allocation3 + $0x2f0] sm:$0xff]
    %v278 = vld [vmem:[#allocation3 + $0x2f8] sm:$0xff]
    %v279 = vld [vmem:[#allocation3 + $0x300] sm:$0xff]
    %v280 = vld [vmem:[#allocation3 + $0x308] sm:$0xff]
    %v281 = vld [vmem:[#allocation3 + $0x310] sm:$0xff]
    %v282 = vld [vmem:[#allocation3 + $0x318] sm:$0xff]
    %v283 = vld [vmem:[#allocation3 + $0x320] sm:$0xff]
    %v284 = vld [vmem:[#allocation3 + $0x328] sm:$0xff]
    %v285 = vld [vmem:[#allocation3 + $0x330] sm:$0xff]
    %v286 = vld [vmem:[#allocation3 + $0x338] sm:$0xff]
    %v287 = vld [vmem:[#allocation3 + $0x340] sm:$0xff]
    %v288 = vld [vmem:[#allocation3 + $0x348] sm:$0xff]
    %v289 = vld [vmem:[#allocation3 + $0x350] sm:$0xff]
    %v290 = vld [vmem:[#allocation3 + $0x358] sm:$0xff]
    %v291 = vld [vmem:[#allocation3 + $0x360] sm:$0xff]
    %v292 = vld [vmem:[#allocation3 + $0x368] sm:$0xff]
    %v293 = vld [vmem:[#allocation3 + $0x370] sm:$0xff]
    %v294 = vld [vmem:[#allocation3 + $0x378] sm:$0xff]
    %v295 = vld [vmem:[#allocation3 + $0x380] sm:$0xff]
    %v296 = vld [vmem:[#allocation3 + $0x388] sm:$0xff]
    %v297 = vld [vmem:[#allocation3 + $0x390] sm:$0xff]
    %v298 = vld [vmem:[#allocation3 + $0x398] sm:$0xff]
    %v299 = vld [vmem:[#allocation3 + $0x3a0] sm:$0xff]
    %v300 = vld [vmem:[#allocation3 + $0x3a8] sm:$0xff]
    %v301 = vld [vmem:[#allocation3 + $0x3b0] sm:$0xff]
    %v302 = vld [vmem:[#allocation3 + $0x3b8] sm:$0xff]
    %v303 = vld [vmem:[#allocation3 + $0x3c0] sm:$0xff]
    %v304 = vld [vmem:[#allocation3 + $0x3c8] sm:$0xff]
    %v305 = vld [vmem:[#allocation3 + $0x3d0] sm:$0xff]
    %v306 = vld [vmem:[#allocation3 + $0x3d8] sm:$0xff]
    %v307 = vld [vmem:[#allocation3 + $0x3e0] sm:$0xff]
    %v308 = vld [vmem:[#allocation3 + $0x3e8] sm:$0xff]
    %v309 = vld [vmem:[#allocation3 + $0x3f0] sm:$0xff]
    %v310 = vld [vmem:[#allocation3 + $0x3f8] sm:$0xff]
    %v311 = vld [vmem:[#allocation5] sm:$0xff]
    %v313 = vperm.slane %v311, 0
    %v314 = vperm.slane %v311, 1
    %v315 = vperm.slane %v311, 2
    %v316 = vperm.slane %v311, 3
    %v317 = vperm.slane %v311, 4
    %v318 = vperm.slane %v311, 5
    %v319 = vperm.slane %v311, 6
    %v320 = vperm.slane %v311, 7
    %v457 = vunpack.c.l.b16 %v183
    %v458 = vunpack.c.h.b16 %v183
    %v459 = vunpack.c.l.b16 %v184
    %v460 = vunpack.c.h.b16 %v184
    %v461 = vunpack.c.l.b16 %v185
    %v462 = vunpack.c.h.b16 %v185
    %v463 = vunpack.c.l.b16 %v186
    %v464 = vunpack.c.h.b16 %v186
    %v465 = vunpack.c.l.b16 %v187
    %v466 = vunpack.c.h.b16 %v187
    %v467 = vunpack.c.l.b16 %v188
    %v468 = vunpack.c.h.b16 %v188
    %v469 = vunpack.c.l.b16 %v189
    %v470 = vunpack.c.h.b16 %v189
    %v471 = vunpack.c.l.b16 %v190
    %v472 = vunpack.c.h.b16 %v190
    %v473 = vunpack.c.l.b16 %v191
    %v474 = vunpack.c.h.b16 %v191
    %v475 = vunpack.c.l.b16 %v192
    %v476 = vunpack.c.h.b16 %v192
    %v477 = vunpack.c.l.b16 %v193
    %v478 = vunpack.c.h.b16 %v193
    %v479 = vunpack.c.l.b16 %v194
    %v480 = vunpack.c.h.b16 %v194
    %v481 = vunpack.c.l.b16 %v195
    %v482 = vunpack.c.h.b16 %v195
    %v483 = vunpack.c.l.b16 %v196
    %v484 = vunpack.c.h.b16 %v196
    %v485 = vunpack.c.l.b16 %v197
    %v486 = vunpack.c.h.b16 %v197
    %v487 = vunpack.c.l.b16 %v198
    %v488 = vunpack.c.h.b16 %v198
    %v489 = vunpack.c.l.b16 %v199
    %v490 = vunpack.c.h.b16 %v199
    %v491 = vunpack.c.l.b16 %v200
    %v492 = vunpack.c.h.b16 %v200
    %v493 = vunpack.c.l.b16 %v201
    %v494 = vunpack.c.h.b16 %v201
    %v495 = vunpack.c.l.b16 %v202
    %v496 = vunpack.c.h.b16 %v202
    %v497 = vunpack.c.l.b16 %v203
    %v498 = vunpack.c.h.b16 %v203
    %v499 = vunpack.c.l.b16 %v204
    %v500 = vunpack.c.h.b16 %v204
    %v501 = vunpack.c.l.b16 %v205
    %v502 = vunpack.c.h.b16 %v205
    %v503 = vunpack.c.l.b16 %v206
    %v504 = vunpack.c.h.b16 %v206
    %v505 = vunpack.c.l.b16 %v207
    %v506 = vunpack.c.h.b16 %v207
    %v507 = vunpack.c.l.b16 %v208
    %v508 = vunpack.c.h.b16 %v208
    %v509 = vunpack.c.l.b16 %v209
    %v510 = vunpack.c.h.b16 %v209
    %v511 = vunpack.c.l.b16 %v210
    %v512 = vunpack.c.h.b16 %v210
    %v513 = vunpack.c.l.b16 %v211
    %v514 = vunpack.c.h.b16 %v211
    %v515 = vunpack.c.l.b16 %v212
    %v516 = vunpack.c.h.b16 %v212
    %v517 = vunpack.c.l.b16 %v213
    %v518 = vunpack.c.h.b16 %v213
    %v519 = vunpack.c.l.b16 %v214
    %v520 = vunpack.c.h.b16 %v214
    %v521 = vunpack.c.l.b16 %v215
    %v522 = vunpack.c.h.b16 %v215
    %v523 = vunpack.c.l.b16 %v216
    %v524 = vunpack.c.h.b16 %v216
    %v525 = vunpack.c.l.b16 %v217
    %v526 = vunpack.c.h.b16 %v217
    %v527 = vunpack.c.l.b16 %v218
    %v528 = vunpack.c.h.b16 %v218
    %v529 = vunpack.c.l.b16 %v219
    %v530 = vunpack.c.h.b16 %v219
    %v531 = vunpack.c.l.b16 %v220
    %v532 = vunpack.c.h.b16 %v220
    %v533 = vunpack.c.l.b16 %v221
    %v534 = vunpack.c.h.b16 %v221
    %v535 = vunpack.c.l.b16 %v222
    %v536 = vunpack.c.h.b16 %v222
    %v537 = vunpack.c.l.b16 %v223
    %v538 = vunpack.c.h.b16 %v223
    %v539 = vunpack.c.l.b16 %v224
    %v540 = vunpack.c.h.b16 %v224
    %v541 = vunpack.c.l.b16 %v225
    %v542 = vunpack.c.h.b16 %v225
    %v543 = vunpack.c.l.b16 %v226
    %v544 = vunpack.c.h.b16 %v226
    %v545 = vunpack.c.l.b16 %v227
    %v546 = vunpack.c.h.b16 %v227
    %v547 = vunpack.c.l.b16 %v228
    %v548 = vunpack.c.h.b16 %v228
    %v549 = vunpack.c.l.b16 %v229
    %v550 = vunpack.c.h.b16 %v229
    %v551 = vunpack.c.l.b16 %v230
    %v552 = vunpack.c.h.b16 %v230
    %v553 = vunpack.c.l.b16 %v231
    %v554 = vunpack.c.h.b16 %v231
    %v555 = vunpack.c.l.b16 %v232
    %v556 = vunpack.c.h.b16 %v232
    %v557 = vunpack.c.l.b16 %v233
    %v558 = vunpack.c.h.b16 %v233
    %v559 = vunpack.c.l.b16 %v234
    %v560 = vunpack.c.h.b16 %v234
    %v561 = vunpack.c.l.b16 %v235
    %v562 = vunpack.c.h.b16 %v235
    %v563 = vunpack.c.l.b16 %v236
    %v564 = vunpack.c.h.b16 %v236
    %v565 = vunpack.c.l.b16 %v237
    %v566 = vunpack.c.h.b16 %v237
    %v567 = vunpack.c.l.b16 %v238
    %v568 = vunpack.c.h.b16 %v238
    %v569 = vunpack.c.l.b16 %v239
    %v570 = vunpack.c.h.b16 %v239
    %v571 = vunpack.c.l.b16 %v240
    %v572 = vunpack.c.h.b16 %v240
    %v573 = vunpack.c.l.b16 %v241
    %v574 = vunpack.c.h.b16 %v241
    %v575 = vunpack.c.l.b16 %v242
    %v576 = vunpack.c.h.b16 %v242
    %v577 = vunpack.c.l.b16 %v243
    %v578 = vunpack.c.h.b16 %v243
    %v579 = vunpack.c.l.b16 %v244
    %v580 = vunpack.c.h.b16 %v244
    %v581 = vunpack.c.l.b16 %v245
    %v582 = vunpack.c.h.b16 %v245
    %v583 = vunpack.c.l.b16 %v246
    %v584 = vunpack.c.h.b16 %v246
    %v585 = vunpack.c.l.b16 %v247
    %v586 = vunpack.c.h.b16 %v247
    %v587 = vunpack.c.l.b16 %v248
    %v588 = vunpack.c.h.b16 %v248
    %v589 = vunpack.c.l.b16 %v249
    %v590 = vunpack.c.h.b16 %v249
    %v591 = vunpack.c.l.b16 %v250
    %v592 = vunpack.c.h.b16 %v250
    %v593 = vunpack.c.l.b16 %v251
    %v594 = vunpack.c.h.b16 %v251
    %v595 = vunpack.c.l.b16 %v252
    %v596 = vunpack.c.h.b16 %v252
    %v597 = vunpack.c.l.b16 %v253
    %v598 = vunpack.c.h.b16 %v253
    %v599 = vunpack.c.l.b16 %v254
    %v600 = vunpack.c.h.b16 %v254
    %v601 = vunpack.c.l.b16 %v255
    %v602 = vunpack.c.h.b16 %v255
    %v603 = vunpack.c.l.b16 %v256
    %v604 = vunpack.c.h.b16 %v256
    %v605 = vunpack.c.l.b16 %v257
    %v606 = vunpack.c.h.b16 %v257
    %v607 = vunpack.c.l.b16 %v258
    %v608 = vunpack.c.h.b16 %v258
    %v609 = vunpack.c.l.b16 %v259
    %v610 = vunpack.c.h.b16 %v259
    %v611 = vunpack.c.l.b16 %v260
    %v612 = vunpack.c.h.b16 %v260
    %v613 = vunpack.c.l.b16 %v261
    %v614 = vunpack.c.h.b16 %v261
    %v615 = vunpack.c.l.b16 %v262
    %v616 = vunpack.c.h.b16 %v262
    %v617 = vunpack.c.l.b16 %v263
    %v618 = vunpack.c.h.b16 %v263
    %v619 = vunpack.c.l.b16 %v264
    %v620 = vunpack.c.h.b16 %v264
    %v621 = vunpack.c.l.b16 %v265
    %v622 = vunpack.c.h.b16 %v265
    %v623 = vunpack.c.l.b16 %v266
    %v624 = vunpack.c.h.b16 %v266
    %v625 = vunpack.c.l.b16 %v267
    %v626 = vunpack.c.h.b16 %v267
    %v627 = vunpack.c.l.b16 %v268
    %v628 = vunpack.c.h.b16 %v268
    %v629 = vunpack.c.l.b16 %v269
    %v630 = vunpack.c.h.b16 %v269
    %v631 = vunpack.c.l.b16 %v270
    %v632 = vunpack.c.h.b16 %v270
    %v633 = vunpack.c.l.b16 %v271
    %v634 = vunpack.c.h.b16 %v271
    %v635 = vunpack.c.l.b16 %v272
    %v636 = vunpack.c.h.b16 %v272
    %v637 = vunpack.c.l.b16 %v273
    %v638 = vunpack.c.h.b16 %v273
    %v639 = vunpack.c.l.b16 %v274
    %v640 = vunpack.c.h.b16 %v274
    %v641 = vunpack.c.l.b16 %v275
    %v642 = vunpack.c.h.b16 %v275
    %v643 = vunpack.c.l.b16 %v276
    %v644 = vunpack.c.h.b16 %v276
    %v645 = vunpack.c.l.b16 %v277
    %v646 = vunpack.c.h.b16 %v277
    %v647 = vunpack.c.l.b16 %v278
    %v648 = vunpack.c.h.b16 %v278
    %v649 = vunpack.c.l.b16 %v279
    %v650 = vunpack.c.h.b16 %v279
    %v651 = vunpack.c.l.b16 %v280
    %v652 = vunpack.c.h.b16 %v280
    %v653 = vunpack.c.l.b16 %v281
    %v654 = vunpack.c.h.b16 %v281
    %v655 = vunpack.c.l.b16 %v282
    %v656 = vunpack.c.h.b16 %v282
    %v657 = vunpack.c.l.b16 %v283
    %v658 = vunpack.c.h.b16 %v283
    %v659 = vunpack.c.l.b16 %v284
    %v660 = vunpack.c.h.b16 %v284
    %v661 = vunpack.c.l.b16 %v285
    %v662 = vunpack.c.h.b16 %v285
    %v663 = vunpack.c.l.b16 %v286
    %v664 = vunpack.c.h.b16 %v286
    %v665 = vunpack.c.l.b16 %v287
    %v666 = vunpack.c.h.b16 %v287
    %v667 = vunpack.c.l.b16 %v288
    %v668 = vunpack.c.h.b16 %v288
    %v669 = vunpack.c.l.b16 %v289
    %v670 = vunpack.c.h.b16 %v289
    %v671 = vunpack.c.l.b16 %v290
    %v672 = vunpack.c.h.b16 %v290
    %v673 = vunpack.c.l.b16 %v291
    %v674 = vunpack.c.h.b16 %v291
    %v675 = vunpack.c.l.b16 %v292
    %v676 = vunpack.c.h.b16 %v292
    %v677 = vunpack.c.l.b16 %v293
    %v678 = vunpack.c.h.b16 %v293
    %v679 = vunpack.c.l.b16 %v294
    %v680 = vunpack.c.h.b16 %v294
    %v681 = vunpack.c.l.b16 %v295
    %v682 = vunpack.c.h.b16 %v295
    %v683 = vunpack.c.l.b16 %v296
    %v684 = vunpack.c.h.b16 %v296
    %v685 = vunpack.c.l.b16 %v297
    %v686 = vunpack.c.h.b16 %v297
    %v687 = vunpack.c.l.b16 %v298
    %v688 = vunpack.c.h.b16 %v298
    %v689 = vunpack.c.l.b16 %v299
    %v690 = vunpack.c.h.b16 %v299
    %v691 = vunpack.c.l.b16 %v300
    %v692 = vunpack.c.h.b16 %v300
    %v693 = vunpack.c.l.b16 %v301
    %v694 = vunpack.c.h.b16 %v301
    %v695 = vunpack.c.l.b16 %v302
    %v696 = vunpack.c.h.b16 %v302
    %v697 = vunpack.c.l.b16 %v303
    %v698 = vunpack.c.h.b16 %v303
    %v699 = vunpack.c.l.b16 %v304
    %v700 = vunpack.c.h.b16 %v304
    %v701 = vunpack.c.l.b16 %v305
    %v702 = vunpack.c.h.b16 %v305
    %v703 = vunpack.c.l.b16 %v306
    %v704 = vunpack.c.h.b16 %v306
    %v705 = vunpack.c.l.b16 %v307
    %v706 = vunpack.c.h.b16 %v307
    %v707 = vunpack.c.l.b16 %v308
    %v708 = vunpack.c.h.b16 %v308
    %v709 = vunpack.c.l.b16 %v309
    %v710 = vunpack.c.h.b16 %v309
    %v711 = vunpack.c.l.b16 %v310
    %v712 = vunpack.c.h.b16 %v310
    %v713 = vpack.c.b16 %v465, %v457
    %v714 = vpack.c.b16 %v466, %v458
    %v715 = vpack.c.b16 %v467, %v459
    %v716 = vpack.c.b16 %v468, %v460
    %v717 = vpack.c.b16 %v469, %v461
    %v718 = vpack.c.b16 %v470, %v462
    %v719 = vpack.c.b16 %v471, %v463
    %v720 = vpack.c.b16 %v472, %v464
    %v721 = vpack.c.b16 %v481, %v473
    %v722 = vpack.c.b16 %v482, %v474
    %v723 = vpack.c.b16 %v483, %v475
    %v724 = vpack.c.b16 %v484, %v476
    %v725 = vpack.c.b16 %v485, %v477
    %v726 = vpack.c.b16 %v486, %v478
    %v727 = vpack.c.b16 %v487, %v479
    %v728 = vpack.c.b16 %v488, %v480
    %v729 = vpack.c.b16 %v497, %v489
    %v730 = vpack.c.b16 %v498, %v490
    %v731 = vpack.c.b16 %v499, %v491
    %v732 = vpack.c.b16 %v500, %v492
    %v733 = vpack.c.b16 %v501, %v493
    %v734 = vpack.c.b16 %v502, %v494
    %v735 = vpack.c.b16 %v503, %v495
    %v736 = vpack.c.b16 %v504, %v496
    %v737 = vpack.c.b16 %v513, %v505
    %v738 = vpack.c.b16 %v514, %v506
    %v739 = vpack.c.b16 %v515, %v507
    %v740 = vpack.c.b16 %v516, %v508
    %v741 = vpack.c.b16 %v517, %v509
    %v742 = vpack.c.b16 %v518, %v510
    %v743 = vpack.c.b16 %v519, %v511
    %v744 = vpack.c.b16 %v520, %v512
    %v745 = vpack.c.b16 %v529, %v521
    %v746 = vpack.c.b16 %v530, %v522
    %v747 = vpack.c.b16 %v531, %v523
    %v748 = vpack.c.b16 %v532, %v524
    %v749 = vpack.c.b16 %v533, %v525
    %v750 = vpack.c.b16 %v534, %v526
    %v751 = vpack.c.b16 %v535, %v527
    %v752 = vpack.c.b16 %v536, %v528
    %v753 = vpack.c.b16 %v545, %v537
    %v754 = vpack.c.b16 %v546, %v538
    %v755 = vpack.c.b16 %v547, %v539
    %v756 = vpack.c.b16 %v548, %v540
    %v757 = vpack.c.b16 %v549, %v541
    %v758 = vpack.c.b16 %v550, %v542
    %v759 = vpack.c.b16 %v551, %v543
    %v760 = vpack.c.b16 %v552, %v544
    %v761 = vpack.c.b16 %v561, %v553
    %v762 = vpack.c.b16 %v562, %v554
    %v763 = vpack.c.b16 %v563, %v555
    %v764 = vpack.c.b16 %v564, %v556
    %v765 = vpack.c.b16 %v565, %v557
    %v766 = vpack.c.b16 %v566, %v558
    %v767 = vpack.c.b16 %v567, %v559
    %v768 = vpack.c.b16 %v568, %v560
    %v769 = vpack.c.b16 %v577, %v569
    %v770 = vpack.c.b16 %v578, %v570
    %v771 = vpack.c.b16 %v579, %v571
    %v772 = vpack.c.b16 %v580, %v572
    %v773 = vpack.c.b16 %v581, %v573
    %v774 = vpack.c.b16 %v582, %v574
    %v775 = vpack.c.b16 %v583, %v575
    %v776 = vpack.c.b16 %v584, %v576
    %v777 = vpack.c.b16 %v593, %v585
    %v778 = vpack.c.b16 %v594, %v586
    %v779 = vpack.c.b16 %v595, %v587
    %v780 = vpack.c.b16 %v596, %v588
    %v781 = vpack.c.b16 %v597, %v589
    %v782 = vpack.c.b16 %v598, %v590
    %v783 = vpack.c.b16 %v599, %v591
    %v784 = vpack.c.b16 %v600, %v592
    %v785 = vpack.c.b16 %v609, %v601
    %v786 = vpack.c.b16 %v610, %v602
    %v787 = vpack.c.b16 %v611, %v603
    %v788 = vpack.c.b16 %v612, %v604
    %v789 = vpack.c.b16 %v613, %v605
    %v790 = vpack.c.b16 %v614, %v606
    %v791 = vpack.c.b16 %v615, %v607
    %v792 = vpack.c.b16 %v616, %v608
    %v793 = vpack.c.b16 %v625, %v617
    %v794 = vpack.c.b16 %v626, %v618
    %v795 = vpack.c.b16 %v627, %v619
    %v796 = vpack.c.b16 %v628, %v620
    %v797 = vpack.c.b16 %v629, %v621
    %v798 = vpack.c.b16 %v630, %v622
    %v799 = vpack.c.b16 %v631, %v623
    %v800 = vpack.c.b16 %v632, %v624
    %v801 = vpack.c.b16 %v641, %v633
    %v802 = vpack.c.b16 %v642, %v634
    %v803 = vpack.c.b16 %v643, %v635
    %v804 = vpack.c.b16 %v644, %v636
    %v805 = vpack.c.b16 %v645, %v637
    %v806 = vpack.c.b16 %v646, %v638
    %v807 = vpack.c.b16 %v647, %v639
    %v808 = vpack.c.b16 %v648, %v640
    %v809 = vpack.c.b16 %v657, %v649
    %v810 = vpack.c.b16 %v658, %v650
    %v811 = vpack.c.b16 %v659, %v651
    %v812 = vpack.c.b16 %v660, %v652
    %v813 = vpack.c.b16 %v661, %v653
    %v814 = vpack.c.b16 %v662, %v654
    %v815 = vpack.c.b16 %v663, %v655
    %v816 = vpack.c.b16 %v664, %v656
    %v817 = vpack.c.b16 %v673, %v665
    %v818 = vpack.c.b16 %v674, %v666
    %v819 = vpack.c.b16 %v675, %v667
    %v820 = vpack.c.b16 %v676, %v668
    %v821 = vpack.c.b16 %v677, %v669
    %v822 = vpack.c.b16 %v678, %v670
    %v823 = vpack.c.b16 %v679, %v671
    %v824 = vpack.c.b16 %v680, %v672
    %v825 = vpack.c.b16 %v689, %v681
    %v826 = vpack.c.b16 %v690, %v682
    %v827 = vpack.c.b16 %v691, %v683
    %v828 = vpack.c.b16 %v692, %v684
    %v829 = vpack.c.b16 %v693, %v685
    %v830 = vpack.c.b16 %v694, %v686
    %v831 = vpack.c.b16 %v695, %v687
    %v832 = vpack.c.b16 %v696, %v688
    %v833 = vpack.c.b16 %v705, %v697
    %v834 = vpack.c.b16 %v706, %v698
    %v835 = vpack.c.b16 %v707, %v699
    %v836 = vpack.c.b16 %v708, %v700
    %v837 = vpack.c.b16 %v709, %v701
    %v838 = vpack.c.b16 %v710, %v702
    %v839 = vpack.c.b16 %v711, %v703
    %v840 = vpack.c.b16 %v712, %v704
    %969 = vmatpush.bf16.msra.mxu0 %v769
    %970 = vmatpush.bf16.msra.mxu0 %v761
    %971 = vmatpush.bf16.msra.mxu0 %v753
    %972 = vmatpush.bf16.msra.mxu0 %v745
    %973 = vmatpush.bf16.msra.mxu0 %v737
    %974 = vmatpush.bf16.msra.mxu0 %v729
    %975 = vmatpush.bf16.msra.mxu0 %v721
    %976 = vmatpush.bf16.msra.mxu0 %v713
    %977 = vmatmul.bf16.gmra.mxu0 %v167
    %v978 = vpop.f32.mrf.mxu0
    %v979 = vadd.f32 %v313, %v978
    %v980 = vpop.f32.mrf.mxu0
    %v981 = vadd.f32 %v313, %v980
    %982 = vmatmul.bf16.gmra.mxu0 %v169
    %v983 = vpop.f32.mrf.mxu0
    %v984 = vadd.f32 %v313, %v983
    %v985 = vpop.f32.mrf.mxu0
    %v986 = vadd.f32 %v313, %v985
    %987 = vmatmul.bf16.gmra.mxu0 %v171
    %v988 = vpop.f32.mrf.mxu0
    %v989 = vadd.f32 %v313, %v988
    %v990 = vpop.f32.mrf.mxu0
    %v991 = vadd.f32 %v313, %v990
    %992 = vmatmul.bf16.gmra.mxu0 %v173
    %v993 = vpop.f32.mrf.mxu0
    %v994 = vadd.f32 %v313, %v993
    %v995 = vpop.f32.mrf.mxu0
    %v996 = vadd.f32 %v313, %v995
    %997 = vmatmul.bf16.gmra.mxu0 %v175
    %v998 = vpop.f32.mrf.mxu0
    %v999 = vadd.f32 %v313, %v998
    %v1000 = vpop.f32.mrf.mxu0
    %v1001 = vadd.f32 %v313, %v1000
    %1002 = vmatmul.bf16.gmra.mxu0 %v177
    %v1003 = vpop.f32.mrf.mxu0
    %v1004 = vadd.f32 %v313, %v1003
    %v1005 = vpop.f32.mrf.mxu0
    %v1006 = vadd.f32 %v313, %v1005
    %1007 = vmatmul.bf16.gmra.mxu0 %v179
    %v1008 = vpop.f32.mrf.mxu0
    %v1009 = vadd.f32 %v313, %v1008
    %v1010 = vpop.f32.mrf.mxu0
    %v1011 = vadd.f32 %v313, %v1010
    %1012 = vmatmul.bf16.gmra.mxu0 %v181
    %v1013 = vpop.f32.mrf.mxu0
    %v1014 = vadd.f32 %v313, %v1013
    %v1015 = vpop.f32.mrf.mxu0
    %v1016 = vadd.f32 %v313, %v1015
    %1017 = vdwg.mxu0
    %1018 = vmatpush.bf16.msra.mxu0 %v833
    %1019 = vmatpush.bf16.msra.mxu0 %v825
    %1020 = vmatpush.bf16.msra.mxu0 %v817
    %1021 = vmatpush.bf16.msra.mxu0 %v809
    %1022 = vmatpush.bf16.msra.mxu0 %v801
    %1023 = vmatpush.bf16.msra.mxu0 %v793
    %1024 = vmatpush.bf16.msra.mxu0 %v785
    %1025 = vmatpush.bf16.msra.mxu0 %v777
    %1026 = vmatmul.bf16.gmra.mxu0 %v168
    %v1027 = vpop.f32.mrf.mxu0
    %v1028 = vadd.f32 %v979, %v1027
    %v1029 = vpop.f32.mrf.mxu0
    %v1030 = vadd.f32 %v981, %v1029
    %1031 = vmatmul.bf16.gmra.mxu0 %v170
    %v1032 = vpop.f32.mrf.mxu0
    %v1033 = vadd.f32 %v984, %v1032
    %v1034 = vpop.f32.mrf.mxu0
    %v1035 = vadd.f32 %v986, %v1034
    %1036 = vmatmul.bf16.gmra.mxu0 %v172
    %v1037 = vpop.f32.mrf.mxu0
    %v1038 = vadd.f32 %v989, %v1037
    %v1039 = vpop.f32.mrf.mxu0
    %v1040 = vadd.f32 %v991, %v1039
    %1041 = vmatmul.bf16.gmra.mxu0 %v174
    %v1042 = vpop.f32.mrf.mxu0
    %v1043 = vadd.f32 %v994, %v1042
    %v1044 = vpop.f32.mrf.mxu0
    %v1045 = vadd.f32 %v996, %v1044
    %1046 = vmatmul.bf16.gmra.mxu0 %v176
    %v1047 = vpop.f32.mrf.mxu0
    %v1048 = vadd.f32 %v999, %v1047
    %v1049 = vpop.f32.mrf.mxu0
    %v1050 = vadd.f32 %v1001, %v1049
    %1051 = vmatmul.bf16.gmra.mxu0 %v178
    %v1052 = vpop.f32.mrf.mxu0
    %v1053 = vadd.f32 %v1004, %v1052
    %v1054 = vpop.f32.mrf.mxu0
    %v1055 = vadd.f32 %v1006, %v1054
    %1056 = vmatmul.bf16.gmra.mxu0 %v180
    %v1057 = vpop.f32.mrf.mxu0
    %v1058 = vadd.f32 %v1009, %v1057
    %v1059 = vpop.f32.mrf.mxu0
    %v1060 = vadd.f32 %v1011, %v1059
    %1061 = vmatmul.bf16.gmra.mxu0 %v182
    %v1062 = vpop.f32.mrf.mxu0
    %v1063 = vadd.f32 %v1014, %v1062
    %v1064 = vpop.f32.mrf.mxu0
    %v1065 = vadd.f32 %v1016, %v1064
    %1066 = vdwg.mxu0
    %1067 = vmatpush.bf16.msra.mxu0 %v770
    %1068 = vmatpush.bf16.msra.mxu0 %v762
    %1069 = vmatpush.bf16.msra.mxu0 %v754
    %1070 = vmatpush.bf16.msra.mxu0 %v746
    %1071 = vmatpush.bf16.msra.mxu0 %v738
    %1072 = vmatpush.bf16.msra.mxu0 %v730
    %1073 = vmatpush.bf16.msra.mxu0 %v722
    %1074 = vmatpush.bf16.msra.mxu0 %v714
    %1075 = vmatmul.bf16.gmra.mxu0 %v167
    %v1076 = vpop.f32.mrf.mxu0
    %v1077 = vadd.f32 %v314, %v1076
    %v1078 = vpop.f32.mrf.mxu0
    %v1079 = vadd.f32 %v314, %v1078
    %1080 = vmatmul.bf16.gmra.mxu0 %v169
    %v1081 = vpop.f32.mrf.mxu0
    %v1082 = vadd.f32 %v314, %v1081
    %v1083 = vpop.f32.mrf.mxu0
    %v1084 = vadd.f32 %v314, %v1083
    %1085 = vmatmul.bf16.gmra.mxu0 %v171
    %v1086 = vpop.f32.mrf.mxu0
    %v1087 = vadd.f32 %v314, %v1086
    %v1088 = vpop.f32.mrf.mxu0
    %v1089 = vadd.f32 %v314, %v1088
    %1090 = vmatmul.bf16.gmra.mxu0 %v173
    %v1091 = vpop.f32.mrf.mxu0
    %v1092 = vadd.f32 %v314, %v1091
    %v1093 = vpop.f32.mrf.mxu0
    %v1094 = vadd.f32 %v314, %v1093
    %1095 = vmatmul.bf16.gmra.mxu0 %v175
    %v1096 = vpop.f32.mrf.mxu0
    %v1097 = vadd.f32 %v314, %v1096
    %v1098 = vpop.f32.mrf.mxu0
    %v1099 = vadd.f32 %v314, %v1098
    %1100 = vmatmul.bf16.gmra.mxu0 %v177
    %v1101 = vpop.f32.mrf.mxu0
    %v1102 = vadd.f32 %v314, %v1101
    %v1103 = vpop.f32.mrf.mxu0
    %v1104 = vadd.f32 %v314, %v1103
    %1105 = vmatmul.bf16.gmra.mxu0 %v179
    %v1106 = vpop.f32.mrf.mxu0
    %v1107 = vadd.f32 %v314, %v1106
    %v1108 = vpop.f32.mrf.mxu0
    %v1109 = vadd.f32 %v314, %v1108
    %1110 = vmatmul.bf16.gmra.mxu0 %v181
    %v1111 = vpop.f32.mrf.mxu0
    %v1112 = vadd.f32 %v314, %v1111
    %v1113 = vpop.f32.mrf.mxu0
    %v1114 = vadd.f32 %v314, %v1113
    %1115 = vdwg.mxu0
    %1116 = vmatpush.bf16.msra.mxu0 %v834
    %1117 = vmatpush.bf16.msra.mxu0 %v826
    %1118 = vmatpush.bf16.msra.mxu0 %v818
    %1119 = vmatpush.bf16.msra.mxu0 %v810
    %1120 = vmatpush.bf16.msra.mxu0 %v802
    %1121 = vmatpush.bf16.msra.mxu0 %v794
    %1122 = vmatpush.bf16.msra.mxu0 %v786
    %1123 = vmatpush.bf16.msra.mxu0 %v778
    %1124 = vmatmul.bf16.gmra.mxu0 %v168
    %v1125 = vpop.f32.mrf.mxu0
    %v1126 = vadd.f32 %v1077, %v1125
    %v1127 = vpop.f32.mrf.mxu0
    %v1128 = vadd.f32 %v1079, %v1127
    %1129 = vmatmul.bf16.gmra.mxu0 %v170
    %v1130 = vpop.f32.mrf.mxu0
    %v1131 = vadd.f32 %v1082, %v1130
    %v1132 = vpop.f32.mrf.mxu0
    %v1133 = vadd.f32 %v1084, %v1132
    %1134 = vmatmul.bf16.gmra.mxu0 %v172
    %v1135 = vpop.f32.mrf.mxu0
    %v1136 = vadd.f32 %v1087, %v1135
    %v1137 = vpop.f32.mrf.mxu0
    %v1138 = vadd.f32 %v1089, %v1137
    %1139 = vmatmul.bf16.gmra.mxu0 %v174
    %v1140 = vpop.f32.mrf.mxu0
    %v1141 = vadd.f32 %v1092, %v1140
    %v1142 = vpop.f32.mrf.mxu0
    %v1143 = vadd.f32 %v1094, %v1142
    %1144 = vmatmul.bf16.gmra.mxu0 %v176
    %v1145 = vpop.f32.mrf.mxu0
    %v1146 = vadd.f32 %v1097, %v1145
    %v1147 = vpop.f32.mrf.mxu0
    %v1148 = vadd.f32 %v1099, %v1147
    %1149 = vmatmul.bf16.gmra.mxu0 %v178
    %v1150 = vpop.f32.mrf.mxu0
    %v1151 = vadd.f32 %v1102, %v1150
    %v1152 = vpop.f32.mrf.mxu0
    %v1153 = vadd.f32 %v1104, %v1152
    %1154 = vmatmul.bf16.gmra.mxu0 %v180
    %v1155 = vpop.f32.mrf.mxu0
    %v1156 = vadd.f32 %v1107, %v1155
    %v1157 = vpop.f32.mrf.mxu0
    %v1158 = vadd.f32 %v1109, %v1157
    %1159 = vmatmul.bf16.gmra.mxu0 %v182
    %v1160 = vpop.f32.mrf.mxu0
    %v1161 = vadd.f32 %v1112, %v1160
    %v1162 = vpop.f32.mrf.mxu0
    %v1163 = vadd.f32 %v1114, %v1162
    %1164 = vdwg.mxu0
    %1165 = vmatpush.bf16.msra.mxu0 %v771
    %1166 = vmatpush.bf16.msra.mxu0 %v763
    %1167 = vmatpush.bf16.msra.mxu0 %v755
    %1168 = vmatpush.bf16.msra.mxu0 %v747
    %1169 = vmatpush.bf16.msra.mxu0 %v739
    %1170 = vmatpush.bf16.msra.mxu0 %v731
    %1171 = vmatpush.bf16.msra.mxu0 %v723
    %1172 = vmatpush.bf16.msra.mxu0 %v715
    %1173 = vmatmul.bf16.gmra.mxu0 %v167
    %v1174 = vpop.f32.mrf.mxu0
    %v1175 = vadd.f32 %v315, %v1174
    %v1176 = vpop.f32.mrf.mxu0
    %v1177 = vadd.f32 %v315, %v1176
    %1178 = vmatmul.bf16.gmra.mxu0 %v169
    %v1179 = vpop.f32.mrf.mxu0
    %v1180 = vadd.f32 %v315, %v1179
    %v1181 = vpop.f32.mrf.mxu0
    %v1182 = vadd.f32 %v315, %v1181
    %1183 = vmatmul.bf16.gmra.mxu0 %v171
    %v1184 = vpop.f32.mrf.mxu0
    %v1185 = vadd.f32 %v315, %v1184
    %v1186 = vpop.f32.mrf.mxu0
    %v1187 = vadd.f32 %v315, %v1186
    %1188 = vmatmul.bf16.gmra.mxu0 %v173
    %v1189 = vpop.f32.mrf.mxu0
    %v1190 = vadd.f32 %v315, %v1189
    %v1191 = vpop.f32.mrf.mxu0
    %v1192 = vadd.f32 %v315, %v1191
    %1193 = vmatmul.bf16.gmra.mxu0 %v175
    %v1194 = vpop.f32.mrf.mxu0
    %v1195 = vadd.f32 %v315, %v1194
    %v1196 = vpop.f32.mrf.mxu0
    %v1197 = vadd.f32 %v315, %v1196
    %1198 = vmatmul.bf16.gmra.mxu0 %v177
    %v1199 = vpop.f32.mrf.mxu0
    %v1200 = vadd.f32 %v315, %v1199
    %v1201 = vpop.f32.mrf.mxu0
    %v1202 = vadd.f32 %v315, %v1201
    %1203 = vmatmul.bf16.gmra.mxu0 %v179
    %v1204 = vpop.f32.mrf.mxu0
    %v1205 = vadd.f32 %v315, %v1204
    %v1206 = vpop.f32.mrf.mxu0
    %v1207 = vadd.f32 %v315, %v1206
    %1208 = vmatmul.bf16.gmra.mxu0 %v181
    %v1209 = vpop.f32.mrf.mxu0
    %v1210 = vadd.f32 %v315, %v1209
    %v1211 = vpop.f32.mrf.mxu0
    %v1212 = vadd.f32 %v315, %v1211
    %1213 = vdwg.mxu0
    %1214 = vmatpush.bf16.msra.mxu0 %v835
    %1215 = vmatpush.bf16.msra.mxu0 %v827
    %1216 = vmatpush.bf16.msra.mxu0 %v819
    %1217 = vmatpush.bf16.msra.mxu0 %v811
    %1218 = vmatpush.bf16.msra.mxu0 %v803
    %1219 = vmatpush.bf16.msra.mxu0 %v795
    %1220 = vmatpush.bf16.msra.mxu0 %v787
    %1221 = vmatpush.bf16.msra.mxu0 %v779
    %1222 = vmatmul.bf16.gmra.mxu0 %v168
    %v1223 = vpop.f32.mrf.mxu0
    %v1224 = vadd.f32 %v1175, %v1223
    %v1225 = vpop.f32.mrf.mxu0
    %v1226 = vadd.f32 %v1177, %v1225
    %1227 = vmatmul.bf16.gmra.mxu0 %v170
    %v1228 = vpop.f32.mrf.mxu0
    %v1229 = vadd.f32 %v1180, %v1228
    %v1230 = vpop.f32.mrf.mxu0
    %v1231 = vadd.f32 %v1182, %v1230
    %1232 = vmatmul.bf16.gmra.mxu0 %v172
    %v1233 = vpop.f32.mrf.mxu0
    %v1234 = vadd.f32 %v1185, %v1233
    %v1235 = vpop.f32.mrf.mxu0
    %v1236 = vadd.f32 %v1187, %v1235
    %1237 = vmatmul.bf16.gmra.mxu0 %v174
    %v1238 = vpop.f32.mrf.mxu0
    %v1239 = vadd.f32 %v1190, %v1238
    %v1240 = vpop.f32.mrf.mxu0
    %v1241 = vadd.f32 %v1192, %v1240
    %1242 = vmatmul.bf16.gmra.mxu0 %v176
    %v1243 = vpop.f32.mrf.mxu0
    %v1244 = vadd.f32 %v1195, %v1243
    %v1245 = vpop.f32.mrf.mxu0
    %v1246 = vadd.f32 %v1197, %v1245
    %1247 = vmatmul.bf16.gmra.mxu0 %v178
    %v1248 = vpop.f32.mrf.mxu0
    %v1249 = vadd.f32 %v1200, %v1248
    %v1250 = vpop.f32.mrf.mxu0
    %v1251 = vadd.f32 %v1202, %v1250
    %1252 = vmatmul.bf16.gmra.mxu0 %v180
    %v1253 = vpop.f32.mrf.mxu0
    %v1254 = vadd.f32 %v1205, %v1253
    %v1255 = vpop.f32.mrf.mxu0
    %v1256 = vadd.f32 %v1207, %v1255
    %1257 = vmatmul.bf16.gmra.mxu0 %v182
    %v1258 = vpop.f32.mrf.mxu0
    %v1259 = vadd.f32 %v1210, %v1258
    %v1260 = vpop.f32.mrf.mxu0
    %v1261 = vadd.f32 %v1212, %v1260
    %1262 = vdwg.mxu0
    %1263 = vmatpush.bf16.msra.mxu0 %v772
    %1264 = vmatpush.bf16.msra.mxu0 %v764
    %1265 = vmatpush.bf16.msra.mxu0 %v756
    %1266 = vmatpush.bf16.msra.mxu0 %v748
    %1267 = vmatpush.bf16.msra.mxu0 %v740
    %1268 = vmatpush.bf16.msra.mxu0 %v732
    %1269 = vmatpush.bf16.msra.mxu0 %v724
    %1270 = vmatpush.bf16.msra.mxu0 %v716
    %1271 = vmatmul.bf16.gmra.mxu0 %v167
    %v1272 = vpop.f32.mrf.mxu0
    %v1273 = vadd.f32 %v316, %v1272
    %v1274 = vpop.f32.mrf.mxu0
    %v1275 = vadd.f32 %v316, %v1274
    %1276 = vmatmul.bf16.gmra.mxu0 %v169
    %v1277 = vpop.f32.mrf.mxu0
    %v1278 = vadd.f32 %v316, %v1277
    %v1279 = vpop.f32.mrf.mxu0
    %v1280 = vadd.f32 %v316, %v1279
    %1281 = vmatmul.bf16.gmra.mxu0 %v171
    %v1282 = vpop.f32.mrf.mxu0
    %v1283 = vadd.f32 %v316, %v1282
    %v1284 = vpop.f32.mrf.mxu0
    %v1285 = vadd.f32 %v316, %v1284
    %1286 = vmatmul.bf16.gmra.mxu0 %v173
    %v1287 = vpop.f32.mrf.mxu0
    %v1288 = vadd.f32 %v316, %v1287
    %v1289 = vpop.f32.mrf.mxu0
    %v1290 = vadd.f32 %v316, %v1289
    %1291 = vmatmul.bf16.gmra.mxu0 %v175
    %v1292 = vpop.f32.mrf.mxu0
    %v1293 = vadd.f32 %v316, %v1292
    %v1294 = vpop.f32.mrf.mxu0
    %v1295 = vadd.f32 %v316, %v1294
    %1296 = vmatmul.bf16.gmra.mxu0 %v177
    %v1297 = vpop.f32.mrf.mxu0
    %v1298 = vadd.f32 %v316, %v1297
    %v1299 = vpop.f32.mrf.mxu0
    %v1300 = vadd.f32 %v316, %v1299
    %1301 = vmatmul.bf16.gmra.mxu0 %v179
    %v1302 = vpop.f32.mrf.mxu0
    %v1303 = vadd.f32 %v316, %v1302
    %v1304 = vpop.f32.mrf.mxu0
    %v1305 = vadd.f32 %v316, %v1304
    %1306 = vmatmul.bf16.gmra.mxu0 %v181
    %v1307 = vpop.f32.mrf.mxu0
    %v1308 = vadd.f32 %v316, %v1307
    %v1309 = vpop.f32.mrf.mxu0
    %v1310 = vadd.f32 %v316, %v1309
    %1311 = vdwg.mxu0
    %1312 = vmatpush.bf16.msra.mxu0 %v836
    %1313 = vmatpush.bf16.msra.mxu0 %v828
    %1314 = vmatpush.bf16.msra.mxu0 %v820
    %1315 = vmatpush.bf16.msra.mxu0 %v812
    %1316 = vmatpush.bf16.msra.mxu0 %v804
    %1317 = vmatpush.bf16.msra.mxu0 %v796
    %1318 = vmatpush.bf16.msra.mxu0 %v788
    %1319 = vmatpush.bf16.msra.mxu0 %v780
    %1320 = vmatmul.bf16.gmra.mxu0 %v168
    %v1321 = vpop.f32.mrf.mxu0
    %v1322 = vadd.f32 %v1273, %v1321
    %v1323 = vpop.f32.mrf.mxu0
    %v1324 = vadd.f32 %v1275, %v1323
    %1325 = vmatmul.bf16.gmra.mxu0 %v170
    %v1326 = vpop.f32.mrf.mxu0
    %v1327 = vadd.f32 %v1278, %v1326
    %v1328 = vpop.f32.mrf.mxu0
    %v1329 = vadd.f32 %v1280, %v1328
    %1330 = vmatmul.bf16.gmra.mxu0 %v172
    %v1331 = vpop.f32.mrf.mxu0
    %v1332 = vadd.f32 %v1283, %v1331
    %v1333 = vpop.f32.mrf.mxu0
    %v1334 = vadd.f32 %v1285, %v1333
    %1335 = vmatmul.bf16.gmra.mxu0 %v174
    %v1336 = vpop.f32.mrf.mxu0
    %v1337 = vadd.f32 %v1288, %v1336
    %v1338 = vpop.f32.mrf.mxu0
    %v1339 = vadd.f32 %v1290, %v1338
    %1340 = vmatmul.bf16.gmra.mxu0 %v176
    %v1341 = vpop.f32.mrf.mxu0
    %v1342 = vadd.f32 %v1293, %v1341
    %v1343 = vpop.f32.mrf.mxu0
    %v1344 = vadd.f32 %v1295, %v1343
    %1345 = vmatmul.bf16.gmra.mxu0 %v178
    %v1346 = vpop.f32.mrf.mxu0
    %v1347 = vadd.f32 %v1298, %v1346
    %v1348 = vpop.f32.mrf.mxu0
    %v1349 = vadd.f32 %v1300, %v1348
    %1350 = vmatmul.bf16.gmra.mxu0 %v180
    %v1351 = vpop.f32.mrf.mxu0
    %v1352 = vadd.f32 %v1303, %v1351
    %v1353 = vpop.f32.mrf.mxu0
    %v1354 = vadd.f32 %v1305, %v1353
    %1355 = vmatmul.bf16.gmra.mxu0 %v182
    %v1356 = vpop.f32.mrf.mxu0
    %v1357 = vadd.f32 %v1308, %v1356
    %v1358 = vpop.f32.mrf.mxu0
    %v1359 = vadd.f32 %v1310, %v1358
    %1360 = vdwg.mxu0
    %1361 = vmatpush.bf16.msra.mxu0 %v773
    %1362 = vmatpush.bf16.msra.mxu0 %v765
    %1363 = vmatpush.bf16.msra.mxu0 %v757
    %1364 = vmatpush.bf16.msra.mxu0 %v749
    %1365 = vmatpush.bf16.msra.mxu0 %v741
    %1366 = vmatpush.bf16.msra.mxu0 %v733
    %1367 = vmatpush.bf16.msra.mxu0 %v725
    %1368 = vmatpush.bf16.msra.mxu0 %v717
    %1369 = vmatmul.bf16.gmra.mxu0 %v167
    %v1370 = vpop.f32.mrf.mxu0
    %v1371 = vadd.f32 %v317, %v1370
    %v1372 = vpop.f32.mrf.mxu0
    %v1373 = vadd.f32 %v317, %v1372
    %1374 = vmatmul.bf16.gmra.mxu0 %v169
    %v1375 = vpop.f32.mrf.mxu0
    %v1376 = vadd.f32 %v317, %v1375
    %v1377 = vpop.f32.mrf.mxu0
    %v1378 = vadd.f32 %v317, %v1377
    %1379 = vmatmul.bf16.gmra.mxu0 %v171
    %v1380 = vpop.f32.mrf.mxu0
    %v1381 = vadd.f32 %v317, %v1380
    %v1382 = vpop.f32.mrf.mxu0
    %v1383 = vadd.f32 %v317, %v1382
    %1384 = vmatmul.bf16.gmra.mxu0 %v173
    %v1385 = vpop.f32.mrf.mxu0
    %v1386 = vadd.f32 %v317, %v1385
    %v1387 = vpop.f32.mrf.mxu0
    %v1388 = vadd.f32 %v317, %v1387
    %1389 = vmatmul.bf16.gmra.mxu0 %v175
    %v1390 = vpop.f32.mrf.mxu0
    %v1391 = vadd.f32 %v317, %v1390
    %v1392 = vpop.f32.mrf.mxu0
    %v1393 = vadd.f32 %v317, %v1392
    %1394 = vmatmul.bf16.gmra.mxu0 %v177
    %v1395 = vpop.f32.mrf.mxu0
    %v1396 = vadd.f32 %v317, %v1395
    %v1397 = vpop.f32.mrf.mxu0
    %v1398 = vadd.f32 %v317, %v1397
    %1399 = vmatmul.bf16.gmra.mxu0 %v179
    %v1400 = vpop.f32.mrf.mxu0
    %v1401 = vadd.f32 %v317, %v1400
    %v1402 = vpop.f32.mrf.mxu0
    %v1403 = vadd.f32 %v317, %v1402
    %1404 = vmatmul.bf16.gmra.mxu0 %v181
    %v1405 = vpop.f32.mrf.mxu0
    %v1406 = vadd.f32 %v317, %v1405
    %v1407 = vpop.f32.mrf.mxu0
    %v1408 = vadd.f32 %v317, %v1407
    %1409 = vdwg.mxu0
    %1410 = vmatpush.bf16.msra.mxu0 %v837
    %1411 = vmatpush.bf16.msra.mxu0 %v829
    %1412 = vmatpush.bf16.msra.mxu0 %v821
    %1413 = vmatpush.bf16.msra.mxu0 %v813
    %1414 = vmatpush.bf16.msra.mxu0 %v805
    %1415 = vmatpush.bf16.msra.mxu0 %v797
    %1416 = vmatpush.bf16.msra.mxu0 %v789
    %1417 = vmatpush.bf16.msra.mxu0 %v781
    %1418 = vmatmul.bf16.gmra.mxu0 %v168
    %v1419 = vpop.f32.mrf.mxu0
    %v1420 = vadd.f32 %v1371, %v1419
    %v1421 = vpop.f32.mrf.mxu0
    %v1422 = vadd.f32 %v1373, %v1421
    %1423 = vmatmul.bf16.gmra.mxu0 %v170
    %v1424 = vpop.f32.mrf.mxu0
    %v1425 = vadd.f32 %v1376, %v1424
    %v1426 = vpop.f32.mrf.mxu0
    %v1427 = vadd.f32 %v1378, %v1426
    %1428 = vmatmul.bf16.gmra.mxu0 %v172
    %v1429 = vpop.f32.mrf.mxu0
    %v1430 = vadd.f32 %v1381, %v1429
    %v1431 = vpop.f32.mrf.mxu0
    %v1432 = vadd.f32 %v1383, %v1431
    %1433 = vmatmul.bf16.gmra.mxu0 %v174
    %v1434 = vpop.f32.mrf.mxu0
    %v1435 = vadd.f32 %v1386, %v1434
    %v1436 = vpop.f32.mrf.mxu0
    %v1437 = vadd.f32 %v1388, %v1436
    %1438 = vmatmul.bf16.gmra.mxu0 %v176
    %v1439 = vpop.f32.mrf.mxu0
    %v1440 = vadd.f32 %v1391, %v1439
    %v1441 = vpop.f32.mrf.mxu0
    %v1442 = vadd.f32 %v1393, %v1441
    %1443 = vmatmul.bf16.gmra.mxu0 %v178
    %v1444 = vpop.f32.mrf.mxu0
    %v1445 = vadd.f32 %v1396, %v1444
    %v1446 = vpop.f32.mrf.mxu0
    %v1447 = vadd.f32 %v1398, %v1446
    %1448 = vmatmul.bf16.gmra.mxu0 %v180
    %v1449 = vpop.f32.mrf.mxu0
    %v1450 = vadd.f32 %v1401, %v1449
    %v1451 = vpop.f32.mrf.mxu0
    %v1452 = vadd.f32 %v1403, %v1451
    %1453 = vmatmul.bf16.gmra.mxu0 %v182
    %v1454 = vpop.f32.mrf.mxu0
    %v1455 = vadd.f32 %v1406, %v1454
    %v1456 = vpop.f32.mrf.mxu0
    %v1457 = vadd.f32 %v1408, %v1456
    %1458 = vdwg.mxu0
    %1459 = vmatpush.bf16.msra.mxu0 %v774
    %1460 = vmatpush.bf16.msra.mxu0 %v766
    %1461 = vmatpush.bf16.msra.mxu0 %v758
    %1462 = vmatpush.bf16.msra.mxu0 %v750
    %1463 = vmatpush.bf16.msra.mxu0 %v742
    %1464 = vmatpush.bf16.msra.mxu0 %v734
    %1465 = vmatpush.bf16.msra.mxu0 %v726
    %1466 = vmatpush.bf16.msra.mxu0 %v718
    %1467 = vmatmul.bf16.gmra.mxu0 %v167
    %v1468 = vpop.f32.mrf.mxu0
    %v1469 = vadd.f32 %v318, %v1468
    %v1470 = vpop.f32.mrf.mxu0
    %v1471 = vadd.f32 %v318, %v1470
    %1472 = vmatmul.bf16.gmra.mxu0 %v169
    %v1473 = vpop.f32.mrf.mxu0
    %v1474 = vadd.f32 %v318, %v1473
    %v1475 = vpop.f32.mrf.mxu0
    %v1476 = vadd.f32 %v318, %v1475
    %1477 = vmatmul.bf16.gmra.mxu0 %v171
    %v1478 = vpop.f32.mrf.mxu0
    %v1479 = vadd.f32 %v318, %v1478
    %v1480 = vpop.f32.mrf.mxu0
    %v1481 = vadd.f32 %v318, %v1480
    %1482 = vmatmul.bf16.gmra.mxu0 %v173
    %v1483 = vpop.f32.mrf.mxu0
    %v1484 = vadd.f32 %v318, %v1483
    %v1485 = vpop.f32.mrf.mxu0
    %v1486 = vadd.f32 %v318, %v1485
    %1487 = vmatmul.bf16.gmra.mxu0 %v175
    %v1488 = vpop.f32.mrf.mxu0
    %v1489 = vadd.f32 %v318, %v1488
    %v1490 = vpop.f32.mrf.mxu0
    %v1491 = vadd.f32 %v318, %v1490
    %1492 = vmatmul.bf16.gmra.mxu0 %v177
    %v1493 = vpop.f32.mrf.mxu0
    %v1494 = vadd.f32 %v318, %v1493
    %v1495 = vpop.f32.mrf.mxu0
    %v1496 = vadd.f32 %v318, %v1495
    %1497 = vmatmul.bf16.gmra.mxu0 %v179
    %v1498 = vpop.f32.mrf.mxu0
    %v1499 = vadd.f32 %v318, %v1498
    %v1500 = vpop.f32.mrf.mxu0
    %v1501 = vadd.f32 %v318, %v1500
    %1502 = vmatmul.bf16.gmra.mxu0 %v181
    %v1503 = vpop.f32.mrf.mxu0
    %v1504 = vadd.f32 %v318, %v1503
    %v1505 = vpop.f32.mrf.mxu0
    %v1506 = vadd.f32 %v318, %v1505
    %1507 = vdwg.mxu0
    %1508 = vmatpush.bf16.msra.mxu0 %v838
    %1509 = vmatpush.bf16.msra.mxu0 %v830
    %1510 = vmatpush.bf16.msra.mxu0 %v822
    %1511 = vmatpush.bf16.msra.mxu0 %v814
    %1512 = vmatpush.bf16.msra.mxu0 %v806
    %1513 = vmatpush.bf16.msra.mxu0 %v798
    %1514 = vmatpush.bf16.msra.mxu0 %v790
    %1515 = vmatpush.bf16.msra.mxu0 %v782
    %1516 = vmatmul.bf16.gmra.mxu0 %v168
    %v1517 = vpop.f32.mrf.mxu0
    %v1518 = vadd.f32 %v1469, %v1517
    %v1519 = vpop.f32.mrf.mxu0
    %v1520 = vadd.f32 %v1471, %v1519
    %1521 = vmatmul.bf16.gmra.mxu0 %v170
    %v1522 = vpop.f32.mrf.mxu0
    %v1523 = vadd.f32 %v1474, %v1522
    %v1524 = vpop.f32.mrf.mxu0
    %v1525 = vadd.f32 %v1476, %v1524
    %1526 = vmatmul.bf16.gmra.mxu0 %v172
    %v1527 = vpop.f32.mrf.mxu0
    %v1528 = vadd.f32 %v1479, %v1527
    %v1529 = vpop.f32.mrf.mxu0
    %v1530 = vadd.f32 %v1481, %v1529
    %1531 = vmatmul.bf16.gmra.mxu0 %v174
    %v1532 = vpop.f32.mrf.mxu0
    %v1533 = vadd.f32 %v1484, %v1532
    %v1534 = vpop.f32.mrf.mxu0
    %v1535 = vadd.f32 %v1486, %v1534
    %1536 = vmatmul.bf16.gmra.mxu0 %v176
    %v1537 = vpop.f32.mrf.mxu0
    %v1538 = vadd.f32 %v1489, %v1537
    %v1539 = vpop.f32.mrf.mxu0
    %v1540 = vadd.f32 %v1491, %v1539
    %1541 = vmatmul.bf16.gmra.mxu0 %v178
    %v1542 = vpop.f32.mrf.mxu0
    %v1543 = vadd.f32 %v1494, %v1542
    %v1544 = vpop.f32.mrf.mxu0
    %v1545 = vadd.f32 %v1496, %v1544
    %1546 = vmatmul.bf16.gmra.mxu0 %v180
    %v1547 = vpop.f32.mrf.mxu0
    %v1548 = vadd.f32 %v1499, %v1547
    %v1549 = vpop.f32.mrf.mxu0
    %v1550 = vadd.f32 %v1501, %v1549
    %1551 = vmatmul.bf16.gmra.mxu0 %v182
    %v1552 = vpop.f32.mrf.mxu0
    %v1553 = vadd.f32 %v1504, %v1552
    %v1554 = vpop.f32.mrf.mxu0
    %v1555 = vadd.f32 %v1506, %v1554
    %1556 = vdwg.mxu0
    %1557 = vmatpush.bf16.msra.mxu0 %v775
    %1558 = vmatpush.bf16.msra.mxu0 %v767
    %1559 = vmatpush.bf16.msra.mxu0 %v759
    %1560 = vmatpush.bf16.msra.mxu0 %v751
    %1561 = vmatpush.bf16.msra.mxu0 %v743
    %1562 = vmatpush.bf16.msra.mxu0 %v735
    %1563 = vmatpush.bf16.msra.mxu0 %v727
    %1564 = vmatpush.bf16.msra.mxu0 %v719
    %1565 = vmatmul.bf16.gmra.mxu0 %v167
    %v1566 = vpop.f32.mrf.mxu0
    %v1567 = vadd.f32 %v319, %v1566
    %v1568 = vpop.f32.mrf.mxu0
    %v1569 = vadd.f32 %v319, %v1568
    %1570 = vmatmul.bf16.gmra.mxu0 %v169
    %v1571 = vpop.f32.mrf.mxu0
    %v1572 = vadd.f32 %v319, %v1571
    %v1573 = vpop.f32.mrf.mxu0
    %v1574 = vadd.f32 %v319, %v1573
    %1575 = vmatmul.bf16.gmra.mxu0 %v171
    %v1576 = vpop.f32.mrf.mxu0
    %v1577 = vadd.f32 %v319, %v1576
    %v1578 = vpop.f32.mrf.mxu0
    %v1579 = vadd.f32 %v319, %v1578
    %1580 = vmatmul.bf16.gmra.mxu0 %v173
    %v1581 = vpop.f32.mrf.mxu0
    %v1582 = vadd.f32 %v319, %v1581
    %v1583 = vpop.f32.mrf.mxu0
    %v1584 = vadd.f32 %v319, %v1583
    %1585 = vmatmul.bf16.gmra.mxu0 %v175
    %v1586 = vpop.f32.mrf.mxu0
    %v1587 = vadd.f32 %v319, %v1586
    %v1588 = vpop.f32.mrf.mxu0
    %v1589 = vadd.f32 %v319, %v1588
    %1590 = vmatmul.bf16.gmra.mxu0 %v177
    %v1591 = vpop.f32.mrf.mxu0
    %v1592 = vadd.f32 %v319, %v1591
    %v1593 = vpop.f32.mrf.mxu0
    %v1594 = vadd.f32 %v319, %v1593
    %1595 = vmatmul.bf16.gmra.mxu0 %v179
    %v1596 = vpop.f32.mrf.mxu0
    %v1597 = vadd.f32 %v319, %v1596
    %v1598 = vpop.f32.mrf.mxu0
    %v1599 = vadd.f32 %v319, %v1598
    %1600 = vmatmul.bf16.gmra.mxu0 %v181
    %v1601 = vpop.f32.mrf.mxu0
    %v1602 = vadd.f32 %v319, %v1601
    %v1603 = vpop.f32.mrf.mxu0
    %v1604 = vadd.f32 %v319, %v1603
    %1605 = vdwg.mxu0
    %1606 = vmatpush.bf16.msra.mxu0 %v839
    %1607 = vmatpush.bf16.msra.mxu0 %v831
    %1608 = vmatpush.bf16.msra.mxu0 %v823
    %1609 = vmatpush.bf16.msra.mxu0 %v815
    %1610 = vmatpush.bf16.msra.mxu0 %v807
    %1611 = vmatpush.bf16.msra.mxu0 %v799
    %1612 = vmatpush.bf16.msra.mxu0 %v791
    %1613 = vmatpush.bf16.msra.mxu0 %v783
    %1614 = vmatmul.bf16.gmra.mxu0 %v168
    %v1615 = vpop.f32.mrf.mxu0
    %v1616 = vadd.f32 %v1567, %v1615
    %v1617 = vpop.f32.mrf.mxu0
    %v1618 = vadd.f32 %v1569, %v1617
    %1619 = vmatmul.bf16.gmra.mxu0 %v170
    %v1620 = vpop.f32.mrf.mxu0
    %v1621 = vadd.f32 %v1572, %v1620
    %v1622 = vpop.f32.mrf.mxu0
    %v1623 = vadd.f32 %v1574, %v1622
    %1624 = vmatmul.bf16.gmra.mxu0 %v172
    %v1625 = vpop.f32.mrf.mxu0
    %v1626 = vadd.f32 %v1577, %v1625
    %v1627 = vpop.f32.mrf.mxu0
    %v1628 = vadd.f32 %v1579, %v1627
    %1629 = vmatmul.bf16.gmra.mxu0 %v174
    %v1630 = vpop.f32.mrf.mxu0
    %v1631 = vadd.f32 %v1582, %v1630
    %v1632 = vpop.f32.mrf.mxu0
    %v1633 = vadd.f32 %v1584, %v1632
    %1634 = vmatmul.bf16.gmra.mxu0 %v176
    %v1635 = vpop.f32.mrf.mxu0
    %v1636 = vadd.f32 %v1587, %v1635
    %v1637 = vpop.f32.mrf.mxu0
    %v1638 = vadd.f32 %v1589, %v1637
    %1639 = vmatmul.bf16.gmra.mxu0 %v178
    %v1640 = vpop.f32.mrf.mxu0
    %v1641 = vadd.f32 %v1592, %v1640
    %v1642 = vpop.f32.mrf.mxu0
    %v1643 = vadd.f32 %v1594, %v1642
    %1644 = vmatmul.bf16.gmra.mxu0 %v180
    %v1645 = vpop.f32.mrf.mxu0
    %v1646 = vadd.f32 %v1597, %v1645
    %v1647 = vpop.f32.mrf.mxu0
    %v1648 = vadd.f32 %v1599, %v1647
    %1649 = vmatmul.bf16.gmra.mxu0 %v182
    %v1650 = vpop.f32.mrf.mxu0
    %v1651 = vadd.f32 %v1602, %v1650
    %v1652 = vpop.f32.mrf.mxu0
    %v1653 = vadd.f32 %v1604, %v1652
    %1654 = vdwg.mxu0
    %1655 = vmatpush.bf16.msra.mxu0 %v776
    %1656 = vmatpush.bf16.msra.mxu0 %v768
    %1657 = vmatpush.bf16.msra.mxu0 %v760
    %1658 = vmatpush.bf16.msra.mxu0 %v752
    %1659 = vmatpush.bf16.msra.mxu0 %v744
    %1660 = vmatpush.bf16.msra.mxu0 %v736
    %1661 = vmatpush.bf16.msra.mxu0 %v728
    %1662 = vmatpush.bf16.msra.mxu0 %v720
    %1663 = vmatmul.bf16.gmra.mxu0 %v167
    %v1664 = vpop.f32.mrf.mxu0
    %v1665 = vadd.f32 %v320, %v1664
    %v1666 = vpop.f32.mrf.mxu0
    %v1667 = vadd.f32 %v320, %v1666
    %1668 = vmatmul.bf16.gmra.mxu0 %v169
    %v1669 = vpop.f32.mrf.mxu0
    %v1670 = vadd.f32 %v320, %v1669
    %v1671 = vpop.f32.mrf.mxu0
    %v1672 = vadd.f32 %v320, %v1671
    %1673 = vmatmul.bf16.gmra.mxu0 %v171
    %v1674 = vpop.f32.mrf.mxu0
    %v1675 = vadd.f32 %v320, %v1674
    %v1676 = vpop.f32.mrf.mxu0
    %v1677 = vadd.f32 %v320, %v1676
    %1678 = vmatmul.bf16.gmra.mxu0 %v173
    %v1679 = vpop.f32.mrf.mxu0
    %v1680 = vadd.f32 %v320, %v1679
    %v1681 = vpop.f32.mrf.mxu0
    %v1682 = vadd.f32 %v320, %v1681
    %1683 = vmatmul.bf16.gmra.mxu0 %v175
    %v1684 = vpop.f32.mrf.mxu0
    %v1685 = vadd.f32 %v320, %v1684
    %v1686 = vpop.f32.mrf.mxu0
    %v1687 = vadd.f32 %v320, %v1686
    %1688 = vmatmul.bf16.gmra.mxu0 %v177
    %v1689 = vpop.f32.mrf.mxu0
    %v1690 = vadd.f32 %v320, %v1689
    %v1691 = vpop.f32.mrf.mxu0
    %v1692 = vadd.f32 %v320, %v1691
    %1693 = vmatmul.bf16.gmra.mxu0 %v179
    %v1694 = vpop.f32.mrf.mxu0
    %v1695 = vadd.f32 %v320, %v1694
    %v1696 = vpop.f32.mrf.mxu0
    %v1697 = vadd.f32 %v320, %v1696
    %1698 = vmatmul.bf16.gmra.mxu0 %v181
    %v1699 = vpop.f32.mrf.mxu0
    %v1700 = vadd.f32 %v320, %v1699
    %v1701 = vpop.f32.mrf.mxu0
    %v1702 = vadd.f32 %v320, %v1701
    %1703 = vdwg.mxu0
    %1704 = vmatpush.bf16.msra.mxu0 %v840
    %1705 = vmatpush.bf16.msra.mxu0 %v832
    %1706 = vmatpush.bf16.msra.mxu0 %v824
    %1707 = vmatpush.bf16.msra.mxu0 %v816
    %1708 = vmatpush.bf16.msra.mxu0 %v808
    %1709 = vmatpush.bf16.msra.mxu0 %v800
    %1710 = vmatpush.bf16.msra.mxu0 %v792
    %1711 = vmatpush.bf16.msra.mxu0 %v784
    %1712 = vmatmul.bf16.gmra.mxu0 %v168
    %v1713 = vpop.f32.mrf.mxu0
    %v1714 = vadd.f32 %v1665, %v1713
    %v1715 = vpop.f32.mrf.mxu0
    %v1716 = vadd.f32 %v1667, %v1715
    %1717 = vmatmul.bf16.gmra.mxu0 %v170
    %v1718 = vpop.f32.mrf.mxu0
    %v1719 = vadd.f32 %v1670, %v1718
    %v1720 = vpop.f32.mrf.mxu0
    %v1721 = vadd.f32 %v1672, %v1720
    %1722 = vmatmul.bf16.gmra.mxu0 %v172
    %v1723 = vpop.f32.mrf.mxu0
    %v1724 = vadd.f32 %v1675, %v1723
    %v1725 = vpop.f32.mrf.mxu0
    %v1726 = vadd.f32 %v1677, %v1725
    %1727 = vmatmul.bf16.gmra.mxu0 %v174
    %v1728 = vpop.f32.mrf.mxu0
    %v1729 = vadd.f32 %v1680, %v1728
    %v1730 = vpop.f32.mrf.mxu0
    %v1731 = vadd.f32 %v1682, %v1730
    %1732 = vmatmul.bf16.gmra.mxu0 %v176
    %v1733 = vpop.f32.mrf.mxu0
    %v1734 = vadd.f32 %v1685, %v1733
    %v1735 = vpop.f32.mrf.mxu0
    %v1736 = vadd.f32 %v1687, %v1735
    %1737 = vmatmul.bf16.gmra.mxu0 %v178
    %v1738 = vpop.f32.mrf.mxu0
    %v1739 = vadd.f32 %v1690, %v1738
    %v1740 = vpop.f32.mrf.mxu0
    %v1741 = vadd.f32 %v1692, %v1740
    %1742 = vmatmul.bf16.gmra.mxu0 %v180
    %v1743 = vpop.f32.mrf.mxu0
    %v1744 = vadd.f32 %v1695, %v1743
    %v1745 = vpop.f32.mrf.mxu0
    %v1746 = vadd.f32 %v1697, %v1745
    %1747 = vmatmul.bf16.gmra.mxu0 %v182
    %v1748 = vpop.f32.mrf.mxu0
    %v1749 = vadd.f32 %v1700, %v1748
    %v1750 = vpop.f32.mrf.mxu0
    %v1751 = vadd.f32 %v1702, %v1750
    %1752 = vdwg.mxu0
    %v1753 = vmax.f32 %v1028, 0.0
    %v1754 = vmax.f32 %v1126, 0.0
    %v1755 = vmax.f32 %v1224, 0.0
    %v1756 = vmax.f32 %v1322, 0.0
    %v1757 = vmax.f32 %v1420, 0.0
    %v1758 = vmax.f32 %v1518, 0.0
    %v1759 = vmax.f32 %v1616, 0.0
    %v1760 = vmax.f32 %v1714, 0.0
    %v1761 = vmax.f32 %v1030, 0.0
    %v1762 = vmax.f32 %v1128, 0.0
    %v1763 = vmax.f32 %v1226, 0.0
    %v1764 = vmax.f32 %v1324, 0.0
    %v1765 = vmax.f32 %v1422, 0.0
    %v1766 = vmax.f32 %v1520, 0.0
    %v1767 = vmax.f32 %v1618, 0.0
    %v1768 = vmax.f32 %v1716, 0.0
    %v1769 = vmax.f32 %v1033, 0.0
    %v1770 = vmax.f32 %v1131, 0.0
    %v1771 = vmax.f32 %v1229, 0.0
    %v1772 = vmax.f32 %v1327, 0.0
    %v1773 = vmax.f32 %v1425, 0.0
    %v1774 = vmax.f32 %v1523, 0.0
    %v1775 = vmax.f32 %v1621, 0.0
    %v1776 = vmax.f32 %v1719, 0.0
    %v1777 = vmax.f32 %v1035, 0.0
    %v1778 = vmax.f32 %v1133, 0.0
    %v1779 = vmax.f32 %v1231, 0.0
    %v1780 = vmax.f32 %v1329, 0.0
    %v1781 = vmax.f32 %v1427, 0.0
    %v1782 = vmax.f32 %v1525, 0.0
    %v1783 = vmax.f32 %v1623, 0.0
    %v1784 = vmax.f32 %v1721, 0.0
    %v1785 = vmax.f32 %v1038, 0.0
    %v1786 = vmax.f32 %v1136, 0.0
    %v1787 = vmax.f32 %v1234, 0.0
    %v1788 = vmax.f32 %v1332, 0.0
    %v1789 = vmax.f32 %v1430, 0.0
    %v1790 = vmax.f32 %v1528, 0.0
    %v1791 = vmax.f32 %v1626, 0.0
    %v1792 = vmax.f32 %v1724, 0.0
    %v1793 = vmax.f32 %v1040, 0.0
    %v1794 = vmax.f32 %v1138, 0.0
    %v1795 = vmax.f32 %v1236, 0.0
    %v1796 = vmax.f32 %v1334, 0.0
    %v1797 = vmax.f32 %v1432, 0.0
    %v1798 = vmax.f32 %v1530, 0.0
    %v1799 = vmax.f32 %v1628, 0.0
    %v1800 = vmax.f32 %v1726, 0.0
    %v1801 = vmax.f32 %v1043, 0.0
    %v1802 = vmax.f32 %v1141, 0.0
    %v1803 = vmax.f32 %v1239, 0.0
    %v1804 = vmax.f32 %v1337, 0.0
    %v1805 = vmax.f32 %v1435, 0.0
    %v1806 = vmax.f32 %v1533, 0.0
    %v1807 = vmax.f32 %v1631, 0.0
    %v1808 = vmax.f32 %v1729, 0.0
    %v1809 = vmax.f32 %v1045, 0.0
    %v1810 = vmax.f32 %v1143, 0.0
    %v1811 = vmax.f32 %v1241, 0.0
    %v1812 = vmax.f32 %v1339, 0.0
    %v1813 = vmax.f32 %v1437, 0.0
    %v1814 = vmax.f32 %v1535, 0.0
    %v1815 = vmax.f32 %v1633, 0.0
    %v1816 = vmax.f32 %v1731, 0.0
    %v1817 = vmax.f32 %v1048, 0.0
    %v1818 = vmax.f32 %v1146, 0.0
    %v1819 = vmax.f32 %v1244, 0.0
    %v1820 = vmax.f32 %v1342, 0.0
    %v1821 = vmax.f32 %v1440, 0.0
    %v1822 = vmax.f32 %v1538, 0.0
    %v1823 = vmax.f32 %v1636, 0.0
    %v1824 = vmax.f32 %v1734, 0.0
    %v1825 = vmax.f32 %v1050, 0.0
    %v1826 = vmax.f32 %v1148, 0.0
    %v1827 = vmax.f32 %v1246, 0.0
    %v1828 = vmax.f32 %v1344, 0.0
    %v1829 = vmax.f32 %v1442, 0.0
    %v1830 = vmax.f32 %v1540, 0.0
    %v1831 = vmax.f32 %v1638, 0.0
    %v1832 = vmax.f32 %v1736, 0.0
    %v1833 = vmax.f32 %v1053, 0.0
    %v1834 = vmax.f32 %v1151, 0.0
    %v1835 = vmax.f32 %v1249, 0.0
    %v1836 = vmax.f32 %v1347, 0.0
    %v1837 = vmax.f32 %v1445, 0.0
    %v1838 = vmax.f32 %v1543, 0.0
    %v1839 = vmax.f32 %v1641, 0.0
    %v1840 = vmax.f32 %v1739, 0.0
    %v1841 = vmax.f32 %v1055, 0.0
    %v1842 = vmax.f32 %v1153, 0.0
    %v1843 = vmax.f32 %v1251, 0.0
    %v1844 = vmax.f32 %v1349, 0.0
    %v1845 = vmax.f32 %v1447, 0.0
    %v1846 = vmax.f32 %v1545, 0.0
    %v1847 = vmax.f32 %v1643, 0.0
    %v1848 = vmax.f32 %v1741, 0.0
    %v1849 = vmax.f32 %v1058, 0.0
    %v1850 = vmax.f32 %v1156, 0.0
    %v1851 = vmax.f32 %v1254, 0.0
    %v1852 = vmax.f32 %v1352, 0.0
    %v1853 = vmax.f32 %v1450, 0.0
    %v1854 = vmax.f32 %v1548, 0.0
    %v1855 = vmax.f32 %v1646, 0.0
    %v1856 = vmax.f32 %v1744, 0.0
    %v1857 = vmax.f32 %v1060, 0.0
    %v1858 = vmax.f32 %v1158, 0.0
    %v1859 = vmax.f32 %v1256, 0.0
    %v1860 = vmax.f32 %v1354, 0.0
    %v1861 = vmax.f32 %v1452, 0.0
    %v1862 = vmax.f32 %v1550, 0.0
    %v1863 = vmax.f32 %v1648, 0.0
    %v1864 = vmax.f32 %v1746, 0.0
    %v1865 = vmax.f32 %v1063, 0.0
    %v1866 = vmax.f32 %v1161, 0.0
    %v1867 = vmax.f32 %v1259, 0.0
    %v1868 = vmax.f32 %v1357, 0.0
    %v1869 = vmax.f32 %v1455, 0.0
    %v1870 = vmax.f32 %v1553, 0.0
    %v1871 = vmax.f32 %v1651, 0.0
    %v1872 = vmax.f32 %v1749, 0.0
    %v1873 = vmax.f32 %v1065, 0.0
    %v1874 = vmax.f32 %v1163, 0.0
    %v1875 = vmax.f32 %v1261, 0.0
    %v1876 = vmax.f32 %v1359, 0.0
    %v1877 = vmax.f32 %v1457, 0.0
    %v1878 = vmax.f32 %v1555, 0.0
    %v1879 = vmax.f32 %v1653, 0.0
    %v1880 = vmax.f32 %v1751, 0.0
    %v1881 = vpack.c.bf16 %v1761, %v1753
    %v1882 = vpack.c.bf16 %v1762, %v1754
    %v1883 = vpack.c.bf16 %v1763, %v1755
    %v1884 = vpack.c.bf16 %v1764, %v1756
    %v1885 = vpack.c.bf16 %v1765, %v1757
    %v1886 = vpack.c.bf16 %v1766, %v1758
    %v1887 = vpack.c.bf16 %v1767, %v1759
    %v1888 = vpack.c.bf16 %v1768, %v1760
    %v1889 = vpack.c.bf16 %v1777, %v1769
    %v1890 = vpack.c.bf16 %v1778, %v1770
    %v1891 = vpack.c.bf16 %v1779, %v1771
    %v1892 = vpack.c.bf16 %v1780, %v1772
    %v1893 = vpack.c.bf16 %v1781, %v1773
    %v1894 = vpack.c.bf16 %v1782, %v1774
    %v1895 = vpack.c.bf16 %v1783, %v1775
    %v1896 = vpack.c.bf16 %v1784, %v1776
    %v1897 = vpack.c.bf16 %v1793, %v1785
    %v1898 = vpack.c.bf16 %v1794, %v1786
    %v1899 = vpack.c.bf16 %v1795, %v1787
    %v1900 = vpack.c.bf16 %v1796, %v1788
    %v1901 = vpack.c.bf16 %v1797, %v1789
    %v1902 = vpack.c.bf16 %v1798, %v1790
    %v1903 = vpack.c.bf16 %v1799, %v1791
    %v1904 = vpack.c.bf16 %v1800, %v1792
    %v1905 = vpack.c.bf16 %v1809, %v1801
    %v1906 = vpack.c.bf16 %v1810, %v1802
    %v1907 = vpack.c.bf16 %v1811, %v1803
    %v1908 = vpack.c.bf16 %v1812, %v1804
    %v1909 = vpack.c.bf16 %v1813, %v1805
    %v1910 = vpack.c.bf16 %v1814, %v1806
    %v1911 = vpack.c.bf16 %v1815, %v1807
    %v1912 = vpack.c.bf16 %v1816, %v1808
    %v1913 = vpack.c.bf16 %v1825, %v1817
    %v1914 = vpack.c.bf16 %v1826, %v1818
    %v1915 = vpack.c.bf16 %v1827, %v1819
    %v1916 = vpack.c.bf16 %v1828, %v1820
    %v1917 = vpack.c.bf16 %v1829, %v1821
    %v1918 = vpack.c.bf16 %v1830, %v1822
    %v1919 = vpack.c.bf16 %v1831, %v1823
    %v1920 = vpack.c.bf16 %v1832, %v1824
    %v1921 = vpack.c.bf16 %v1841, %v1833
    %v1922 = vpack.c.bf16 %v1842, %v1834
    %v1923 = vpack.c.bf16 %v1843, %v1835
    %v1924 = vpack.c.bf16 %v1844, %v1836
    %v1925 = vpack.c.bf16 %v1845, %v1837
    %v1926 = vpack.c.bf16 %v1846, %v1838
    %v1927 = vpack.c.bf16 %v1847, %v1839
    %v1928 = vpack.c.bf16 %v1848, %v1840
    %v1929 = vpack.c.bf16 %v1857, %v1849
    %v1930 = vpack.c.bf16 %v1858, %v1850
    %v1931 = vpack.c.bf16 %v1859, %v1851
    %v1932 = vpack.c.bf16 %v1860, %v1852
    %v1933 = vpack.c.bf16 %v1861, %v1853
    %v1934 = vpack.c.bf16 %v1862, %v1854
    %v1935 = vpack.c.bf16 %v1863, %v1855
    %v1936 = vpack.c.bf16 %v1864, %v1856
    %v1937 = vpack.c.bf16 %v1873, %v1865
    %v1938 = vpack.c.bf16 %v1874, %v1866
    %v1939 = vpack.c.bf16 %v1875, %v1867
    %v1940 = vpack.c.bf16 %v1876, %v1868
    %v1941 = vpack.c.bf16 %v1877, %v1869
    %v1942 = vpack.c.bf16 %v1878, %v1870
    %v1943 = vpack.c.bf16 %v1879, %v1871
    %v1944 = vpack.c.bf16 %v1880, %v1872
    %v1945 = vld [vmem:[#allocation7] sm:$0xff]
    %v1946 = vld [vmem:[#allocation7 + $0x8] sm:$0xff]
    %v1947 = vld [vmem:[#allocation7 + $0x10] sm:$0xff]
    %v1948 = vld [vmem:[#allocation7 + $0x18] sm:$0xff]
    %v1949 = vld [vmem:[#allocation7 + $0x20] sm:$0xff]
    %v1950 = vld [vmem:[#allocation7 + $0x28] sm:$0xff]
    %v1951 = vld [vmem:[#allocation7 + $0x30] sm:$0xff]
    %v1952 = vld [vmem:[#allocation7 + $0x38] sm:$0xff]
    %v1953 = vld [vmem:[#allocation7 + $0x40] sm:$0xff]
    %v1954 = vld [vmem:[#allocation7 + $0x48] sm:$0xff]
    %v1955 = vld [vmem:[#allocation7 + $0x50] sm:$0xff]
    %v1956 = vld [vmem:[#allocation7 + $0x58] sm:$0xff]
    %v1957 = vld [vmem:[#allocation7 + $0x60] sm:$0xff]
    %v1958 = vld [vmem:[#allocation7 + $0x68] sm:$0xff]
    %v1959 = vld [vmem:[#allocation7 + $0x70] sm:$0xff]
    %v1960 = vld [vmem:[#allocation7 + $0x78] sm:$0xff]
    %v1961 = vld [vmem:[#allocation7 + $0x80] sm:$0xff]
    %v1962 = vld [vmem:[#allocation7 + $0x88] sm:$0xff]
    %v1963 = vld [vmem:[#allocation7 + $0x90] sm:$0xff]
    %v1964 = vld [vmem:[#allocation7 + $0x98] sm:$0xff]
    %v1965 = vld [vmem:[#allocation7 + $0xa0] sm:$0xff]
    %v1966 = vld [vmem:[#allocation7 + $0xa8] sm:$0xff]
    %v1967 = vld [vmem:[#allocation7 + $0xb0] sm:$0xff]
    %v1968 = vld [vmem:[#allocation7 + $0xb8] sm:$0xff]
    %v1969 = vld [vmem:[#allocation7 + $0xc0] sm:$0xff]
    %v1970 = vld [vmem:[#allocation7 + $0xc8] sm:$0xff]
    %v1971 = vld [vmem:[#allocation7 + $0xd0] sm:$0xff]
    %v1972 = vld [vmem:[#allocation7 + $0xd8] sm:$0xff]
    %v1973 = vld [vmem:[#allocation7 + $0xe0] sm:$0xff]
    %v1974 = vld [vmem:[#allocation7 + $0xe8] sm:$0xff]
    %v1975 = vld [vmem:[#allocation7 + $0xf0] sm:$0xff]
    %v1976 = vld [vmem:[#allocation7 + $0xf8] sm:$0xff]
    %v1977 = vld [vmem:[#allocation7 + $0x100] sm:$0xff]
    %v1978 = vld [vmem:[#allocation7 + $0x108] sm:$0xff]
    %v1979 = vld [vmem:[#allocation7 + $0x110] sm:$0xff]
    %v1980 = vld [vmem:[#allocation7 + $0x118] sm:$0xff]
    %v1981 = vld [vmem:[#allocation7 + $0x120] sm:$0xff]
    %v1982 = vld [vmem:[#allocation7 + $0x128] sm:$0xff]
    %v1983 = vld [vmem:[#allocation7 + $0x130] sm:$0xff]
    %v1984 = vld [vmem:[#allocation7 + $0x138] sm:$0xff]
    %v1985 = vld [vmem:[#allocation7 + $0x140] sm:$0xff]
    %v1986 = vld [vmem:[#allocation7 + $0x148] sm:$0xff]
    %v1987 = vld [vmem:[#allocation7 + $0x150] sm:$0xff]
    %v1988 = vld [vmem:[#allocation7 + $0x158] sm:$0xff]
    %v1989 = vld [vmem:[#allocation7 + $0x160] sm:$0xff]
    %v1990 = vld [vmem:[#allocation7 + $0x168] sm:$0xff]
    %v1991 = vld [vmem:[#allocation7 + $0x170] sm:$0xff]
    %v1992 = vld [vmem:[#allocation7 + $0x178] sm:$0xff]
    %v1993 = vld [vmem:[#allocation7 + $0x180] sm:$0xff]
    %v1994 = vld [vmem:[#allocation7 + $0x188] sm:$0xff]
    %v1995 = vld [vmem:[#allocation7 + $0x190] sm:$0xff]
    %v1996 = vld [vmem:[#allocation7 + $0x198] sm:$0xff]
    %v1997 = vld [vmem:[#allocation7 + $0x1a0] sm:$0xff]
    %v1998 = vld [vmem:[#allocation7 + $0x1a8] sm:$0xff]
    %v1999 = vld [vmem:[#allocation7 + $0x1b0] sm:$0xff]
    %v2000 = vld [vmem:[#allocation7 + $0x1b8] sm:$0xff]
    %v2001 = vld [vmem:[#allocation7 + $0x1c0] sm:$0xff]
    %v2002 = vld [vmem:[#allocation7 + $0x1c8] sm:$0xff]
    %v2003 = vld [vmem:[#allocation7 + $0x1d0] sm:$0xff]
    %v2004 = vld [vmem:[#allocation7 + $0x1d8] sm:$0xff]
    %v2005 = vld [vmem:[#allocation7 + $0x1e0] sm:$0xff]
    %v2006 = vld [vmem:[#allocation7 + $0x1e8] sm:$0xff]
    %v2007 = vld [vmem:[#allocation7 + $0x1f0] sm:$0xff]
    %v2008 = vld [vmem:[#allocation7 + $0x1f8] sm:$0xff]
    %v2009 = vld [vmem:[#allocation7 + $0x200] sm:$0xff]
    %v2010 = vld [vmem:[#allocation7 + $0x208] sm:$0xff]
    %v2011 = vld [vmem:[#allocation7 + $0x210] sm:$0xff]
    %v2012 = vld [vmem:[#allocation7 + $0x218] sm:$0xff]
    %v2013 = vld [vmem:[#allocation7 + $0x220] sm:$0xff]
    %v2014 = vld [vmem:[#allocation7 + $0x228] sm:$0xff]
    %v2015 = vld [vmem:[#allocation7 + $0x230] sm:$0xff]
    %v2016 = vld [vmem:[#allocation7 + $0x238] sm:$0xff]
    %v2017 = vld [vmem:[#allocation7 + $0x240] sm:$0xff]
    %v2018 = vld [vmem:[#allocation7 + $0x248] sm:$0xff]
    %v2019 = vld [vmem:[#allocation7 + $0x250] sm:$0xff]
    %v2020 = vld [vmem:[#allocation7 + $0x258] sm:$0xff]
    %v2021 = vld [vmem:[#allocation7 + $0x260] sm:$0xff]
    %v2022 = vld [vmem:[#allocation7 + $0x268] sm:$0xff]
    %v2023 = vld [vmem:[#allocation7 + $0x270] sm:$0xff]
    %v2024 = vld [vmem:[#allocation7 + $0x278] sm:$0xff]
    %v2025 = vld [vmem:[#allocation7 + $0x280] sm:$0xff]
    %v2026 = vld [vmem:[#allocation7 + $0x288] sm:$0xff]
    %v2027 = vld [vmem:[#allocation7 + $0x290] sm:$0xff]
    %v2028 = vld [vmem:[#allocation7 + $0x298] sm:$0xff]
    %v2029 = vld [vmem:[#allocation7 + $0x2a0] sm:$0xff]
    %v2030 = vld [vmem:[#allocation7 + $0x2a8] sm:$0xff]
    %v2031 = vld [vmem:[#allocation7 + $0x2b0] sm:$0xff]
    %v2032 = vld [vmem:[#allocation7 + $0x2b8] sm:$0xff]
    %v2033 = vld [vmem:[#allocation7 + $0x2c0] sm:$0xff]
    %v2034 = vld [vmem:[#allocation7 + $0x2c8] sm:$0xff]
    %v2035 = vld [vmem:[#allocation7 + $0x2d0] sm:$0xff]
    %v2036 = vld [vmem:[#allocation7 + $0x2d8] sm:$0xff]
    %v2037 = vld [vmem:[#allocation7 + $0x2e0] sm:$0xff]
    %v2038 = vld [vmem:[#allocation7 + $0x2e8] sm:$0xff]
    %v2039 = vld [vmem:[#allocation7 + $0x2f0] sm:$0xff]
    %v2040 = vld [vmem:[#allocation7 + $0x2f8] sm:$0xff]
    %v2041 = vld [vmem:[#allocation7 + $0x300] sm:$0xff]
    %v2042 = vld [vmem:[#allocation7 + $0x308] sm:$0xff]
    %v2043 = vld [vmem:[#allocation7 + $0x310] sm:$0xff]
    %v2044 = vld [vmem:[#allocation7 + $0x318] sm:$0xff]
    %v2045 = vld [vmem:[#allocation7 + $0x320] sm:$0xff]
    %v2046 = vld [vmem:[#allocation7 + $0x328] sm:$0xff]
    %v2047 = vld [vmem:[#allocation7 + $0x330] sm:$0xff]
    %v2048 = vld [vmem:[#allocation7 + $0x338] sm:$0xff]
    %v2049 = vld [vmem:[#allocation7 + $0x340] sm:$0xff]
    %v2050 = vld [vmem:[#allocation7 + $0x348] sm:$0xff]
    %v2051 = vld [vmem:[#allocation7 + $0x350] sm:$0xff]
    %v2052 = vld [vmem:[#allocation7 + $0x358] sm:$0xff]
    %v2053 = vld [vmem:[#allocation7 + $0x360] sm:$0xff]
    %v2054 = vld [vmem:[#allocation7 + $0x368] sm:$0xff]
    %v2055 = vld [vmem:[#allocation7 + $0x370] sm:$0xff]
    %v2056 = vld [vmem:[#allocation7 + $0x378] sm:$0xff]
    %v2057 = vld [vmem:[#allocation7 + $0x380] sm:$0xff]
    %v2058 = vld [vmem:[#allocation7 + $0x388] sm:$0xff]
    %v2059 = vld [vmem:[#allocation7 + $0x390] sm:$0xff]
    %v2060 = vld [vmem:[#allocation7 + $0x398] sm:$0xff]
    %v2061 = vld [vmem:[#allocation7 + $0x3a0] sm:$0xff]
    %v2062 = vld [vmem:[#allocation7 + $0x3a8] sm:$0xff]
    %v2063 = vld [vmem:[#allocation7 + $0x3b0] sm:$0xff]
    %v2064 = vld [vmem:[#allocation7 + $0x3b8] sm:$0xff]
    %v2065 = vld [vmem:[#allocation7 + $0x3c0] sm:$0xff]
    %v2066 = vld [vmem:[#allocation7 + $0x3c8] sm:$0xff]
    %v2067 = vld [vmem:[#allocation7 + $0x3d0] sm:$0xff]
    %v2068 = vld [vmem:[#allocation7 + $0x3d8] sm:$0xff]
    %v2069 = vld [vmem:[#allocation7 + $0x3e0] sm:$0xff]
    %v2070 = vld [vmem:[#allocation7 + $0x3e8] sm:$0xff]
    %v2071 = vld [vmem:[#allocation7 + $0x3f0] sm:$0xff]
    %v2072 = vld [vmem:[#allocation7 + $0x3f8] sm:$0xff]
    %v2073 = vld [vmem:[#allocation7 + $0x400] sm:$0xff]
    %v2074 = vld [vmem:[#allocation7 + $0x408] sm:$0xff]
    %v2075 = vld [vmem:[#allocation7 + $0x410] sm:$0xff]
    %v2076 = vld [vmem:[#allocation7 + $0x418] sm:$0xff]
    %v2077 = vld [vmem:[#allocation7 + $0x420] sm:$0xff]
    %v2078 = vld [vmem:[#allocation7 + $0x428] sm:$0xff]
    %v2079 = vld [vmem:[#allocation7 + $0x430] sm:$0xff]
    %v2080 = vld [vmem:[#allocation7 + $0x438] sm:$0xff]
    %v2081 = vld [vmem:[#allocation7 + $0x440] sm:$0xff]
    %v2082 = vld [vmem:[#allocation7 + $0x448] sm:$0xff]
    %v2083 = vld [vmem:[#allocation7 + $0x450] sm:$0xff]
    %v2084 = vld [vmem:[#allocation7 + $0x458] sm:$0xff]
    %v2085 = vld [vmem:[#allocation7 + $0x460] sm:$0xff]
    %v2086 = vld [vmem:[#allocation7 + $0x468] sm:$0xff]
    %v2087 = vld [vmem:[#allocation7 + $0x470] sm:$0xff]
    %v2088 = vld [vmem:[#allocation7 + $0x478] sm:$0xff]
    %v2089 = vld [vmem:[#allocation7 + $0x480] sm:$0xff]
    %v2090 = vld [vmem:[#allocation7 + $0x488] sm:$0xff]
    %v2091 = vld [vmem:[#allocation7 + $0x490] sm:$0xff]
    %v2092 = vld [vmem:[#allocation7 + $0x498] sm:$0xff]
    %v2093 = vld [vmem:[#allocation7 + $0x4a0] sm:$0xff]
    %v2094 = vld [vmem:[#allocation7 + $0x4a8] sm:$0xff]
    %v2095 = vld [vmem:[#allocation7 + $0x4b0] sm:$0xff]
    %v2096 = vld [vmem:[#allocation7 + $0x4b8] sm:$0xff]
    %v2097 = vld [vmem:[#allocation7 + $0x4c0] sm:$0xff]
    %v2098 = vld [vmem:[#allocation7 + $0x4c8] sm:$0xff]
    %v2099 = vld [vmem:[#allocation7 + $0x4d0] sm:$0xff]
    %v2100 = vld [vmem:[#allocation7 + $0x4d8] sm:$0xff]
    %v2101 = vld [vmem:[#allocation7 + $0x4e0] sm:$0xff]
    %v2102 = vld [vmem:[#allocation7 + $0x4e8] sm:$0xff]
    %v2103 = vld [vmem:[#allocation7 + $0x4f0] sm:$0xff]
    %v2104 = vld [vmem:[#allocation7 + $0x4f8] sm:$0xff]
    %v2105 = vld [vmem:[#allocation7 + $0x500] sm:$0xff]
    %v2106 = vld [vmem:[#allocation7 + $0x508] sm:$0xff]
    %v2107 = vld [vmem:[#allocation7 + $0x510] sm:$0xff]
    %v2108 = vld [vmem:[#allocation7 + $0x518] sm:$0xff]
    %v2109 = vld [vmem:[#allocation7 + $0x520] sm:$0xff]
    %v2110 = vld [vmem:[#allocation7 + $0x528] sm:$0xff]
    %v2111 = vld [vmem:[#allocation7 + $0x530] sm:$0xff]
    %v2112 = vld [vmem:[#allocation7 + $0x538] sm:$0xff]
    %v2113 = vld [vmem:[#allocation7 + $0x540] sm:$0xff]
    %v2114 = vld [vmem:[#allocation7 + $0x548] sm:$0xff]
    %v2115 = vld [vmem:[#allocation7 + $0x550] sm:$0xff]
    %v2116 = vld [vmem:[#allocation7 + $0x558] sm:$0xff]
    %v2117 = vld [vmem:[#allocation7 + $0x560] sm:$0xff]
    %v2118 = vld [vmem:[#allocation7 + $0x568] sm:$0xff]
    %v2119 = vld [vmem:[#allocation7 + $0x570] sm:$0xff]
    %v2120 = vld [vmem:[#allocation7 + $0x578] sm:$0xff]
    %v2121 = vld [vmem:[#allocation7 + $0x580] sm:$0xff]
    %v2122 = vld [vmem:[#allocation7 + $0x588] sm:$0xff]
    %v2123 = vld [vmem:[#allocation7 + $0x590] sm:$0xff]
    %v2124 = vld [vmem:[#allocation7 + $0x598] sm:$0xff]
    %v2125 = vld [vmem:[#allocation7 + $0x5a0] sm:$0xff]
    %v2126 = vld [vmem:[#allocation7 + $0x5a8] sm:$0xff]
    %v2127 = vld [vmem:[#allocation7 + $0x5b0] sm:$0xff]
    %v2128 = vld [vmem:[#allocation7 + $0x5b8] sm:$0xff]
    %v2129 = vld [vmem:[#allocation7 + $0x5c0] sm:$0xff]
    %v2130 = vld [vmem:[#allocation7 + $0x5c8] sm:$0xff]
    %v2131 = vld [vmem:[#allocation7 + $0x5d0] sm:$0xff]
    %v2132 = vld [vmem:[#allocation7 + $0x5d8] sm:$0xff]
    %v2133 = vld [vmem:[#allocation7 + $0x5e0] sm:$0xff]
    %v2134 = vld [vmem:[#allocation7 + $0x5e8] sm:$0xff]
    %v2135 = vld [vmem:[#allocation7 + $0x5f0] sm:$0xff]
    %v2136 = vld [vmem:[#allocation7 + $0x5f8] sm:$0xff]
    %v2137 = vld [vmem:[#allocation7 + $0x600] sm:$0xff]
    %v2138 = vld [vmem:[#allocation7 + $0x608] sm:$0xff]
    %v2139 = vld [vmem:[#allocation7 + $0x610] sm:$0xff]
    %v2140 = vld [vmem:[#allocation7 + $0x618] sm:$0xff]
    %v2141 = vld [vmem:[#allocation7 + $0x620] sm:$0xff]
    %v2142 = vld [vmem:[#allocation7 + $0x628] sm:$0xff]
    %v2143 = vld [vmem:[#allocation7 + $0x630] sm:$0xff]
    %v2144 = vld [vmem:[#allocation7 + $0x638] sm:$0xff]
    %v2145 = vld [vmem:[#allocation7 + $0x640] sm:$0xff]
    %v2146 = vld [vmem:[#allocation7 + $0x648] sm:$0xff]
    %v2147 = vld [vmem:[#allocation7 + $0x650] sm:$0xff]
    %v2148 = vld [vmem:[#allocation7 + $0x658] sm:$0xff]
    %v2149 = vld [vmem:[#allocation7 + $0x660] sm:$0xff]
    %v2150 = vld [vmem:[#allocation7 + $0x668] sm:$0xff]
    %v2151 = vld [vmem:[#allocation7 + $0x670] sm:$0xff]
    %v2152 = vld [vmem:[#allocation7 + $0x678] sm:$0xff]
    %v2153 = vld [vmem:[#allocation7 + $0x680] sm:$0xff]
    %v2154 = vld [vmem:[#allocation7 + $0x688] sm:$0xff]
    %v2155 = vld [vmem:[#allocation7 + $0x690] sm:$0xff]
    %v2156 = vld [vmem:[#allocation7 + $0x698] sm:$0xff]
    %v2157 = vld [vmem:[#allocation7 + $0x6a0] sm:$0xff]
    %v2158 = vld [vmem:[#allocation7 + $0x6a8] sm:$0xff]
    %v2159 = vld [vmem:[#allocation7 + $0x6b0] sm:$0xff]
    %v2160 = vld [vmem:[#allocation7 + $0x6b8] sm:$0xff]
    %v2161 = vld [vmem:[#allocation7 + $0x6c0] sm:$0xff]
    %v2162 = vld [vmem:[#allocation7 + $0x6c8] sm:$0xff]
    %v2163 = vld [vmem:[#allocation7 + $0x6d0] sm:$0xff]
    %v2164 = vld [vmem:[#allocation7 + $0x6d8] sm:$0xff]
    %v2165 = vld [vmem:[#allocation7 + $0x6e0] sm:$0xff]
    %v2166 = vld [vmem:[#allocation7 + $0x6e8] sm:$0xff]
    %v2167 = vld [vmem:[#allocation7 + $0x6f0] sm:$0xff]
    %v2168 = vld [vmem:[#allocation7 + $0x6f8] sm:$0xff]
    %v2169 = vld [vmem:[#allocation7 + $0x700] sm:$0xff]
    %v2170 = vld [vmem:[#allocation7 + $0x708] sm:$0xff]
    %v2171 = vld [vmem:[#allocation7 + $0x710] sm:$0xff]
    %v2172 = vld [vmem:[#allocation7 + $0x718] sm:$0xff]
    %v2173 = vld [vmem:[#allocation7 + $0x720] sm:$0xff]
    %v2174 = vld [vmem:[#allocation7 + $0x728] sm:$0xff]
    %v2175 = vld [vmem:[#allocation7 + $0x730] sm:$0xff]
    %v2176 = vld [vmem:[#allocation7 + $0x738] sm:$0xff]
    %v2177 = vld [vmem:[#allocation7 + $0x740] sm:$0xff]
    %v2178 = vld [vmem:[#allocation7 + $0x748] sm:$0xff]
    %v2179 = vld [vmem:[#allocation7 + $0x750] sm:$0xff]
    %v2180 = vld [vmem:[#allocation7 + $0x758] sm:$0xff]
    %v2181 = vld [vmem:[#allocation7 + $0x760] sm:$0xff]
    %v2182 = vld [vmem:[#allocation7 + $0x768] sm:$0xff]
    %v2183 = vld [vmem:[#allocation7 + $0x770] sm:$0xff]
    %v2184 = vld [vmem:[#allocation7 + $0x778] sm:$0xff]
    %v2185 = vld [vmem:[#allocation7 + $0x780] sm:$0xff]
    %v2186 = vld [vmem:[#allocation7 + $0x788] sm:$0xff]
    %v2187 = vld [vmem:[#allocation7 + $0x790] sm:$0xff]
    %v2188 = vld [vmem:[#allocation7 + $0x798] sm:$0xff]
    %v2189 = vld [vmem:[#allocation7 + $0x7a0] sm:$0xff]
    %v2190 = vld [vmem:[#allocation7 + $0x7a8] sm:$0xff]
    %v2191 = vld [vmem:[#allocation7 + $0x7b0] sm:$0xff]
    %v2192 = vld [vmem:[#allocation7 + $0x7b8] sm:$0xff]
    %v2193 = vld [vmem:[#allocation7 + $0x7c0] sm:$0xff]
    %v2194 = vld [vmem:[#allocation7 + $0x7c8] sm:$0xff]
    %v2195 = vld [vmem:[#allocation7 + $0x7d0] sm:$0xff]
    %v2196 = vld [vmem:[#allocation7 + $0x7d8] sm:$0xff]
    %v2197 = vld [vmem:[#allocation7 + $0x7e0] sm:$0xff]
    %v2198 = vld [vmem:[#allocation7 + $0x7e8] sm:$0xff]
    %v2199 = vld [vmem:[#allocation7 + $0x7f0] sm:$0xff]
    %v2200 = vld [vmem:[#allocation7 + $0x7f8] sm:$0xff]
    %v2201 = vld [vmem:[#allocation7 + $0x800] sm:$0xff]
    %v2202 = vld [vmem:[#allocation7 + $0x808] sm:$0xff]
    %v2203 = vld [vmem:[#allocation7 + $0x810] sm:$0xff]
    %v2204 = vld [vmem:[#allocation7 + $0x818] sm:$0xff]
    %v2205 = vld [vmem:[#allocation7 + $0x820] sm:$0xff]
    %v2206 = vld [vmem:[#allocation7 + $0x828] sm:$0xff]
    %v2207 = vld [vmem:[#allocation7 + $0x830] sm:$0xff]
    %v2208 = vld [vmem:[#allocation7 + $0x838] sm:$0xff]
    %v2209 = vld [vmem:[#allocation7 + $0x840] sm:$0xff]
    %v2210 = vld [vmem:[#allocation7 + $0x848] sm:$0xff]
    %v2211 = vld [vmem:[#allocation7 + $0x850] sm:$0xff]
    %v2212 = vld [vmem:[#allocation7 + $0x858] sm:$0xff]
    %v2213 = vld [vmem:[#allocation7 + $0x860] sm:$0xff]
    %v2214 = vld [vmem:[#allocation7 + $0x868] sm:$0xff]
    %v2215 = vld [vmem:[#allocation7 + $0x870] sm:$0xff]
    %v2216 = vld [vmem:[#allocation7 + $0x878] sm:$0xff]
    %v2217 = vld [vmem:[#allocation7 + $0x880] sm:$0xff]
    %v2218 = vld [vmem:[#allocation7 + $0x888] sm:$0xff]
    %v2219 = vld [vmem:[#allocation7 + $0x890] sm:$0xff]
    %v2220 = vld [vmem:[#allocation7 + $0x898] sm:$0xff]
    %v2221 = vld [vmem:[#allocation7 + $0x8a0] sm:$0xff]
    %v2222 = vld [vmem:[#allocation7 + $0x8a8] sm:$0xff]
    %v2223 = vld [vmem:[#allocation7 + $0x8b0] sm:$0xff]
    %v2224 = vld [vmem:[#allocation7 + $0x8b8] sm:$0xff]
    %v2225 = vld [vmem:[#allocation7 + $0x8c0] sm:$0xff]
    %v2226 = vld [vmem:[#allocation7 + $0x8c8] sm:$0xff]
    %v2227 = vld [vmem:[#allocation7 + $0x8d0] sm:$0xff]
    %v2228 = vld [vmem:[#allocation7 + $0x8d8] sm:$0xff]
    %v2229 = vld [vmem:[#allocation7 + $0x8e0] sm:$0xff]
    %v2230 = vld [vmem:[#allocation7 + $0x8e8] sm:$0xff]
    %v2231 = vld [vmem:[#allocation7 + $0x8f0] sm:$0xff]
    %v2232 = vld [vmem:[#allocation7 + $0x8f8] sm:$0xff]
    %v2233 = vld [vmem:[#allocation7 + $0x900] sm:$0xff]
    %v2234 = vld [vmem:[#allocation7 + $0x908] sm:$0xff]
    %v2235 = vld [vmem:[#allocation7 + $0x910] sm:$0xff]
    %v2236 = vld [vmem:[#allocation7 + $0x918] sm:$0xff]
    %v2237 = vld [vmem:[#allocation7 + $0x920] sm:$0xff]
    %v2238 = vld [vmem:[#allocation7 + $0x928] sm:$0xff]
    %v2239 = vld [vmem:[#allocation7 + $0x930] sm:$0xff]
    %v2240 = vld [vmem:[#allocation7 + $0x938] sm:$0xff]
    %v2241 = vld [vmem:[#allocation7 + $0x940] sm:$0xff]
    %v2242 = vld [vmem:[#allocation7 + $0x948] sm:$0xff]
    %v2243 = vld [vmem:[#allocation7 + $0x950] sm:$0xff]
    %v2244 = vld [vmem:[#allocation7 + $0x958] sm:$0xff]
    %v2245 = vld [vmem:[#allocation7 + $0x960] sm:$0xff]
    %v2246 = vld [vmem:[#allocation7 + $0x968] sm:$0xff]
    %v2247 = vld [vmem:[#allocation7 + $0x970] sm:$0xff]
    %v2248 = vld [vmem:[#allocation7 + $0x978] sm:$0xff]
    %v2249 = vld [vmem:[#allocation7 + $0x980] sm:$0xff]
    %v2250 = vld [vmem:[#allocation7 + $0x988] sm:$0xff]
    %v2251 = vld [vmem:[#allocation7 + $0x990] sm:$0xff]
    %v2252 = vld [vmem:[#allocation7 + $0x998] sm:$0xff]
    %v2253 = vld [vmem:[#allocation7 + $0x9a0] sm:$0xff]
    %v2254 = vld [vmem:[#allocation7 + $0x9a8] sm:$0xff]
    %v2255 = vld [vmem:[#allocation7 + $0x9b0] sm:$0xff]
    %v2256 = vld [vmem:[#allocation7 + $0x9b8] sm:$0xff]
    %v2257 = vld [vmem:[#allocation7 + $0x9c0] sm:$0xff]
    %v2258 = vld [vmem:[#allocation7 + $0x9c8] sm:$0xff]
    %v2259 = vld [vmem:[#allocation7 + $0x9d0] sm:$0xff]
    %v2260 = vld [vmem:[#allocation7 + $0x9d8] sm:$0xff]
    %v2261 = vld [vmem:[#allocation7 + $0x9e0] sm:$0xff]
    %v2262 = vld [vmem:[#allocation7 + $0x9e8] sm:$0xff]
    %v2263 = vld [vmem:[#allocation7 + $0x9f0] sm:$0xff]
    %v2264 = vld [vmem:[#allocation7 + $0x9f8] sm:$0xff]
    %v2265 = vld [vmem:[#allocation7 + $0xa00] sm:$0xff]
    %v2266 = vld [vmem:[#allocation7 + $0xa08] sm:$0xff]
    %v2267 = vld [vmem:[#allocation7 + $0xa10] sm:$0xff]
    %v2268 = vld [vmem:[#allocation7 + $0xa18] sm:$0xff]
    %v2269 = vld [vmem:[#allocation7 + $0xa20] sm:$0xff]
    %v2270 = vld [vmem:[#allocation7 + $0xa28] sm:$0xff]
    %v2271 = vld [vmem:[#allocation7 + $0xa30] sm:$0xff]
    %v2272 = vld [vmem:[#allocation7 + $0xa38] sm:$0xff]
    %v2273 = vld [vmem:[#allocation7 + $0xa40] sm:$0xff]
    %v2274 = vld [vmem:[#allocation7 + $0xa48] sm:$0xff]
    %v2275 = vld [vmem:[#allocation7 + $0xa50] sm:$0xff]
    %v2276 = vld [vmem:[#allocation7 + $0xa58] sm:$0xff]
    %v2277 = vld [vmem:[#allocation7 + $0xa60] sm:$0xff]
    %v2278 = vld [vmem:[#allocation7 + $0xa68] sm:$0xff]
    %v2279 = vld [vmem:[#allocation7 + $0xa70] sm:$0xff]
    %v2280 = vld [vmem:[#allocation7 + $0xa78] sm:$0xff]
    %v2281 = vld [vmem:[#allocation7 + $0xa80] sm:$0xff]
    %v2282 = vld [vmem:[#allocation7 + $0xa88] sm:$0xff]
    %v2283 = vld [vmem:[#allocation7 + $0xa90] sm:$0xff]
    %v2284 = vld [vmem:[#allocation7 + $0xa98] sm:$0xff]
    %v2285 = vld [vmem:[#allocation7 + $0xaa0] sm:$0xff]
    %v2286 = vld [vmem:[#allocation7 + $0xaa8] sm:$0xff]
    %v2287 = vld [vmem:[#allocation7 + $0xab0] sm:$0xff]
    %v2288 = vld [vmem:[#allocation7 + $0xab8] sm:$0xff]
    %v2289 = vld [vmem:[#allocation7 + $0xac0] sm:$0xff]
    %v2290 = vld [vmem:[#allocation7 + $0xac8] sm:$0xff]
    %v2291 = vld [vmem:[#allocation7 + $0xad0] sm:$0xff]
    %v2292 = vld [vmem:[#allocation7 + $0xad8] sm:$0xff]
    %v2293 = vld [vmem:[#allocation7 + $0xae0] sm:$0xff]
    %v2294 = vld [vmem:[#allocation7 + $0xae8] sm:$0xff]
    %v2295 = vld [vmem:[#allocation7 + $0xaf0] sm:$0xff]
    %v2296 = vld [vmem:[#allocation7 + $0xaf8] sm:$0xff]
    %v2297 = vld [vmem:[#allocation7 + $0xb00] sm:$0xff]
    %v2298 = vld [vmem:[#allocation7 + $0xb08] sm:$0xff]
    %v2299 = vld [vmem:[#allocation7 + $0xb10] sm:$0xff]
    %v2300 = vld [vmem:[#allocation7 + $0xb18] sm:$0xff]
    %v2301 = vld [vmem:[#allocation7 + $0xb20] sm:$0xff]
    %v2302 = vld [vmem:[#allocation7 + $0xb28] sm:$0xff]
    %v2303 = vld [vmem:[#allocation7 + $0xb30] sm:$0xff]
    %v2304 = vld [vmem:[#allocation7 + $0xb38] sm:$0xff]
    %v2305 = vld [vmem:[#allocation7 + $0xb40] sm:$0xff]
    %v2306 = vld [vmem:[#allocation7 + $0xb48] sm:$0xff]
    %v2307 = vld [vmem:[#allocation7 + $0xb50] sm:$0xff]
    %v2308 = vld [vmem:[#allocation7 + $0xb58] sm:$0xff]
    %v2309 = vld [vmem:[#allocation7 + $0xb60] sm:$0xff]
    %v2310 = vld [vmem:[#allocation7 + $0xb68] sm:$0xff]
    %v2311 = vld [vmem:[#allocation7 + $0xb70] sm:$0xff]
    %v2312 = vld [vmem:[#allocation7 + $0xb78] sm:$0xff]
    %v2313 = vld [vmem:[#allocation7 + $0xb80] sm:$0xff]
    %v2314 = vld [vmem:[#allocation7 + $0xb88] sm:$0xff]
    %v2315 = vld [vmem:[#allocation7 + $0xb90] sm:$0xff]
    %v2316 = vld [vmem:[#allocation7 + $0xb98] sm:$0xff]
    %v2317 = vld [vmem:[#allocation7 + $0xba0] sm:$0xff]
    %v2318 = vld [vmem:[#allocation7 + $0xba8] sm:$0xff]
    %v2319 = vld [vmem:[#allocation7 + $0xbb0] sm:$0xff]
    %v2320 = vld [vmem:[#allocation7 + $0xbb8] sm:$0xff]
    %v2321 = vld [vmem:[#allocation7 + $0xbc0] sm:$0xff]
    %v2322 = vld [vmem:[#allocation7 + $0xbc8] sm:$0xff]
    %v2323 = vld [vmem:[#allocation7 + $0xbd0] sm:$0xff]
    %v2324 = vld [vmem:[#allocation7 + $0xbd8] sm:$0xff]
    %v2325 = vld [vmem:[#allocation7 + $0xbe0] sm:$0xff]
    %v2326 = vld [vmem:[#allocation7 + $0xbe8] sm:$0xff]
    %v2327 = vld [vmem:[#allocation7 + $0xbf0] sm:$0xff]
    %v2328 = vld [vmem:[#allocation7 + $0xbf8] sm:$0xff]
    %v2329 = vld [vmem:[#allocation7 + $0xc00] sm:$0xff]
    %v2330 = vld [vmem:[#allocation7 + $0xc08] sm:$0xff]
    %v2331 = vld [vmem:[#allocation7 + $0xc10] sm:$0xff]
    %v2332 = vld [vmem:[#allocation7 + $0xc18] sm:$0xff]
    %v2333 = vld [vmem:[#allocation7 + $0xc20] sm:$0xff]
    %v2334 = vld [vmem:[#allocation7 + $0xc28] sm:$0xff]
    %v2335 = vld [vmem:[#allocation7 + $0xc30] sm:$0xff]
    %v2336 = vld [vmem:[#allocation7 + $0xc38] sm:$0xff]
    %v2337 = vld [vmem:[#allocation7 + $0xc40] sm:$0xff]
    %v2338 = vld [vmem:[#allocation7 + $0xc48] sm:$0xff]
    %v2339 = vld [vmem:[#allocation7 + $0xc50] sm:$0xff]
    %v2340 = vld [vmem:[#allocation7 + $0xc58] sm:$0xff]
    %v2341 = vld [vmem:[#allocation7 + $0xc60] sm:$0xff]
    %v2342 = vld [vmem:[#allocation7 + $0xc68] sm:$0xff]
    %v2343 = vld [vmem:[#allocation7 + $0xc70] sm:$0xff]
    %v2344 = vld [vmem:[#allocation7 + $0xc78] sm:$0xff]
    %v2345 = vld [vmem:[#allocation7 + $0xc80] sm:$0xff]
    %v2346 = vld [vmem:[#allocation7 + $0xc88] sm:$0xff]
    %v2347 = vld [vmem:[#allocation7 + $0xc90] sm:$0xff]
    %v2348 = vld [vmem:[#allocation7 + $0xc98] sm:$0xff]
    %v2349 = vld [vmem:[#allocation7 + $0xca0] sm:$0xff]
    %v2350 = vld [vmem:[#allocation7 + $0xca8] sm:$0xff]
    %v2351 = vld [vmem:[#allocation7 + $0xcb0] sm:$0xff]
    %v2352 = vld [vmem:[#allocation7 + $0xcb8] sm:$0xff]
    %v2353 = vld [vmem:[#allocation7 + $0xcc0] sm:$0xff]
    %v2354 = vld [vmem:[#allocation7 + $0xcc8] sm:$0xff]
    %v2355 = vld [vmem:[#allocation7 + $0xcd0] sm:$0xff]
    %v2356 = vld [vmem:[#allocation7 + $0xcd8] sm:$0xff]
    %v2357 = vld [vmem:[#allocation7 + $0xce0] sm:$0xff]
    %v2358 = vld [vmem:[#allocation7 + $0xce8] sm:$0xff]
    %v2359 = vld [vmem:[#allocation7 + $0xcf0] sm:$0xff]
    %v2360 = vld [vmem:[#allocation7 + $0xcf8] sm:$0xff]
    %v2361 = vld [vmem:[#allocation7 + $0xd00] sm:$0xff]
    %v2362 = vld [vmem:[#allocation7 + $0xd08] sm:$0xff]
    %v2363 = vld [vmem:[#allocation7 + $0xd10] sm:$0xff]
    %v2364 = vld [vmem:[#allocation7 + $0xd18] sm:$0xff]
    %v2365 = vld [vmem:[#allocation7 + $0xd20] sm:$0xff]
    %v2366 = vld [vmem:[#allocation7 + $0xd28] sm:$0xff]
    %v2367 = vld [vmem:[#allocation7 + $0xd30] sm:$0xff]
    %v2368 = vld [vmem:[#allocation7 + $0xd38] sm:$0xff]
    %v2369 = vld [vmem:[#allocation7 + $0xd40] sm:$0xff]
    %v2370 = vld [vmem:[#allocation7 + $0xd48] sm:$0xff]
    %v2371 = vld [vmem:[#allocation7 + $0xd50] sm:$0xff]
    %v2372 = vld [vmem:[#allocation7 + $0xd58] sm:$0xff]
    %v2373 = vld [vmem:[#allocation7 + $0xd60] sm:$0xff]
    %v2374 = vld [vmem:[#allocation7 + $0xd68] sm:$0xff]
    %v2375 = vld [vmem:[#allocation7 + $0xd70] sm:$0xff]
    %v2376 = vld [vmem:[#allocation7 + $0xd78] sm:$0xff]
    %v2377 = vld [vmem:[#allocation7 + $0xd80] sm:$0xff]
    %v2378 = vld [vmem:[#allocation7 + $0xd88] sm:$0xff]
    %v2379 = vld [vmem:[#allocation7 + $0xd90] sm:$0xff]
    %v2380 = vld [vmem:[#allocation7 + $0xd98] sm:$0xff]
    %v2381 = vld [vmem:[#allocation7 + $0xda0] sm:$0xff]
    %v2382 = vld [vmem:[#allocation7 + $0xda8] sm:$0xff]
    %v2383 = vld [vmem:[#allocation7 + $0xdb0] sm:$0xff]
    %v2384 = vld [vmem:[#allocation7 + $0xdb8] sm:$0xff]
    %v2385 = vld [vmem:[#allocation7 + $0xdc0] sm:$0xff]
    %v2386 = vld [vmem:[#allocation7 + $0xdc8] sm:$0xff]
    %v2387 = vld [vmem:[#allocation7 + $0xdd0] sm:$0xff]
    %v2388 = vld [vmem:[#allocation7 + $0xdd8] sm:$0xff]
    %v2389 = vld [vmem:[#allocation7 + $0xde0] sm:$0xff]
    %v2390 = vld [vmem:[#allocation7 + $0xde8] sm:$0xff]
    %v2391 = vld [vmem:[#allocation7 + $0xdf0] sm:$0xff]
    %v2392 = vld [vmem:[#allocation7 + $0xdf8] sm:$0xff]
    %v2393 = vld [vmem:[#allocation7 + $0xe00] sm:$0xff]
    %v2394 = vld [vmem:[#allocation7 + $0xe08] sm:$0xff]
    %v2395 = vld [vmem:[#allocation7 + $0xe10] sm:$0xff]
    %v2396 = vld [vmem:[#allocation7 + $0xe18] sm:$0xff]
    %v2397 = vld [vmem:[#allocation7 + $0xe20] sm:$0xff]
    %v2398 = vld [vmem:[#allocation7 + $0xe28] sm:$0xff]
    %v2399 = vld [vmem:[#allocation7 + $0xe30] sm:$0xff]
    %v2400 = vld [vmem:[#allocation7 + $0xe38] sm:$0xff]
    %v2401 = vld [vmem:[#allocation7 + $0xe40] sm:$0xff]
    %v2402 = vld [vmem:[#allocation7 + $0xe48] sm:$0xff]
    %v2403 = vld [vmem:[#allocation7 + $0xe50] sm:$0xff]
    %v2404 = vld [vmem:[#allocation7 + $0xe58] sm:$0xff]
    %v2405 = vld [vmem:[#allocation7 + $0xe60] sm:$0xff]
    %v2406 = vld [vmem:[#allocation7 + $0xe68] sm:$0xff]
    %v2407 = vld [vmem:[#allocation7 + $0xe70] sm:$0xff]
    %v2408 = vld [vmem:[#allocation7 + $0xe78] sm:$0xff]
    %v2409 = vld [vmem:[#allocation7 + $0xe80] sm:$0xff]
    %v2410 = vld [vmem:[#allocation7 + $0xe88] sm:$0xff]
    %v2411 = vld [vmem:[#allocation7 + $0xe90] sm:$0xff]
    %v2412 = vld [vmem:[#allocation7 + $0xe98] sm:$0xff]
    %v2413 = vld [vmem:[#allocation7 + $0xea0] sm:$0xff]
    %v2414 = vld [vmem:[#allocation7 + $0xea8] sm:$0xff]
    %v2415 = vld [vmem:[#allocation7 + $0xeb0] sm:$0xff]
    %v2416 = vld [vmem:[#allocation7 + $0xeb8] sm:$0xff]
    %v2417 = vld [vmem:[#allocation7 + $0xec0] sm:$0xff]
    %v2418 = vld [vmem:[#allocation7 + $0xec8] sm:$0xff]
    %v2419 = vld [vmem:[#allocation7 + $0xed0] sm:$0xff]
    %v2420 = vld [vmem:[#allocation7 + $0xed8] sm:$0xff]
    %v2421 = vld [vmem:[#allocation7 + $0xee0] sm:$0xff]
    %v2422 = vld [vmem:[#allocation7 + $0xee8] sm:$0xff]
    %v2423 = vld [vmem:[#allocation7 + $0xef0] sm:$0xff]
    %v2424 = vld [vmem:[#allocation7 + $0xef8] sm:$0xff]
    %v2425 = vld [vmem:[#allocation7 + $0xf00] sm:$0xff]
    %v2426 = vld [vmem:[#allocation7 + $0xf08] sm:$0xff]
    %v2427 = vld [vmem:[#allocation7 + $0xf10] sm:$0xff]
    %v2428 = vld [vmem:[#allocation7 + $0xf18] sm:$0xff]
    %v2429 = vld [vmem:[#allocation7 + $0xf20] sm:$0xff]
    %v2430 = vld [vmem:[#allocation7 + $0xf28] sm:$0xff]
    %v2431 = vld [vmem:[#allocation7 + $0xf30] sm:$0xff]
    %v2432 = vld [vmem:[#allocation7 + $0xf38] sm:$0xff]
    %v2433 = vld [vmem:[#allocation7 + $0xf40] sm:$0xff]
    %v2434 = vld [vmem:[#allocation7 + $0xf48] sm:$0xff]
    %v2435 = vld [vmem:[#allocation7 + $0xf50] sm:$0xff]
    %v2436 = vld [vmem:[#allocation7 + $0xf58] sm:$0xff]
    %v2437 = vld [vmem:[#allocation7 + $0xf60] sm:$0xff]
    %v2438 = vld [vmem:[#allocation7 + $0xf68] sm:$0xff]
    %v2439 = vld [vmem:[#allocation7 + $0xf70] sm:$0xff]
    %v2440 = vld [vmem:[#allocation7 + $0xf78] sm:$0xff]
    %v2441 = vld [vmem:[#allocation7 + $0xf80] sm:$0xff]
    %v2442 = vld [vmem:[#allocation7 + $0xf88] sm:$0xff]
    %v2443 = vld [vmem:[#allocation7 + $0xf90] sm:$0xff]
    %v2444 = vld [vmem:[#allocation7 + $0xf98] sm:$0xff]
    %v2445 = vld [vmem:[#allocation7 + $0xfa0] sm:$0xff]
    %v2446 = vld [vmem:[#allocation7 + $0xfa8] sm:$0xff]
    %v2447 = vld [vmem:[#allocation7 + $0xfb0] sm:$0xff]
    %v2448 = vld [vmem:[#allocation7 + $0xfb8] sm:$0xff]
    %v2449 = vld [vmem:[#allocation7 + $0xfc0] sm:$0xff]
    %v2450 = vld [vmem:[#allocation7 + $0xfc8] sm:$0xff]
    %v2451 = vld [vmem:[#allocation7 + $0xfd0] sm:$0xff]
    %v2452 = vld [vmem:[#allocation7 + $0xfd8] sm:$0xff]
    %v2453 = vld [vmem:[#allocation7 + $0xfe0] sm:$0xff]
    %v2454 = vld [vmem:[#allocation7 + $0xfe8] sm:$0xff]
    %v2455 = vld [vmem:[#allocation7 + $0xff0] sm:$0xff]
    %v2456 = vld [vmem:[#allocation7 + $0xff8] sm:$0xff]
    %v2457 = vld [vmem:[#allocation8] sm:$0xff]
    %v2459 = vperm.slane %v2457, 0
    %v2460 = vperm.slane %v2457, 1
    %v2461 = vperm.slane %v2457, 2
    %v2462 = vperm.slane %v2457, 3
    %v2463 = vperm.slane %v2457, 4
    %v2464 = vperm.slane %v2457, 5
    %v2465 = vperm.slane %v2457, 6
    %v2466 = vperm.slane %v2457, 7
    %v2987 = vunpack.c.l.b16 %v1945
    %v2988 = vunpack.c.h.b16 %v1945
    %v2989 = vunpack.c.l.b16 %v1946
    %v2990 = vunpack.c.h.b16 %v1946
    %v2991 = vunpack.c.l.b16 %v1947
    %v2992 = vunpack.c.h.b16 %v1947
    %v2993 = vunpack.c.l.b16 %v1948
    %v2994 = vunpack.c.h.b16 %v1948
    %v2995 = vunpack.c.l.b16 %v1949
    %v2996 = vunpack.c.h.b16 %v1949
    %v2997 = vunpack.c.l.b16 %v1950
    %v2998 = vunpack.c.h.b16 %v1950
    %v2999 = vunpack.c.l.b16 %v1951
    %v3000 = vunpack.c.h.b16 %v1951
    %v3001 = vunpack.c.l.b16 %v1952
    %v3002 = vunpack.c.h.b16 %v1952
    %v3003 = vunpack.c.l.b16 %v1953
    %v3004 = vunpack.c.h.b16 %v1953
    %v3005 = vunpack.c.l.b16 %v1954
    %v3006 = vunpack.c.h.b16 %v1954
    %v3007 = vunpack.c.l.b16 %v1955
    %v3008 = vunpack.c.h.b16 %v1955
    %v3009 = vunpack.c.l.b16 %v1956
    %v3010 = vunpack.c.h.b16 %v1956
    %v3011 = vunpack.c.l.b16 %v1957
    %v3012 = vunpack.c.h.b16 %v1957
    %v3013 = vunpack.c.l.b16 %v1958
    %v3014 = vunpack.c.h.b16 %v1958
    %v3015 = vunpack.c.l.b16 %v1959
    %v3016 = vunpack.c.h.b16 %v1959
    %v3017 = vunpack.c.l.b16 %v1960
    %v3018 = vunpack.c.h.b16 %v1960
    %v3019 = vunpack.c.l.b16 %v1961
    %v3020 = vunpack.c.h.b16 %v1961
    %v3021 = vunpack.c.l.b16 %v1962
    %v3022 = vunpack.c.h.b16 %v1962
    %v3023 = vunpack.c.l.b16 %v1963
    %v3024 = vunpack.c.h.b16 %v1963
    %v3025 = vunpack.c.l.b16 %v1964
    %v3026 = vunpack.c.h.b16 %v1964
    %v3027 = vunpack.c.l.b16 %v1965
    %v3028 = vunpack.c.h.b16 %v1965
    %v3029 = vunpack.c.l.b16 %v1966
    %v3030 = vunpack.c.h.b16 %v1966
    %v3031 = vunpack.c.l.b16 %v1967
    %v3032 = vunpack.c.h.b16 %v1967
    %v3033 = vunpack.c.l.b16 %v1968
    %v3034 = vunpack.c.h.b16 %v1968
    %v3035 = vunpack.c.l.b16 %v1969
    %v3036 = vunpack.c.h.b16 %v1969
    %v3037 = vunpack.c.l.b16 %v1970
    %v3038 = vunpack.c.h.b16 %v1970
    %v3039 = vunpack.c.l.b16 %v1971
    %v3040 = vunpack.c.h.b16 %v1971
    %v3041 = vunpack.c.l.b16 %v1972
    %v3042 = vunpack.c.h.b16 %v1972
    %v3043 = vunpack.c.l.b16 %v1973
    %v3044 = vunpack.c.h.b16 %v1973
    %v3045 = vunpack.c.l.b16 %v1974
    %v3046 = vunpack.c.h.b16 %v1974
    %v3047 = vunpack.c.l.b16 %v1975
    %v3048 = vunpack.c.h.b16 %v1975
    %v3049 = vunpack.c.l.b16 %v1976
    %v3050 = vunpack.c.h.b16 %v1976
    %v3051 = vunpack.c.l.b16 %v1977
    %v3052 = vunpack.c.h.b16 %v1977
    %v3053 = vunpack.c.l.b16 %v1978
    %v3054 = vunpack.c.h.b16 %v1978
    %v3055 = vunpack.c.l.b16 %v1979
    %v3056 = vunpack.c.h.b16 %v1979
    %v3057 = vunpack.c.l.b16 %v1980
    %v3058 = vunpack.c.h.b16 %v1980
    %v3059 = vunpack.c.l.b16 %v1981
    %v3060 = vunpack.c.h.b16 %v1981
    %v3061 = vunpack.c.l.b16 %v1982
    %v3062 = vunpack.c.h.b16 %v1982
    %v3063 = vunpack.c.l.b16 %v1983
    %v3064 = vunpack.c.h.b16 %v1983
    %v3065 = vunpack.c.l.b16 %v1984
    %v3066 = vunpack.c.h.b16 %v1984
    %v3067 = vunpack.c.l.b16 %v1985
    %v3068 = vunpack.c.h.b16 %v1985
    %v3069 = vunpack.c.l.b16 %v1986
    %v3070 = vunpack.c.h.b16 %v1986
    %v3071 = vunpack.c.l.b16 %v1987
    %v3072 = vunpack.c.h.b16 %v1987
    %v3073 = vunpack.c.l.b16 %v1988
    %v3074 = vunpack.c.h.b16 %v1988
    %v3075 = vunpack.c.l.b16 %v1989
    %v3076 = vunpack.c.h.b16 %v1989
    %v3077 = vunpack.c.l.b16 %v1990
    %v3078 = vunpack.c.h.b16 %v1990
    %v3079 = vunpack.c.l.b16 %v1991
    %v3080 = vunpack.c.h.b16 %v1991
    %v3081 = vunpack.c.l.b16 %v1992
    %v3082 = vunpack.c.h.b16 %v1992
    %v3083 = vunpack.c.l.b16 %v1993
    %v3084 = vunpack.c.h.b16 %v1993
    %v3085 = vunpack.c.l.b16 %v1994
    %v3086 = vunpack.c.h.b16 %v1994
    %v3087 = vunpack.c.l.b16 %v1995
    %v3088 = vunpack.c.h.b16 %v1995
    %v3089 = vunpack.c.l.b16 %v1996
    %v3090 = vunpack.c.h.b16 %v1996
    %v3091 = vunpack.c.l.b16 %v1997
    %v3092 = vunpack.c.h.b16 %v1997
    %v3093 = vunpack.c.l.b16 %v1998
    %v3094 = vunpack.c.h.b16 %v1998
    %v3095 = vunpack.c.l.b16 %v1999
    %v3096 = vunpack.c.h.b16 %v1999
    %v3097 = vunpack.c.l.b16 %v2000
    %v3098 = vunpack.c.h.b16 %v2000
    %v3099 = vunpack.c.l.b16 %v2001
    %v3100 = vunpack.c.h.b16 %v2001
    %v3101 = vunpack.c.l.b16 %v2002
    %v3102 = vunpack.c.h.b16 %v2002
    %v3103 = vunpack.c.l.b16 %v2003
    %v3104 = vunpack.c.h.b16 %v2003
    %v3105 = vunpack.c.l.b16 %v2004
    %v3106 = vunpack.c.h.b16 %v2004
    %v3107 = vunpack.c.l.b16 %v2005
    %v3108 = vunpack.c.h.b16 %v2005
    %v3109 = vunpack.c.l.b16 %v2006
    %v3110 = vunpack.c.h.b16 %v2006
    %v3111 = vunpack.c.l.b16 %v2007
    %v3112 = vunpack.c.h.b16 %v2007
    %v3113 = vunpack.c.l.b16 %v2008
    %v3114 = vunpack.c.h.b16 %v2008
    %v3115 = vunpack.c.l.b16 %v2009
    %v3116 = vunpack.c.h.b16 %v2009
    %v3117 = vunpack.c.l.b16 %v2010
    %v3118 = vunpack.c.h.b16 %v2010
    %v3119 = vunpack.c.l.b16 %v2011
    %v3120 = vunpack.c.h.b16 %v2011
    %v3121 = vunpack.c.l.b16 %v2012
    %v3122 = vunpack.c.h.b16 %v2012
    %v3123 = vunpack.c.l.b16 %v2013
    %v3124 = vunpack.c.h.b16 %v2013
    %v3125 = vunpack.c.l.b16 %v2014
    %v3126 = vunpack.c.h.b16 %v2014
    %v3127 = vunpack.c.l.b16 %v2015
    %v3128 = vunpack.c.h.b16 %v2015
    %v3129 = vunpack.c.l.b16 %v2016
    %v3130 = vunpack.c.h.b16 %v2016
    %v3131 = vunpack.c.l.b16 %v2017
    %v3132 = vunpack.c.h.b16 %v2017
    %v3133 = vunpack.c.l.b16 %v2018
    %v3134 = vunpack.c.h.b16 %v2018
    %v3135 = vunpack.c.l.b16 %v2019
    %v3136 = vunpack.c.h.b16 %v2019
    %v3137 = vunpack.c.l.b16 %v2020
    %v3138 = vunpack.c.h.b16 %v2020
    %v3139 = vunpack.c.l.b16 %v2021
    %v3140 = vunpack.c.h.b16 %v2021
    %v3141 = vunpack.c.l.b16 %v2022
    %v3142 = vunpack.c.h.b16 %v2022
    %v3143 = vunpack.c.l.b16 %v2023
    %v3144 = vunpack.c.h.b16 %v2023
    %v3145 = vunpack.c.l.b16 %v2024
    %v3146 = vunpack.c.h.b16 %v2024
    %v3147 = vunpack.c.l.b16 %v2025
    %v3148 = vunpack.c.h.b16 %v2025
    %v3149 = vunpack.c.l.b16 %v2026
    %v3150 = vunpack.c.h.b16 %v2026
    %v3151 = vunpack.c.l.b16 %v2027
    %v3152 = vunpack.c.h.b16 %v2027
    %v3153 = vunpack.c.l.b16 %v2028
    %v3154 = vunpack.c.h.b16 %v2028
    %v3155 = vunpack.c.l.b16 %v2029
    %v3156 = vunpack.c.h.b16 %v2029
    %v3157 = vunpack.c.l.b16 %v2030
    %v3158 = vunpack.c.h.b16 %v2030
    %v3159 = vunpack.c.l.b16 %v2031
    %v3160 = vunpack.c.h.b16 %v2031
    %v3161 = vunpack.c.l.b16 %v2032
    %v3162 = vunpack.c.h.b16 %v2032
    %v3163 = vunpack.c.l.b16 %v2033
    %v3164 = vunpack.c.h.b16 %v2033
    %v3165 = vunpack.c.l.b16 %v2034
    %v3166 = vunpack.c.h.b16 %v2034
    %v3167 = vunpack.c.l.b16 %v2035
    %v3168 = vunpack.c.h.b16 %v2035
    %v3169 = vunpack.c.l.b16 %v2036
    %v3170 = vunpack.c.h.b16 %v2036
    %v3171 = vunpack.c.l.b16 %v2037
    %v3172 = vunpack.c.h.b16 %v2037
    %v3173 = vunpack.c.l.b16 %v2038
    %v3174 = vunpack.c.h.b16 %v2038
    %v3175 = vunpack.c.l.b16 %v2039
    %v3176 = vunpack.c.h.b16 %v2039
    %v3177 = vunpack.c.l.b16 %v2040
    %v3178 = vunpack.c.h.b16 %v2040
    %v3179 = vunpack.c.l.b16 %v2041
    %v3180 = vunpack.c.h.b16 %v2041
    %v3181 = vunpack.c.l.b16 %v2042
    %v3182 = vunpack.c.h.b16 %v2042
    %v3183 = vunpack.c.l.b16 %v2043
    %v3184 = vunpack.c.h.b16 %v2043
    %v3185 = vunpack.c.l.b16 %v2044
    %v3186 = vunpack.c.h.b16 %v2044
    %v3187 = vunpack.c.l.b16 %v2045
    %v3188 = vunpack.c.h.b16 %v2045
    %v3189 = vunpack.c.l.b16 %v2046
    %v3190 = vunpack.c.h.b16 %v2046
    %v3191 = vunpack.c.l.b16 %v2047
    %v3192 = vunpack.c.h.b16 %v2047
    %v3193 = vunpack.c.l.b16 %v2048
    %v3194 = vunpack.c.h.b16 %v2048
    %v3195 = vunpack.c.l.b16 %v2049
    %v3196 = vunpack.c.h.b16 %v2049
    %v3197 = vunpack.c.l.b16 %v2050
    %v3198 = vunpack.c.h.b16 %v2050
    %v3199 = vunpack.c.l.b16 %v2051
    %v3200 = vunpack.c.h.b16 %v2051
    %v3201 = vunpack.c.l.b16 %v2052
    %v3202 = vunpack.c.h.b16 %v2052
    %v3203 = vunpack.c.l.b16 %v2053
    %v3204 = vunpack.c.h.b16 %v2053
    %v3205 = vunpack.c.l.b16 %v2054
    %v3206 = vunpack.c.h.b16 %v2054
    %v3207 = vunpack.c.l.b16 %v2055
    %v3208 = vunpack.c.h.b16 %v2055
    %v3209 = vunpack.c.l.b16 %v2056
    %v3210 = vunpack.c.h.b16 %v2056
    %v3211 = vunpack.c.l.b16 %v2057
    %v3212 = vunpack.c.h.b16 %v2057
    %v3213 = vunpack.c.l.b16 %v2058
    %v3214 = vunpack.c.h.b16 %v2058
    %v3215 = vunpack.c.l.b16 %v2059
    %v3216 = vunpack.c.h.b16 %v2059
    %v3217 = vunpack.c.l.b16 %v2060
    %v3218 = vunpack.c.h.b16 %v2060
    %v3219 = vunpack.c.l.b16 %v2061
    %v3220 = vunpack.c.h.b16 %v2061
    %v3221 = vunpack.c.l.b16 %v2062
    %v3222 = vunpack.c.h.b16 %v2062
    %v3223 = vunpack.c.l.b16 %v2063
    %v3224 = vunpack.c.h.b16 %v2063
    %v3225 = vunpack.c.l.b16 %v2064
    %v3226 = vunpack.c.h.b16 %v2064
    %v3227 = vunpack.c.l.b16 %v2065
    %v3228 = vunpack.c.h.b16 %v2065
    %v3229 = vunpack.c.l.b16 %v2066
    %v3230 = vunpack.c.h.b16 %v2066
    %v3231 = vunpack.c.l.b16 %v2067
    %v3232 = vunpack.c.h.b16 %v2067
    %v3233 = vunpack.c.l.b16 %v2068
    %v3234 = vunpack.c.h.b16 %v2068
    %v3235 = vunpack.c.l.b16 %v2069
    %v3236 = vunpack.c.h.b16 %v2069
    %v3237 = vunpack.c.l.b16 %v2070
    %v3238 = vunpack.c.h.b16 %v2070
    %v3239 = vunpack.c.l.b16 %v2071
    %v3240 = vunpack.c.h.b16 %v2071
    %v3241 = vunpack.c.l.b16 %v2072
    %v3242 = vunpack.c.h.b16 %v2072
    %v3243 = vunpack.c.l.b16 %v2073
    %v3244 = vunpack.c.h.b16 %v2073
    %v3245 = vunpack.c.l.b16 %v2074
    %v3246 = vunpack.c.h.b16 %v2074
    %v3247 = vunpack.c.l.b16 %v2075
    %v3248 = vunpack.c.h.b16 %v2075
    %v3249 = vunpack.c.l.b16 %v2076
    %v3250 = vunpack.c.h.b16 %v2076
    %v3251 = vunpack.c.l.b16 %v2077
    %v3252 = vunpack.c.h.b16 %v2077
    %v3253 = vunpack.c.l.b16 %v2078
    %v3254 = vunpack.c.h.b16 %v2078
    %v3255 = vunpack.c.l.b16 %v2079
    %v3256 = vunpack.c.h.b16 %v2079
    %v3257 = vunpack.c.l.b16 %v2080
    %v3258 = vunpack.c.h.b16 %v2080
    %v3259 = vunpack.c.l.b16 %v2081
    %v3260 = vunpack.c.h.b16 %v2081
    %v3261 = vunpack.c.l.b16 %v2082
    %v3262 = vunpack.c.h.b16 %v2082
    %v3263 = vunpack.c.l.b16 %v2083
    %v3264 = vunpack.c.h.b16 %v2083
    %v3265 = vunpack.c.l.b16 %v2084
    %v3266 = vunpack.c.h.b16 %v2084
    %v3267 = vunpack.c.l.b16 %v2085
    %v3268 = vunpack.c.h.b16 %v2085
    %v3269 = vunpack.c.l.b16 %v2086
    %v3270 = vunpack.c.h.b16 %v2086
    %v3271 = vunpack.c.l.b16 %v2087
    %v3272 = vunpack.c.h.b16 %v2087
    %v3273 = vunpack.c.l.b16 %v2088
    %v3274 = vunpack.c.h.b16 %v2088
    %v3275 = vunpack.c.l.b16 %v2089
    %v3276 = vunpack.c.h.b16 %v2089
    %v3277 = vunpack.c.l.b16 %v2090
    %v3278 = vunpack.c.h.b16 %v2090
    %v3279 = vunpack.c.l.b16 %v2091
    %v3280 = vunpack.c.h.b16 %v2091
    %v3281 = vunpack.c.l.b16 %v2092
    %v3282 = vunpack.c.h.b16 %v2092
    %v3283 = vunpack.c.l.b16 %v2093
    %v3284 = vunpack.c.h.b16 %v2093
    %v3285 = vunpack.c.l.b16 %v2094
    %v3286 = vunpack.c.h.b16 %v2094
    %v3287 = vunpack.c.l.b16 %v2095
    %v3288 = vunpack.c.h.b16 %v2095
    %v3289 = vunpack.c.l.b16 %v2096
    %v3290 = vunpack.c.h.b16 %v2096
    %v3291 = vunpack.c.l.b16 %v2097
    %v3292 = vunpack.c.h.b16 %v2097
    %v3293 = vunpack.c.l.b16 %v2098
    %v3294 = vunpack.c.h.b16 %v2098
    %v3295 = vunpack.c.l.b16 %v2099
    %v3296 = vunpack.c.h.b16 %v2099
    %v3297 = vunpack.c.l.b16 %v2100
    %v3298 = vunpack.c.h.b16 %v2100
    %v3299 = vunpack.c.l.b16 %v2101
    %v3300 = vunpack.c.h.b16 %v2101
    %v3301 = vunpack.c.l.b16 %v2102
    %v3302 = vunpack.c.h.b16 %v2102
    %v3303 = vunpack.c.l.b16 %v2103
    %v3304 = vunpack.c.h.b16 %v2103
    %v3305 = vunpack.c.l.b16 %v2104
    %v3306 = vunpack.c.h.b16 %v2104
    %v3307 = vunpack.c.l.b16 %v2105
    %v3308 = vunpack.c.h.b16 %v2105
    %v3309 = vunpack.c.l.b16 %v2106
    %v3310 = vunpack.c.h.b16 %v2106
    %v3311 = vunpack.c.l.b16 %v2107
    %v3312 = vunpack.c.h.b16 %v2107
    %v3313 = vunpack.c.l.b16 %v2108
    %v3314 = vunpack.c.h.b16 %v2108
    %v3315 = vunpack.c.l.b16 %v2109
    %v3316 = vunpack.c.h.b16 %v2109
    %v3317 = vunpack.c.l.b16 %v2110
    %v3318 = vunpack.c.h.b16 %v2110
    %v3319 = vunpack.c.l.b16 %v2111
    %v3320 = vunpack.c.h.b16 %v2111
    %v3321 = vunpack.c.l.b16 %v2112
    %v3322 = vunpack.c.h.b16 %v2112
    %v3323 = vunpack.c.l.b16 %v2113
    %v3324 = vunpack.c.h.b16 %v2113
    %v3325 = vunpack.c.l.b16 %v2114
    %v3326 = vunpack.c.h.b16 %v2114
    %v3327 = vunpack.c.l.b16 %v2115
    %v3328 = vunpack.c.h.b16 %v2115
    %v3329 = vunpack.c.l.b16 %v2116
    %v3330 = vunpack.c.h.b16 %v2116
    %v3331 = vunpack.c.l.b16 %v2117
    %v3332 = vunpack.c.h.b16 %v2117
    %v3333 = vunpack.c.l.b16 %v2118
    %v3334 = vunpack.c.h.b16 %v2118
    %v3335 = vunpack.c.l.b16 %v2119
    %v3336 = vunpack.c.h.b16 %v2119
    %v3337 = vunpack.c.l.b16 %v2120
    %v3338 = vunpack.c.h.b16 %v2120
    %v3339 = vunpack.c.l.b16 %v2121
    %v3340 = vunpack.c.h.b16 %v2121
    %v3341 = vunpack.c.l.b16 %v2122
    %v3342 = vunpack.c.h.b16 %v2122
    %v3343 = vunpack.c.l.b16 %v2123
    %v3344 = vunpack.c.h.b16 %v2123
    %v3345 = vunpack.c.l.b16 %v2124
    %v3346 = vunpack.c.h.b16 %v2124
    %v3347 = vunpack.c.l.b16 %v2125
    %v3348 = vunpack.c.h.b16 %v2125
    %v3349 = vunpack.c.l.b16 %v2126
    %v3350 = vunpack.c.h.b16 %v2126
    %v3351 = vunpack.c.l.b16 %v2127
    %v3352 = vunpack.c.h.b16 %v2127
    %v3353 = vunpack.c.l.b16 %v2128
    %v3354 = vunpack.c.h.b16 %v2128
    %v3355 = vunpack.c.l.b16 %v2129
    %v3356 = vunpack.c.h.b16 %v2129
    %v3357 = vunpack.c.l.b16 %v2130
    %v3358 = vunpack.c.h.b16 %v2130
    %v3359 = vunpack.c.l.b16 %v2131
    %v3360 = vunpack.c.h.b16 %v2131
    %v3361 = vunpack.c.l.b16 %v2132
    %v3362 = vunpack.c.h.b16 %v2132
    %v3363 = vunpack.c.l.b16 %v2133
    %v3364 = vunpack.c.h.b16 %v2133
    %v3365 = vunpack.c.l.b16 %v2134
    %v3366 = vunpack.c.h.b16 %v2134
    %v3367 = vunpack.c.l.b16 %v2135
    %v3368 = vunpack.c.h.b16 %v2135
    %v3369 = vunpack.c.l.b16 %v2136
    %v3370 = vunpack.c.h.b16 %v2136
    %v3371 = vunpack.c.l.b16 %v2137
    %v3372 = vunpack.c.h.b16 %v2137
    %v3373 = vunpack.c.l.b16 %v2138
    %v3374 = vunpack.c.h.b16 %v2138
    %v3375 = vunpack.c.l.b16 %v2139
    %v3376 = vunpack.c.h.b16 %v2139
    %v3377 = vunpack.c.l.b16 %v2140
    %v3378 = vunpack.c.h.b16 %v2140
    %v3379 = vunpack.c.l.b16 %v2141
    %v3380 = vunpack.c.h.b16 %v2141
    %v3381 = vunpack.c.l.b16 %v2142
    %v3382 = vunpack.c.h.b16 %v2142
    %v3383 = vunpack.c.l.b16 %v2143
    %v3384 = vunpack.c.h.b16 %v2143
    %v3385 = vunpack.c.l.b16 %v2144
    %v3386 = vunpack.c.h.b16 %v2144
    %v3387 = vunpack.c.l.b16 %v2145
    %v3388 = vunpack.c.h.b16 %v2145
    %v3389 = vunpack.c.l.b16 %v2146
    %v3390 = vunpack.c.h.b16 %v2146
    %v3391 = vunpack.c.l.b16 %v2147
    %v3392 = vunpack.c.h.b16 %v2147
    %v3393 = vunpack.c.l.b16 %v2148
    %v3394 = vunpack.c.h.b16 %v2148
    %v3395 = vunpack.c.l.b16 %v2149
    %v3396 = vunpack.c.h.b16 %v2149
    %v3397 = vunpack.c.l.b16 %v2150
    %v3398 = vunpack.c.h.b16 %v2150
    %v3399 = vunpack.c.l.b16 %v2151
    %v3400 = vunpack.c.h.b16 %v2151
    %v3401 = vunpack.c.l.b16 %v2152
    %v3402 = vunpack.c.h.b16 %v2152
    %v3403 = vunpack.c.l.b16 %v2153
    %v3404 = vunpack.c.h.b16 %v2153
    %v3405 = vunpack.c.l.b16 %v2154
    %v3406 = vunpack.c.h.b16 %v2154
    %v3407 = vunpack.c.l.b16 %v2155
    %v3408 = vunpack.c.h.b16 %v2155
    %v3409 = vunpack.c.l.b16 %v2156
    %v3410 = vunpack.c.h.b16 %v2156
    %v3411 = vunpack.c.l.b16 %v2157
    %v3412 = vunpack.c.h.b16 %v2157
    %v3413 = vunpack.c.l.b16 %v2158
    %v3414 = vunpack.c.h.b16 %v2158
    %v3415 = vunpack.c.l.b16 %v2159
    %v3416 = vunpack.c.h.b16 %v2159
    %v3417 = vunpack.c.l.b16 %v2160
    %v3418 = vunpack.c.h.b16 %v2160
    %v3419 = vunpack.c.l.b16 %v2161
    %v3420 = vunpack.c.h.b16 %v2161
    %v3421 = vunpack.c.l.b16 %v2162
    %v3422 = vunpack.c.h.b16 %v2162
    %v3423 = vunpack.c.l.b16 %v2163
    %v3424 = vunpack.c.h.b16 %v2163
    %v3425 = vunpack.c.l.b16 %v2164
    %v3426 = vunpack.c.h.b16 %v2164
    %v3427 = vunpack.c.l.b16 %v2165
    %v3428 = vunpack.c.h.b16 %v2165
    %v3429 = vunpack.c.l.b16 %v2166
    %v3430 = vunpack.c.h.b16 %v2166
    %v3431 = vunpack.c.l.b16 %v2167
    %v3432 = vunpack.c.h.b16 %v2167
    %v3433 = vunpack.c.l.b16 %v2168
    %v3434 = vunpack.c.h.b16 %v2168
    %v3435 = vunpack.c.l.b16 %v2169
    %v3436 = vunpack.c.h.b16 %v2169
    %v3437 = vunpack.c.l.b16 %v2170
    %v3438 = vunpack.c.h.b16 %v2170
    %v3439 = vunpack.c.l.b16 %v2171
    %v3440 = vunpack.c.h.b16 %v2171
    %v3441 = vunpack.c.l.b16 %v2172
    %v3442 = vunpack.c.h.b16 %v2172
    %v3443 = vunpack.c.l.b16 %v2173
    %v3444 = vunpack.c.h.b16 %v2173
    %v3445 = vunpack.c.l.b16 %v2174
    %v3446 = vunpack.c.h.b16 %v2174
    %v3447 = vunpack.c.l.b16 %v2175
    %v3448 = vunpack.c.h.b16 %v2175
    %v3449 = vunpack.c.l.b16 %v2176
    %v3450 = vunpack.c.h.b16 %v2176
    %v3451 = vunpack.c.l.b16 %v2177
    %v3452 = vunpack.c.h.b16 %v2177
    %v3453 = vunpack.c.l.b16 %v2178
    %v3454 = vunpack.c.h.b16 %v2178
    %v3455 = vunpack.c.l.b16 %v2179
    %v3456 = vunpack.c.h.b16 %v2179
    %v3457 = vunpack.c.l.b16 %v2180
    %v3458 = vunpack.c.h.b16 %v2180
    %v3459 = vunpack.c.l.b16 %v2181
    %v3460 = vunpack.c.h.b16 %v2181
    %v3461 = vunpack.c.l.b16 %v2182
    %v3462 = vunpack.c.h.b16 %v2182
    %v3463 = vunpack.c.l.b16 %v2183
    %v3464 = vunpack.c.h.b16 %v2183
    %v3465 = vunpack.c.l.b16 %v2184
    %v3466 = vunpack.c.h.b16 %v2184
    %v3467 = vunpack.c.l.b16 %v2185
    %v3468 = vunpack.c.h.b16 %v2185
    %v3469 = vunpack.c.l.b16 %v2186
    %v3470 = vunpack.c.h.b16 %v2186
    %v3471 = vunpack.c.l.b16 %v2187
    %v3472 = vunpack.c.h.b16 %v2187
    %v3473 = vunpack.c.l.b16 %v2188
    %v3474 = vunpack.c.h.b16 %v2188
    %v3475 = vunpack.c.l.b16 %v2189
    %v3476 = vunpack.c.h.b16 %v2189
    %v3477 = vunpack.c.l.b16 %v2190
    %v3478 = vunpack.c.h.b16 %v2190
    %v3479 = vunpack.c.l.b16 %v2191
    %v3480 = vunpack.c.h.b16 %v2191
    %v3481 = vunpack.c.l.b16 %v2192
    %v3482 = vunpack.c.h.b16 %v2192
    %v3483 = vunpack.c.l.b16 %v2193
    %v3484 = vunpack.c.h.b16 %v2193
    %v3485 = vunpack.c.l.b16 %v2194
    %v3486 = vunpack.c.h.b16 %v2194
    %v3487 = vunpack.c.l.b16 %v2195
    %v3488 = vunpack.c.h.b16 %v2195
    %v3489 = vunpack.c.l.b16 %v2196
    %v3490 = vunpack.c.h.b16 %v2196
    %v3491 = vunpack.c.l.b16 %v2197
    %v3492 = vunpack.c.h.b16 %v2197
    %v3493 = vunpack.c.l.b16 %v2198
    %v3494 = vunpack.c.h.b16 %v2198
    %v3495 = vunpack.c.l.b16 %v2199
    %v3496 = vunpack.c.h.b16 %v2199
    %v3497 = vunpack.c.l.b16 %v2200
    %v3498 = vunpack.c.h.b16 %v2200
    %v3499 = vunpack.c.l.b16 %v2201
    %v3500 = vunpack.c.h.b16 %v2201
    %v3501 = vunpack.c.l.b16 %v2202
    %v3502 = vunpack.c.h.b16 %v2202
    %v3503 = vunpack.c.l.b16 %v2203
    %v3504 = vunpack.c.h.b16 %v2203
    %v3505 = vunpack.c.l.b16 %v2204
    %v3506 = vunpack.c.h.b16 %v2204
    %v3507 = vunpack.c.l.b16 %v2205
    %v3508 = vunpack.c.h.b16 %v2205
    %v3509 = vunpack.c.l.b16 %v2206
    %v3510 = vunpack.c.h.b16 %v2206
    %v3511 = vunpack.c.l.b16 %v2207
    %v3512 = vunpack.c.h.b16 %v2207
    %v3513 = vunpack.c.l.b16 %v2208
    %v3514 = vunpack.c.h.b16 %v2208
    %v3515 = vunpack.c.l.b16 %v2209
    %v3516 = vunpack.c.h.b16 %v2209
    %v3517 = vunpack.c.l.b16 %v2210
    %v3518 = vunpack.c.h.b16 %v2210
    %v3519 = vunpack.c.l.b16 %v2211
    %v3520 = vunpack.c.h.b16 %v2211
    %v3521 = vunpack.c.l.b16 %v2212
    %v3522 = vunpack.c.h.b16 %v2212
    %v3523 = vunpack.c.l.b16 %v2213
    %v3524 = vunpack.c.h.b16 %v2213
    %v3525 = vunpack.c.l.b16 %v2214
    %v3526 = vunpack.c.h.b16 %v2214
    %v3527 = vunpack.c.l.b16 %v2215
    %v3528 = vunpack.c.h.b16 %v2215
    %v3529 = vunpack.c.l.b16 %v2216
    %v3530 = vunpack.c.h.b16 %v2216
    %v3531 = vunpack.c.l.b16 %v2217
    %v3532 = vunpack.c.h.b16 %v2217
    %v3533 = vunpack.c.l.b16 %v2218
    %v3534 = vunpack.c.h.b16 %v2218
    %v3535 = vunpack.c.l.b16 %v2219
    %v3536 = vunpack.c.h.b16 %v2219
    %v3537 = vunpack.c.l.b16 %v2220
    %v3538 = vunpack.c.h.b16 %v2220
    %v3539 = vunpack.c.l.b16 %v2221
    %v3540 = vunpack.c.h.b16 %v2221
    %v3541 = vunpack.c.l.b16 %v2222
    %v3542 = vunpack.c.h.b16 %v2222
    %v3543 = vunpack.c.l.b16 %v2223
    %v3544 = vunpack.c.h.b16 %v2223
    %v3545 = vunpack.c.l.b16 %v2224
    %v3546 = vunpack.c.h.b16 %v2224
    %v3547 = vunpack.c.l.b16 %v2225
    %v3548 = vunpack.c.h.b16 %v2225
    %v3549 = vunpack.c.l.b16 %v2226
    %v3550 = vunpack.c.h.b16 %v2226
    %v3551 = vunpack.c.l.b16 %v2227
    %v3552 = vunpack.c.h.b16 %v2227
    %v3553 = vunpack.c.l.b16 %v2228
    %v3554 = vunpack.c.h.b16 %v2228
    %v3555 = vunpack.c.l.b16 %v2229
    %v3556 = vunpack.c.h.b16 %v2229
    %v3557 = vunpack.c.l.b16 %v2230
    %v3558 = vunpack.c.h.b16 %v2230
    %v3559 = vunpack.c.l.b16 %v2231
    %v3560 = vunpack.c.h.b16 %v2231
    %v3561 = vunpack.c.l.b16 %v2232
    %v3562 = vunpack.c.h.b16 %v2232
    %v3563 = vunpack.c.l.b16 %v2233
    %v3564 = vunpack.c.h.b16 %v2233
    %v3565 = vunpack.c.l.b16 %v2234
    %v3566 = vunpack.c.h.b16 %v2234
    %v3567 = vunpack.c.l.b16 %v2235
    %v3568 = vunpack.c.h.b16 %v2235
    %v3569 = vunpack.c.l.b16 %v2236
    %v3570 = vunpack.c.h.b16 %v2236
    %v3571 = vunpack.c.l.b16 %v2237
    %v3572 = vunpack.c.h.b16 %v2237
    %v3573 = vunpack.c.l.b16 %v2238
    %v3574 = vunpack.c.h.b16 %v2238
    %v3575 = vunpack.c.l.b16 %v2239
    %v3576 = vunpack.c.h.b16 %v2239
    %v3577 = vunpack.c.l.b16 %v2240
    %v3578 = vunpack.c.h.b16 %v2240
    %v3579 = vunpack.c.l.b16 %v2241
    %v3580 = vunpack.c.h.b16 %v2241
    %v3581 = vunpack.c.l.b16 %v2242
    %v3582 = vunpack.c.h.b16 %v2242
    %v3583 = vunpack.c.l.b16 %v2243
    %v3584 = vunpack.c.h.b16 %v2243
    %v3585 = vunpack.c.l.b16 %v2244
    %v3586 = vunpack.c.h.b16 %v2244
    %v3587 = vunpack.c.l.b16 %v2245
    %v3588 = vunpack.c.h.b16 %v2245
    %v3589 = vunpack.c.l.b16 %v2246
    %v3590 = vunpack.c.h.b16 %v2246
    %v3591 = vunpack.c.l.b16 %v2247
    %v3592 = vunpack.c.h.b16 %v2247
    %v3593 = vunpack.c.l.b16 %v2248
    %v3594 = vunpack.c.h.b16 %v2248
    %v3595 = vunpack.c.l.b16 %v2249
    %v3596 = vunpack.c.h.b16 %v2249
    %v3597 = vunpack.c.l.b16 %v2250
    %v3598 = vunpack.c.h.b16 %v2250
    %v3599 = vunpack.c.l.b16 %v2251
    %v3600 = vunpack.c.h.b16 %v2251
    %v3601 = vunpack.c.l.b16 %v2252
    %v3602 = vunpack.c.h.b16 %v2252
    %v3603 = vunpack.c.l.b16 %v2253
    %v3604 = vunpack.c.h.b16 %v2253
    %v3605 = vunpack.c.l.b16 %v2254
    %v3606 = vunpack.c.h.b16 %v2254
    %v3607 = vunpack.c.l.b16 %v2255
    %v3608 = vunpack.c.h.b16 %v2255
    %v3609 = vunpack.c.l.b16 %v2256
    %v3610 = vunpack.c.h.b16 %v2256
    %v3611 = vunpack.c.l.b16 %v2257
    %v3612 = vunpack.c.h.b16 %v2257
    %v3613 = vunpack.c.l.b16 %v2258
    %v3614 = vunpack.c.h.b16 %v2258
    %v3615 = vunpack.c.l.b16 %v2259
    %v3616 = vunpack.c.h.b16 %v2259
    %v3617 = vunpack.c.l.b16 %v2260
    %v3618 = vunpack.c.h.b16 %v2260
    %v3619 = vunpack.c.l.b16 %v2261
    %v3620 = vunpack.c.h.b16 %v2261
    %v3621 = vunpack.c.l.b16 %v2262
    %v3622 = vunpack.c.h.b16 %v2262
    %v3623 = vunpack.c.l.b16 %v2263
    %v3624 = vunpack.c.h.b16 %v2263
    %v3625 = vunpack.c.l.b16 %v2264
    %v3626 = vunpack.c.h.b16 %v2264
    %v3627 = vunpack.c.l.b16 %v2265
    %v3628 = vunpack.c.h.b16 %v2265
    %v3629 = vunpack.c.l.b16 %v2266
    %v3630 = vunpack.c.h.b16 %v2266
    %v3631 = vunpack.c.l.b16 %v2267
    %v3632 = vunpack.c.h.b16 %v2267
    %v3633 = vunpack.c.l.b16 %v2268
    %v3634 = vunpack.c.h.b16 %v2268
    %v3635 = vunpack.c.l.b16 %v2269
    %v3636 = vunpack.c.h.b16 %v2269
    %v3637 = vunpack.c.l.b16 %v2270
    %v3638 = vunpack.c.h.b16 %v2270
    %v3639 = vunpack.c.l.b16 %v2271
    %v3640 = vunpack.c.h.b16 %v2271
    %v3641 = vunpack.c.l.b16 %v2272
    %v3642 = vunpack.c.h.b16 %v2272
    %v3643 = vunpack.c.l.b16 %v2273
    %v3644 = vunpack.c.h.b16 %v2273
    %v3645 = vunpack.c.l.b16 %v2274
    %v3646 = vunpack.c.h.b16 %v2274
    %v3647 = vunpack.c.l.b16 %v2275
    %v3648 = vunpack.c.h.b16 %v2275
    %v3649 = vunpack.c.l.b16 %v2276
    %v3650 = vunpack.c.h.b16 %v2276
    %v3651 = vunpack.c.l.b16 %v2277
    %v3652 = vunpack.c.h.b16 %v2277
    %v3653 = vunpack.c.l.b16 %v2278
    %v3654 = vunpack.c.h.b16 %v2278
    %v3655 = vunpack.c.l.b16 %v2279
    %v3656 = vunpack.c.h.b16 %v2279
    %v3657 = vunpack.c.l.b16 %v2280
    %v3658 = vunpack.c.h.b16 %v2280
    %v3659 = vunpack.c.l.b16 %v2281
    %v3660 = vunpack.c.h.b16 %v2281
    %v3661 = vunpack.c.l.b16 %v2282
    %v3662 = vunpack.c.h.b16 %v2282
    %v3663 = vunpack.c.l.b16 %v2283
    %v3664 = vunpack.c.h.b16 %v2283
    %v3665 = vunpack.c.l.b16 %v2284
    %v3666 = vunpack.c.h.b16 %v2284
    %v3667 = vunpack.c.l.b16 %v2285
    %v3668 = vunpack.c.h.b16 %v2285
    %v3669 = vunpack.c.l.b16 %v2286
    %v3670 = vunpack.c.h.b16 %v2286
    %v3671 = vunpack.c.l.b16 %v2287
    %v3672 = vunpack.c.h.b16 %v2287
    %v3673 = vunpack.c.l.b16 %v2288
    %v3674 = vunpack.c.h.b16 %v2288
    %v3675 = vunpack.c.l.b16 %v2289
    %v3676 = vunpack.c.h.b16 %v2289
    %v3677 = vunpack.c.l.b16 %v2290
    %v3678 = vunpack.c.h.b16 %v2290
    %v3679 = vunpack.c.l.b16 %v2291
    %v3680 = vunpack.c.h.b16 %v2291
    %v3681 = vunpack.c.l.b16 %v2292
    %v3682 = vunpack.c.h.b16 %v2292
    %v3683 = vunpack.c.l.b16 %v2293
    %v3684 = vunpack.c.h.b16 %v2293
    %v3685 = vunpack.c.l.b16 %v2294
    %v3686 = vunpack.c.h.b16 %v2294
    %v3687 = vunpack.c.l.b16 %v2295
    %v3688 = vunpack.c.h.b16 %v2295
    %v3689 = vunpack.c.l.b16 %v2296
    %v3690 = vunpack.c.h.b16 %v2296
    %v3691 = vunpack.c.l.b16 %v2297
    %v3692 = vunpack.c.h.b16 %v2297
    %v3693 = vunpack.c.l.b16 %v2298
    %v3694 = vunpack.c.h.b16 %v2298
    %v3695 = vunpack.c.l.b16 %v2299
    %v3696 = vunpack.c.h.b16 %v2299
    %v3697 = vunpack.c.l.b16 %v2300
    %v3698 = vunpack.c.h.b16 %v2300
    %v3699 = vunpack.c.l.b16 %v2301
    %v3700 = vunpack.c.h.b16 %v2301
    %v3701 = vunpack.c.l.b16 %v2302
    %v3702 = vunpack.c.h.b16 %v2302
    %v3703 = vunpack.c.l.b16 %v2303
    %v3704 = vunpack.c.h.b16 %v2303
    %v3705 = vunpack.c.l.b16 %v2304
    %v3706 = vunpack.c.h.b16 %v2304
    %v3707 = vunpack.c.l.b16 %v2305
    %v3708 = vunpack.c.h.b16 %v2305
    %v3709 = vunpack.c.l.b16 %v2306
    %v3710 = vunpack.c.h.b16 %v2306
    %v3711 = vunpack.c.l.b16 %v2307
    %v3712 = vunpack.c.h.b16 %v2307
    %v3713 = vunpack.c.l.b16 %v2308
    %v3714 = vunpack.c.h.b16 %v2308
    %v3715 = vunpack.c.l.b16 %v2309
    %v3716 = vunpack.c.h.b16 %v2309
    %v3717 = vunpack.c.l.b16 %v2310
    %v3718 = vunpack.c.h.b16 %v2310
    %v3719 = vunpack.c.l.b16 %v2311
    %v3720 = vunpack.c.h.b16 %v2311
    %v3721 = vunpack.c.l.b16 %v2312
    %v3722 = vunpack.c.h.b16 %v2312
    %v3723 = vunpack.c.l.b16 %v2313
    %v3724 = vunpack.c.h.b16 %v2313
    %v3725 = vunpack.c.l.b16 %v2314
    %v3726 = vunpack.c.h.b16 %v2314
    %v3727 = vunpack.c.l.b16 %v2315
    %v3728 = vunpack.c.h.b16 %v2315
    %v3729 = vunpack.c.l.b16 %v2316
    %v3730 = vunpack.c.h.b16 %v2316
    %v3731 = vunpack.c.l.b16 %v2317
    %v3732 = vunpack.c.h.b16 %v2317
    %v3733 = vunpack.c.l.b16 %v2318
    %v3734 = vunpack.c.h.b16 %v2318
    %v3735 = vunpack.c.l.b16 %v2319
    %v3736 = vunpack.c.h.b16 %v2319
    %v3737 = vunpack.c.l.b16 %v2320
    %v3738 = vunpack.c.h.b16 %v2320
    %v3739 = vunpack.c.l.b16 %v2321
    %v3740 = vunpack.c.h.b16 %v2321
    %v3741 = vunpack.c.l.b16 %v2322
    %v3742 = vunpack.c.h.b16 %v2322
    %v3743 = vunpack.c.l.b16 %v2323
    %v3744 = vunpack.c.h.b16 %v2323
    %v3745 = vunpack.c.l.b16 %v2324
    %v3746 = vunpack.c.h.b16 %v2324
    %v3747 = vunpack.c.l.b16 %v2325
    %v3748 = vunpack.c.h.b16 %v2325
    %v3749 = vunpack.c.l.b16 %v2326
    %v3750 = vunpack.c.h.b16 %v2326
    %v3751 = vunpack.c.l.b16 %v2327
    %v3752 = vunpack.c.h.b16 %v2327
    %v3753 = vunpack.c.l.b16 %v2328
    %v3754 = vunpack.c.h.b16 %v2328
    %v3755 = vunpack.c.l.b16 %v2329
    %v3756 = vunpack.c.h.b16 %v2329
    %v3757 = vunpack.c.l.b16 %v2330
    %v3758 = vunpack.c.h.b16 %v2330
    %v3759 = vunpack.c.l.b16 %v2331
    %v3760 = vunpack.c.h.b16 %v2331
    %v3761 = vunpack.c.l.b16 %v2332
    %v3762 = vunpack.c.h.b16 %v2332
    %v3763 = vunpack.c.l.b16 %v2333
    %v3764 = vunpack.c.h.b16 %v2333
    %v3765 = vunpack.c.l.b16 %v2334
    %v3766 = vunpack.c.h.b16 %v2334
    %v3767 = vunpack.c.l.b16 %v2335
    %v3768 = vunpack.c.h.b16 %v2335
    %v3769 = vunpack.c.l.b16 %v2336
    %v3770 = vunpack.c.h.b16 %v2336
    %v3771 = vunpack.c.l.b16 %v2337
    %v3772 = vunpack.c.h.b16 %v2337
    %v3773 = vunpack.c.l.b16 %v2338
    %v3774 = vunpack.c.h.b16 %v2338
    %v3775 = vunpack.c.l.b16 %v2339
    %v3776 = vunpack.c.h.b16 %v2339
    %v3777 = vunpack.c.l.b16 %v2340
    %v3778 = vunpack.c.h.b16 %v2340
    %v3779 = vunpack.c.l.b16 %v2341
    %v3780 = vunpack.c.h.b16 %v2341
    %v3781 = vunpack.c.l.b16 %v2342
    %v3782 = vunpack.c.h.b16 %v2342
    %v3783 = vunpack.c.l.b16 %v2343
    %v3784 = vunpack.c.h.b16 %v2343
    %v3785 = vunpack.c.l.b16 %v2344
    %v3786 = vunpack.c.h.b16 %v2344
    %v3787 = vunpack.c.l.b16 %v2345
    %v3788 = vunpack.c.h.b16 %v2345
    %v3789 = vunpack.c.l.b16 %v2346
    %v3790 = vunpack.c.h.b16 %v2346
    %v3791 = vunpack.c.l.b16 %v2347
    %v3792 = vunpack.c.h.b16 %v2347
    %v3793 = vunpack.c.l.b16 %v2348
    %v3794 = vunpack.c.h.b16 %v2348
    %v3795 = vunpack.c.l.b16 %v2349
    %v3796 = vunpack.c.h.b16 %v2349
    %v3797 = vunpack.c.l.b16 %v2350
    %v3798 = vunpack.c.h.b16 %v2350
    %v3799 = vunpack.c.l.b16 %v2351
    %v3800 = vunpack.c.h.b16 %v2351
    %v3801 = vunpack.c.l.b16 %v2352
    %v3802 = vunpack.c.h.b16 %v2352
    %v3803 = vunpack.c.l.b16 %v2353
    %v3804 = vunpack.c.h.b16 %v2353
    %v3805 = vunpack.c.l.b16 %v2354
    %v3806 = vunpack.c.h.b16 %v2354
    %v3807 = vunpack.c.l.b16 %v2355
    %v3808 = vunpack.c.h.b16 %v2355
    %v3809 = vunpack.c.l.b16 %v2356
    %v3810 = vunpack.c.h.b16 %v2356
    %v3811 = vunpack.c.l.b16 %v2357
    %v3812 = vunpack.c.h.b16 %v2357
    %v3813 = vunpack.c.l.b16 %v2358
    %v3814 = vunpack.c.h.b16 %v2358
    %v3815 = vunpack.c.l.b16 %v2359
    %v3816 = vunpack.c.h.b16 %v2359
    %v3817 = vunpack.c.l.b16 %v2360
    %v3818 = vunpack.c.h.b16 %v2360
    %v3819 = vunpack.c.l.b16 %v2361
    %v3820 = vunpack.c.h.b16 %v2361
    %v3821 = vunpack.c.l.b16 %v2362
    %v3822 = vunpack.c.h.b16 %v2362
    %v3823 = vunpack.c.l.b16 %v2363
    %v3824 = vunpack.c.h.b16 %v2363
    %v3825 = vunpack.c.l.b16 %v2364
    %v3826 = vunpack.c.h.b16 %v2364
    %v3827 = vunpack.c.l.b16 %v2365
    %v3828 = vunpack.c.h.b16 %v2365
    %v3829 = vunpack.c.l.b16 %v2366
    %v3830 = vunpack.c.h.b16 %v2366
    %v3831 = vunpack.c.l.b16 %v2367
    %v3832 = vunpack.c.h.b16 %v2367
    %v3833 = vunpack.c.l.b16 %v2368
    %v3834 = vunpack.c.h.b16 %v2368
    %v3835 = vunpack.c.l.b16 %v2369
    %v3836 = vunpack.c.h.b16 %v2369
    %v3837 = vunpack.c.l.b16 %v2370
    %v3838 = vunpack.c.h.b16 %v2370
    %v3839 = vunpack.c.l.b16 %v2371
    %v3840 = vunpack.c.h.b16 %v2371
    %v3841 = vunpack.c.l.b16 %v2372
    %v3842 = vunpack.c.h.b16 %v2372
    %v3843 = vunpack.c.l.b16 %v2373
    %v3844 = vunpack.c.h.b16 %v2373
    %v3845 = vunpack.c.l.b16 %v2374
    %v3846 = vunpack.c.h.b16 %v2374
    %v3847 = vunpack.c.l.b16 %v2375
    %v3848 = vunpack.c.h.b16 %v2375
    %v3849 = vunpack.c.l.b16 %v2376
    %v3850 = vunpack.c.h.b16 %v2376
    %v3851 = vunpack.c.l.b16 %v2377
    %v3852 = vunpack.c.h.b16 %v2377
    %v3853 = vunpack.c.l.b16 %v2378
    %v3854 = vunpack.c.h.b16 %v2378
    %v3855 = vunpack.c.l.b16 %v2379
    %v3856 = vunpack.c.h.b16 %v2379
    %v3857 = vunpack.c.l.b16 %v2380
    %v3858 = vunpack.c.h.b16 %v2380
    %v3859 = vunpack.c.l.b16 %v2381
    %v3860 = vunpack.c.h.b16 %v2381
    %v3861 = vunpack.c.l.b16 %v2382
    %v3862 = vunpack.c.h.b16 %v2382
    %v3863 = vunpack.c.l.b16 %v2383
    %v3864 = vunpack.c.h.b16 %v2383
    %v3865 = vunpack.c.l.b16 %v2384
    %v3866 = vunpack.c.h.b16 %v2384
    %v3867 = vunpack.c.l.b16 %v2385
    %v3868 = vunpack.c.h.b16 %v2385
    %v3869 = vunpack.c.l.b16 %v2386
    %v3870 = vunpack.c.h.b16 %v2386
    %v3871 = vunpack.c.l.b16 %v2387
    %v3872 = vunpack.c.h.b16 %v2387
    %v3873 = vunpack.c.l.b16 %v2388
    %v3874 = vunpack.c.h.b16 %v2388
    %v3875 = vunpack.c.l.b16 %v2389
    %v3876 = vunpack.c.h.b16 %v2389
    %v3877 = vunpack.c.l.b16 %v2390
    %v3878 = vunpack.c.h.b16 %v2390
    %v3879 = vunpack.c.l.b16 %v2391
    %v3880 = vunpack.c.h.b16 %v2391
    %v3881 = vunpack.c.l.b16 %v2392
    %v3882 = vunpack.c.h.b16 %v2392
    %v3883 = vunpack.c.l.b16 %v2393
    %v3884 = vunpack.c.h.b16 %v2393
    %v3885 = vunpack.c.l.b16 %v2394
    %v3886 = vunpack.c.h.b16 %v2394
    %v3887 = vunpack.c.l.b16 %v2395
    %v3888 = vunpack.c.h.b16 %v2395
    %v3889 = vunpack.c.l.b16 %v2396
    %v3890 = vunpack.c.h.b16 %v2396
    %v3891 = vunpack.c.l.b16 %v2397
    %v3892 = vunpack.c.h.b16 %v2397
    %v3893 = vunpack.c.l.b16 %v2398
    %v3894 = vunpack.c.h.b16 %v2398
    %v3895 = vunpack.c.l.b16 %v2399
    %v3896 = vunpack.c.h.b16 %v2399
    %v3897 = vunpack.c.l.b16 %v2400
    %v3898 = vunpack.c.h.b16 %v2400
    %v3899 = vunpack.c.l.b16 %v2401
    %v3900 = vunpack.c.h.b16 %v2401
    %v3901 = vunpack.c.l.b16 %v2402
    %v3902 = vunpack.c.h.b16 %v2402
    %v3903 = vunpack.c.l.b16 %v2403
    %v3904 = vunpack.c.h.b16 %v2403
    %v3905 = vunpack.c.l.b16 %v2404
    %v3906 = vunpack.c.h.b16 %v2404
    %v3907 = vunpack.c.l.b16 %v2405
    %v3908 = vunpack.c.h.b16 %v2405
    %v3909 = vunpack.c.l.b16 %v2406
    %v3910 = vunpack.c.h.b16 %v2406
    %v3911 = vunpack.c.l.b16 %v2407
    %v3912 = vunpack.c.h.b16 %v2407
    %v3913 = vunpack.c.l.b16 %v2408
    %v3914 = vunpack.c.h.b16 %v2408
    %v3915 = vunpack.c.l.b16 %v2409
    %v3916 = vunpack.c.h.b16 %v2409
    %v3917 = vunpack.c.l.b16 %v2410
    %v3918 = vunpack.c.h.b16 %v2410
    %v3919 = vunpack.c.l.b16 %v2411
    %v3920 = vunpack.c.h.b16 %v2411
    %v3921 = vunpack.c.l.b16 %v2412
    %v3922 = vunpack.c.h.b16 %v2412
    %v3923 = vunpack.c.l.b16 %v2413
    %v3924 = vunpack.c.h.b16 %v2413
    %v3925 = vunpack.c.l.b16 %v2414
    %v3926 = vunpack.c.h.b16 %v2414
    %v3927 = vunpack.c.l.b16 %v2415
    %v3928 = vunpack.c.h.b16 %v2415
    %v3929 = vunpack.c.l.b16 %v2416
    %v3930 = vunpack.c.h.b16 %v2416
    %v3931 = vunpack.c.l.b16 %v2417
    %v3932 = vunpack.c.h.b16 %v2417
    %v3933 = vunpack.c.l.b16 %v2418
    %v3934 = vunpack.c.h.b16 %v2418
    %v3935 = vunpack.c.l.b16 %v2419
    %v3936 = vunpack.c.h.b16 %v2419
    %v3937 = vunpack.c.l.b16 %v2420
    %v3938 = vunpack.c.h.b16 %v2420
    %v3939 = vunpack.c.l.b16 %v2421
    %v3940 = vunpack.c.h.b16 %v2421
    %v3941 = vunpack.c.l.b16 %v2422
    %v3942 = vunpack.c.h.b16 %v2422
    %v3943 = vunpack.c.l.b16 %v2423
    %v3944 = vunpack.c.h.b16 %v2423
    %v3945 = vunpack.c.l.b16 %v2424
    %v3946 = vunpack.c.h.b16 %v2424
    %v3947 = vunpack.c.l.b16 %v2425
    %v3948 = vunpack.c.h.b16 %v2425
    %v3949 = vunpack.c.l.b16 %v2426
    %v3950 = vunpack.c.h.b16 %v2426
    %v3951 = vunpack.c.l.b16 %v2427
    %v3952 = vunpack.c.h.b16 %v2427
    %v3953 = vunpack.c.l.b16 %v2428
    %v3954 = vunpack.c.h.b16 %v2428
    %v3955 = vunpack.c.l.b16 %v2429
    %v3956 = vunpack.c.h.b16 %v2429
    %v3957 = vunpack.c.l.b16 %v2430
    %v3958 = vunpack.c.h.b16 %v2430
    %v3959 = vunpack.c.l.b16 %v2431
    %v3960 = vunpack.c.h.b16 %v2431
    %v3961 = vunpack.c.l.b16 %v2432
    %v3962 = vunpack.c.h.b16 %v2432
    %v3963 = vunpack.c.l.b16 %v2433
    %v3964 = vunpack.c.h.b16 %v2433
    %v3965 = vunpack.c.l.b16 %v2434
    %v3966 = vunpack.c.h.b16 %v2434
    %v3967 = vunpack.c.l.b16 %v2435
    %v3968 = vunpack.c.h.b16 %v2435
    %v3969 = vunpack.c.l.b16 %v2436
    %v3970 = vunpack.c.h.b16 %v2436
    %v3971 = vunpack.c.l.b16 %v2437
    %v3972 = vunpack.c.h.b16 %v2437
    %v3973 = vunpack.c.l.b16 %v2438
    %v3974 = vunpack.c.h.b16 %v2438
    %v3975 = vunpack.c.l.b16 %v2439
    %v3976 = vunpack.c.h.b16 %v2439
    %v3977 = vunpack.c.l.b16 %v2440
    %v3978 = vunpack.c.h.b16 %v2440
    %v3979 = vunpack.c.l.b16 %v2441
    %v3980 = vunpack.c.h.b16 %v2441
    %v3981 = vunpack.c.l.b16 %v2442
    %v3982 = vunpack.c.h.b16 %v2442
    %v3983 = vunpack.c.l.b16 %v2443
    %v3984 = vunpack.c.h.b16 %v2443
    %v3985 = vunpack.c.l.b16 %v2444
    %v3986 = vunpack.c.h.b16 %v2444
    %v3987 = vunpack.c.l.b16 %v2445
    %v3988 = vunpack.c.h.b16 %v2445
    %v3989 = vunpack.c.l.b16 %v2446
    %v3990 = vunpack.c.h.b16 %v2446
    %v3991 = vunpack.c.l.b16 %v2447
    %v3992 = vunpack.c.h.b16 %v2447
    %v3993 = vunpack.c.l.b16 %v2448
    %v3994 = vunpack.c.h.b16 %v2448
    %v3995 = vunpack.c.l.b16 %v2449
    %v3996 = vunpack.c.h.b16 %v2449
    %v3997 = vunpack.c.l.b16 %v2450
    %v3998 = vunpack.c.h.b16 %v2450
    %v3999 = vunpack.c.l.b16 %v2451
    %v4000 = vunpack.c.h.b16 %v2451
    %v4001 = vunpack.c.l.b16 %v2452
    %v4002 = vunpack.c.h.b16 %v2452
    %v4003 = vunpack.c.l.b16 %v2453
    %v4004 = vunpack.c.h.b16 %v2453
    %v4005 = vunpack.c.l.b16 %v2454
    %v4006 = vunpack.c.h.b16 %v2454
    %v4007 = vunpack.c.l.b16 %v2455
    %v4008 = vunpack.c.h.b16 %v2455
    %v4009 = vunpack.c.l.b16 %v2456
    %v4010 = vunpack.c.h.b16 %v2456
    %v4011 = vpack.c.b16 %v2995, %v2987
    %v4012 = vpack.c.b16 %v2996, %v2988
    %v4013 = vpack.c.b16 %v2997, %v2989
    %v4014 = vpack.c.b16 %v2998, %v2990
    %v4015 = vpack.c.b16 %v2999, %v2991
    %v4016 = vpack.c.b16 %v3000, %v2992
    %v4017 = vpack.c.b16 %v3001, %v2993
    %v4018 = vpack.c.b16 %v3002, %v2994
    %v4019 = vpack.c.b16 %v3011, %v3003
    %v4020 = vpack.c.b16 %v3012, %v3004
    %v4021 = vpack.c.b16 %v3013, %v3005
    %v4022 = vpack.c.b16 %v3014, %v3006
    %v4023 = vpack.c.b16 %v3015, %v3007
    %v4024 = vpack.c.b16 %v3016, %v3008
    %v4025 = vpack.c.b16 %v3017, %v3009
    %v4026 = vpack.c.b16 %v3018, %v3010
    %v4027 = vpack.c.b16 %v3027, %v3019
    %v4028 = vpack.c.b16 %v3028, %v3020
    %v4029 = vpack.c.b16 %v3029, %v3021
    %v4030 = vpack.c.b16 %v3030, %v3022
    %v4031 = vpack.c.b16 %v3031, %v3023
    %v4032 = vpack.c.b16 %v3032, %v3024
    %v4033 = vpack.c.b16 %v3033, %v3025
    %v4034 = vpack.c.b16 %v3034, %v3026
    %v4035 = vpack.c.b16 %v3043, %v3035
    %v4036 = vpack.c.b16 %v3044, %v3036
    %v4037 = vpack.c.b16 %v3045, %v3037
    %v4038 = vpack.c.b16 %v3046, %v3038
    %v4039 = vpack.c.b16 %v3047, %v3039
    %v4040 = vpack.c.b16 %v3048, %v3040
    %v4041 = vpack.c.b16 %v3049, %v3041
    %v4042 = vpack.c.b16 %v3050, %v3042
    %v4043 = vpack.c.b16 %v3059, %v3051
    %v4044 = vpack.c.b16 %v3060, %v3052
    %v4045 = vpack.c.b16 %v3061, %v3053
    %v4046 = vpack.c.b16 %v3062, %v3054
    %v4047 = vpack.c.b16 %v3063, %v3055
    %v4048 = vpack.c.b16 %v3064, %v3056
    %v4049 = vpack.c.b16 %v3065, %v3057
    %v4050 = vpack.c.b16 %v3066, %v3058
    %v4051 = vpack.c.b16 %v3075, %v3067
    %v4052 = vpack.c.b16 %v3076, %v3068
    %v4053 = vpack.c.b16 %v3077, %v3069
    %v4054 = vpack.c.b16 %v3078, %v3070
    %v4055 = vpack.c.b16 %v3079, %v3071
    %v4056 = vpack.c.b16 %v3080, %v3072
    %v4057 = vpack.c.b16 %v3081, %v3073
    %v4058 = vpack.c.b16 %v3082, %v3074
    %v4059 = vpack.c.b16 %v3091, %v3083
    %v4060 = vpack.c.b16 %v3092, %v3084
    %v4061 = vpack.c.b16 %v3093, %v3085
    %v4062 = vpack.c.b16 %v3094, %v3086
    %v4063 = vpack.c.b16 %v3095, %v3087
    %v4064 = vpack.c.b16 %v3096, %v3088
    %v4065 = vpack.c.b16 %v3097, %v3089
    %v4066 = vpack.c.b16 %v3098, %v3090
    %v4067 = vpack.c.b16 %v3107, %v3099
    %v4068 = vpack.c.b16 %v3108, %v3100
    %v4069 = vpack.c.b16 %v3109, %v3101
    %v4070 = vpack.c.b16 %v3110, %v3102
    %v4071 = vpack.c.b16 %v3111, %v3103
    %v4072 = vpack.c.b16 %v3112, %v3104
    %v4073 = vpack.c.b16 %v3113, %v3105
    %v4074 = vpack.c.b16 %v3114, %v3106
    %v4075 = vpack.c.b16 %v3123, %v3115
    %v4076 = vpack.c.b16 %v3124, %v3116
    %v4077 = vpack.c.b16 %v3125, %v3117
    %v4078 = vpack.c.b16 %v3126, %v3118
    %v4079 = vpack.c.b16 %v3127, %v3119
    %v4080 = vpack.c.b16 %v3128, %v3120
    %v4081 = vpack.c.b16 %v3129, %v3121
    %v4082 = vpack.c.b16 %v3130, %v3122
    %v4083 = vpack.c.b16 %v3139, %v3131
    %v4084 = vpack.c.b16 %v3140, %v3132
    %v4085 = vpack.c.b16 %v3141, %v3133
    %v4086 = vpack.c.b16 %v3142, %v3134
    %v4087 = vpack.c.b16 %v3143, %v3135
    %v4088 = vpack.c.b16 %v3144, %v3136
    %v4089 = vpack.c.b16 %v3145, %v3137
    %v4090 = vpack.c.b16 %v3146, %v3138
    %v4091 = vpack.c.b16 %v3155, %v3147
    %v4092 = vpack.c.b16 %v3156, %v3148
    %v4093 = vpack.c.b16 %v3157, %v3149
    %v4094 = vpack.c.b16 %v3158, %v3150
    %v4095 = vpack.c.b16 %v3159, %v3151
    %v4096 = vpack.c.b16 %v3160, %v3152
    %v4097 = vpack.c.b16 %v3161, %v3153
    %v4098 = vpack.c.b16 %v3162, %v3154
    %v4099 = vpack.c.b16 %v3171, %v3163
    %v4100 = vpack.c.b16 %v3172, %v3164
    %v4101 = vpack.c.b16 %v3173, %v3165
    %v4102 = vpack.c.b16 %v3174, %v3166
    %v4103 = vpack.c.b16 %v3175, %v3167
    %v4104 = vpack.c.b16 %v3176, %v3168
    %v4105 = vpack.c.b16 %v3177, %v3169
    %v4106 = vpack.c.b16 %v3178, %v3170
    %v4107 = vpack.c.b16 %v3187, %v3179
    %v4108 = vpack.c.b16 %v3188, %v3180
    %v4109 = vpack.c.b16 %v3189, %v3181
    %v4110 = vpack.c.b16 %v3190, %v3182
    %v4111 = vpack.c.b16 %v3191, %v3183
    %v4112 = vpack.c.b16 %v3192, %v3184
    %v4113 = vpack.c.b16 %v3193, %v3185
    %v4114 = vpack.c.b16 %v3194, %v3186
    %v4115 = vpack.c.b16 %v3203, %v3195
    %v4116 = vpack.c.b16 %v3204, %v3196
    %v4117 = vpack.c.b16 %v3205, %v3197
    %v4118 = vpack.c.b16 %v3206, %v3198
    %v4119 = vpack.c.b16 %v3207, %v3199
    %v4120 = vpack.c.b16 %v3208, %v3200
    %v4121 = vpack.c.b16 %v3209, %v3201
    %v4122 = vpack.c.b16 %v3210, %v3202
    %v4123 = vpack.c.b16 %v3219, %v3211
    %v4124 = vpack.c.b16 %v3220, %v3212
    %v4125 = vpack.c.b16 %v3221, %v3213
    %v4126 = vpack.c.b16 %v3222, %v3214
    %v4127 = vpack.c.b16 %v3223, %v3215
    %v4128 = vpack.c.b16 %v3224, %v3216
    %v4129 = vpack.c.b16 %v3225, %v3217
    %v4130 = vpack.c.b16 %v3226, %v3218
    %v4131 = vpack.c.b16 %v3235, %v3227
    %v4132 = vpack.c.b16 %v3236, %v3228
    %v4133 = vpack.c.b16 %v3237, %v3229
    %v4134 = vpack.c.b16 %v3238, %v3230
    %v4135 = vpack.c.b16 %v3239, %v3231
    %v4136 = vpack.c.b16 %v3240, %v3232
    %v4137 = vpack.c.b16 %v3241, %v3233
    %v4138 = vpack.c.b16 %v3242, %v3234
    %v4139 = vpack.c.b16 %v3251, %v3243
    %v4140 = vpack.c.b16 %v3252, %v3244
    %v4141 = vpack.c.b16 %v3253, %v3245
    %v4142 = vpack.c.b16 %v3254, %v3246
    %v4143 = vpack.c.b16 %v3255, %v3247
    %v4144 = vpack.c.b16 %v3256, %v3248
    %v4145 = vpack.c.b16 %v3257, %v3249
    %v4146 = vpack.c.b16 %v3258, %v3250
    %v4147 = vpack.c.b16 %v3267, %v3259
    %v4148 = vpack.c.b16 %v3268, %v3260
    %v4149 = vpack.c.b16 %v3269, %v3261
    %v4150 = vpack.c.b16 %v3270, %v3262
    %v4151 = vpack.c.b16 %v3271, %v3263
    %v4152 = vpack.c.b16 %v3272, %v3264
    %v4153 = vpack.c.b16 %v3273, %v3265
    %v4154 = vpack.c.b16 %v3274, %v3266
    %v4155 = vpack.c.b16 %v3283, %v3275
    %v4156 = vpack.c.b16 %v3284, %v3276
    %v4157 = vpack.c.b16 %v3285, %v3277
    %v4158 = vpack.c.b16 %v3286, %v3278
    %v4159 = vpack.c.b16 %v3287, %v3279
    %v4160 = vpack.c.b16 %v3288, %v3280
    %v4161 = vpack.c.b16 %v3289, %v3281
    %v4162 = vpack.c.b16 %v3290, %v3282
    %v4163 = vpack.c.b16 %v3299, %v3291
    %v4164 = vpack.c.b16 %v3300, %v3292
    %v4165 = vpack.c.b16 %v3301, %v3293
    %v4166 = vpack.c.b16 %v3302, %v3294
    %v4167 = vpack.c.b16 %v3303, %v3295
    %v4168 = vpack.c.b16 %v3304, %v3296
    %v4169 = vpack.c.b16 %v3305, %v3297
    %v4170 = vpack.c.b16 %v3306, %v3298
    %v4171 = vpack.c.b16 %v3315, %v3307
    %v4172 = vpack.c.b16 %v3316, %v3308
    %v4173 = vpack.c.b16 %v3317, %v3309
    %v4174 = vpack.c.b16 %v3318, %v3310
    %v4175 = vpack.c.b16 %v3319, %v3311
    %v4176 = vpack.c.b16 %v3320, %v3312
    %v4177 = vpack.c.b16 %v3321, %v3313
    %v4178 = vpack.c.b16 %v3322, %v3314
    %v4179 = vpack.c.b16 %v3331, %v3323
    %v4180 = vpack.c.b16 %v3332, %v3324
    %v4181 = vpack.c.b16 %v3333, %v3325
    %v4182 = vpack.c.b16 %v3334, %v3326
    %v4183 = vpack.c.b16 %v3335, %v3327
    %v4184 = vpack.c.b16 %v3336, %v3328
    %v4185 = vpack.c.b16 %v3337, %v3329
    %v4186 = vpack.c.b16 %v3338, %v3330
    %v4187 = vpack.c.b16 %v3347, %v3339
    %v4188 = vpack.c.b16 %v3348, %v3340
    %v4189 = vpack.c.b16 %v3349, %v3341
    %v4190 = vpack.c.b16 %v3350, %v3342
    %v4191 = vpack.c.b16 %v3351, %v3343
    %v4192 = vpack.c.b16 %v3352, %v3344
    %v4193 = vpack.c.b16 %v3353, %v3345
    %v4194 = vpack.c.b16 %v3354, %v3346
    %v4195 = vpack.c.b16 %v3363, %v3355
    %v4196 = vpack.c.b16 %v3364, %v3356
    %v4197 = vpack.c.b16 %v3365, %v3357
    %v4198 = vpack.c.b16 %v3366, %v3358
    %v4199 = vpack.c.b16 %v3367, %v3359
    %v4200 = vpack.c.b16 %v3368, %v3360
    %v4201 = vpack.c.b16 %v3369, %v3361
    %v4202 = vpack.c.b16 %v3370, %v3362
    %v4203 = vpack.c.b16 %v3379, %v3371
    %v4204 = vpack.c.b16 %v3380, %v3372
    %v4205 = vpack.c.b16 %v3381, %v3373
    %v4206 = vpack.c.b16 %v3382, %v3374
    %v4207 = vpack.c.b16 %v3383, %v3375
    %v4208 = vpack.c.b16 %v3384, %v3376
    %v4209 = vpack.c.b16 %v3385, %v3377
    %v4210 = vpack.c.b16 %v3386, %v3378
    %v4211 = vpack.c.b16 %v3395, %v3387
    %v4212 = vpack.c.b16 %v3396, %v3388
    %v4213 = vpack.c.b16 %v3397, %v3389
    %v4214 = vpack.c.b16 %v3398, %v3390
    %v4215 = vpack.c.b16 %v3399, %v3391
    %v4216 = vpack.c.b16 %v3400, %v3392
    %v4217 = vpack.c.b16 %v3401, %v3393
    %v4218 = vpack.c.b16 %v3402, %v3394
    %v4219 = vpack.c.b16 %v3411, %v3403
    %v4220 = vpack.c.b16 %v3412, %v3404
    %v4221 = vpack.c.b16 %v3413, %v3405
    %v4222 = vpack.c.b16 %v3414, %v3406
    %v4223 = vpack.c.b16 %v3415, %v3407
    %v4224 = vpack.c.b16 %v3416, %v3408
    %v4225 = vpack.c.b16 %v3417, %v3409
    %v4226 = vpack.c.b16 %v3418, %v3410
    %v4227 = vpack.c.b16 %v3427, %v3419
    %v4228 = vpack.c.b16 %v3428, %v3420
    %v4229 = vpack.c.b16 %v3429, %v3421
    %v4230 = vpack.c.b16 %v3430, %v3422
    %v4231 = vpack.c.b16 %v3431, %v3423
    %v4232 = vpack.c.b16 %v3432, %v3424
    %v4233 = vpack.c.b16 %v3433, %v3425
    %v4234 = vpack.c.b16 %v3434, %v3426
    %v4235 = vpack.c.b16 %v3443, %v3435
    %v4236 = vpack.c.b16 %v3444, %v3436
    %v4237 = vpack.c.b16 %v3445, %v3437
    %v4238 = vpack.c.b16 %v3446, %v3438
    %v4239 = vpack.c.b16 %v3447, %v3439
    %v4240 = vpack.c.b16 %v3448, %v3440
    %v4241 = vpack.c.b16 %v3449, %v3441
    %v4242 = vpack.c.b16 %v3450, %v3442
    %v4243 = vpack.c.b16 %v3459, %v3451
    %v4244 = vpack.c.b16 %v3460, %v3452
    %v4245 = vpack.c.b16 %v3461, %v3453
    %v4246 = vpack.c.b16 %v3462, %v3454
    %v4247 = vpack.c.b16 %v3463, %v3455
    %v4248 = vpack.c.b16 %v3464, %v3456
    %v4249 = vpack.c.b16 %v3465, %v3457
    %v4250 = vpack.c.b16 %v3466, %v3458
    %v4251 = vpack.c.b16 %v3475, %v3467
    %v4252 = vpack.c.b16 %v3476, %v3468
    %v4253 = vpack.c.b16 %v3477, %v3469
    %v4254 = vpack.c.b16 %v3478, %v3470
    %v4255 = vpack.c.b16 %v3479, %v3471
    %v4256 = vpack.c.b16 %v3480, %v3472
    %v4257 = vpack.c.b16 %v3481, %v3473
    %v4258 = vpack.c.b16 %v3482, %v3474
    %v4259 = vpack.c.b16 %v3491, %v3483
    %v4260 = vpack.c.b16 %v3492, %v3484
    %v4261 = vpack.c.b16 %v3493, %v3485
    %v4262 = vpack.c.b16 %v3494, %v3486
    %v4263 = vpack.c.b16 %v3495, %v3487
    %v4264 = vpack.c.b16 %v3496, %v3488
    %v4265 = vpack.c.b16 %v3497, %v3489
    %v4266 = vpack.c.b16 %v3498, %v3490
    %v4267 = vpack.c.b16 %v3507, %v3499
    %v4268 = vpack.c.b16 %v3508, %v3500
    %v4269 = vpack.c.b16 %v3509, %v3501
    %v4270 = vpack.c.b16 %v3510, %v3502
    %v4271 = vpack.c.b16 %v3511, %v3503
    %v4272 = vpack.c.b16 %v3512, %v3504
    %v4273 = vpack.c.b16 %v3513, %v3505
    %v4274 = vpack.c.b16 %v3514, %v3506
    %v4275 = vpack.c.b16 %v3523, %v3515
    %v4276 = vpack.c.b16 %v3524, %v3516
    %v4277 = vpack.c.b16 %v3525, %v3517
    %v4278 = vpack.c.b16 %v3526, %v3518
    %v4279 = vpack.c.b16 %v3527, %v3519
    %v4280 = vpack.c.b16 %v3528, %v3520
    %v4281 = vpack.c.b16 %v3529, %v3521
    %v4282 = vpack.c.b16 %v3530, %v3522
    %v4283 = vpack.c.b16 %v3539, %v3531
    %v4284 = vpack.c.b16 %v3540, %v3532
    %v4285 = vpack.c.b16 %v3541, %v3533
    %v4286 = vpack.c.b16 %v3542, %v3534
    %v4287 = vpack.c.b16 %v3543, %v3535
    %v4288 = vpack.c.b16 %v3544, %v3536
    %v4289 = vpack.c.b16 %v3545, %v3537
    %v4290 = vpack.c.b16 %v3546, %v3538
    %v4291 = vpack.c.b16 %v3555, %v3547
    %v4292 = vpack.c.b16 %v3556, %v3548
    %v4293 = vpack.c.b16 %v3557, %v3549
    %v4294 = vpack.c.b16 %v3558, %v3550
    %v4295 = vpack.c.b16 %v3559, %v3551
    %v4296 = vpack.c.b16 %v3560, %v3552
    %v4297 = vpack.c.b16 %v3561, %v3553
    %v4298 = vpack.c.b16 %v3562, %v3554
    %v4299 = vpack.c.b16 %v3571, %v3563
    %v4300 = vpack.c.b16 %v3572, %v3564
    %v4301 = vpack.c.b16 %v3573, %v3565
    %v4302 = vpack.c.b16 %v3574, %v3566
    %v4303 = vpack.c.b16 %v3575, %v3567
    %v4304 = vpack.c.b16 %v3576, %v3568
    %v4305 = vpack.c.b16 %v3577, %v3569
    %v4306 = vpack.c.b16 %v3578, %v3570
    %v4307 = vpack.c.b16 %v3587, %v3579
    %v4308 = vpack.c.b16 %v3588, %v3580
    %v4309 = vpack.c.b16 %v3589, %v3581
    %v4310 = vpack.c.b16 %v3590, %v3582
    %v4311 = vpack.c.b16 %v3591, %v3583
    %v4312 = vpack.c.b16 %v3592, %v3584
    %v4313 = vpack.c.b16 %v3593, %v3585
    %v4314 = vpack.c.b16 %v3594, %v3586
    %v4315 = vpack.c.b16 %v3603, %v3595
    %v4316 = vpack.c.b16 %v3604, %v3596
    %v4317 = vpack.c.b16 %v3605, %v3597
    %v4318 = vpack.c.b16 %v3606, %v3598
    %v4319 = vpack.c.b16 %v3607, %v3599
    %v4320 = vpack.c.b16 %v3608, %v3600
    %v4321 = vpack.c.b16 %v3609, %v3601
    %v4322 = vpack.c.b16 %v3610, %v3602
    %v4323 = vpack.c.b16 %v3619, %v3611
    %v4324 = vpack.c.b16 %v3620, %v3612
    %v4325 = vpack.c.b16 %v3621, %v3613
    %v4326 = vpack.c.b16 %v3622, %v3614
    %v4327 = vpack.c.b16 %v3623, %v3615
    %v4328 = vpack.c.b16 %v3624, %v3616
    %v4329 = vpack.c.b16 %v3625, %v3617
    %v4330 = vpack.c.b16 %v3626, %v3618
    %v4331 = vpack.c.b16 %v3635, %v3627
    %v4332 = vpack.c.b16 %v3636, %v3628
    %v4333 = vpack.c.b16 %v3637, %v3629
    %v4334 = vpack.c.b16 %v3638, %v3630
    %v4335 = vpack.c.b16 %v3639, %v3631
    %v4336 = vpack.c.b16 %v3640, %v3632
    %v4337 = vpack.c.b16 %v3641, %v3633
    %v4338 = vpack.c.b16 %v3642, %v3634
    %v4339 = vpack.c.b16 %v3651, %v3643
    %v4340 = vpack.c.b16 %v3652, %v3644
    %v4341 = vpack.c.b16 %v3653, %v3645
    %v4342 = vpack.c.b16 %v3654, %v3646
    %v4343 = vpack.c.b16 %v3655, %v3647
    %v4344 = vpack.c.b16 %v3656, %v3648
    %v4345 = vpack.c.b16 %v3657, %v3649
    %v4346 = vpack.c.b16 %v3658, %v3650
    %v4347 = vpack.c.b16 %v3667, %v3659
    %v4348 = vpack.c.b16 %v3668, %v3660
    %v4349 = vpack.c.b16 %v3669, %v3661
    %v4350 = vpack.c.b16 %v3670, %v3662
    %v4351 = vpack.c.b16 %v3671, %v3663
    %v4352 = vpack.c.b16 %v3672, %v3664
    %v4353 = vpack.c.b16 %v3673, %v3665
    %v4354 = vpack.c.b16 %v3674, %v3666
    %v4355 = vpack.c.b16 %v3683, %v3675
    %v4356 = vpack.c.b16 %v3684, %v3676
    %v4357 = vpack.c.b16 %v3685, %v3677
    %v4358 = vpack.c.b16 %v3686, %v3678
    %v4359 = vpack.c.b16 %v3687, %v3679
    %v4360 = vpack.c.b16 %v3688, %v3680
    %v4361 = vpack.c.b16 %v3689, %v3681
    %v4362 = vpack.c.b16 %v3690, %v3682
    %v4363 = vpack.c.b16 %v3699, %v3691
    %v4364 = vpack.c.b16 %v3700, %v3692
    %v4365 = vpack.c.b16 %v3701, %v3693
    %v4366 = vpack.c.b16 %v3702, %v3694
    %v4367 = vpack.c.b16 %v3703, %v3695
    %v4368 = vpack.c.b16 %v3704, %v3696
    %v4369 = vpack.c.b16 %v3705, %v3697
    %v4370 = vpack.c.b16 %v3706, %v3698
    %v4371 = vpack.c.b16 %v3715, %v3707
    %v4372 = vpack.c.b16 %v3716, %v3708
    %v4373 = vpack.c.b16 %v3717, %v3709
    %v4374 = vpack.c.b16 %v3718, %v3710
    %v4375 = vpack.c.b16 %v3719, %v3711
    %v4376 = vpack.c.b16 %v3720, %v3712
    %v4377 = vpack.c.b16 %v3721, %v3713
    %v4378 = vpack.c.b16 %v3722, %v3714
    %v4379 = vpack.c.b16 %v3731, %v3723
    %v4380 = vpack.c.b16 %v3732, %v3724
    %v4381 = vpack.c.b16 %v3733, %v3725
    %v4382 = vpack.c.b16 %v3734, %v3726
    %v4383 = vpack.c.b16 %v3735, %v3727
    %v4384 = vpack.c.b16 %v3736, %v3728
    %v4385 = vpack.c.b16 %v3737, %v3729
    %v4386 = vpack.c.b16 %v3738, %v3730
    %v4387 = vpack.c.b16 %v3747, %v3739
    %v4388 = vpack.c.b16 %v3748, %v3740
    %v4389 = vpack.c.b16 %v3749, %v3741
    %v4390 = vpack.c.b16 %v3750, %v3742
    %v4391 = vpack.c.b16 %v3751, %v3743
    %v4392 = vpack.c.b16 %v3752, %v3744
    %v4393 = vpack.c.b16 %v3753, %v3745
    %v4394 = vpack.c.b16 %v3754, %v3746
    %v4395 = vpack.c.b16 %v3763, %v3755
    %v4396 = vpack.c.b16 %v3764, %v3756
    %v4397 = vpack.c.b16 %v3765, %v3757
    %v4398 = vpack.c.b16 %v3766, %v3758
    %v4399 = vpack.c.b16 %v3767, %v3759
    %v4400 = vpack.c.b16 %v3768, %v3760
    %v4401 = vpack.c.b16 %v3769, %v3761
    %v4402 = vpack.c.b16 %v3770, %v3762
    %v4403 = vpack.c.b16 %v3779, %v3771
    %v4404 = vpack.c.b16 %v3780, %v3772
    %v4405 = vpack.c.b16 %v3781, %v3773
    %v4406 = vpack.c.b16 %v3782, %v3774
    %v4407 = vpack.c.b16 %v3783, %v3775
    %v4408 = vpack.c.b16 %v3784, %v3776
    %v4409 = vpack.c.b16 %v3785, %v3777
    %v4410 = vpack.c.b16 %v3786, %v3778
    %v4411 = vpack.c.b16 %v3795, %v3787
    %v4412 = vpack.c.b16 %v3796, %v3788
    %v4413 = vpack.c.b16 %v3797, %v3789
    %v4414 = vpack.c.b16 %v3798, %v3790
    %v4415 = vpack.c.b16 %v3799, %v3791
    %v4416 = vpack.c.b16 %v3800, %v3792
    %v4417 = vpack.c.b16 %v3801, %v3793
    %v4418 = vpack.c.b16 %v3802, %v3794
    %v4419 = vpack.c.b16 %v3811, %v3803
    %v4420 = vpack.c.b16 %v3812, %v3804
    %v4421 = vpack.c.b16 %v3813, %v3805
    %v4422 = vpack.c.b16 %v3814, %v3806
    %v4423 = vpack.c.b16 %v3815, %v3807
    %v4424 = vpack.c.b16 %v3816, %v3808
    %v4425 = vpack.c.b16 %v3817, %v3809
    %v4426 = vpack.c.b16 %v3818, %v3810
    %v4427 = vpack.c.b16 %v3827, %v3819
    %v4428 = vpack.c.b16 %v3828, %v3820
    %v4429 = vpack.c.b16 %v3829, %v3821
    %v4430 = vpack.c.b16 %v3830, %v3822
    %v4431 = vpack.c.b16 %v3831, %v3823
    %v4432 = vpack.c.b16 %v3832, %v3824
    %v4433 = vpack.c.b16 %v3833, %v3825
    %v4434 = vpack.c.b16 %v3834, %v3826
    %v4435 = vpack.c.b16 %v3843, %v3835
    %v4436 = vpack.c.b16 %v3844, %v3836
    %v4437 = vpack.c.b16 %v3845, %v3837
    %v4438 = vpack.c.b16 %v3846, %v3838
    %v4439 = vpack.c.b16 %v3847, %v3839
    %v4440 = vpack.c.b16 %v3848, %v3840
    %v4441 = vpack.c.b16 %v3849, %v3841
    %v4442 = vpack.c.b16 %v3850, %v3842
    %v4443 = vpack.c.b16 %v3859, %v3851
    %v4444 = vpack.c.b16 %v3860, %v3852
    %v4445 = vpack.c.b16 %v3861, %v3853
    %v4446 = vpack.c.b16 %v3862, %v3854
    %v4447 = vpack.c.b16 %v3863, %v3855
    %v4448 = vpack.c.b16 %v3864, %v3856
    %v4449 = vpack.c.b16 %v3865, %v3857
    %v4450 = vpack.c.b16 %v3866, %v3858
    %v4451 = vpack.c.b16 %v3875, %v3867
    %v4452 = vpack.c.b16 %v3876, %v3868
    %v4453 = vpack.c.b16 %v3877, %v3869
    %v4454 = vpack.c.b16 %v3878, %v3870
    %v4455 = vpack.c.b16 %v3879, %v3871
    %v4456 = vpack.c.b16 %v3880, %v3872
    %v4457 = vpack.c.b16 %v3881, %v3873
    %v4458 = vpack.c.b16 %v3882, %v3874
    %v4459 = vpack.c.b16 %v3891, %v3883
    %v4460 = vpack.c.b16 %v3892, %v3884
    %v4461 = vpack.c.b16 %v3893, %v3885
    %v4462 = vpack.c.b16 %v3894, %v3886
    %v4463 = vpack.c.b16 %v3895, %v3887
    %v4464 = vpack.c.b16 %v3896, %v3888
    %v4465 = vpack.c.b16 %v3897, %v3889
    %v4466 = vpack.c.b16 %v3898, %v3890
    %v4467 = vpack.c.b16 %v3907, %v3899
    %v4468 = vpack.c.b16 %v3908, %v3900
    %v4469 = vpack.c.b16 %v3909, %v3901
    %v4470 = vpack.c.b16 %v3910, %v3902
    %v4471 = vpack.c.b16 %v3911, %v3903
    %v4472 = vpack.c.b16 %v3912, %v3904
    %v4473 = vpack.c.b16 %v3913, %v3905
    %v4474 = vpack.c.b16 %v3914, %v3906
    %v4475 = vpack.c.b16 %v3923, %v3915
    %v4476 = vpack.c.b16 %v3924, %v3916
    %v4477 = vpack.c.b16 %v3925, %v3917
    %v4478 = vpack.c.b16 %v3926, %v3918
    %v4479 = vpack.c.b16 %v3927, %v3919
    %v4480 = vpack.c.b16 %v3928, %v3920
    %v4481 = vpack.c.b16 %v3929, %v3921
    %v4482 = vpack.c.b16 %v3930, %v3922
    %v4483 = vpack.c.b16 %v3939, %v3931
    %v4484 = vpack.c.b16 %v3940, %v3932
    %v4485 = vpack.c.b16 %v3941, %v3933
    %v4486 = vpack.c.b16 %v3942, %v3934
    %v4487 = vpack.c.b16 %v3943, %v3935
    %v4488 = vpack.c.b16 %v3944, %v3936
    %v4489 = vpack.c.b16 %v3945, %v3937
    %v4490 = vpack.c.b16 %v3946, %v3938
    %v4491 = vpack.c.b16 %v3955, %v3947
    %v4492 = vpack.c.b16 %v3956, %v3948
    %v4493 = vpack.c.b16 %v3957, %v3949
    %v4494 = vpack.c.b16 %v3958, %v3950
    %v4495 = vpack.c.b16 %v3959, %v3951
    %v4496 = vpack.c.b16 %v3960, %v3952
    %v4497 = vpack.c.b16 %v3961, %v3953
    %v4498 = vpack.c.b16 %v3962, %v3954
    %v4499 = vpack.c.b16 %v3971, %v3963
    %v4500 = vpack.c.b16 %v3972, %v3964
    %v4501 = vpack.c.b16 %v3973, %v3965
    %v4502 = vpack.c.b16 %v3974, %v3966
    %v4503 = vpack.c.b16 %v3975, %v3967
    %v4504 = vpack.c.b16 %v3976, %v3968
    %v4505 = vpack.c.b16 %v3977, %v3969
    %v4506 = vpack.c.b16 %v3978, %v3970
    %v4507 = vpack.c.b16 %v3987, %v3979
    %v4508 = vpack.c.b16 %v3988, %v3980
    %v4509 = vpack.c.b16 %v3989, %v3981
    %v4510 = vpack.c.b16 %v3990, %v3982
    %v4511 = vpack.c.b16 %v3991, %v3983
    %v4512 = vpack.c.b16 %v3992, %v3984
    %v4513 = vpack.c.b16 %v3993, %v3985
    %v4514 = vpack.c.b16 %v3994, %v3986
    %v4515 = vpack.c.b16 %v4003, %v3995
    %v4516 = vpack.c.b16 %v4004, %v3996
    %v4517 = vpack.c.b16 %v4005, %v3997
    %v4518 = vpack.c.b16 %v4006, %v3998
    %v4519 = vpack.c.b16 %v4007, %v3999
    %v4520 = vpack.c.b16 %v4008, %v4000
    %v4521 = vpack.c.b16 %v4009, %v4001
    %v4522 = vpack.c.b16 %v4010, %v4002
    %5035 = vmatpush.bf16.msra.mxu0 %v4067
    %5036 = vmatpush.bf16.msra.mxu0 %v4059
    %5037 = vmatpush.bf16.msra.mxu0 %v4051
    %5038 = vmatpush.bf16.msra.mxu0 %v4043
    %5039 = vmatpush.bf16.msra.mxu0 %v4035
    %5040 = vmatpush.bf16.msra.mxu0 %v4027
    %5041 = vmatpush.bf16.msra.mxu0 %v4019
    %5042 = vmatpush.bf16.msra.mxu0 %v4011
    %5043 = vmatmul.bf16.gmra.mxu0 %v1881
    %v5044 = vpop.f32.mrf.mxu0
    %v5045 = vadd.f32 %v2459, %v5044
    %v5046 = vpop.f32.mrf.mxu0
    %v5047 = vadd.f32 %v2459, %v5046
    %5048 = vmatmul.bf16.gmra.mxu0 %v1889
    %v5049 = vpop.f32.mrf.mxu0
    %v5050 = vadd.f32 %v2459, %v5049
    %v5051 = vpop.f32.mrf.mxu0
    %v5052 = vadd.f32 %v2459, %v5051
    %5053 = vmatmul.bf16.gmra.mxu0 %v1897
    %v5054 = vpop.f32.mrf.mxu0
    %v5055 = vadd.f32 %v2459, %v5054
    %v5056 = vpop.f32.mrf.mxu0
    %v5057 = vadd.f32 %v2459, %v5056
    %5058 = vmatmul.bf16.gmra.mxu0 %v1905
    %v5059 = vpop.f32.mrf.mxu0
    %v5060 = vadd.f32 %v2459, %v5059
    %v5061 = vpop.f32.mrf.mxu0
    %v5062 = vadd.f32 %v2459, %v5061
    %5063 = vmatmul.bf16.gmra.mxu0 %v1913
    %v5064 = vpop.f32.mrf.mxu0
    %v5065 = vadd.f32 %v2459, %v5064
    %v5066 = vpop.f32.mrf.mxu0
    %v5067 = vadd.f32 %v2459, %v5066
    %5068 = vmatmul.bf16.gmra.mxu0 %v1921
    %v5069 = vpop.f32.mrf.mxu0
    %v5070 = vadd.f32 %v2459, %v5069
    %v5071 = vpop.f32.mrf.mxu0
    %v5072 = vadd.f32 %v2459, %v5071
    %5073 = vmatmul.bf16.gmra.mxu0 %v1929
    %v5074 = vpop.f32.mrf.mxu0
    %v5075 = vadd.f32 %v2459, %v5074
    %v5076 = vpop.f32.mrf.mxu0
    %v5077 = vadd.f32 %v2459, %v5076
    %5078 = vmatmul.bf16.gmra.mxu0 %v1937
    %v5079 = vpop.f32.mrf.mxu0
    %v5080 = vadd.f32 %v2459, %v5079
    %v5081 = vpop.f32.mrf.mxu0
    %v5082 = vadd.f32 %v2459, %v5081
    %5083 = vdwg.mxu0
    %5084 = vmatpush.bf16.msra.mxu0 %v4131
    %5085 = vmatpush.bf16.msra.mxu0 %v4123
    %5086 = vmatpush.bf16.msra.mxu0 %v4115
    %5087 = vmatpush.bf16.msra.mxu0 %v4107
    %5088 = vmatpush.bf16.msra.mxu0 %v4099
    %5089 = vmatpush.bf16.msra.mxu0 %v4091
    %5090 = vmatpush.bf16.msra.mxu0 %v4083
    %5091 = vmatpush.bf16.msra.mxu0 %v4075
    %5092 = vmatmul.bf16.gmra.mxu0 %v1882
    %v5093 = vpop.f32.mrf.mxu0
    %v5094 = vadd.f32 %v5045, %v5093
    %v5095 = vpop.f32.mrf.mxu0
    %v5096 = vadd.f32 %v5047, %v5095
    %5097 = vmatmul.bf16.gmra.mxu0 %v1890
    %v5098 = vpop.f32.mrf.mxu0
    %v5099 = vadd.f32 %v5050, %v5098
    %v5100 = vpop.f32.mrf.mxu0
    %v5101 = vadd.f32 %v5052, %v5100
    %5102 = vmatmul.bf16.gmra.mxu0 %v1898
    %v5103 = vpop.f32.mrf.mxu0
    %v5104 = vadd.f32 %v5055, %v5103
    %v5105 = vpop.f32.mrf.mxu0
    %v5106 = vadd.f32 %v5057, %v5105
    %5107 = vmatmul.bf16.gmra.mxu0 %v1906
    %v5108 = vpop.f32.mrf.mxu0
    %v5109 = vadd.f32 %v5060, %v5108
    %v5110 = vpop.f32.mrf.mxu0
    %v5111 = vadd.f32 %v5062, %v5110
    %5112 = vmatmul.bf16.gmra.mxu0 %v1914
    %v5113 = vpop.f32.mrf.mxu0
    %v5114 = vadd.f32 %v5065, %v5113
    %v5115 = vpop.f32.mrf.mxu0
    %v5116 = vadd.f32 %v5067, %v5115
    %5117 = vmatmul.bf16.gmra.mxu0 %v1922
    %v5118 = vpop.f32.mrf.mxu0
    %v5119 = vadd.f32 %v5070, %v5118
    %v5120 = vpop.f32.mrf.mxu0
    %v5121 = vadd.f32 %v5072, %v5120
    %5122 = vmatmul.bf16.gmra.mxu0 %v1930
    %v5123 = vpop.f32.mrf.mxu0
    %v5124 = vadd.f32 %v5075, %v5123
    %v5125 = vpop.f32.mrf.mxu0
    %v5126 = vadd.f32 %v5077, %v5125
    %5127 = vmatmul.bf16.gmra.mxu0 %v1938
    %v5128 = vpop.f32.mrf.mxu0
    %v5129 = vadd.f32 %v5080, %v5128
    %v5130 = vpop.f32.mrf.mxu0
    %v5131 = vadd.f32 %v5082, %v5130
    %5132 = vdwg.mxu0
    %5133 = vmatpush.bf16.msra.mxu0 %v4195
    %5134 = vmatpush.bf16.msra.mxu0 %v4187
    %5135 = vmatpush.bf16.msra.mxu0 %v4179
    %5136 = vmatpush.bf16.msra.mxu0 %v4171
    %5137 = vmatpush.bf16.msra.mxu0 %v4163
    %5138 = vmatpush.bf16.msra.mxu0 %v4155
    %5139 = vmatpush.bf16.msra.mxu0 %v4147
    %5140 = vmatpush.bf16.msra.mxu0 %v4139
    %5141 = vmatmul.bf16.gmra.mxu0 %v1883
    %v5142 = vpop.f32.mrf.mxu0
    %v5143 = vadd.f32 %v5094, %v5142
    %v5144 = vpop.f32.mrf.mxu0
    %v5145 = vadd.f32 %v5096, %v5144
    %5146 = vmatmul.bf16.gmra.mxu0 %v1891
    %v5147 = vpop.f32.mrf.mxu0
    %v5148 = vadd.f32 %v5099, %v5147
    %v5149 = vpop.f32.mrf.mxu0
    %v5150 = vadd.f32 %v5101, %v5149
    %5151 = vmatmul.bf16.gmra.mxu0 %v1899
    %v5152 = vpop.f32.mrf.mxu0
    %v5153 = vadd.f32 %v5104, %v5152
    %v5154 = vpop.f32.mrf.mxu0
    %v5155 = vadd.f32 %v5106, %v5154
    %5156 = vmatmul.bf16.gmra.mxu0 %v1907
    %v5157 = vpop.f32.mrf.mxu0
    %v5158 = vadd.f32 %v5109, %v5157
    %v5159 = vpop.f32.mrf.mxu0
    %v5160 = vadd.f32 %v5111, %v5159
    %5161 = vmatmul.bf16.gmra.mxu0 %v1915
    %v5162 = vpop.f32.mrf.mxu0
    %v5163 = vadd.f32 %v5114, %v5162
    %v5164 = vpop.f32.mrf.mxu0
    %v5165 = vadd.f32 %v5116, %v5164
    %5166 = vmatmul.bf16.gmra.mxu0 %v1923
    %v5167 = vpop.f32.mrf.mxu0
    %v5168 = vadd.f32 %v5119, %v5167
    %v5169 = vpop.f32.mrf.mxu0
    %v5170 = vadd.f32 %v5121, %v5169
    %5171 = vmatmul.bf16.gmra.mxu0 %v1931
    %v5172 = vpop.f32.mrf.mxu0
    %v5173 = vadd.f32 %v5124, %v5172
    %v5174 = vpop.f32.mrf.mxu0
    %v5175 = vadd.f32 %v5126, %v5174
    %5176 = vmatmul.bf16.gmra.mxu0 %v1939
    %v5177 = vpop.f32.mrf.mxu0
    %v5178 = vadd.f32 %v5129, %v5177
    %v5179 = vpop.f32.mrf.mxu0
    %v5180 = vadd.f32 %v5131, %v5179
    %5181 = vdwg.mxu0
    %5182 = vmatpush.bf16.msra.mxu0 %v4259
    %5183 = vmatpush.bf16.msra.mxu0 %v4251
    %5184 = vmatpush.bf16.msra.mxu0 %v4243
    %5185 = vmatpush.bf16.msra.mxu0 %v4235
    %5186 = vmatpush.bf16.msra.mxu0 %v4227
    %5187 = vmatpush.bf16.msra.mxu0 %v4219
    %5188 = vmatpush.bf16.msra.mxu0 %v4211
    %5189 = vmatpush.bf16.msra.mxu0 %v4203
    %5190 = vmatmul.bf16.gmra.mxu0 %v1884
    %v5191 = vpop.f32.mrf.mxu0
    %v5192 = vadd.f32 %v5143, %v5191
    %v5193 = vpop.f32.mrf.mxu0
    %v5194 = vadd.f32 %v5145, %v5193
    %5195 = vmatmul.bf16.gmra.mxu0 %v1892
    %v5196 = vpop.f32.mrf.mxu0
    %v5197 = vadd.f32 %v5148, %v5196
    %v5198 = vpop.f32.mrf.mxu0
    %v5199 = vadd.f32 %v5150, %v5198
    %5200 = vmatmul.bf16.gmra.mxu0 %v1900
    %v5201 = vpop.f32.mrf.mxu0
    %v5202 = vadd.f32 %v5153, %v5201
    %v5203 = vpop.f32.mrf.mxu0
    %v5204 = vadd.f32 %v5155, %v5203
    %5205 = vmatmul.bf16.gmra.mxu0 %v1908
    %v5206 = vpop.f32.mrf.mxu0
    %v5207 = vadd.f32 %v5158, %v5206
    %v5208 = vpop.f32.mrf.mxu0
    %v5209 = vadd.f32 %v5160, %v5208
    %5210 = vmatmul.bf16.gmra.mxu0 %v1916
    %v5211 = vpop.f32.mrf.mxu0
    %v5212 = vadd.f32 %v5163, %v5211
    %v5213 = vpop.f32.mrf.mxu0
    %v5214 = vadd.f32 %v5165, %v5213
    %5215 = vmatmul.bf16.gmra.mxu0 %v1924
    %v5216 = vpop.f32.mrf.mxu0
    %v5217 = vadd.f32 %v5168, %v5216
    %v5218 = vpop.f32.mrf.mxu0
    %v5219 = vadd.f32 %v5170, %v5218
    %5220 = vmatmul.bf16.gmra.mxu0 %v1932
    %v5221 = vpop.f32.mrf.mxu0
    %v5222 = vadd.f32 %v5173, %v5221
    %v5223 = vpop.f32.mrf.mxu0
    %v5224 = vadd.f32 %v5175, %v5223
    %5225 = vmatmul.bf16.gmra.mxu0 %v1940
    %v5226 = vpop.f32.mrf.mxu0
    %v5227 = vadd.f32 %v5178, %v5226
    %v5228 = vpop.f32.mrf.mxu0
    %v5229 = vadd.f32 %v5180, %v5228
    %5230 = vdwg.mxu0
    %5231 = vmatpush.bf16.msra.mxu0 %v4323
    %5232 = vmatpush.bf16.msra.mxu0 %v4315
    %5233 = vmatpush.bf16.msra.mxu0 %v4307
    %5234 = vmatpush.bf16.msra.mxu0 %v4299
    %5235 = vmatpush.bf16.msra.mxu0 %v4291
    %5236 = vmatpush.bf16.msra.mxu0 %v4283
    %5237 = vmatpush.bf16.msra.mxu0 %v4275
    %5238 = vmatpush.bf16.msra.mxu0 %v4267
    %5239 = vmatmul.bf16.gmra.mxu0 %v1885
    %v5240 = vpop.f32.mrf.mxu0
    %v5241 = vadd.f32 %v5192, %v5240
    %v5242 = vpop.f32.mrf.mxu0
    %v5243 = vadd.f32 %v5194, %v5242
    %5244 = vmatmul.bf16.gmra.mxu0 %v1893
    %v5245 = vpop.f32.mrf.mxu0
    %v5246 = vadd.f32 %v5197, %v5245
    %v5247 = vpop.f32.mrf.mxu0
    %v5248 = vadd.f32 %v5199, %v5247
    %5249 = vmatmul.bf16.gmra.mxu0 %v1901
    %v5250 = vpop.f32.mrf.mxu0
    %v5251 = vadd.f32 %v5202, %v5250
    %v5252 = vpop.f32.mrf.mxu0
    %v5253 = vadd.f32 %v5204, %v5252
    %5254 = vmatmul.bf16.gmra.mxu0 %v1909
    %v5255 = vpop.f32.mrf.mxu0
    %v5256 = vadd.f32 %v5207, %v5255
    %v5257 = vpop.f32.mrf.mxu0
    %v5258 = vadd.f32 %v5209, %v5257
    %5259 = vmatmul.bf16.gmra.mxu0 %v1917
    %v5260 = vpop.f32.mrf.mxu0
    %v5261 = vadd.f32 %v5212, %v5260
    %v5262 = vpop.f32.mrf.mxu0
    %v5263 = vadd.f32 %v5214, %v5262
    %5264 = vmatmul.bf16.gmra.mxu0 %v1925
    %v5265 = vpop.f32.mrf.mxu0
    %v5266 = vadd.f32 %v5217, %v5265
    %v5267 = vpop.f32.mrf.mxu0
    %v5268 = vadd.f32 %v5219, %v5267
    %5269 = vmatmul.bf16.gmra.mxu0 %v1933
    %v5270 = vpop.f32.mrf.mxu0
    %v5271 = vadd.f32 %v5222, %v5270
    %v5272 = vpop.f32.mrf.mxu0
    %v5273 = vadd.f32 %v5224, %v5272
    %5274 = vmatmul.bf16.gmra.mxu0 %v1941
    %v5275 = vpop.f32.mrf.mxu0
    %v5276 = vadd.f32 %v5227, %v5275
    %v5277 = vpop.f32.mrf.mxu0
    %v5278 = vadd.f32 %v5229, %v5277
    %5279 = vdwg.mxu0
    %5280 = vmatpush.bf16.msra.mxu0 %v4387
    %5281 = vmatpush.bf16.msra.mxu0 %v4379
    %5282 = vmatpush.bf16.msra.mxu0 %v4371
    %5283 = vmatpush.bf16.msra.mxu0 %v4363
    %5284 = vmatpush.bf16.msra.mxu0 %v4355
    %5285 = vmatpush.bf16.msra.mxu0 %v4347
    %5286 = vmatpush.bf16.msra.mxu0 %v4339
    %5287 = vmatpush.bf16.msra.mxu0 %v4331
    %5288 = vmatmul.bf16.gmra.mxu0 %v1886
    %v5289 = vpop.f32.mrf.mxu0
    %v5290 = vadd.f32 %v5241, %v5289
    %v5291 = vpop.f32.mrf.mxu0
    %v5292 = vadd.f32 %v5243, %v5291
    %5293 = vmatmul.bf16.gmra.mxu0 %v1894
    %v5294 = vpop.f32.mrf.mxu0
    %v5295 = vadd.f32 %v5246, %v5294
    %v5296 = vpop.f32.mrf.mxu0
    %v5297 = vadd.f32 %v5248, %v5296
    %5298 = vmatmul.bf16.gmra.mxu0 %v1902
    %v5299 = vpop.f32.mrf.mxu0
    %v5300 = vadd.f32 %v5251, %v5299
    %v5301 = vpop.f32.mrf.mxu0
    %v5302 = vadd.f32 %v5253, %v5301
    %5303 = vmatmul.bf16.gmra.mxu0 %v1910
    %v5304 = vpop.f32.mrf.mxu0
    %v5305 = vadd.f32 %v5256, %v5304
    %v5306 = vpop.f32.mrf.mxu0
    %v5307 = vadd.f32 %v5258, %v5306
    %5308 = vmatmul.bf16.gmra.mxu0 %v1918
    %v5309 = vpop.f32.mrf.mxu0
    %v5310 = vadd.f32 %v5261, %v5309
    %v5311 = vpop.f32.mrf.mxu0
    %v5312 = vadd.f32 %v5263, %v5311
    %5313 = vmatmul.bf16.gmra.mxu0 %v1926
    %v5314 = vpop.f32.mrf.mxu0
    %v5315 = vadd.f32 %v5266, %v5314
    %v5316 = vpop.f32.mrf.mxu0
    %v5317 = vadd.f32 %v5268, %v5316
    %5318 = vmatmul.bf16.gmra.mxu0 %v1934
    %v5319 = vpop.f32.mrf.mxu0
    %v5320 = vadd.f32 %v5271, %v5319
    %v5321 = vpop.f32.mrf.mxu0
    %v5322 = vadd.f32 %v5273, %v5321
    %5323 = vmatmul.bf16.gmra.mxu0 %v1942
    %v5324 = vpop.f32.mrf.mxu0
    %v5325 = vadd.f32 %v5276, %v5324
    %v5326 = vpop.f32.mrf.mxu0
    %v5327 = vadd.f32 %v5278, %v5326
    %5328 = vdwg.mxu0
    %5329 = vmatpush.bf16.msra.mxu0 %v4451
    %5330 = vmatpush.bf16.msra.mxu0 %v4443
    %5331 = vmatpush.bf16.msra.mxu0 %v4435
    %5332 = vmatpush.bf16.msra.mxu0 %v4427
    %5333 = vmatpush.bf16.msra.mxu0 %v4419
    %5334 = vmatpush.bf16.msra.mxu0 %v4411
    %5335 = vmatpush.bf16.msra.mxu0 %v4403
    %5336 = vmatpush.bf16.msra.mxu0 %v4395
    %5337 = vmatmul.bf16.gmra.mxu0 %v1887
    %v5338 = vpop.f32.mrf.mxu0
    %v5339 = vadd.f32 %v5290, %v5338
    %v5340 = vpop.f32.mrf.mxu0
    %v5341 = vadd.f32 %v5292, %v5340
    %5342 = vmatmul.bf16.gmra.mxu0 %v1895
    %v5343 = vpop.f32.mrf.mxu0
    %v5344 = vadd.f32 %v5295, %v5343
    %v5345 = vpop.f32.mrf.mxu0
    %v5346 = vadd.f32 %v5297, %v5345
    %5347 = vmatmul.bf16.gmra.mxu0 %v1903
    %v5348 = vpop.f32.mrf.mxu0
    %v5349 = vadd.f32 %v5300, %v5348
    %v5350 = vpop.f32.mrf.mxu0
    %v5351 = vadd.f32 %v5302, %v5350
    %5352 = vmatmul.bf16.gmra.mxu0 %v1911
    %v5353 = vpop.f32.mrf.mxu0
    %v5354 = vadd.f32 %v5305, %v5353
    %v5355 = vpop.f32.mrf.mxu0
    %v5356 = vadd.f32 %v5307, %v5355
    %5357 = vmatmul.bf16.gmra.mxu0 %v1919
    %v5358 = vpop.f32.mrf.mxu0
    %v5359 = vadd.f32 %v5310, %v5358
    %v5360 = vpop.f32.mrf.mxu0
    %v5361 = vadd.f32 %v5312, %v5360
    %5362 = vmatmul.bf16.gmra.mxu0 %v1927
    %v5363 = vpop.f32.mrf.mxu0
    %v5364 = vadd.f32 %v5315, %v5363
    %v5365 = vpop.f32.mrf.mxu0
    %v5366 = vadd.f32 %v5317, %v5365
    %5367 = vmatmul.bf16.gmra.mxu0 %v1935
    %v5368 = vpop.f32.mrf.mxu0
    %v5369 = vadd.f32 %v5320, %v5368
    %v5370 = vpop.f32.mrf.mxu0
    %v5371 = vadd.f32 %v5322, %v5370
    %5372 = vmatmul.bf16.gmra.mxu0 %v1943
    %v5373 = vpop.f32.mrf.mxu0
    %v5374 = vadd.f32 %v5325, %v5373
    %v5375 = vpop.f32.mrf.mxu0
    %v5376 = vadd.f32 %v5327, %v5375
    %5377 = vdwg.mxu0
    %5378 = vmatpush.bf16.msra.mxu0 %v4515
    %5379 = vmatpush.bf16.msra.mxu0 %v4507
    %5380 = vmatpush.bf16.msra.mxu0 %v4499
    %5381 = vmatpush.bf16.msra.mxu0 %v4491
    %5382 = vmatpush.bf16.msra.mxu0 %v4483
    %5383 = vmatpush.bf16.msra.mxu0 %v4475
    %5384 = vmatpush.bf16.msra.mxu0 %v4467
    %5385 = vmatpush.bf16.msra.mxu0 %v4459
    %5386 = vmatmul.bf16.gmra.mxu0 %v1888
    %v5387 = vpop.f32.mrf.mxu0
    %v5388 = vadd.f32 %v5339, %v5387
    %v5389 = vpop.f32.mrf.mxu0
    %v5390 = vadd.f32 %v5341, %v5389
    %5391 = vmatmul.bf16.gmra.mxu0 %v1896
    %v5392 = vpop.f32.mrf.mxu0
    %v5393 = vadd.f32 %v5344, %v5392
    %v5394 = vpop.f32.mrf.mxu0
    %v5395 = vadd.f32 %v5346, %v5394
    %5396 = vmatmul.bf16.gmra.mxu0 %v1904
    %v5397 = vpop.f32.mrf.mxu0
    %v5398 = vadd.f32 %v5349, %v5397
    %v5399 = vpop.f32.mrf.mxu0
    %v5400 = vadd.f32 %v5351, %v5399
    %5401 = vmatmul.bf16.gmra.mxu0 %v1912
    %v5402 = vpop.f32.mrf.mxu0
    %v5403 = vadd.f32 %v5354, %v5402
    %v5404 = vpop.f32.mrf.mxu0
    %v5405 = vadd.f32 %v5356, %v5404
    %5406 = vmatmul.bf16.gmra.mxu0 %v1920
    %v5407 = vpop.f32.mrf.mxu0
    %v5408 = vadd.f32 %v5359, %v5407
    %v5409 = vpop.f32.mrf.mxu0
    %v5410 = vadd.f32 %v5361, %v5409
    %5411 = vmatmul.bf16.gmra.mxu0 %v1928
    %v5412 = vpop.f32.mrf.mxu0
    %v5413 = vadd.f32 %v5364, %v5412
    %v5414 = vpop.f32.mrf.mxu0
    %v5415 = vadd.f32 %v5366, %v5414
    %5416 = vmatmul.bf16.gmra.mxu0 %v1936
    %v5417 = vpop.f32.mrf.mxu0
    %v5418 = vadd.f32 %v5369, %v5417
    %v5419 = vpop.f32.mrf.mxu0
    %v5420 = vadd.f32 %v5371, %v5419
    %5421 = vmatmul.bf16.gmra.mxu0 %v1944
    %v5422 = vpop.f32.mrf.mxu0
    %v5423 = vadd.f32 %v5374, %v5422
    %v5424 = vpop.f32.mrf.mxu0
    %v5425 = vadd.f32 %v5376, %v5424
    %5426 = vdwg.mxu0
    %5427 = vmatpush.bf16.msra.mxu0 %v4068
    %5428 = vmatpush.bf16.msra.mxu0 %v4060
    %5429 = vmatpush.bf16.msra.mxu0 %v4052
    %5430 = vmatpush.bf16.msra.mxu0 %v4044
    %5431 = vmatpush.bf16.msra.mxu0 %v4036
    %5432 = vmatpush.bf16.msra.mxu0 %v4028
    %5433 = vmatpush.bf16.msra.mxu0 %v4020
    %5434 = vmatpush.bf16.msra.mxu0 %v4012
    %5435 = vmatmul.bf16.gmra.mxu0 %v1881
    %v5436 = vpop.f32.mrf.mxu0
    %v5437 = vadd.f32 %v2460, %v5436
    %v5438 = vpop.f32.mrf.mxu0
    %v5439 = vadd.f32 %v2460, %v5438
    %5440 = vmatmul.bf16.gmra.mxu0 %v1889
    %v5441 = vpop.f32.mrf.mxu0
    %v5442 = vadd.f32 %v2460, %v5441
    %v5443 = vpop.f32.mrf.mxu0
    %v5444 = vadd.f32 %v2460, %v5443
    %5445 = vmatmul.bf16.gmra.mxu0 %v1897
    %v5446 = vpop.f32.mrf.mxu0
    %v5447 = vadd.f32 %v2460, %v5446
    %v5448 = vpop.f32.mrf.mxu0
    %v5449 = vadd.f32 %v2460, %v5448
    %5450 = vmatmul.bf16.gmra.mxu0 %v1905
    %v5451 = vpop.f32.mrf.mxu0
    %v5452 = vadd.f32 %v2460, %v5451
    %v5453 = vpop.f32.mrf.mxu0
    %v5454 = vadd.f32 %v2460, %v5453
    %5455 = vmatmul.bf16.gmra.mxu0 %v1913
    %v5456 = vpop.f32.mrf.mxu0
    %v5457 = vadd.f32 %v2460, %v5456
    %v5458 = vpop.f32.mrf.mxu0
    %v5459 = vadd.f32 %v2460, %v5458
    %5460 = vmatmul.bf16.gmra.mxu0 %v1921
    %v5461 = vpop.f32.mrf.mxu0
    %v5462 = vadd.f32 %v2460, %v5461
    %v5463 = vpop.f32.mrf.mxu0
    %v5464 = vadd.f32 %v2460, %v5463
    %5465 = vmatmul.bf16.gmra.mxu0 %v1929
    %v5466 = vpop.f32.mrf.mxu0
    %v5467 = vadd.f32 %v2460, %v5466
    %v5468 = vpop.f32.mrf.mxu0
    %v5469 = vadd.f32 %v2460, %v5468
    %5470 = vmatmul.bf16.gmra.mxu0 %v1937
    %v5471 = vpop.f32.mrf.mxu0
    %v5472 = vadd.f32 %v2460, %v5471
    %v5473 = vpop.f32.mrf.mxu0
    %v5474 = vadd.f32 %v2460, %v5473
    %5475 = vdwg.mxu0
    %5476 = vmatpush.bf16.msra.mxu0 %v4132
    %5477 = vmatpush.bf16.msra.mxu0 %v4124
    %5478 = vmatpush.bf16.msra.mxu0 %v4116
    %5479 = vmatpush.bf16.msra.mxu0 %v4108
    %5480 = vmatpush.bf16.msra.mxu0 %v4100
    %5481 = vmatpush.bf16.msra.mxu0 %v4092
    %5482 = vmatpush.bf16.msra.mxu0 %v4084
    %5483 = vmatpush.bf16.msra.mxu0 %v4076
    %5484 = vmatmul.bf16.gmra.mxu0 %v1882
    %v5485 = vpop.f32.mrf.mxu0
    %v5486 = vadd.f32 %v5437, %v5485
    %v5487 = vpop.f32.mrf.mxu0
    %v5488 = vadd.f32 %v5439, %v5487
    %5489 = vmatmul.bf16.gmra.mxu0 %v1890
    %v5490 = vpop.f32.mrf.mxu0
    %v5491 = vadd.f32 %v5442, %v5490
    %v5492 = vpop.f32.mrf.mxu0
    %v5493 = vadd.f32 %v5444, %v5492
    %5494 = vmatmul.bf16.gmra.mxu0 %v1898
    %v5495 = vpop.f32.mrf.mxu0
    %v5496 = vadd.f32 %v5447, %v5495
    %v5497 = vpop.f32.mrf.mxu0
    %v5498 = vadd.f32 %v5449, %v5497
    %5499 = vmatmul.bf16.gmra.mxu0 %v1906
    %v5500 = vpop.f32.mrf.mxu0
    %v5501 = vadd.f32 %v5452, %v5500
    %v5502 = vpop.f32.mrf.mxu0
    %v5503 = vadd.f32 %v5454, %v5502
    %5504 = vmatmul.bf16.gmra.mxu0 %v1914
    %v5505 = vpop.f32.mrf.mxu0
    %v5506 = vadd.f32 %v5457, %v5505
    %v5507 = vpop.f32.mrf.mxu0
    %v5508 = vadd.f32 %v5459, %v5507
    %5509 = vmatmul.bf16.gmra.mxu0 %v1922
    %v5510 = vpop.f32.mrf.mxu0
    %v5511 = vadd.f32 %v5462, %v5510
    %v5512 = vpop.f32.mrf.mxu0
    %v5513 = vadd.f32 %v5464, %v5512
    %5514 = vmatmul.bf16.gmra.mxu0 %v1930
    %v5515 = vpop.f32.mrf.mxu0
    %v5516 = vadd.f32 %v5467, %v5515
    %v5517 = vpop.f32.mrf.mxu0
    %v5518 = vadd.f32 %v5469, %v5517
    %5519 = vmatmul.bf16.gmra.mxu0 %v1938
    %v5520 = vpop.f32.mrf.mxu0
    %v5521 = vadd.f32 %v5472, %v5520
    %v5522 = vpop.f32.mrf.mxu0
    %v5523 = vadd.f32 %v5474, %v5522
    %5524 = vdwg.mxu0
    %5525 = vmatpush.bf16.msra.mxu0 %v4196
    %5526 = vmatpush.bf16.msra.mxu0 %v4188
    %5527 = vmatpush.bf16.msra.mxu0 %v4180
    %5528 = vmatpush.bf16.msra.mxu0 %v4172
    %5529 = vmatpush.bf16.msra.mxu0 %v4164
    %5530 = vmatpush.bf16.msra.mxu0 %v4156
    %5531 = vmatpush.bf16.msra.mxu0 %v4148
    %5532 = vmatpush.bf16.msra.mxu0 %v4140
    %5533 = vmatmul.bf16.gmra.mxu0 %v1883
    %v5534 = vpop.f32.mrf.mxu0
    %v5535 = vadd.f32 %v5486, %v5534
    %v5536 = vpop.f32.mrf.mxu0
    %v5537 = vadd.f32 %v5488, %v5536
    %5538 = vmatmul.bf16.gmra.mxu0 %v1891
    %v5539 = vpop.f32.mrf.mxu0
    %v5540 = vadd.f32 %v5491, %v5539
    %v5541 = vpop.f32.mrf.mxu0
    %v5542 = vadd.f32 %v5493, %v5541
    %5543 = vmatmul.bf16.gmra.mxu0 %v1899
    %v5544 = vpop.f32.mrf.mxu0
    %v5545 = vadd.f32 %v5496, %v5544
    %v5546 = vpop.f32.mrf.mxu0
    %v5547 = vadd.f32 %v5498, %v5546
    %5548 = vmatmul.bf16.gmra.mxu0 %v1907
    %v5549 = vpop.f32.mrf.mxu0
    %v5550 = vadd.f32 %v5501, %v5549
    %v5551 = vpop.f32.mrf.mxu0
    %v5552 = vadd.f32 %v5503, %v5551
    %5553 = vmatmul.bf16.gmra.mxu0 %v1915
    %v5554 = vpop.f32.mrf.mxu0
    %v5555 = vadd.f32 %v5506, %v5554
    %v5556 = vpop.f32.mrf.mxu0
    %v5557 = vadd.f32 %v5508, %v5556
    %5558 = vmatmul.bf16.gmra.mxu0 %v1923
    %v5559 = vpop.f32.mrf.mxu0
    %v5560 = vadd.f32 %v5511, %v5559
    %v5561 = vpop.f32.mrf.mxu0
    %v5562 = vadd.f32 %v5513, %v5561
    %5563 = vmatmul.bf16.gmra.mxu0 %v1931
    %v5564 = vpop.f32.mrf.mxu0
    %v5565 = vadd.f32 %v5516, %v5564
    %v5566 = vpop.f32.mrf.mxu0
    %v5567 = vadd.f32 %v5518, %v5566
    %5568 = vmatmul.bf16.gmra.mxu0 %v1939
    %v5569 = vpop.f32.mrf.mxu0
    %v5570 = vadd.f32 %v5521, %v5569
    %v5571 = vpop.f32.mrf.mxu0
    %v5572 = vadd.f32 %v5523, %v5571
    %5573 = vdwg.mxu0
    %5574 = vmatpush.bf16.msra.mxu0 %v4260
    %5575 = vmatpush.bf16.msra.mxu0 %v4252
    %5576 = vmatpush.bf16.msra.mxu0 %v4244
    %5577 = vmatpush.bf16.msra.mxu0 %v4236
    %5578 = vmatpush.bf16.msra.mxu0 %v4228
    %5579 = vmatpush.bf16.msra.mxu0 %v4220
    %5580 = vmatpush.bf16.msra.mxu0 %v4212
    %5581 = vmatpush.bf16.msra.mxu0 %v4204
    %5582 = vmatmul.bf16.gmra.mxu0 %v1884
    %v5583 = vpop.f32.mrf.mxu0
    %v5584 = vadd.f32 %v5535, %v5583
    %v5585 = vpop.f32.mrf.mxu0
    %v5586 = vadd.f32 %v5537, %v5585
    %5587 = vmatmul.bf16.gmra.mxu0 %v1892
    %v5588 = vpop.f32.mrf.mxu0
    %v5589 = vadd.f32 %v5540, %v5588
    %v5590 = vpop.f32.mrf.mxu0
    %v5591 = vadd.f32 %v5542, %v5590
    %5592 = vmatmul.bf16.gmra.mxu0 %v1900
    %v5593 = vpop.f32.mrf.mxu0
    %v5594 = vadd.f32 %v5545, %v5593
    %v5595 = vpop.f32.mrf.mxu0
    %v5596 = vadd.f32 %v5547, %v5595
    %5597 = vmatmul.bf16.gmra.mxu0 %v1908
    %v5598 = vpop.f32.mrf.mxu0
    %v5599 = vadd.f32 %v5550, %v5598
    %v5600 = vpop.f32.mrf.mxu0
    %v5601 = vadd.f32 %v5552, %v5600
    %5602 = vmatmul.bf16.gmra.mxu0 %v1916
    %v5603 = vpop.f32.mrf.mxu0
    %v5604 = vadd.f32 %v5555, %v5603
    %v5605 = vpop.f32.mrf.mxu0
    %v5606 = vadd.f32 %v5557, %v5605
    %5607 = vmatmul.bf16.gmra.mxu0 %v1924
    %v5608 = vpop.f32.mrf.mxu0
    %v5609 = vadd.f32 %v5560, %v5608
    %v5610 = vpop.f32.mrf.mxu0
    %v5611 = vadd.f32 %v5562, %v5610
    %5612 = vmatmul.bf16.gmra.mxu0 %v1932
    %v5613 = vpop.f32.mrf.mxu0
    %v5614 = vadd.f32 %v5565, %v5613
    %v5615 = vpop.f32.mrf.mxu0
    %v5616 = vadd.f32 %v5567, %v5615
    %5617 = vmatmul.bf16.gmra.mxu0 %v1940
    %v5618 = vpop.f32.mrf.mxu0
    %v5619 = vadd.f32 %v5570, %v5618
    %v5620 = vpop.f32.mrf.mxu0
    %v5621 = vadd.f32 %v5572, %v5620
    %5622 = vdwg.mxu0
    %5623 = vmatpush.bf16.msra.mxu0 %v4324
    %5624 = vmatpush.bf16.msra.mxu0 %v4316
    %5625 = vmatpush.bf16.msra.mxu0 %v4308
    %5626 = vmatpush.bf16.msra.mxu0 %v4300
    %5627 = vmatpush.bf16.msra.mxu0 %v4292
    %5628 = vmatpush.bf16.msra.mxu0 %v4284
    %5629 = vmatpush.bf16.msra.mxu0 %v4276
    %5630 = vmatpush.bf16.msra.mxu0 %v4268
    %5631 = vmatmul.bf16.gmra.mxu0 %v1885
    %v5632 = vpop.f32.mrf.mxu0
    %v5633 = vadd.f32 %v5584, %v5632
    %v5634 = vpop.f32.mrf.mxu0
    %v5635 = vadd.f32 %v5586, %v5634
    %5636 = vmatmul.bf16.gmra.mxu0 %v1893
    %v5637 = vpop.f32.mrf.mxu0
    %v5638 = vadd.f32 %v5589, %v5637
    %v5639 = vpop.f32.mrf.mxu0
    %v5640 = vadd.f32 %v5591, %v5639
    %5641 = vmatmul.bf16.gmra.mxu0 %v1901
    %v5642 = vpop.f32.mrf.mxu0
    %v5643 = vadd.f32 %v5594, %v5642
    %v5644 = vpop.f32.mrf.mxu0
    %v5645 = vadd.f32 %v5596, %v5644
    %5646 = vmatmul.bf16.gmra.mxu0 %v1909
    %v5647 = vpop.f32.mrf.mxu0
    %v5648 = vadd.f32 %v5599, %v5647
    %v5649 = vpop.f32.mrf.mxu0
    %v5650 = vadd.f32 %v5601, %v5649
    %5651 = vmatmul.bf16.gmra.mxu0 %v1917
    %v5652 = vpop.f32.mrf.mxu0
    %v5653 = vadd.f32 %v5604, %v5652
    %v5654 = vpop.f32.mrf.mxu0
    %v5655 = vadd.f32 %v5606, %v5654
    %5656 = vmatmul.bf16.gmra.mxu0 %v1925
    %v5657 = vpop.f32.mrf.mxu0
    %v5658 = vadd.f32 %v5609, %v5657
    %v5659 = vpop.f32.mrf.mxu0
    %v5660 = vadd.f32 %v5611, %v5659
    %5661 = vmatmul.bf16.gmra.mxu0 %v1933
    %v5662 = vpop.f32.mrf.mxu0
    %v5663 = vadd.f32 %v5614, %v5662
    %v5664 = vpop.f32.mrf.mxu0
    %v5665 = vadd.f32 %v5616, %v5664
    %5666 = vmatmul.bf16.gmra.mxu0 %v1941
    %v5667 = vpop.f32.mrf.mxu0
    %v5668 = vadd.f32 %v5619, %v5667
    %v5669 = vpop.f32.mrf.mxu0
    %v5670 = vadd.f32 %v5621, %v5669
    %5671 = vdwg.mxu0
    %5672 = vmatpush.bf16.msra.mxu0 %v4388
    %5673 = vmatpush.bf16.msra.mxu0 %v4380
    %5674 = vmatpush.bf16.msra.mxu0 %v4372
    %5675 = vmatpush.bf16.msra.mxu0 %v4364
    %5676 = vmatpush.bf16.msra.mxu0 %v4356
    %5677 = vmatpush.bf16.msra.mxu0 %v4348
    %5678 = vmatpush.bf16.msra.mxu0 %v4340
    %5679 = vmatpush.bf16.msra.mxu0 %v4332
    %5680 = vmatmul.bf16.gmra.mxu0 %v1886
    %v5681 = vpop.f32.mrf.mxu0
    %v5682 = vadd.f32 %v5633, %v5681
    %v5683 = vpop.f32.mrf.mxu0
    %v5684 = vadd.f32 %v5635, %v5683
    %5685 = vmatmul.bf16.gmra.mxu0 %v1894
    %v5686 = vpop.f32.mrf.mxu0
    %v5687 = vadd.f32 %v5638, %v5686
    %v5688 = vpop.f32.mrf.mxu0
    %v5689 = vadd.f32 %v5640, %v5688
    %5690 = vmatmul.bf16.gmra.mxu0 %v1902
    %v5691 = vpop.f32.mrf.mxu0
    %v5692 = vadd.f32 %v5643, %v5691
    %v5693 = vpop.f32.mrf.mxu0
    %v5694 = vadd.f32 %v5645, %v5693
    %5695 = vmatmul.bf16.gmra.mxu0 %v1910
    %v5696 = vpop.f32.mrf.mxu0
    %v5697 = vadd.f32 %v5648, %v5696
    %v5698 = vpop.f32.mrf.mxu0
    %v5699 = vadd.f32 %v5650, %v5698
    %5700 = vmatmul.bf16.gmra.mxu0 %v1918
    %v5701 = vpop.f32.mrf.mxu0
    %v5702 = vadd.f32 %v5653, %v5701
    %v5703 = vpop.f32.mrf.mxu0
    %v5704 = vadd.f32 %v5655, %v5703
    %5705 = vmatmul.bf16.gmra.mxu0 %v1926
    %v5706 = vpop.f32.mrf.mxu0
    %v5707 = vadd.f32 %v5658, %v5706
    %v5708 = vpop.f32.mrf.mxu0
    %v5709 = vadd.f32 %v5660, %v5708
    %5710 = vmatmul.bf16.gmra.mxu0 %v1934
    %v5711 = vpop.f32.mrf.mxu0
    %v5712 = vadd.f32 %v5663, %v5711
    %v5713 = vpop.f32.mrf.mxu0
    %v5714 = vadd.f32 %v5665, %v5713
    %5715 = vmatmul.bf16.gmra.mxu0 %v1942
    %v5716 = vpop.f32.mrf.mxu0
    %v5717 = vadd.f32 %v5668, %v5716
    %v5718 = vpop.f32.mrf.mxu0
    %v5719 = vadd.f32 %v5670, %v5718
    %5720 = vdwg.mxu0
    %5721 = vmatpush.bf16.msra.mxu0 %v4452
    %5722 = vmatpush.bf16.msra.mxu0 %v4444
    %5723 = vmatpush.bf16.msra.mxu0 %v4436
    %5724 = vmatpush.bf16.msra.mxu0 %v4428
    %5725 = vmatpush.bf16.msra.mxu0 %v4420
    %5726 = vmatpush.bf16.msra.mxu0 %v4412
    %5727 = vmatpush.bf16.msra.mxu0 %v4404
    %5728 = vmatpush.bf16.msra.mxu0 %v4396
    %5729 = vmatmul.bf16.gmra.mxu0 %v1887
    %v5730 = vpop.f32.mrf.mxu0
    %v5731 = vadd.f32 %v5682, %v5730
    %v5732 = vpop.f32.mrf.mxu0
    %v5733 = vadd.f32 %v5684, %v5732
    %5734 = vmatmul.bf16.gmra.mxu0 %v1895
    %v5735 = vpop.f32.mrf.mxu0
    %v5736 = vadd.f32 %v5687, %v5735
    %v5737 = vpop.f32.mrf.mxu0
    %v5738 = vadd.f32 %v5689, %v5737
    %5739 = vmatmul.bf16.gmra.mxu0 %v1903
    %v5740 = vpop.f32.mrf.mxu0
    %v5741 = vadd.f32 %v5692, %v5740
    %v5742 = vpop.f32.mrf.mxu0
    %v5743 = vadd.f32 %v5694, %v5742
    %5744 = vmatmul.bf16.gmra.mxu0 %v1911
    %v5745 = vpop.f32.mrf.mxu0
    %v5746 = vadd.f32 %v5697, %v5745
    %v5747 = vpop.f32.mrf.mxu0
    %v5748 = vadd.f32 %v5699, %v5747
    %5749 = vmatmul.bf16.gmra.mxu0 %v1919
    %v5750 = vpop.f32.mrf.mxu0
    %v5751 = vadd.f32 %v5702, %v5750
    %v5752 = vpop.f32.mrf.mxu0
    %v5753 = vadd.f32 %v5704, %v5752
    %5754 = vmatmul.bf16.gmra.mxu0 %v1927
    %v5755 = vpop.f32.mrf.mxu0
    %v5756 = vadd.f32 %v5707, %v5755
    %v5757 = vpop.f32.mrf.mxu0
    %v5758 = vadd.f32 %v5709, %v5757
    %5759 = vmatmul.bf16.gmra.mxu0 %v1935
    %v5760 = vpop.f32.mrf.mxu0
    %v5761 = vadd.f32 %v5712, %v5760
    %v5762 = vpop.f32.mrf.mxu0
    %v5763 = vadd.f32 %v5714, %v5762
    %5764 = vmatmul.bf16.gmra.mxu0 %v1943
    %v5765 = vpop.f32.mrf.mxu0
    %v5766 = vadd.f32 %v5717, %v5765
    %v5767 = vpop.f32.mrf.mxu0
    %v5768 = vadd.f32 %v5719, %v5767
    %5769 = vdwg.mxu0
    %5770 = vmatpush.bf16.msra.mxu0 %v4516
    %5771 = vmatpush.bf16.msra.mxu0 %v4508
    %5772 = vmatpush.bf16.msra.mxu0 %v4500
    %5773 = vmatpush.bf16.msra.mxu0 %v4492
    %5774 = vmatpush.bf16.msra.mxu0 %v4484
    %5775 = vmatpush.bf16.msra.mxu0 %v4476
    %5776 = vmatpush.bf16.msra.mxu0 %v4468
    %5777 = vmatpush.bf16.msra.mxu0 %v4460
    %5778 = vmatmul.bf16.gmra.mxu0 %v1888
    %v5779 = vpop.f32.mrf.mxu0
    %v5780 = vadd.f32 %v5731, %v5779
    %v5781 = vpop.f32.mrf.mxu0
    %v5782 = vadd.f32 %v5733, %v5781
    %5783 = vmatmul.bf16.gmra.mxu0 %v1896
    %v5784 = vpop.f32.mrf.mxu0
    %v5785 = vadd.f32 %v5736, %v5784
    %v5786 = vpop.f32.mrf.mxu0
    %v5787 = vadd.f32 %v5738, %v5786
    %5788 = vmatmul.bf16.gmra.mxu0 %v1904
    %v5789 = vpop.f32.mrf.mxu0
    %v5790 = vadd.f32 %v5741, %v5789
    %v5791 = vpop.f32.mrf.mxu0
    %v5792 = vadd.f32 %v5743, %v5791
    %5793 = vmatmul.bf16.gmra.mxu0 %v1912
    %v5794 = vpop.f32.mrf.mxu0
    %v5795 = vadd.f32 %v5746, %v5794
    %v5796 = vpop.f32.mrf.mxu0
    %v5797 = vadd.f32 %v5748, %v5796
    %5798 = vmatmul.bf16.gmra.mxu0 %v1920
    %v5799 = vpop.f32.mrf.mxu0
    %v5800 = vadd.f32 %v5751, %v5799
    %v5801 = vpop.f32.mrf.mxu0
    %v5802 = vadd.f32 %v5753, %v5801
    %5803 = vmatmul.bf16.gmra.mxu0 %v1928
    %v5804 = vpop.f32.mrf.mxu0
    %v5805 = vadd.f32 %v5756, %v5804
    %v5806 = vpop.f32.mrf.mxu0
    %v5807 = vadd.f32 %v5758, %v5806
    %5808 = vmatmul.bf16.gmra.mxu0 %v1936
    %v5809 = vpop.f32.mrf.mxu0
    %v5810 = vadd.f32 %v5761, %v5809
    %v5811 = vpop.f32.mrf.mxu0
    %v5812 = vadd.f32 %v5763, %v5811
    %5813 = vmatmul.bf16.gmra.mxu0 %v1944
    %v5814 = vpop.f32.mrf.mxu0
    %v5815 = vadd.f32 %v5766, %v5814
    %v5816 = vpop.f32.mrf.mxu0
    %v5817 = vadd.f32 %v5768, %v5816
    %5818 = vdwg.mxu0
    %5819 = vmatpush.bf16.msra.mxu0 %v4069
    %5820 = vmatpush.bf16.msra.mxu0 %v4061
    %5821 = vmatpush.bf16.msra.mxu0 %v4053
    %5822 = vmatpush.bf16.msra.mxu0 %v4045
    %5823 = vmatpush.bf16.msra.mxu0 %v4037
    %5824 = vmatpush.bf16.msra.mxu0 %v4029
    %5825 = vmatpush.bf16.msra.mxu0 %v4021
    %5826 = vmatpush.bf16.msra.mxu0 %v4013
    %5827 = vmatmul.bf16.gmra.mxu0 %v1881
    %v5828 = vpop.f32.mrf.mxu0
    %v5829 = vadd.f32 %v2461, %v5828
    %v5830 = vpop.f32.mrf.mxu0
    %v5831 = vadd.f32 %v2461, %v5830
    %5832 = vmatmul.bf16.gmra.mxu0 %v1889
    %v5833 = vpop.f32.mrf.mxu0
    %v5834 = vadd.f32 %v2461, %v5833
    %v5835 = vpop.f32.mrf.mxu0
    %v5836 = vadd.f32 %v2461, %v5835
    %5837 = vmatmul.bf16.gmra.mxu0 %v1897
    %v5838 = vpop.f32.mrf.mxu0
    %v5839 = vadd.f32 %v2461, %v5838
    %v5840 = vpop.f32.mrf.mxu0
    %v5841 = vadd.f32 %v2461, %v5840
    %5842 = vmatmul.bf16.gmra.mxu0 %v1905
    %v5843 = vpop.f32.mrf.mxu0
    %v5844 = vadd.f32 %v2461, %v5843
    %v5845 = vpop.f32.mrf.mxu0
    %v5846 = vadd.f32 %v2461, %v5845
    %5847 = vmatmul.bf16.gmra.mxu0 %v1913
    %v5848 = vpop.f32.mrf.mxu0
    %v5849 = vadd.f32 %v2461, %v5848
    %v5850 = vpop.f32.mrf.mxu0
    %v5851 = vadd.f32 %v2461, %v5850
    %5852 = vmatmul.bf16.gmra.mxu0 %v1921
    %v5853 = vpop.f32.mrf.mxu0
    %v5854 = vadd.f32 %v2461, %v5853
    %v5855 = vpop.f32.mrf.mxu0
    %v5856 = vadd.f32 %v2461, %v5855
    %5857 = vmatmul.bf16.gmra.mxu0 %v1929
    %v5858 = vpop.f32.mrf.mxu0
    %v5859 = vadd.f32 %v2461, %v5858
    %v5860 = vpop.f32.mrf.mxu0
    %v5861 = vadd.f32 %v2461, %v5860
    %5862 = vmatmul.bf16.gmra.mxu0 %v1937
    %v5863 = vpop.f32.mrf.mxu0
    %v5864 = vadd.f32 %v2461, %v5863
    %v5865 = vpop.f32.mrf.mxu0
    %v5866 = vadd.f32 %v2461, %v5865
    %5867 = vdwg.mxu0
    %5868 = vmatpush.bf16.msra.mxu0 %v4133
    %5869 = vmatpush.bf16.msra.mxu0 %v4125
    %5870 = vmatpush.bf16.msra.mxu0 %v4117
    %5871 = vmatpush.bf16.msra.mxu0 %v4109
    %5872 = vmatpush.bf16.msra.mxu0 %v4101
    %5873 = vmatpush.bf16.msra.mxu0 %v4093
    %5874 = vmatpush.bf16.msra.mxu0 %v4085
    %5875 = vmatpush.bf16.msra.mxu0 %v4077
    %5876 = vmatmul.bf16.gmra.mxu0 %v1882
    %v5877 = vpop.f32.mrf.mxu0
    %v5878 = vadd.f32 %v5829, %v5877
    %v5879 = vpop.f32.mrf.mxu0
    %v5880 = vadd.f32 %v5831, %v5879
    %5881 = vmatmul.bf16.gmra.mxu0 %v1890
    %v5882 = vpop.f32.mrf.mxu0
    %v5883 = vadd.f32 %v5834, %v5882
    %v5884 = vpop.f32.mrf.mxu0
    %v5885 = vadd.f32 %v5836, %v5884
    %5886 = vmatmul.bf16.gmra.mxu0 %v1898
    %v5887 = vpop.f32.mrf.mxu0
    %v5888 = vadd.f32 %v5839, %v5887
    %v5889 = vpop.f32.mrf.mxu0
    %v5890 = vadd.f32 %v5841, %v5889
    %5891 = vmatmul.bf16.gmra.mxu0 %v1906
    %v5892 = vpop.f32.mrf.mxu0
    %v5893 = vadd.f32 %v5844, %v5892
    %v5894 = vpop.f32.mrf.mxu0
    %v5895 = vadd.f32 %v5846, %v5894
    %5896 = vmatmul.bf16.gmra.mxu0 %v1914
    %v5897 = vpop.f32.mrf.mxu0
    %v5898 = vadd.f32 %v5849, %v5897
    %v5899 = vpop.f32.mrf.mxu0
    %v5900 = vadd.f32 %v5851, %v5899
    %5901 = vmatmul.bf16.gmra.mxu0 %v1922
    %v5902 = vpop.f32.mrf.mxu0
    %v5903 = vadd.f32 %v5854, %v5902
    %v5904 = vpop.f32.mrf.mxu0
    %v5905 = vadd.f32 %v5856, %v5904
    %5906 = vmatmul.bf16.gmra.mxu0 %v1930
    %v5907 = vpop.f32.mrf.mxu0
    %v5908 = vadd.f32 %v5859, %v5907
    %v5909 = vpop.f32.mrf.mxu0
    %v5910 = vadd.f32 %v5861, %v5909
    %5911 = vmatmul.bf16.gmra.mxu0 %v1938
    %v5912 = vpop.f32.mrf.mxu0
    %v5913 = vadd.f32 %v5864, %v5912
    %v5914 = vpop.f32.mrf.mxu0
    %v5915 = vadd.f32 %v5866, %v5914
    %5916 = vdwg.mxu0
    %5917 = vmatpush.bf16.msra.mxu0 %v4197
    %5918 = vmatpush.bf16.msra.mxu0 %v4189
    %5919 = vmatpush.bf16.msra.mxu0 %v4181
    %5920 = vmatpush.bf16.msra.mxu0 %v4173
    %5921 = vmatpush.bf16.msra.mxu0 %v4165
    %5922 = vmatpush.bf16.msra.mxu0 %v4157
    %5923 = vmatpush.bf16.msra.mxu0 %v4149
    %5924 = vmatpush.bf16.msra.mxu0 %v4141
    %5925 = vmatmul.bf16.gmra.mxu0 %v1883
    %v5926 = vpop.f32.mrf.mxu0
    %v5927 = vadd.f32 %v5878, %v5926
    %v5928 = vpop.f32.mrf.mxu0
    %v5929 = vadd.f32 %v5880, %v5928
    %5930 = vmatmul.bf16.gmra.mxu0 %v1891
    %v5931 = vpop.f32.mrf.mxu0
    %v5932 = vadd.f32 %v5883, %v5931
    %v5933 = vpop.f32.mrf.mxu0
    %v5934 = vadd.f32 %v5885, %v5933
    %5935 = vmatmul.bf16.gmra.mxu0 %v1899
    %v5936 = vpop.f32.mrf.mxu0
    %v5937 = vadd.f32 %v5888, %v5936
    %v5938 = vpop.f32.mrf.mxu0
    %v5939 = vadd.f32 %v5890, %v5938
    %5940 = vmatmul.bf16.gmra.mxu0 %v1907
    %v5941 = vpop.f32.mrf.mxu0
    %v5942 = vadd.f32 %v5893, %v5941
    %v5943 = vpop.f32.mrf.mxu0
    %v5944 = vadd.f32 %v5895, %v5943
    %5945 = vmatmul.bf16.gmra.mxu0 %v1915
    %v5946 = vpop.f32.mrf.mxu0
    %v5947 = vadd.f32 %v5898, %v5946
    %v5948 = vpop.f32.mrf.mxu0
    %v5949 = vadd.f32 %v5900, %v5948
    %5950 = vmatmul.bf16.gmra.mxu0 %v1923
    %v5951 = vpop.f32.mrf.mxu0
    %v5952 = vadd.f32 %v5903, %v5951
    %v5953 = vpop.f32.mrf.mxu0
    %v5954 = vadd.f32 %v5905, %v5953
    %5955 = vmatmul.bf16.gmra.mxu0 %v1931
    %v5956 = vpop.f32.mrf.mxu0
    %v5957 = vadd.f32 %v5908, %v5956
    %v5958 = vpop.f32.mrf.mxu0
    %v5959 = vadd.f32 %v5910, %v5958
    %5960 = vmatmul.bf16.gmra.mxu0 %v1939
    %v5961 = vpop.f32.mrf.mxu0
    %v5962 = vadd.f32 %v5913, %v5961
    %v5963 = vpop.f32.mrf.mxu0
    %v5964 = vadd.f32 %v5915, %v5963
    %5965 = vdwg.mxu0
    %5966 = vmatpush.bf16.msra.mxu0 %v4261
    %5967 = vmatpush.bf16.msra.mxu0 %v4253
    %5968 = vmatpush.bf16.msra.mxu0 %v4245
    %5969 = vmatpush.bf16.msra.mxu0 %v4237
    %5970 = vmatpush.bf16.msra.mxu0 %v4229
    %5971 = vmatpush.bf16.msra.mxu0 %v4221
    %5972 = vmatpush.bf16.msra.mxu0 %v4213
    %5973 = vmatpush.bf16.msra.mxu0 %v4205
    %5974 = vmatmul.bf16.gmra.mxu0 %v1884
    %v5975 = vpop.f32.mrf.mxu0
    %v5976 = vadd.f32 %v5927, %v5975
    %v5977 = vpop.f32.mrf.mxu0
    %v5978 = vadd.f32 %v5929, %v5977
    %5979 = vmatmul.bf16.gmra.mxu0 %v1892
    %v5980 = vpop.f32.mrf.mxu0
    %v5981 = vadd.f32 %v5932, %v5980
    %v5982 = vpop.f32.mrf.mxu0
    %v5983 = vadd.f32 %v5934, %v5982
    %5984 = vmatmul.bf16.gmra.mxu0 %v1900
    %v5985 = vpop.f32.mrf.mxu0
    %v5986 = vadd.f32 %v5937, %v5985
    %v5987 = vpop.f32.mrf.mxu0
    %v5988 = vadd.f32 %v5939, %v5987
    %5989 = vmatmul.bf16.gmra.mxu0 %v1908
    %v5990 = vpop.f32.mrf.mxu0
    %v5991 = vadd.f32 %v5942, %v5990
    %v5992 = vpop.f32.mrf.mxu0
    %v5993 = vadd.f32 %v5944, %v5992
    %5994 = vmatmul.bf16.gmra.mxu0 %v1916
    %v5995 = vpop.f32.mrf.mxu0
    %v5996 = vadd.f32 %v5947, %v5995
    %v5997 = vpop.f32.mrf.mxu0
    %v5998 = vadd.f32 %v5949, %v5997
    %5999 = vmatmul.bf16.gmra.mxu0 %v1924
    %v6000 = vpop.f32.mrf.mxu0
    %v6001 = vadd.f32 %v5952, %v6000
    %v6002 = vpop.f32.mrf.mxu0
    %v6003 = vadd.f32 %v5954, %v6002
    %6004 = vmatmul.bf16.gmra.mxu0 %v1932
    %v6005 = vpop.f32.mrf.mxu0
    %v6006 = vadd.f32 %v5957, %v6005
    %v6007 = vpop.f32.mrf.mxu0
    %v6008 = vadd.f32 %v5959, %v6007
    %6009 = vmatmul.bf16.gmra.mxu0 %v1940
    %v6010 = vpop.f32.mrf.mxu0
    %v6011 = vadd.f32 %v5962, %v6010
    %v6012 = vpop.f32.mrf.mxu0
    %v6013 = vadd.f32 %v5964, %v6012
    %6014 = vdwg.mxu0
    %6015 = vmatpush.bf16.msra.mxu0 %v4325
    %6016 = vmatpush.bf16.msra.mxu0 %v4317
    %6017 = vmatpush.bf16.msra.mxu0 %v4309
    %6018 = vmatpush.bf16.msra.mxu0 %v4301
    %6019 = vmatpush.bf16.msra.mxu0 %v4293
    %6020 = vmatpush.bf16.msra.mxu0 %v4285
    %6021 = vmatpush.bf16.msra.mxu0 %v4277
    %6022 = vmatpush.bf16.msra.mxu0 %v4269
    %6023 = vmatmul.bf16.gmra.mxu0 %v1885
    %v6024 = vpop.f32.mrf.mxu0
    %v6025 = vadd.f32 %v5976, %v6024
    %v6026 = vpop.f32.mrf.mxu0
    %v6027 = vadd.f32 %v5978, %v6026
    %6028 = vmatmul.bf16.gmra.mxu0 %v1893
    %v6029 = vpop.f32.mrf.mxu0
    %v6030 = vadd.f32 %v5981, %v6029
    %v6031 = vpop.f32.mrf.mxu0
    %v6032 = vadd.f32 %v5983, %v6031
    %6033 = vmatmul.bf16.gmra.mxu0 %v1901
    %v6034 = vpop.f32.mrf.mxu0
    %v6035 = vadd.f32 %v5986, %v6034
    %v6036 = vpop.f32.mrf.mxu0
    %v6037 = vadd.f32 %v5988, %v6036
    %6038 = vmatmul.bf16.gmra.mxu0 %v1909
    %v6039 = vpop.f32.mrf.mxu0
    %v6040 = vadd.f32 %v5991, %v6039
    %v6041 = vpop.f32.mrf.mxu0
    %v6042 = vadd.f32 %v5993, %v6041
    %6043 = vmatmul.bf16.gmra.mxu0 %v1917
    %v6044 = vpop.f32.mrf.mxu0
    %v6045 = vadd.f32 %v5996, %v6044
    %v6046 = vpop.f32.mrf.mxu0
    %v6047 = vadd.f32 %v5998, %v6046
    %6048 = vmatmul.bf16.gmra.mxu0 %v1925
    %v6049 = vpop.f32.mrf.mxu0
    %v6050 = vadd.f32 %v6001, %v6049
    %v6051 = vpop.f32.mrf.mxu0
    %v6052 = vadd.f32 %v6003, %v6051
    %6053 = vmatmul.bf16.gmra.mxu0 %v1933
    %v6054 = vpop.f32.mrf.mxu0
    %v6055 = vadd.f32 %v6006, %v6054
    %v6056 = vpop.f32.mrf.mxu0
    %v6057 = vadd.f32 %v6008, %v6056
    %6058 = vmatmul.bf16.gmra.mxu0 %v1941
    %v6059 = vpop.f32.mrf.mxu0
    %v6060 = vadd.f32 %v6011, %v6059
    %v6061 = vpop.f32.mrf.mxu0
    %v6062 = vadd.f32 %v6013, %v6061
    %6063 = vdwg.mxu0
    %6064 = vmatpush.bf16.msra.mxu0 %v4389
    %6065 = vmatpush.bf16.msra.mxu0 %v4381
    %6066 = vmatpush.bf16.msra.mxu0 %v4373
    %6067 = vmatpush.bf16.msra.mxu0 %v4365
    %6068 = vmatpush.bf16.msra.mxu0 %v4357
    %6069 = vmatpush.bf16.msra.mxu0 %v4349
    %6070 = vmatpush.bf16.msra.mxu0 %v4341
    %6071 = vmatpush.bf16.msra.mxu0 %v4333
    %6072 = vmatmul.bf16.gmra.mxu0 %v1886
    %v6073 = vpop.f32.mrf.mxu0
    %v6074 = vadd.f32 %v6025, %v6073
    %v6075 = vpop.f32.mrf.mxu0
    %v6076 = vadd.f32 %v6027, %v6075
    %6077 = vmatmul.bf16.gmra.mxu0 %v1894
    %v6078 = vpop.f32.mrf.mxu0
    %v6079 = vadd.f32 %v6030, %v6078
    %v6080 = vpop.f32.mrf.mxu0
    %v6081 = vadd.f32 %v6032, %v6080
    %6082 = vmatmul.bf16.gmra.mxu0 %v1902
    %v6083 = vpop.f32.mrf.mxu0
    %v6084 = vadd.f32 %v6035, %v6083
    %v6085 = vpop.f32.mrf.mxu0
    %v6086 = vadd.f32 %v6037, %v6085
    %6087 = vmatmul.bf16.gmra.mxu0 %v1910
    %v6088 = vpop.f32.mrf.mxu0
    %v6089 = vadd.f32 %v6040, %v6088
    %v6090 = vpop.f32.mrf.mxu0
    %v6091 = vadd.f32 %v6042, %v6090
    %6092 = vmatmul.bf16.gmra.mxu0 %v1918
    %v6093 = vpop.f32.mrf.mxu0
    %v6094 = vadd.f32 %v6045, %v6093
    %v6095 = vpop.f32.mrf.mxu0
    %v6096 = vadd.f32 %v6047, %v6095
    %6097 = vmatmul.bf16.gmra.mxu0 %v1926
    %v6098 = vpop.f32.mrf.mxu0
    %v6099 = vadd.f32 %v6050, %v6098
    %v6100 = vpop.f32.mrf.mxu0
    %v6101 = vadd.f32 %v6052, %v6100
    %6102 = vmatmul.bf16.gmra.mxu0 %v1934
    %v6103 = vpop.f32.mrf.mxu0
    %v6104 = vadd.f32 %v6055, %v6103
    %v6105 = vpop.f32.mrf.mxu0
    %v6106 = vadd.f32 %v6057, %v6105
    %6107 = vmatmul.bf16.gmra.mxu0 %v1942
    %v6108 = vpop.f32.mrf.mxu0
    %v6109 = vadd.f32 %v6060, %v6108
    %v6110 = vpop.f32.mrf.mxu0
    %v6111 = vadd.f32 %v6062, %v6110
    %6112 = vdwg.mxu0
    %6113 = vmatpush.bf16.msra.mxu0 %v4453
    %6114 = vmatpush.bf16.msra.mxu0 %v4445
    %6115 = vmatpush.bf16.msra.mxu0 %v4437
    %6116 = vmatpush.bf16.msra.mxu0 %v4429
    %6117 = vmatpush.bf16.msra.mxu0 %v4421
    %6118 = vmatpush.bf16.msra.mxu0 %v4413
    %6119 = vmatpush.bf16.msra.mxu0 %v4405
    %6120 = vmatpush.bf16.msra.mxu0 %v4397
    %6121 = vmatmul.bf16.gmra.mxu0 %v1887
    %v6122 = vpop.f32.mrf.mxu0
    %v6123 = vadd.f32 %v6074, %v6122
    %v6124 = vpop.f32.mrf.mxu0
    %v6125 = vadd.f32 %v6076, %v6124
    %6126 = vmatmul.bf16.gmra.mxu0 %v1895
    %v6127 = vpop.f32.mrf.mxu0
    %v6128 = vadd.f32 %v6079, %v6127
    %v6129 = vpop.f32.mrf.mxu0
    %v6130 = vadd.f32 %v6081, %v6129
    %6131 = vmatmul.bf16.gmra.mxu0 %v1903
    %v6132 = vpop.f32.mrf.mxu0
    %v6133 = vadd.f32 %v6084, %v6132
    %v6134 = vpop.f32.mrf.mxu0
    %v6135 = vadd.f32 %v6086, %v6134
    %6136 = vmatmul.bf16.gmra.mxu0 %v1911
    %v6137 = vpop.f32.mrf.mxu0
    %v6138 = vadd.f32 %v6089, %v6137
    %v6139 = vpop.f32.mrf.mxu0
    %v6140 = vadd.f32 %v6091, %v6139
    %6141 = vmatmul.bf16.gmra.mxu0 %v1919
    %v6142 = vpop.f32.mrf.mxu0
    %v6143 = vadd.f32 %v6094, %v6142
    %v6144 = vpop.f32.mrf.mxu0
    %v6145 = vadd.f32 %v6096, %v6144
    %6146 = vmatmul.bf16.gmra.mxu0 %v1927
    %v6147 = vpop.f32.mrf.mxu0
    %v6148 = vadd.f32 %v6099, %v6147
    %v6149 = vpop.f32.mrf.mxu0
    %v6150 = vadd.f32 %v6101, %v6149
    %6151 = vmatmul.bf16.gmra.mxu0 %v1935
    %v6152 = vpop.f32.mrf.mxu0
    %v6153 = vadd.f32 %v6104, %v6152
    %v6154 = vpop.f32.mrf.mxu0
    %v6155 = vadd.f32 %v6106, %v6154
    %6156 = vmatmul.bf16.gmra.mxu0 %v1943
    %v6157 = vpop.f32.mrf.mxu0
    %v6158 = vadd.f32 %v6109, %v6157
    %v6159 = vpop.f32.mrf.mxu0
    %v6160 = vadd.f32 %v6111, %v6159
    %6161 = vdwg.mxu0
    %6162 = vmatpush.bf16.msra.mxu0 %v4517
    %6163 = vmatpush.bf16.msra.mxu0 %v4509
    %6164 = vmatpush.bf16.msra.mxu0 %v4501
    %6165 = vmatpush.bf16.msra.mxu0 %v4493
    %6166 = vmatpush.bf16.msra.mxu0 %v4485
    %6167 = vmatpush.bf16.msra.mxu0 %v4477
    %6168 = vmatpush.bf16.msra.mxu0 %v4469
    %6169 = vmatpush.bf16.msra.mxu0 %v4461
    %6170 = vmatmul.bf16.gmra.mxu0 %v1888
    %v6171 = vpop.f32.mrf.mxu0
    %v6172 = vadd.f32 %v6123, %v6171
    %v6173 = vpop.f32.mrf.mxu0
    %v6174 = vadd.f32 %v6125, %v6173
    %6175 = vmatmul.bf16.gmra.mxu0 %v1896
    %v6176 = vpop.f32.mrf.mxu0
    %v6177 = vadd.f32 %v6128, %v6176
    %v6178 = vpop.f32.mrf.mxu0
    %v6179 = vadd.f32 %v6130, %v6178
    %6180 = vmatmul.bf16.gmra.mxu0 %v1904
    %v6181 = vpop.f32.mrf.mxu0
    %v6182 = vadd.f32 %v6133, %v6181
    %v6183 = vpop.f32.mrf.mxu0
    %v6184 = vadd.f32 %v6135, %v6183
    %6185 = vmatmul.bf16.gmra.mxu0 %v1912
    %v6186 = vpop.f32.mrf.mxu0
    %v6187 = vadd.f32 %v6138, %v6186
    %v6188 = vpop.f32.mrf.mxu0
    %v6189 = vadd.f32 %v6140, %v6188
    %6190 = vmatmul.bf16.gmra.mxu0 %v1920
    %v6191 = vpop.f32.mrf.mxu0
    %v6192 = vadd.f32 %v6143, %v6191
    %v6193 = vpop.f32.mrf.mxu0
    %v6194 = vadd.f32 %v6145, %v6193
    %6195 = vmatmul.bf16.gmra.mxu0 %v1928
    %v6196 = vpop.f32.mrf.mxu0
    %v6197 = vadd.f32 %v6148, %v6196
    %v6198 = vpop.f32.mrf.mxu0
    %v6199 = vadd.f32 %v6150, %v6198
    %6200 = vmatmul.bf16.gmra.mxu0 %v1936
    %v6201 = vpop.f32.mrf.mxu0
    %v6202 = vadd.f32 %v6153, %v6201
    %v6203 = vpop.f32.mrf.mxu0
    %v6204 = vadd.f32 %v6155, %v6203
    %6205 = vmatmul.bf16.gmra.mxu0 %v1944
    %v6206 = vpop.f32.mrf.mxu0
    %v6207 = vadd.f32 %v6158, %v6206
    %v6208 = vpop.f32.mrf.mxu0
    %v6209 = vadd.f32 %v6160, %v6208
    %6210 = vdwg.mxu0
    %6211 = vmatpush.bf16.msra.mxu0 %v4070
    %6212 = vmatpush.bf16.msra.mxu0 %v4062
    %6213 = vmatpush.bf16.msra.mxu0 %v4054
    %6214 = vmatpush.bf16.msra.mxu0 %v4046
    %6215 = vmatpush.bf16.msra.mxu0 %v4038
    %6216 = vmatpush.bf16.msra.mxu0 %v4030
    %6217 = vmatpush.bf16.msra.mxu0 %v4022
    %6218 = vmatpush.bf16.msra.mxu0 %v4014
    %6219 = vmatmul.bf16.gmra.mxu0 %v1881
    %v6220 = vpop.f32.mrf.mxu0
    %v6221 = vadd.f32 %v2462, %v6220
    %v6222 = vpop.f32.mrf.mxu0
    %v6223 = vadd.f32 %v2462, %v6222
    %6224 = vmatmul.bf16.gmra.mxu0 %v1889
    %v6225 = vpop.f32.mrf.mxu0
    %v6226 = vadd.f32 %v2462, %v6225
    %v6227 = vpop.f32.mrf.mxu0
    %v6228 = vadd.f32 %v2462, %v6227
    %6229 = vmatmul.bf16.gmra.mxu0 %v1897
    %v6230 = vpop.f32.mrf.mxu0
    %v6231 = vadd.f32 %v2462, %v6230
    %v6232 = vpop.f32.mrf.mxu0
    %v6233 = vadd.f32 %v2462, %v6232
    %6234 = vmatmul.bf16.gmra.mxu0 %v1905
    %v6235 = vpop.f32.mrf.mxu0
    %v6236 = vadd.f32 %v2462, %v6235
    %v6237 = vpop.f32.mrf.mxu0
    %v6238 = vadd.f32 %v2462, %v6237
    %6239 = vmatmul.bf16.gmra.mxu0 %v1913
    %v6240 = vpop.f32.mrf.mxu0
    %v6241 = vadd.f32 %v2462, %v6240
    %v6242 = vpop.f32.mrf.mxu0
    %v6243 = vadd.f32 %v2462, %v6242
    %6244 = vmatmul.bf16.gmra.mxu0 %v1921
    %v6245 = vpop.f32.mrf.mxu0
    %v6246 = vadd.f32 %v2462, %v6245
    %v6247 = vpop.f32.mrf.mxu0
    %v6248 = vadd.f32 %v2462, %v6247
    %6249 = vmatmul.bf16.gmra.mxu0 %v1929
    %v6250 = vpop.f32.mrf.mxu0
    %v6251 = vadd.f32 %v2462, %v6250
    %v6252 = vpop.f32.mrf.mxu0
    %v6253 = vadd.f32 %v2462, %v6252
    %6254 = vmatmul.bf16.gmra.mxu0 %v1937
    %v6255 = vpop.f32.mrf.mxu0
    %v6256 = vadd.f32 %v2462, %v6255
    %v6257 = vpop.f32.mrf.mxu0
    %v6258 = vadd.f32 %v2462, %v6257
    %6259 = vdwg.mxu0
    %6260 = vmatpush.bf16.msra.mxu0 %v4134
    %6261 = vmatpush.bf16.msra.mxu0 %v4126
    %6262 = vmatpush.bf16.msra.mxu0 %v4118
    %6263 = vmatpush.bf16.msra.mxu0 %v4110
    %6264 = vmatpush.bf16.msra.mxu0 %v4102
    %6265 = vmatpush.bf16.msra.mxu0 %v4094
    %6266 = vmatpush.bf16.msra.mxu0 %v4086
    %6267 = vmatpush.bf16.msra.mxu0 %v4078
    %6268 = vmatmul.bf16.gmra.mxu0 %v1882
    %v6269 = vpop.f32.mrf.mxu0
    %v6270 = vadd.f32 %v6221, %v6269
    %v6271 = vpop.f32.mrf.mxu0
    %v6272 = vadd.f32 %v6223, %v6271
    %6273 = vmatmul.bf16.gmra.mxu0 %v1890
    %v6274 = vpop.f32.mrf.mxu0
    %v6275 = vadd.f32 %v6226, %v6274
    %v6276 = vpop.f32.mrf.mxu0
    %v6277 = vadd.f32 %v6228, %v6276
    %6278 = vmatmul.bf16.gmra.mxu0 %v1898
    %v6279 = vpop.f32.mrf.mxu0
    %v6280 = vadd.f32 %v6231, %v6279
    %v6281 = vpop.f32.mrf.mxu0
    %v6282 = vadd.f32 %v6233, %v6281
    %6283 = vmatmul.bf16.gmra.mxu0 %v1906
    %v6284 = vpop.f32.mrf.mxu0
    %v6285 = vadd.f32 %v6236, %v6284
    %v6286 = vpop.f32.mrf.mxu0
    %v6287 = vadd.f32 %v6238, %v6286
    %6288 = vmatmul.bf16.gmra.mxu0 %v1914
    %v6289 = vpop.f32.mrf.mxu0
    %v6290 = vadd.f32 %v6241, %v6289
    %v6291 = vpop.f32.mrf.mxu0
    %v6292 = vadd.f32 %v6243, %v6291
    %6293 = vmatmul.bf16.gmra.mxu0 %v1922
    %v6294 = vpop.f32.mrf.mxu0
    %v6295 = vadd.f32 %v6246, %v6294
    %v6296 = vpop.f32.mrf.mxu0
    %v6297 = vadd.f32 %v6248, %v6296
    %6298 = vmatmul.bf16.gmra.mxu0 %v1930
    %v6299 = vpop.f32.mrf.mxu0
    %v6300 = vadd.f32 %v6251, %v6299
    %v6301 = vpop.f32.mrf.mxu0
    %v6302 = vadd.f32 %v6253, %v6301
    %6303 = vmatmul.bf16.gmra.mxu0 %v1938
    %v6304 = vpop.f32.mrf.mxu0
    %v6305 = vadd.f32 %v6256, %v6304
    %v6306 = vpop.f32.mrf.mxu0
    %v6307 = vadd.f32 %v6258, %v6306
    %6308 = vdwg.mxu0
    %6309 = vmatpush.bf16.msra.mxu0 %v4198
    %6310 = vmatpush.bf16.msra.mxu0 %v4190
    %6311 = vmatpush.bf16.msra.mxu0 %v4182
    %6312 = vmatpush.bf16.msra.mxu0 %v4174
    %6313 = vmatpush.bf16.msra.mxu0 %v4166
    %6314 = vmatpush.bf16.msra.mxu0 %v4158
    %6315 = vmatpush.bf16.msra.mxu0 %v4150
    %6316 = vmatpush.bf16.msra.mxu0 %v4142
    %6317 = vmatmul.bf16.gmra.mxu0 %v1883
    %v6318 = vpop.f32.mrf.mxu0
    %v6319 = vadd.f32 %v6270, %v6318
    %v6320 = vpop.f32.mrf.mxu0
    %v6321 = vadd.f32 %v6272, %v6320
    %6322 = vmatmul.bf16.gmra.mxu0 %v1891
    %v6323 = vpop.f32.mrf.mxu0
    %v6324 = vadd.f32 %v6275, %v6323
    %v6325 = vpop.f32.mrf.mxu0
    %v6326 = vadd.f32 %v6277, %v6325
    %6327 = vmatmul.bf16.gmra.mxu0 %v1899
    %v6328 = vpop.f32.mrf.mxu0
    %v6329 = vadd.f32 %v6280, %v6328
    %v6330 = vpop.f32.mrf.mxu0
    %v6331 = vadd.f32 %v6282, %v6330
    %6332 = vmatmul.bf16.gmra.mxu0 %v1907
    %v6333 = vpop.f32.mrf.mxu0
    %v6334 = vadd.f32 %v6285, %v6333
    %v6335 = vpop.f32.mrf.mxu0
    %v6336 = vadd.f32 %v6287, %v6335
    %6337 = vmatmul.bf16.gmra.mxu0 %v1915
    %v6338 = vpop.f32.mrf.mxu0
    %v6339 = vadd.f32 %v6290, %v6338
    %v6340 = vpop.f32.mrf.mxu0
    %v6341 = vadd.f32 %v6292, %v6340
    %6342 = vmatmul.bf16.gmra.mxu0 %v1923
    %v6343 = vpop.f32.mrf.mxu0
    %v6344 = vadd.f32 %v6295, %v6343
    %v6345 = vpop.f32.mrf.mxu0
    %v6346 = vadd.f32 %v6297, %v6345
    %6347 = vmatmul.bf16.gmra.mxu0 %v1931
    %v6348 = vpop.f32.mrf.mxu0
    %v6349 = vadd.f32 %v6300, %v6348
    %v6350 = vpop.f32.mrf.mxu0
    %v6351 = vadd.f32 %v6302, %v6350
    %6352 = vmatmul.bf16.gmra.mxu0 %v1939
    %v6353 = vpop.f32.mrf.mxu0
    %v6354 = vadd.f32 %v6305, %v6353
    %v6355 = vpop.f32.mrf.mxu0
    %v6356 = vadd.f32 %v6307, %v6355
    %6357 = vdwg.mxu0
    %6358 = vmatpush.bf16.msra.mxu0 %v4262
    %6359 = vmatpush.bf16.msra.mxu0 %v4254
    %6360 = vmatpush.bf16.msra.mxu0 %v4246
    %6361 = vmatpush.bf16.msra.mxu0 %v4238
    %6362 = vmatpush.bf16.msra.mxu0 %v4230
    %6363 = vmatpush.bf16.msra.mxu0 %v4222
    %6364 = vmatpush.bf16.msra.mxu0 %v4214
    %6365 = vmatpush.bf16.msra.mxu0 %v4206
    %6366 = vmatmul.bf16.gmra.mxu0 %v1884
    %v6367 = vpop.f32.mrf.mxu0
    %v6368 = vadd.f32 %v6319, %v6367
    %v6369 = vpop.f32.mrf.mxu0
    %v6370 = vadd.f32 %v6321, %v6369
    %6371 = vmatmul.bf16.gmra.mxu0 %v1892
    %v6372 = vpop.f32.mrf.mxu0
    %v6373 = vadd.f32 %v6324, %v6372
    %v6374 = vpop.f32.mrf.mxu0
    %v6375 = vadd.f32 %v6326, %v6374
    %6376 = vmatmul.bf16.gmra.mxu0 %v1900
    %v6377 = vpop.f32.mrf.mxu0
    %v6378 = vadd.f32 %v6329, %v6377
    %v6379 = vpop.f32.mrf.mxu0
    %v6380 = vadd.f32 %v6331, %v6379
    %6381 = vmatmul.bf16.gmra.mxu0 %v1908
    %v6382 = vpop.f32.mrf.mxu0
    %v6383 = vadd.f32 %v6334, %v6382
    %v6384 = vpop.f32.mrf.mxu0
    %v6385 = vadd.f32 %v6336, %v6384
    %6386 = vmatmul.bf16.gmra.mxu0 %v1916
    %v6387 = vpop.f32.mrf.mxu0
    %v6388 = vadd.f32 %v6339, %v6387
    %v6389 = vpop.f32.mrf.mxu0
    %v6390 = vadd.f32 %v6341, %v6389
    %6391 = vmatmul.bf16.gmra.mxu0 %v1924
    %v6392 = vpop.f32.mrf.mxu0
    %v6393 = vadd.f32 %v6344, %v6392
    %v6394 = vpop.f32.mrf.mxu0
    %v6395 = vadd.f32 %v6346, %v6394
    %6396 = vmatmul.bf16.gmra.mxu0 %v1932
    %v6397 = vpop.f32.mrf.mxu0
    %v6398 = vadd.f32 %v6349, %v6397
    %v6399 = vpop.f32.mrf.mxu0
    %v6400 = vadd.f32 %v6351, %v6399
    %6401 = vmatmul.bf16.gmra.mxu0 %v1940
    %v6402 = vpop.f32.mrf.mxu0
    %v6403 = vadd.f32 %v6354, %v6402
    %v6404 = vpop.f32.mrf.mxu0
    %v6405 = vadd.f32 %v6356, %v6404
    %6406 = vdwg.mxu0
    %6407 = vmatpush.bf16.msra.mxu0 %v4326
    %6408 = vmatpush.bf16.msra.mxu0 %v4318
    %6409 = vmatpush.bf16.msra.mxu0 %v4310
    %6410 = vmatpush.bf16.msra.mxu0 %v4302
    %6411 = vmatpush.bf16.msra.mxu0 %v4294
    %6412 = vmatpush.bf16.msra.mxu0 %v4286
    %6413 = vmatpush.bf16.msra.mxu0 %v4278
    %6414 = vmatpush.bf16.msra.mxu0 %v4270
    %6415 = vmatmul.bf16.gmra.mxu0 %v1885
    %v6416 = vpop.f32.mrf.mxu0
    %v6417 = vadd.f32 %v6368, %v6416
    %v6418 = vpop.f32.mrf.mxu0
    %v6419 = vadd.f32 %v6370, %v6418
    %6420 = vmatmul.bf16.gmra.mxu0 %v1893
    %v6421 = vpop.f32.mrf.mxu0
    %v6422 = vadd.f32 %v6373, %v6421
    %v6423 = vpop.f32.mrf.mxu0
    %v6424 = vadd.f32 %v6375, %v6423
    %6425 = vmatmul.bf16.gmra.mxu0 %v1901
    %v6426 = vpop.f32.mrf.mxu0
    %v6427 = vadd.f32 %v6378, %v6426
    %v6428 = vpop.f32.mrf.mxu0
    %v6429 = vadd.f32 %v6380, %v6428
    %6430 = vmatmul.bf16.gmra.mxu0 %v1909
    %v6431 = vpop.f32.mrf.mxu0
    %v6432 = vadd.f32 %v6383, %v6431
    %v6433 = vpop.f32.mrf.mxu0
    %v6434 = vadd.f32 %v6385, %v6433
    %6435 = vmatmul.bf16.gmra.mxu0 %v1917
    %v6436 = vpop.f32.mrf.mxu0
    %v6437 = vadd.f32 %v6388, %v6436
    %v6438 = vpop.f32.mrf.mxu0
    %v6439 = vadd.f32 %v6390, %v6438
    %6440 = vmatmul.bf16.gmra.mxu0 %v1925
    %v6441 = vpop.f32.mrf.mxu0
    %v6442 = vadd.f32 %v6393, %v6441
    %v6443 = vpop.f32.mrf.mxu0
    %v6444 = vadd.f32 %v6395, %v6443
    %6445 = vmatmul.bf16.gmra.mxu0 %v1933
    %v6446 = vpop.f32.mrf.mxu0
    %v6447 = vadd.f32 %v6398, %v6446
    %v6448 = vpop.f32.mrf.mxu0
    %v6449 = vadd.f32 %v6400, %v6448
    %6450 = vmatmul.bf16.gmra.mxu0 %v1941
    %v6451 = vpop.f32.mrf.mxu0
    %v6452 = vadd.f32 %v6403, %v6451
    %v6453 = vpop.f32.mrf.mxu0
    %v6454 = vadd.f32 %v6405, %v6453
    %6455 = vdwg.mxu0
    %6456 = vmatpush.bf16.msra.mxu0 %v4390
    %6457 = vmatpush.bf16.msra.mxu0 %v4382
    %6458 = vmatpush.bf16.msra.mxu0 %v4374
    %6459 = vmatpush.bf16.msra.mxu0 %v4366
    %6460 = vmatpush.bf16.msra.mxu0 %v4358
    %6461 = vmatpush.bf16.msra.mxu0 %v4350
    %6462 = vmatpush.bf16.msra.mxu0 %v4342
    %6463 = vmatpush.bf16.msra.mxu0 %v4334
    %6464 = vmatmul.bf16.gmra.mxu0 %v1886
    %v6465 = vpop.f32.mrf.mxu0
    %v6466 = vadd.f32 %v6417, %v6465
    %v6467 = vpop.f32.mrf.mxu0
    %v6468 = vadd.f32 %v6419, %v6467
    %6469 = vmatmul.bf16.gmra.mxu0 %v1894
    %v6470 = vpop.f32.mrf.mxu0
    %v6471 = vadd.f32 %v6422, %v6470
    %v6472 = vpop.f32.mrf.mxu0
    %v6473 = vadd.f32 %v6424, %v6472
    %6474 = vmatmul.bf16.gmra.mxu0 %v1902
    %v6475 = vpop.f32.mrf.mxu0
    %v6476 = vadd.f32 %v6427, %v6475
    %v6477 = vpop.f32.mrf.mxu0
    %v6478 = vadd.f32 %v6429, %v6477
    %6479 = vmatmul.bf16.gmra.mxu0 %v1910
    %v6480 = vpop.f32.mrf.mxu0
    %v6481 = vadd.f32 %v6432, %v6480
    %v6482 = vpop.f32.mrf.mxu0
    %v6483 = vadd.f32 %v6434, %v6482
    %6484 = vmatmul.bf16.gmra.mxu0 %v1918
    %v6485 = vpop.f32.mrf.mxu0
    %v6486 = vadd.f32 %v6437, %v6485
    %v6487 = vpop.f32.mrf.mxu0
    %v6488 = vadd.f32 %v6439, %v6487
    %6489 = vmatmul.bf16.gmra.mxu0 %v1926
    %v6490 = vpop.f32.mrf.mxu0
    %v6491 = vadd.f32 %v6442, %v6490
    %v6492 = vpop.f32.mrf.mxu0
    %v6493 = vadd.f32 %v6444, %v6492
    %6494 = vmatmul.bf16.gmra.mxu0 %v1934
    %v6495 = vpop.f32.mrf.mxu0
    %v6496 = vadd.f32 %v6447, %v6495
    %v6497 = vpop.f32.mrf.mxu0
    %v6498 = vadd.f32 %v6449, %v6497
    %6499 = vmatmul.bf16.gmra.mxu0 %v1942
    %v6500 = vpop.f32.mrf.mxu0
    %v6501 = vadd.f32 %v6452, %v6500
    %v6502 = vpop.f32.mrf.mxu0
    %v6503 = vadd.f32 %v6454, %v6502
    %6504 = vdwg.mxu0
    %6505 = vmatpush.bf16.msra.mxu0 %v4454
    %6506 = vmatpush.bf16.msra.mxu0 %v4446
    %6507 = vmatpush.bf16.msra.mxu0 %v4438
    %6508 = vmatpush.bf16.msra.mxu0 %v4430
    %6509 = vmatpush.bf16.msra.mxu0 %v4422
    %6510 = vmatpush.bf16.msra.mxu0 %v4414
    %6511 = vmatpush.bf16.msra.mxu0 %v4406
    %6512 = vmatpush.bf16.msra.mxu0 %v4398
    %6513 = vmatmul.bf16.gmra.mxu0 %v1887
    %v6514 = vpop.f32.mrf.mxu0
    %v6515 = vadd.f32 %v6466, %v6514
    %v6516 = vpop.f32.mrf.mxu0
    %v6517 = vadd.f32 %v6468, %v6516
    %6518 = vmatmul.bf16.gmra.mxu0 %v1895
    %v6519 = vpop.f32.mrf.mxu0
    %v6520 = vadd.f32 %v6471, %v6519
    %v6521 = vpop.f32.mrf.mxu0
    %v6522 = vadd.f32 %v6473, %v6521
    %6523 = vmatmul.bf16.gmra.mxu0 %v1903
    %v6524 = vpop.f32.mrf.mxu0
    %v6525 = vadd.f32 %v6476, %v6524
    %v6526 = vpop.f32.mrf.mxu0
    %v6527 = vadd.f32 %v6478, %v6526
    %6528 = vmatmul.bf16.gmra.mxu0 %v1911
    %v6529 = vpop.f32.mrf.mxu0
    %v6530 = vadd.f32 %v6481, %v6529
    %v6531 = vpop.f32.mrf.mxu0
    %v6532 = vadd.f32 %v6483, %v6531
    %6533 = vmatmul.bf16.gmra.mxu0 %v1919
    %v6534 = vpop.f32.mrf.mxu0
    %v6535 = vadd.f32 %v6486, %v6534
    %v6536 = vpop.f32.mrf.mxu0
    %v6537 = vadd.f32 %v6488, %v6536
    %6538 = vmatmul.bf16.gmra.mxu0 %v1927
    %v6539 = vpop.f32.mrf.mxu0
    %v6540 = vadd.f32 %v6491, %v6539
    %v6541 = vpop.f32.mrf.mxu0
    %v6542 = vadd.f32 %v6493, %v6541
    %6543 = vmatmul.bf16.gmra.mxu0 %v1935
    %v6544 = vpop.f32.mrf.mxu0
    %v6545 = vadd.f32 %v6496, %v6544
    %v6546 = vpop.f32.mrf.mxu0
    %v6547 = vadd.f32 %v6498, %v6546
    %6548 = vmatmul.bf16.gmra.mxu0 %v1943
    %v6549 = vpop.f32.mrf.mxu0
    %v6550 = vadd.f32 %v6501, %v6549
    %v6551 = vpop.f32.mrf.mxu0
    %v6552 = vadd.f32 %v6503, %v6551
    %6553 = vdwg.mxu0
    %6554 = vmatpush.bf16.msra.mxu0 %v4518
    %6555 = vmatpush.bf16.msra.mxu0 %v4510
    %6556 = vmatpush.bf16.msra.mxu0 %v4502
    %6557 = vmatpush.bf16.msra.mxu0 %v4494
    %6558 = vmatpush.bf16.msra.mxu0 %v4486
    %6559 = vmatpush.bf16.msra.mxu0 %v4478
    %6560 = vmatpush.bf16.msra.mxu0 %v4470
    %6561 = vmatpush.bf16.msra.mxu0 %v4462
    %6562 = vmatmul.bf16.gmra.mxu0 %v1888
    %v6563 = vpop.f32.mrf.mxu0
    %v6564 = vadd.f32 %v6515, %v6563
    %v6565 = vpop.f32.mrf.mxu0
    %v6566 = vadd.f32 %v6517, %v6565
    %6567 = vmatmul.bf16.gmra.mxu0 %v1896
    %v6568 = vpop.f32.mrf.mxu0
    %v6569 = vadd.f32 %v6520, %v6568
    %v6570 = vpop.f32.mrf.mxu0
    %v6571 = vadd.f32 %v6522, %v6570
    %6572 = vmatmul.bf16.gmra.mxu0 %v1904
    %v6573 = vpop.f32.mrf.mxu0
    %v6574 = vadd.f32 %v6525, %v6573
    %v6575 = vpop.f32.mrf.mxu0
    %v6576 = vadd.f32 %v6527, %v6575
    %6577 = vmatmul.bf16.gmra.mxu0 %v1912
    %v6578 = vpop.f32.mrf.mxu0
    %v6579 = vadd.f32 %v6530, %v6578
    %v6580 = vpop.f32.mrf.mxu0
    %v6581 = vadd.f32 %v6532, %v6580
    %6582 = vmatmul.bf16.gmra.mxu0 %v1920
    %v6583 = vpop.f32.mrf.mxu0
    %v6584 = vadd.f32 %v6535, %v6583
    %v6585 = vpop.f32.mrf.mxu0
    %v6586 = vadd.f32 %v6537, %v6585
    %6587 = vmatmul.bf16.gmra.mxu0 %v1928
    %v6588 = vpop.f32.mrf.mxu0
    %v6589 = vadd.f32 %v6540, %v6588
    %v6590 = vpop.f32.mrf.mxu0
    %v6591 = vadd.f32 %v6542, %v6590
    %6592 = vmatmul.bf16.gmra.mxu0 %v1936
    %v6593 = vpop.f32.mrf.mxu0
    %v6594 = vadd.f32 %v6545, %v6593
    %v6595 = vpop.f32.mrf.mxu0
    %v6596 = vadd.f32 %v6547, %v6595
    %6597 = vmatmul.bf16.gmra.mxu0 %v1944
    %v6598 = vpop.f32.mrf.mxu0
    %v6599 = vadd.f32 %v6550, %v6598
    %v6600 = vpop.f32.mrf.mxu0
    %v6601 = vadd.f32 %v6552, %v6600
    %6602 = vdwg.mxu0
    %6603 = vmatpush.bf16.msra.mxu0 %v4071
    %6604 = vmatpush.bf16.msra.mxu0 %v4063
    %6605 = vmatpush.bf16.msra.mxu0 %v4055
    %6606 = vmatpush.bf16.msra.mxu0 %v4047
    %6607 = vmatpush.bf16.msra.mxu0 %v4039
    %6608 = vmatpush.bf16.msra.mxu0 %v4031
    %6609 = vmatpush.bf16.msra.mxu0 %v4023
    %6610 = vmatpush.bf16.msra.mxu0 %v4015
    %6611 = vmatmul.bf16.gmra.mxu0 %v1881
    %v6612 = vpop.f32.mrf.mxu0
    %v6613 = vadd.f32 %v2463, %v6612
    %v6614 = vpop.f32.mrf.mxu0
    %v6615 = vadd.f32 %v2463, %v6614
    %6616 = vmatmul.bf16.gmra.mxu0 %v1889
    %v6617 = vpop.f32.mrf.mxu0
    %v6618 = vadd.f32 %v2463, %v6617
    %v6619 = vpop.f32.mrf.mxu0
    %v6620 = vadd.f32 %v2463, %v6619
    %6621 = vmatmul.bf16.gmra.mxu0 %v1897
    %v6622 = vpop.f32.mrf.mxu0
    %v6623 = vadd.f32 %v2463, %v6622
    %v6624 = vpop.f32.mrf.mxu0
    %v6625 = vadd.f32 %v2463, %v6624
    %6626 = vmatmul.bf16.gmra.mxu0 %v1905
    %v6627 = vpop.f32.mrf.mxu0
    %v6628 = vadd.f32 %v2463, %v6627
    %v6629 = vpop.f32.mrf.mxu0
    %v6630 = vadd.f32 %v2463, %v6629
    %6631 = vmatmul.bf16.gmra.mxu0 %v1913
    %v6632 = vpop.f32.mrf.mxu0
    %v6633 = vadd.f32 %v2463, %v6632
    %v6634 = vpop.f32.mrf.mxu0
    %v6635 = vadd.f32 %v2463, %v6634
    %6636 = vmatmul.bf16.gmra.mxu0 %v1921
    %v6637 = vpop.f32.mrf.mxu0
    %v6638 = vadd.f32 %v2463, %v6637
    %v6639 = vpop.f32.mrf.mxu0
    %v6640 = vadd.f32 %v2463, %v6639
    %6641 = vmatmul.bf16.gmra.mxu0 %v1929
    %v6642 = vpop.f32.mrf.mxu0
    %v6643 = vadd.f32 %v2463, %v6642
    %v6644 = vpop.f32.mrf.mxu0
    %v6645 = vadd.f32 %v2463, %v6644
    %6646 = vmatmul.bf16.gmra.mxu0 %v1937
    %v6647 = vpop.f32.mrf.mxu0
    %v6648 = vadd.f32 %v2463, %v6647
    %v6649 = vpop.f32.mrf.mxu0
    %v6650 = vadd.f32 %v2463, %v6649
    %6651 = vdwg.mxu0
    %6652 = vmatpush.bf16.msra.mxu0 %v4135
    %6653 = vmatpush.bf16.msra.mxu0 %v4127
    %6654 = vmatpush.bf16.msra.mxu0 %v4119
    %6655 = vmatpush.bf16.msra.mxu0 %v4111
    %6656 = vmatpush.bf16.msra.mxu0 %v4103
    %6657 = vmatpush.bf16.msra.mxu0 %v4095
    %6658 = vmatpush.bf16.msra.mxu0 %v4087
    %6659 = vmatpush.bf16.msra.mxu0 %v4079
    %6660 = vmatmul.bf16.gmra.mxu0 %v1882
    %v6661 = vpop.f32.mrf.mxu0
    %v6662 = vadd.f32 %v6613, %v6661
    %v6663 = vpop.f32.mrf.mxu0
    %v6664 = vadd.f32 %v6615, %v6663
    %6665 = vmatmul.bf16.gmra.mxu0 %v1890
    %v6666 = vpop.f32.mrf.mxu0
    %v6667 = vadd.f32 %v6618, %v6666
    %v6668 = vpop.f32.mrf.mxu0
    %v6669 = vadd.f32 %v6620, %v6668
    %6670 = vmatmul.bf16.gmra.mxu0 %v1898
    %v6671 = vpop.f32.mrf.mxu0
    %v6672 = vadd.f32 %v6623, %v6671
    %v6673 = vpop.f32.mrf.mxu0
    %v6674 = vadd.f32 %v6625, %v6673
    %6675 = vmatmul.bf16.gmra.mxu0 %v1906
    %v6676 = vpop.f32.mrf.mxu0
    %v6677 = vadd.f32 %v6628, %v6676
    %v6678 = vpop.f32.mrf.mxu0
    %v6679 = vadd.f32 %v6630, %v6678
    %6680 = vmatmul.bf16.gmra.mxu0 %v1914
    %v6681 = vpop.f32.mrf.mxu0
    %v6682 = vadd.f32 %v6633, %v6681
    %v6683 = vpop.f32.mrf.mxu0
    %v6684 = vadd.f32 %v6635, %v6683
    %6685 = vmatmul.bf16.gmra.mxu0 %v1922
    %v6686 = vpop.f32.mrf.mxu0
    %v6687 = vadd.f32 %v6638, %v6686
    %v6688 = vpop.f32.mrf.mxu0
    %v6689 = vadd.f32 %v6640, %v6688
    %6690 = vmatmul.bf16.gmra.mxu0 %v1930
    %v6691 = vpop.f32.mrf.mxu0
    %v6692 = vadd.f32 %v6643, %v6691
    %v6693 = vpop.f32.mrf.mxu0
    %v6694 = vadd.f32 %v6645, %v6693
    %6695 = vmatmul.bf16.gmra.mxu0 %v1938
    %v6696 = vpop.f32.mrf.mxu0
    %v6697 = vadd.f32 %v6648, %v6696
    %v6698 = vpop.f32.mrf.mxu0
    %v6699 = vadd.f32 %v6650, %v6698
    %6700 = vdwg.mxu0
    %6701 = vmatpush.bf16.msra.mxu0 %v4199
    %6702 = vmatpush.bf16.msra.mxu0 %v4191
    %6703 = vmatpush.bf16.msra.mxu0 %v4183
    %6704 = vmatpush.bf16.msra.mxu0 %v4175
    %6705 = vmatpush.bf16.msra.mxu0 %v4167
    %6706 = vmatpush.bf16.msra.mxu0 %v4159
    %6707 = vmatpush.bf16.msra.mxu0 %v4151
    %6708 = vmatpush.bf16.msra.mxu0 %v4143
    %6709 = vmatmul.bf16.gmra.mxu0 %v1883
    %v6710 = vpop.f32.mrf.mxu0
    %v6711 = vadd.f32 %v6662, %v6710
    %v6712 = vpop.f32.mrf.mxu0
    %v6713 = vadd.f32 %v6664, %v6712
    %6714 = vmatmul.bf16.gmra.mxu0 %v1891
    %v6715 = vpop.f32.mrf.mxu0
    %v6716 = vadd.f32 %v6667, %v6715
    %v6717 = vpop.f32.mrf.mxu0
    %v6718 = vadd.f32 %v6669, %v6717
    %6719 = vmatmul.bf16.gmra.mxu0 %v1899
    %v6720 = vpop.f32.mrf.mxu0
    %v6721 = vadd.f32 %v6672, %v6720
    %v6722 = vpop.f32.mrf.mxu0
    %v6723 = vadd.f32 %v6674, %v6722
    %6724 = vmatmul.bf16.gmra.mxu0 %v1907
    %v6725 = vpop.f32.mrf.mxu0
    %v6726 = vadd.f32 %v6677, %v6725
    %v6727 = vpop.f32.mrf.mxu0
    %v6728 = vadd.f32 %v6679, %v6727
    %6729 = vmatmul.bf16.gmra.mxu0 %v1915
    %v6730 = vpop.f32.mrf.mxu0
    %v6731 = vadd.f32 %v6682, %v6730
    %v6732 = vpop.f32.mrf.mxu0
    %v6733 = vadd.f32 %v6684, %v6732
    %6734 = vmatmul.bf16.gmra.mxu0 %v1923
    %v6735 = vpop.f32.mrf.mxu0
    %v6736 = vadd.f32 %v6687, %v6735
    %v6737 = vpop.f32.mrf.mxu0
    %v6738 = vadd.f32 %v6689, %v6737
    %6739 = vmatmul.bf16.gmra.mxu0 %v1931
    %v6740 = vpop.f32.mrf.mxu0
    %v6741 = vadd.f32 %v6692, %v6740
    %v6742 = vpop.f32.mrf.mxu0
    %v6743 = vadd.f32 %v6694, %v6742
    %6744 = vmatmul.bf16.gmra.mxu0 %v1939
    %v6745 = vpop.f32.mrf.mxu0
    %v6746 = vadd.f32 %v6697, %v6745
    %v6747 = vpop.f32.mrf.mxu0
    %v6748 = vadd.f32 %v6699, %v6747
    %6749 = vdwg.mxu0
    %6750 = vmatpush.bf16.msra.mxu0 %v4263
    %6751 = vmatpush.bf16.msra.mxu0 %v4255
    %6752 = vmatpush.bf16.msra.mxu0 %v4247
    %6753 = vmatpush.bf16.msra.mxu0 %v4239
    %6754 = vmatpush.bf16.msra.mxu0 %v4231
    %6755 = vmatpush.bf16.msra.mxu0 %v4223
    %6756 = vmatpush.bf16.msra.mxu0 %v4215
    %6757 = vmatpush.bf16.msra.mxu0 %v4207
    %6758 = vmatmul.bf16.gmra.mxu0 %v1884
    %v6759 = vpop.f32.mrf.mxu0
    %v6760 = vadd.f32 %v6711, %v6759
    %v6761 = vpop.f32.mrf.mxu0
    %v6762 = vadd.f32 %v6713, %v6761
    %6763 = vmatmul.bf16.gmra.mxu0 %v1892
    %v6764 = vpop.f32.mrf.mxu0
    %v6765 = vadd.f32 %v6716, %v6764
    %v6766 = vpop.f32.mrf.mxu0
    %v6767 = vadd.f32 %v6718, %v6766
    %6768 = vmatmul.bf16.gmra.mxu0 %v1900
    %v6769 = vpop.f32.mrf.mxu0
    %v6770 = vadd.f32 %v6721, %v6769
    %v6771 = vpop.f32.mrf.mxu0
    %v6772 = vadd.f32 %v6723, %v6771
    %6773 = vmatmul.bf16.gmra.mxu0 %v1908
    %v6774 = vpop.f32.mrf.mxu0
    %v6775 = vadd.f32 %v6726, %v6774
    %v6776 = vpop.f32.mrf.mxu0
    %v6777 = vadd.f32 %v6728, %v6776
    %6778 = vmatmul.bf16.gmra.mxu0 %v1916
    %v6779 = vpop.f32.mrf.mxu0
    %v6780 = vadd.f32 %v6731, %v6779
    %v6781 = vpop.f32.mrf.mxu0
    %v6782 = vadd.f32 %v6733, %v6781
    %6783 = vmatmul.bf16.gmra.mxu0 %v1924
    %v6784 = vpop.f32.mrf.mxu0
    %v6785 = vadd.f32 %v6736, %v6784
    %v6786 = vpop.f32.mrf.mxu0
    %v6787 = vadd.f32 %v6738, %v6786
    %6788 = vmatmul.bf16.gmra.mxu0 %v1932
    %v6789 = vpop.f32.mrf.mxu0
    %v6790 = vadd.f32 %v6741, %v6789
    %v6791 = vpop.f32.mrf.mxu0
    %v6792 = vadd.f32 %v6743, %v6791
    %6793 = vmatmul.bf16.gmra.mxu0 %v1940
    %v6794 = vpop.f32.mrf.mxu0
    %v6795 = vadd.f32 %v6746, %v6794
    %v6796 = vpop.f32.mrf.mxu0
    %v6797 = vadd.f32 %v6748, %v6796
    %6798 = vdwg.mxu0
    %6799 = vmatpush.bf16.msra.mxu0 %v4327
    %6800 = vmatpush.bf16.msra.mxu0 %v4319
    %6801 = vmatpush.bf16.msra.mxu0 %v4311
    %6802 = vmatpush.bf16.msra.mxu0 %v4303
    %6803 = vmatpush.bf16.msra.mxu0 %v4295
    %6804 = vmatpush.bf16.msra.mxu0 %v4287
    %6805 = vmatpush.bf16.msra.mxu0 %v4279
    %6806 = vmatpush.bf16.msra.mxu0 %v4271
    %6807 = vmatmul.bf16.gmra.mxu0 %v1885
    %v6808 = vpop.f32.mrf.mxu0
    %v6809 = vadd.f32 %v6760, %v6808
    %v6810 = vpop.f32.mrf.mxu0
    %v6811 = vadd.f32 %v6762, %v6810
    %6812 = vmatmul.bf16.gmra.mxu0 %v1893
    %v6813 = vpop.f32.mrf.mxu0
    %v6814 = vadd.f32 %v6765, %v6813
    %v6815 = vpop.f32.mrf.mxu0
    %v6816 = vadd.f32 %v6767, %v6815
    %6817 = vmatmul.bf16.gmra.mxu0 %v1901
    %v6818 = vpop.f32.mrf.mxu0
    %v6819 = vadd.f32 %v6770, %v6818
    %v6820 = vpop.f32.mrf.mxu0
    %v6821 = vadd.f32 %v6772, %v6820
    %6822 = vmatmul.bf16.gmra.mxu0 %v1909
    %v6823 = vpop.f32.mrf.mxu0
    %v6824 = vadd.f32 %v6775, %v6823
    %v6825 = vpop.f32.mrf.mxu0
    %v6826 = vadd.f32 %v6777, %v6825
    %6827 = vmatmul.bf16.gmra.mxu0 %v1917
    %v6828 = vpop.f32.mrf.mxu0
    %v6829 = vadd.f32 %v6780, %v6828
    %v6830 = vpop.f32.mrf.mxu0
    %v6831 = vadd.f32 %v6782, %v6830
    %6832 = vmatmul.bf16.gmra.mxu0 %v1925
    %v6833 = vpop.f32.mrf.mxu0
    %v6834 = vadd.f32 %v6785, %v6833
    %v6835 = vpop.f32.mrf.mxu0
    %v6836 = vadd.f32 %v6787, %v6835
    %6837 = vmatmul.bf16.gmra.mxu0 %v1933
    %v6838 = vpop.f32.mrf.mxu0
    %v6839 = vadd.f32 %v6790, %v6838
    %v6840 = vpop.f32.mrf.mxu0
    %v6841 = vadd.f32 %v6792, %v6840
    %6842 = vmatmul.bf16.gmra.mxu0 %v1941
    %v6843 = vpop.f32.mrf.mxu0
    %v6844 = vadd.f32 %v6795, %v6843
    %v6845 = vpop.f32.mrf.mxu0
    %v6846 = vadd.f32 %v6797, %v6845
    %6847 = vdwg.mxu0
    %6848 = vmatpush.bf16.msra.mxu0 %v4391
    %6849 = vmatpush.bf16.msra.mxu0 %v4383
    %6850 = vmatpush.bf16.msra.mxu0 %v4375
    %6851 = vmatpush.bf16.msra.mxu0 %v4367
    %6852 = vmatpush.bf16.msra.mxu0 %v4359
    %6853 = vmatpush.bf16.msra.mxu0 %v4351
    %6854 = vmatpush.bf16.msra.mxu0 %v4343
    %6855 = vmatpush.bf16.msra.mxu0 %v4335
    %6856 = vmatmul.bf16.gmra.mxu0 %v1886
    %v6857 = vpop.f32.mrf.mxu0
    %v6858 = vadd.f32 %v6809, %v6857
    %v6859 = vpop.f32.mrf.mxu0
    %v6860 = vadd.f32 %v6811, %v6859
    %6861 = vmatmul.bf16.gmra.mxu0 %v1894
    %v6862 = vpop.f32.mrf.mxu0
    %v6863 = vadd.f32 %v6814, %v6862
    %v6864 = vpop.f32.mrf.mxu0
    %v6865 = vadd.f32 %v6816, %v6864
    %6866 = vmatmul.bf16.gmra.mxu0 %v1902
    %v6867 = vpop.f32.mrf.mxu0
    %v6868 = vadd.f32 %v6819, %v6867
    %v6869 = vpop.f32.mrf.mxu0
    %v6870 = vadd.f32 %v6821, %v6869
    %6871 = vmatmul.bf16.gmra.mxu0 %v1910
    %v6872 = vpop.f32.mrf.mxu0
    %v6873 = vadd.f32 %v6824, %v6872
    %v6874 = vpop.f32.mrf.mxu0
    %v6875 = vadd.f32 %v6826, %v6874
    %6876 = vmatmul.bf16.gmra.mxu0 %v1918
    %v6877 = vpop.f32.mrf.mxu0
    %v6878 = vadd.f32 %v6829, %v6877
    %v6879 = vpop.f32.mrf.mxu0
    %v6880 = vadd.f32 %v6831, %v6879
    %6881 = vmatmul.bf16.gmra.mxu0 %v1926
    %v6882 = vpop.f32.mrf.mxu0
    %v6883 = vadd.f32 %v6834, %v6882
    %v6884 = vpop.f32.mrf.mxu0
    %v6885 = vadd.f32 %v6836, %v6884
    %6886 = vmatmul.bf16.gmra.mxu0 %v1934
    %v6887 = vpop.f32.mrf.mxu0
    %v6888 = vadd.f32 %v6839, %v6887
    %v6889 = vpop.f32.mrf.mxu0
    %v6890 = vadd.f32 %v6841, %v6889
    %6891 = vmatmul.bf16.gmra.mxu0 %v1942
    %v6892 = vpop.f32.mrf.mxu0
    %v6893 = vadd.f32 %v6844, %v6892
    %v6894 = vpop.f32.mrf.mxu0
    %v6895 = vadd.f32 %v6846, %v6894
    %6896 = vdwg.mxu0
    %6897 = vmatpush.bf16.msra.mxu0 %v4455
    %6898 = vmatpush.bf16.msra.mxu0 %v4447
    %6899 = vmatpush.bf16.msra.mxu0 %v4439
    %6900 = vmatpush.bf16.msra.mxu0 %v4431
    %6901 = vmatpush.bf16.msra.mxu0 %v4423
    %6902 = vmatpush.bf16.msra.mxu0 %v4415
    %6903 = vmatpush.bf16.msra.mxu0 %v4407
    %6904 = vmatpush.bf16.msra.mxu0 %v4399
    %6905 = vmatmul.bf16.gmra.mxu0 %v1887
    %v6906 = vpop.f32.mrf.mxu0
    %v6907 = vadd.f32 %v6858, %v6906
    %v6908 = vpop.f32.mrf.mxu0
    %v6909 = vadd.f32 %v6860, %v6908
    %6910 = vmatmul.bf16.gmra.mxu0 %v1895
    %v6911 = vpop.f32.mrf.mxu0
    %v6912 = vadd.f32 %v6863, %v6911
    %v6913 = vpop.f32.mrf.mxu0
    %v6914 = vadd.f32 %v6865, %v6913
    %6915 = vmatmul.bf16.gmra.mxu0 %v1903
    %v6916 = vpop.f32.mrf.mxu0
    %v6917 = vadd.f32 %v6868, %v6916
    %v6918 = vpop.f32.mrf.mxu0
    %v6919 = vadd.f32 %v6870, %v6918
    %6920 = vmatmul.bf16.gmra.mxu0 %v1911
    %v6921 = vpop.f32.mrf.mxu0
    %v6922 = vadd.f32 %v6873, %v6921
    %v6923 = vpop.f32.mrf.mxu0
    %v6924 = vadd.f32 %v6875, %v6923
    %6925 = vmatmul.bf16.gmra.mxu0 %v1919
    %v6926 = vpop.f32.mrf.mxu0
    %v6927 = vadd.f32 %v6878, %v6926
    %v6928 = vpop.f32.mrf.mxu0
    %v6929 = vadd.f32 %v6880, %v6928
    %6930 = vmatmul.bf16.gmra.mxu0 %v1927
    %v6931 = vpop.f32.mrf.mxu0
    %v6932 = vadd.f32 %v6883, %v6931
    %v6933 = vpop.f32.mrf.mxu0
    %v6934 = vadd.f32 %v6885, %v6933
    %6935 = vmatmul.bf16.gmra.mxu0 %v1935
    %v6936 = vpop.f32.mrf.mxu0
    %v6937 = vadd.f32 %v6888, %v6936
    %v6938 = vpop.f32.mrf.mxu0
    %v6939 = vadd.f32 %v6890, %v6938
    %6940 = vmatmul.bf16.gmra.mxu0 %v1943
    %v6941 = vpop.f32.mrf.mxu0
    %v6942 = vadd.f32 %v6893, %v6941
    %v6943 = vpop.f32.mrf.mxu0
    %v6944 = vadd.f32 %v6895, %v6943
    %6945 = vdwg.mxu0
    %6946 = vmatpush.bf16.msra.mxu0 %v4519
    %6947 = vmatpush.bf16.msra.mxu0 %v4511
    %6948 = vmatpush.bf16.msra.mxu0 %v4503
    %6949 = vmatpush.bf16.msra.mxu0 %v4495
    %6950 = vmatpush.bf16.msra.mxu0 %v4487
    %6951 = vmatpush.bf16.msra.mxu0 %v4479
    %6952 = vmatpush.bf16.msra.mxu0 %v4471
    %6953 = vmatpush.bf16.msra.mxu0 %v4463
    %6954 = vmatmul.bf16.gmra.mxu0 %v1888
    %v6955 = vpop.f32.mrf.mxu0
    %v6956 = vadd.f32 %v6907, %v6955
    %v6957 = vpop.f32.mrf.mxu0
    %v6958 = vadd.f32 %v6909, %v6957
    %6959 = vmatmul.bf16.gmra.mxu0 %v1896
    %v6960 = vpop.f32.mrf.mxu0
    %v6961 = vadd.f32 %v6912, %v6960
    %v6962 = vpop.f32.mrf.mxu0
    %v6963 = vadd.f32 %v6914, %v6962
    %6964 = vmatmul.bf16.gmra.mxu0 %v1904
    %v6965 = vpop.f32.mrf.mxu0
    %v6966 = vadd.f32 %v6917, %v6965
    %v6967 = vpop.f32.mrf.mxu0
    %v6968 = vadd.f32 %v6919, %v6967
    %6969 = vmatmul.bf16.gmra.mxu0 %v1912
    %v6970 = vpop.f32.mrf.mxu0
    %v6971 = vadd.f32 %v6922, %v6970
    %v6972 = vpop.f32.mrf.mxu0
    %v6973 = vadd.f32 %v6924, %v6972
    %6974 = vmatmul.bf16.gmra.mxu0 %v1920
    %v6975 = vpop.f32.mrf.mxu0
    %v6976 = vadd.f32 %v6927, %v6975
    %v6977 = vpop.f32.mrf.mxu0
    %v6978 = vadd.f32 %v6929, %v6977
    %6979 = vmatmul.bf16.gmra.mxu0 %v1928
    %v6980 = vpop.f32.mrf.mxu0
    %v6981 = vadd.f32 %v6932, %v6980
    %v6982 = vpop.f32.mrf.mxu0
    %v6983 = vadd.f32 %v6934, %v6982
    %6984 = vmatmul.bf16.gmra.mxu0 %v1936
    %v6985 = vpop.f32.mrf.mxu0
    %v6986 = vadd.f32 %v6937, %v6985
    %v6987 = vpop.f32.mrf.mxu0
    %v6988 = vadd.f32 %v6939, %v6987
    %6989 = vmatmul.bf16.gmra.mxu0 %v1944
    %v6990 = vpop.f32.mrf.mxu0
    %v6991 = vadd.f32 %v6942, %v6990
    %v6992 = vpop.f32.mrf.mxu0
    %v6993 = vadd.f32 %v6944, %v6992
    %6994 = vdwg.mxu0
    %6995 = vmatpush.bf16.msra.mxu0 %v4072
    %6996 = vmatpush.bf16.msra.mxu0 %v4064
    %6997 = vmatpush.bf16.msra.mxu0 %v4056
    %6998 = vmatpush.bf16.msra.mxu0 %v4048
    %6999 = vmatpush.bf16.msra.mxu0 %v4040
    %7000 = vmatpush.bf16.msra.mxu0 %v4032
    %7001 = vmatpush.bf16.msra.mxu0 %v4024
    %7002 = vmatpush.bf16.msra.mxu0 %v4016
    %7003 = vmatmul.bf16.gmra.mxu0 %v1881
    %v7004 = vpop.f32.mrf.mxu0
    %v7005 = vadd.f32 %v2464, %v7004
    %v7006 = vpop.f32.mrf.mxu0
    %v7007 = vadd.f32 %v2464, %v7006
    %7008 = vmatmul.bf16.gmra.mxu0 %v1889
    %v7009 = vpop.f32.mrf.mxu0
    %v7010 = vadd.f32 %v2464, %v7009
    %v7011 = vpop.f32.mrf.mxu0
    %v7012 = vadd.f32 %v2464, %v7011
    %7013 = vmatmul.bf16.gmra.mxu0 %v1897
    %v7014 = vpop.f32.mrf.mxu0
    %v7015 = vadd.f32 %v2464, %v7014
    %v7016 = vpop.f32.mrf.mxu0
    %v7017 = vadd.f32 %v2464, %v7016
    %7018 = vmatmul.bf16.gmra.mxu0 %v1905
    %v7019 = vpop.f32.mrf.mxu0
    %v7020 = vadd.f32 %v2464, %v7019
    %v7021 = vpop.f32.mrf.mxu0
    %v7022 = vadd.f32 %v2464, %v7021
    %7023 = vmatmul.bf16.gmra.mxu0 %v1913
    %v7024 = vpop.f32.mrf.mxu0
    %v7025 = vadd.f32 %v2464, %v7024
    %v7026 = vpop.f32.mrf.mxu0
    %v7027 = vadd.f32 %v2464, %v7026
    %7028 = vmatmul.bf16.gmra.mxu0 %v1921
    %v7029 = vpop.f32.mrf.mxu0
    %v7030 = vadd.f32 %v2464, %v7029
    %v7031 = vpop.f32.mrf.mxu0
    %v7032 = vadd.f32 %v2464, %v7031
    %7033 = vmatmul.bf16.gmra.mxu0 %v1929
    %v7034 = vpop.f32.mrf.mxu0
    %v7035 = vadd.f32 %v2464, %v7034
    %v7036 = vpop.f32.mrf.mxu0
    %v7037 = vadd.f32 %v2464, %v7036
    %7038 = vmatmul.bf16.gmra.mxu0 %v1937
    %v7039 = vpop.f32.mrf.mxu0
    %v7040 = vadd.f32 %v2464, %v7039
    %v7041 = vpop.f32.mrf.mxu0
    %v7042 = vadd.f32 %v2464, %v7041
    %7043 = vdwg.mxu0
    %7044 = vmatpush.bf16.msra.mxu0 %v4136
    %7045 = vmatpush.bf16.msra.mxu0 %v4128
    %7046 = vmatpush.bf16.msra.mxu0 %v4120
    %7047 = vmatpush.bf16.msra.mxu0 %v4112
    %7048 = vmatpush.bf16.msra.mxu0 %v4104
    %7049 = vmatpush.bf16.msra.mxu0 %v4096
    %7050 = vmatpush.bf16.msra.mxu0 %v4088
    %7051 = vmatpush.bf16.msra.mxu0 %v4080
    %7052 = vmatmul.bf16.gmra.mxu0 %v1882
    %v7053 = vpop.f32.mrf.mxu0
    %v7054 = vadd.f32 %v7005, %v7053
    %v7055 = vpop.f32.mrf.mxu0
    %v7056 = vadd.f32 %v7007, %v7055
    %7057 = vmatmul.bf16.gmra.mxu0 %v1890
    %v7058 = vpop.f32.mrf.mxu0
    %v7059 = vadd.f32 %v7010, %v7058
    %v7060 = vpop.f32.mrf.mxu0
    %v7061 = vadd.f32 %v7012, %v7060
    %7062 = vmatmul.bf16.gmra.mxu0 %v1898
    %v7063 = vpop.f32.mrf.mxu0
    %v7064 = vadd.f32 %v7015, %v7063
    %v7065 = vpop.f32.mrf.mxu0
    %v7066 = vadd.f32 %v7017, %v7065
    %7067 = vmatmul.bf16.gmra.mxu0 %v1906
    %v7068 = vpop.f32.mrf.mxu0
    %v7069 = vadd.f32 %v7020, %v7068
    %v7070 = vpop.f32.mrf.mxu0
    %v7071 = vadd.f32 %v7022, %v7070
    %7072 = vmatmul.bf16.gmra.mxu0 %v1914
    %v7073 = vpop.f32.mrf.mxu0
    %v7074 = vadd.f32 %v7025, %v7073
    %v7075 = vpop.f32.mrf.mxu0
    %v7076 = vadd.f32 %v7027, %v7075
    %7077 = vmatmul.bf16.gmra.mxu0 %v1922
    %v7078 = vpop.f32.mrf.mxu0
    %v7079 = vadd.f32 %v7030, %v7078
    %v7080 = vpop.f32.mrf.mxu0
    %v7081 = vadd.f32 %v7032, %v7080
    %7082 = vmatmul.bf16.gmra.mxu0 %v1930
    %v7083 = vpop.f32.mrf.mxu0
    %v7084 = vadd.f32 %v7035, %v7083
    %v7085 = vpop.f32.mrf.mxu0
    %v7086 = vadd.f32 %v7037, %v7085
    %7087 = vmatmul.bf16.gmra.mxu0 %v1938
    %v7088 = vpop.f32.mrf.mxu0
    %v7089 = vadd.f32 %v7040, %v7088
    %v7090 = vpop.f32.mrf.mxu0
    %v7091 = vadd.f32 %v7042, %v7090
    %7092 = vdwg.mxu0
    %7093 = vmatpush.bf16.msra.mxu0 %v4200
    %7094 = vmatpush.bf16.msra.mxu0 %v4192
    %7095 = vmatpush.bf16.msra.mxu0 %v4184
    %7096 = vmatpush.bf16.msra.mxu0 %v4176
    %7097 = vmatpush.bf16.msra.mxu0 %v4168
    %7098 = vmatpush.bf16.msra.mxu0 %v4160
    %7099 = vmatpush.bf16.msra.mxu0 %v4152
    %7100 = vmatpush.bf16.msra.mxu0 %v4144
    %7101 = vmatmul.bf16.gmra.mxu0 %v1883
    %v7102 = vpop.f32.mrf.mxu0
    %v7103 = vadd.f32 %v7054, %v7102
    %v7104 = vpop.f32.mrf.mxu0
    %v7105 = vadd.f32 %v7056, %v7104
    %7106 = vmatmul.bf16.gmra.mxu0 %v1891
    %v7107 = vpop.f32.mrf.mxu0
    %v7108 = vadd.f32 %v7059, %v7107
    %v7109 = vpop.f32.mrf.mxu0
    %v7110 = vadd.f32 %v7061, %v7109
    %7111 = vmatmul.bf16.gmra.mxu0 %v1899
    %v7112 = vpop.f32.mrf.mxu0
    %v7113 = vadd.f32 %v7064, %v7112
    %v7114 = vpop.f32.mrf.mxu0
    %v7115 = vadd.f32 %v7066, %v7114
    %7116 = vmatmul.bf16.gmra.mxu0 %v1907
    %v7117 = vpop.f32.mrf.mxu0
    %v7118 = vadd.f32 %v7069, %v7117
    %v7119 = vpop.f32.mrf.mxu0
    %v7120 = vadd.f32 %v7071, %v7119
    %7121 = vmatmul.bf16.gmra.mxu0 %v1915
    %v7122 = vpop.f32.mrf.mxu0
    %v7123 = vadd.f32 %v7074, %v7122
    %v7124 = vpop.f32.mrf.mxu0
    %v7125 = vadd.f32 %v7076, %v7124
    %7126 = vmatmul.bf16.gmra.mxu0 %v1923
    %v7127 = vpop.f32.mrf.mxu0
    %v7128 = vadd.f32 %v7079, %v7127
    %v7129 = vpop.f32.mrf.mxu0
    %v7130 = vadd.f32 %v7081, %v7129
    %7131 = vmatmul.bf16.gmra.mxu0 %v1931
    %v7132 = vpop.f32.mrf.mxu0
    %v7133 = vadd.f32 %v7084, %v7132
    %v7134 = vpop.f32.mrf.mxu0
    %v7135 = vadd.f32 %v7086, %v7134
    %7136 = vmatmul.bf16.gmra.mxu0 %v1939
    %v7137 = vpop.f32.mrf.mxu0
    %v7138 = vadd.f32 %v7089, %v7137
    %v7139 = vpop.f32.mrf.mxu0
    %v7140 = vadd.f32 %v7091, %v7139
    %7141 = vdwg.mxu0
    %7142 = vmatpush.bf16.msra.mxu0 %v4264
    %7143 = vmatpush.bf16.msra.mxu0 %v4256
    %7144 = vmatpush.bf16.msra.mxu0 %v4248
    %7145 = vmatpush.bf16.msra.mxu0 %v4240
    %7146 = vmatpush.bf16.msra.mxu0 %v4232
    %7147 = vmatpush.bf16.msra.mxu0 %v4224
    %7148 = vmatpush.bf16.msra.mxu0 %v4216
    %7149 = vmatpush.bf16.msra.mxu0 %v4208
    %7150 = vmatmul.bf16.gmra.mxu0 %v1884
    %v7151 = vpop.f32.mrf.mxu0
    %v7152 = vadd.f32 %v7103, %v7151
    %v7153 = vpop.f32.mrf.mxu0
    %v7154 = vadd.f32 %v7105, %v7153
    %7155 = vmatmul.bf16.gmra.mxu0 %v1892
    %v7156 = vpop.f32.mrf.mxu0
    %v7157 = vadd.f32 %v7108, %v7156
    %v7158 = vpop.f32.mrf.mxu0
    %v7159 = vadd.f32 %v7110, %v7158
    %7160 = vmatmul.bf16.gmra.mxu0 %v1900
    %v7161 = vpop.f32.mrf.mxu0
    %v7162 = vadd.f32 %v7113, %v7161
    %v7163 = vpop.f32.mrf.mxu0
    %v7164 = vadd.f32 %v7115, %v7163
    %7165 = vmatmul.bf16.gmra.mxu0 %v1908
    %v7166 = vpop.f32.mrf.mxu0
    %v7167 = vadd.f32 %v7118, %v7166
    %v7168 = vpop.f32.mrf.mxu0
    %v7169 = vadd.f32 %v7120, %v7168
    %7170 = vmatmul.bf16.gmra.mxu0 %v1916
    %v7171 = vpop.f32.mrf.mxu0
    %v7172 = vadd.f32 %v7123, %v7171
    %v7173 = vpop.f32.mrf.mxu0
    %v7174 = vadd.f32 %v7125, %v7173
    %7175 = vmatmul.bf16.gmra.mxu0 %v1924
    %v7176 = vpop.f32.mrf.mxu0
    %v7177 = vadd.f32 %v7128, %v7176
    %v7178 = vpop.f32.mrf.mxu0
    %v7179 = vadd.f32 %v7130, %v7178
    %7180 = vmatmul.bf16.gmra.mxu0 %v1932
    %v7181 = vpop.f32.mrf.mxu0
    %v7182 = vadd.f32 %v7133, %v7181
    %v7183 = vpop.f32.mrf.mxu0
    %v7184 = vadd.f32 %v7135, %v7183
    %7185 = vmatmul.bf16.gmra.mxu0 %v1940
    %v7186 = vpop.f32.mrf.mxu0
    %v7187 = vadd.f32 %v7138, %v7186
    %v7188 = vpop.f32.mrf.mxu0
    %v7189 = vadd.f32 %v7140, %v7188
    %7190 = vdwg.mxu0
    %7191 = vmatpush.bf16.msra.mxu0 %v4328
    %7192 = vmatpush.bf16.msra.mxu0 %v4320
    %7193 = vmatpush.bf16.msra.mxu0 %v4312
    %7194 = vmatpush.bf16.msra.mxu0 %v4304
    %7195 = vmatpush.bf16.msra.mxu0 %v4296
    %7196 = vmatpush.bf16.msra.mxu0 %v4288
    %7197 = vmatpush.bf16.msra.mxu0 %v4280
    %7198 = vmatpush.bf16.msra.mxu0 %v4272
    %7199 = vmatmul.bf16.gmra.mxu0 %v1885
    %v7200 = vpop.f32.mrf.mxu0
    %v7201 = vadd.f32 %v7152, %v7200
    %v7202 = vpop.f32.mrf.mxu0
    %v7203 = vadd.f32 %v7154, %v7202
    %7204 = vmatmul.bf16.gmra.mxu0 %v1893
    %v7205 = vpop.f32.mrf.mxu0
    %v7206 = vadd.f32 %v7157, %v7205
    %v7207 = vpop.f32.mrf.mxu0
    %v7208 = vadd.f32 %v7159, %v7207
    %7209 = vmatmul.bf16.gmra.mxu0 %v1901
    %v7210 = vpop.f32.mrf.mxu0
    %v7211 = vadd.f32 %v7162, %v7210
    %v7212 = vpop.f32.mrf.mxu0
    %v7213 = vadd.f32 %v7164, %v7212
    %7214 = vmatmul.bf16.gmra.mxu0 %v1909
    %v7215 = vpop.f32.mrf.mxu0
    %v7216 = vadd.f32 %v7167, %v7215
    %v7217 = vpop.f32.mrf.mxu0
    %v7218 = vadd.f32 %v7169, %v7217
    %7219 = vmatmul.bf16.gmra.mxu0 %v1917
    %v7220 = vpop.f32.mrf.mxu0
    %v7221 = vadd.f32 %v7172, %v7220
    %v7222 = vpop.f32.mrf.mxu0
    %v7223 = vadd.f32 %v7174, %v7222
    %7224 = vmatmul.bf16.gmra.mxu0 %v1925
    %v7225 = vpop.f32.mrf.mxu0
    %v7226 = vadd.f32 %v7177, %v7225
    %v7227 = vpop.f32.mrf.mxu0
    %v7228 = vadd.f32 %v7179, %v7227
    %7229 = vmatmul.bf16.gmra.mxu0 %v1933
    %v7230 = vpop.f32.mrf.mxu0
    %v7231 = vadd.f32 %v7182, %v7230
    %v7232 = vpop.f32.mrf.mxu0
    %v7233 = vadd.f32 %v7184, %v7232
    %7234 = vmatmul.bf16.gmra.mxu0 %v1941
    %v7235 = vpop.f32.mrf.mxu0
    %v7236 = vadd.f32 %v7187, %v7235
    %v7237 = vpop.f32.mrf.mxu0
    %v7238 = vadd.f32 %v7189, %v7237
    %7239 = vdwg.mxu0
    %7240 = vmatpush.bf16.msra.mxu0 %v4392
    %7241 = vmatpush.bf16.msra.mxu0 %v4384
    %7242 = vmatpush.bf16.msra.mxu0 %v4376
    %7243 = vmatpush.bf16.msra.mxu0 %v4368
    %7244 = vmatpush.bf16.msra.mxu0 %v4360
    %7245 = vmatpush.bf16.msra.mxu0 %v4352
    %7246 = vmatpush.bf16.msra.mxu0 %v4344
    %7247 = vmatpush.bf16.msra.mxu0 %v4336
    %7248 = vmatmul.bf16.gmra.mxu0 %v1886
    %v7249 = vpop.f32.mrf.mxu0
    %v7250 = vadd.f32 %v7201, %v7249
    %v7251 = vpop.f32.mrf.mxu0
    %v7252 = vadd.f32 %v7203, %v7251
    %7253 = vmatmul.bf16.gmra.mxu0 %v1894
    %v7254 = vpop.f32.mrf.mxu0
    %v7255 = vadd.f32 %v7206, %v7254
    %v7256 = vpop.f32.mrf.mxu0
    %v7257 = vadd.f32 %v7208, %v7256
    %7258 = vmatmul.bf16.gmra.mxu0 %v1902
    %v7259 = vpop.f32.mrf.mxu0
    %v7260 = vadd.f32 %v7211, %v7259
    %v7261 = vpop.f32.mrf.mxu0
    %v7262 = vadd.f32 %v7213, %v7261
    %7263 = vmatmul.bf16.gmra.mxu0 %v1910
    %v7264 = vpop.f32.mrf.mxu0
    %v7265 = vadd.f32 %v7216, %v7264
    %v7266 = vpop.f32.mrf.mxu0
    %v7267 = vadd.f32 %v7218, %v7266
    %7268 = vmatmul.bf16.gmra.mxu0 %v1918
    %v7269 = vpop.f32.mrf.mxu0
    %v7270 = vadd.f32 %v7221, %v7269
    %v7271 = vpop.f32.mrf.mxu0
    %v7272 = vadd.f32 %v7223, %v7271
    %7273 = vmatmul.bf16.gmra.mxu0 %v1926
    %v7274 = vpop.f32.mrf.mxu0
    %v7275 = vadd.f32 %v7226, %v7274
    %v7276 = vpop.f32.mrf.mxu0
    %v7277 = vadd.f32 %v7228, %v7276
    %7278 = vmatmul.bf16.gmra.mxu0 %v1934
    %v7279 = vpop.f32.mrf.mxu0
    %v7280 = vadd.f32 %v7231, %v7279
    %v7281 = vpop.f32.mrf.mxu0
    %v7282 = vadd.f32 %v7233, %v7281
    %7283 = vmatmul.bf16.gmra.mxu0 %v1942
    %v7284 = vpop.f32.mrf.mxu0
    %v7285 = vadd.f32 %v7236, %v7284
    %v7286 = vpop.f32.mrf.mxu0
    %v7287 = vadd.f32 %v7238, %v7286
    %7288 = vdwg.mxu0
    %7289 = vmatpush.bf16.msra.mxu0 %v4456
    %7290 = vmatpush.bf16.msra.mxu0 %v4448
    %7291 = vmatpush.bf16.msra.mxu0 %v4440
    %7292 = vmatpush.bf16.msra.mxu0 %v4432
    %7293 = vmatpush.bf16.msra.mxu0 %v4424
    %7294 = vmatpush.bf16.msra.mxu0 %v4416
    %7295 = vmatpush.bf16.msra.mxu0 %v4408
    %7296 = vmatpush.bf16.msra.mxu0 %v4400
    %7297 = vmatmul.bf16.gmra.mxu0 %v1887
    %v7298 = vpop.f32.mrf.mxu0
    %v7299 = vadd.f32 %v7250, %v7298
    %v7300 = vpop.f32.mrf.mxu0
    %v7301 = vadd.f32 %v7252, %v7300
    %7302 = vmatmul.bf16.gmra.mxu0 %v1895
    %v7303 = vpop.f32.mrf.mxu0
    %v7304 = vadd.f32 %v7255, %v7303
    %v7305 = vpop.f32.mrf.mxu0
    %v7306 = vadd.f32 %v7257, %v7305
    %7307 = vmatmul.bf16.gmra.mxu0 %v1903
    %v7308 = vpop.f32.mrf.mxu0
    %v7309 = vadd.f32 %v7260, %v7308
    %v7310 = vpop.f32.mrf.mxu0
    %v7311 = vadd.f32 %v7262, %v7310
    %7312 = vmatmul.bf16.gmra.mxu0 %v1911
    %v7313 = vpop.f32.mrf.mxu0
    %v7314 = vadd.f32 %v7265, %v7313
    %v7315 = vpop.f32.mrf.mxu0
    %v7316 = vadd.f32 %v7267, %v7315
    %7317 = vmatmul.bf16.gmra.mxu0 %v1919
    %v7318 = vpop.f32.mrf.mxu0
    %v7319 = vadd.f32 %v7270, %v7318
    %v7320 = vpop.f32.mrf.mxu0
    %v7321 = vadd.f32 %v7272, %v7320
    %7322 = vmatmul.bf16.gmra.mxu0 %v1927
    %v7323 = vpop.f32.mrf.mxu0
    %v7324 = vadd.f32 %v7275, %v7323
    %v7325 = vpop.f32.mrf.mxu0
    %v7326 = vadd.f32 %v7277, %v7325
    %7327 = vmatmul.bf16.gmra.mxu0 %v1935
    %v7328 = vpop.f32.mrf.mxu0
    %v7329 = vadd.f32 %v7280, %v7328
    %v7330 = vpop.f32.mrf.mxu0
    %v7331 = vadd.f32 %v7282, %v7330
    %7332 = vmatmul.bf16.gmra.mxu0 %v1943
    %v7333 = vpop.f32.mrf.mxu0
    %v7334 = vadd.f32 %v7285, %v7333
    %v7335 = vpop.f32.mrf.mxu0
    %v7336 = vadd.f32 %v7287, %v7335
    %7337 = vdwg.mxu0
    %7338 = vmatpush.bf16.msra.mxu0 %v4520
    %7339 = vmatpush.bf16.msra.mxu0 %v4512
    %7340 = vmatpush.bf16.msra.mxu0 %v4504
    %7341 = vmatpush.bf16.msra.mxu0 %v4496
    %7342 = vmatpush.bf16.msra.mxu0 %v4488
    %7343 = vmatpush.bf16.msra.mxu0 %v4480
    %7344 = vmatpush.bf16.msra.mxu0 %v4472
    %7345 = vmatpush.bf16.msra.mxu0 %v4464
    %7346 = vmatmul.bf16.gmra.mxu0 %v1888
    %v7347 = vpop.f32.mrf.mxu0
    %v7348 = vadd.f32 %v7299, %v7347
    %v7349 = vpop.f32.mrf.mxu0
    %v7350 = vadd.f32 %v7301, %v7349
    %7351 = vmatmul.bf16.gmra.mxu0 %v1896
    %v7352 = vpop.f32.mrf.mxu0
    %v7353 = vadd.f32 %v7304, %v7352
    %v7354 = vpop.f32.mrf.mxu0
    %v7355 = vadd.f32 %v7306, %v7354
    %7356 = vmatmul.bf16.gmra.mxu0 %v1904
    %v7357 = vpop.f32.mrf.mxu0
    %v7358 = vadd.f32 %v7309, %v7357
    %v7359 = vpop.f32.mrf.mxu0
    %v7360 = vadd.f32 %v7311, %v7359
    %7361 = vmatmul.bf16.gmra.mxu0 %v1912
    %v7362 = vpop.f32.mrf.mxu0
    %v7363 = vadd.f32 %v7314, %v7362
    %v7364 = vpop.f32.mrf.mxu0
    %v7365 = vadd.f32 %v7316, %v7364
    %7366 = vmatmul.bf16.gmra.mxu0 %v1920
    %v7367 = vpop.f32.mrf.mxu0
    %v7368 = vadd.f32 %v7319, %v7367
    %v7369 = vpop.f32.mrf.mxu0
    %v7370 = vadd.f32 %v7321, %v7369
    %7371 = vmatmul.bf16.gmra.mxu0 %v1928
    %v7372 = vpop.f32.mrf.mxu0
    %v7373 = vadd.f32 %v7324, %v7372
    %v7374 = vpop.f32.mrf.mxu0
    %v7375 = vadd.f32 %v7326, %v7374
    %7376 = vmatmul.bf16.gmra.mxu0 %v1936
    %v7377 = vpop.f32.mrf.mxu0
    %v7378 = vadd.f32 %v7329, %v7377
    %v7379 = vpop.f32.mrf.mxu0
    %v7380 = vadd.f32 %v7331, %v7379
    %7381 = vmatmul.bf16.gmra.mxu0 %v1944
    %v7382 = vpop.f32.mrf.mxu0
    %v7383 = vadd.f32 %v7334, %v7382
    %v7384 = vpop.f32.mrf.mxu0
    %v7385 = vadd.f32 %v7336, %v7384
    %7386 = vdwg.mxu0
    %7387 = vmatpush.bf16.msra.mxu0 %v4073
    %7388 = vmatpush.bf16.msra.mxu0 %v4065
    %7389 = vmatpush.bf16.msra.mxu0 %v4057
    %7390 = vmatpush.bf16.msra.mxu0 %v4049
    %7391 = vmatpush.bf16.msra.mxu0 %v4041
    %7392 = vmatpush.bf16.msra.mxu0 %v4033
    %7393 = vmatpush.bf16.msra.mxu0 %v4025
    %7394 = vmatpush.bf16.msra.mxu0 %v4017
    %7395 = vmatmul.bf16.gmra.mxu0 %v1881
    %v7396 = vpop.f32.mrf.mxu0
    %v7397 = vadd.f32 %v2465, %v7396
    %v7398 = vpop.f32.mrf.mxu0
    %v7399 = vadd.f32 %v2465, %v7398
    %7400 = vmatmul.bf16.gmra.mxu0 %v1889
    %v7401 = vpop.f32.mrf.mxu0
    %v7402 = vadd.f32 %v2465, %v7401
    %v7403 = vpop.f32.mrf.mxu0
    %v7404 = vadd.f32 %v2465, %v7403
    %7405 = vmatmul.bf16.gmra.mxu0 %v1897
    %v7406 = vpop.f32.mrf.mxu0
    %v7407 = vadd.f32 %v2465, %v7406
    %v7408 = vpop.f32.mrf.mxu0
    %v7409 = vadd.f32 %v2465, %v7408
    %7410 = vmatmul.bf16.gmra.mxu0 %v1905
    %v7411 = vpop.f32.mrf.mxu0
    %v7412 = vadd.f32 %v2465, %v7411
    %v7413 = vpop.f32.mrf.mxu0
    %v7414 = vadd.f32 %v2465, %v7413
    %7415 = vmatmul.bf16.gmra.mxu0 %v1913
    %v7416 = vpop.f32.mrf.mxu0
    %v7417 = vadd.f32 %v2465, %v7416
    %v7418 = vpop.f32.mrf.mxu0
    %v7419 = vadd.f32 %v2465, %v7418
    %7420 = vmatmul.bf16.gmra.mxu0 %v1921
    %v7421 = vpop.f32.mrf.mxu0
    %v7422 = vadd.f32 %v2465, %v7421
    %v7423 = vpop.f32.mrf.mxu0
    %v7424 = vadd.f32 %v2465, %v7423
    %7425 = vmatmul.bf16.gmra.mxu0 %v1929
    %v7426 = vpop.f32.mrf.mxu0
    %v7427 = vadd.f32 %v2465, %v7426
    %v7428 = vpop.f32.mrf.mxu0
    %v7429 = vadd.f32 %v2465, %v7428
    %7430 = vmatmul.bf16.gmra.mxu0 %v1937
    %v7431 = vpop.f32.mrf.mxu0
    %v7432 = vadd.f32 %v2465, %v7431
    %v7433 = vpop.f32.mrf.mxu0
    %v7434 = vadd.f32 %v2465, %v7433
    %7435 = vdwg.mxu0
    %7436 = vmatpush.bf16.msra.mxu0 %v4137
    %7437 = vmatpush.bf16.msra.mxu0 %v4129
    %7438 = vmatpush.bf16.msra.mxu0 %v4121
    %7439 = vmatpush.bf16.msra.mxu0 %v4113
    %7440 = vmatpush.bf16.msra.mxu0 %v4105
    %7441 = vmatpush.bf16.msra.mxu0 %v4097
    %7442 = vmatpush.bf16.msra.mxu0 %v4089
    %7443 = vmatpush.bf16.msra.mxu0 %v4081
    %7444 = vmatmul.bf16.gmra.mxu0 %v1882
    %v7445 = vpop.f32.mrf.mxu0
    %v7446 = vadd.f32 %v7397, %v7445
    %v7447 = vpop.f32.mrf.mxu0
    %v7448 = vadd.f32 %v7399, %v7447
    %7449 = vmatmul.bf16.gmra.mxu0 %v1890
    %v7450 = vpop.f32.mrf.mxu0
    %v7451 = vadd.f32 %v7402, %v7450
    %v7452 = vpop.f32.mrf.mxu0
    %v7453 = vadd.f32 %v7404, %v7452
    %7454 = vmatmul.bf16.gmra.mxu0 %v1898
    %v7455 = vpop.f32.mrf.mxu0
    %v7456 = vadd.f32 %v7407, %v7455
    %v7457 = vpop.f32.mrf.mxu0
    %v7458 = vadd.f32 %v7409, %v7457
    %7459 = vmatmul.bf16.gmra.mxu0 %v1906
    %v7460 = vpop.f32.mrf.mxu0
    %v7461 = vadd.f32 %v7412, %v7460
    %v7462 = vpop.f32.mrf.mxu0
    %v7463 = vadd.f32 %v7414, %v7462
    %7464 = vmatmul.bf16.gmra.mxu0 %v1914
    %v7465 = vpop.f32.mrf.mxu0
    %v7466 = vadd.f32 %v7417, %v7465
    %v7467 = vpop.f32.mrf.mxu0
    %v7468 = vadd.f32 %v7419, %v7467
    %7469 = vmatmul.bf16.gmra.mxu0 %v1922
    %v7470 = vpop.f32.mrf.mxu0
    %v7471 = vadd.f32 %v7422, %v7470
    %v7472 = vpop.f32.mrf.mxu0
    %v7473 = vadd.f32 %v7424, %v7472
    %7474 = vmatmul.bf16.gmra.mxu0 %v1930
    %v7475 = vpop.f32.mrf.mxu0
    %v7476 = vadd.f32 %v7427, %v7475
    %v7477 = vpop.f32.mrf.mxu0
    %v7478 = vadd.f32 %v7429, %v7477
    %7479 = vmatmul.bf16.gmra.mxu0 %v1938
    %v7480 = vpop.f32.mrf.mxu0
    %v7481 = vadd.f32 %v7432, %v7480
    %v7482 = vpop.f32.mrf.mxu0
    %v7483 = vadd.f32 %v7434, %v7482
    %7484 = vdwg.mxu0
    %7485 = vmatpush.bf16.msra.mxu0 %v4201
    %7486 = vmatpush.bf16.msra.mxu0 %v4193
    %7487 = vmatpush.bf16.msra.mxu0 %v4185
    %7488 = vmatpush.bf16.msra.mxu0 %v4177
    %7489 = vmatpush.bf16.msra.mxu0 %v4169
    %7490 = vmatpush.bf16.msra.mxu0 %v4161
    %7491 = vmatpush.bf16.msra.mxu0 %v4153
    %7492 = vmatpush.bf16.msra.mxu0 %v4145
    %7493 = vmatmul.bf16.gmra.mxu0 %v1883
    %v7494 = vpop.f32.mrf.mxu0
    %v7495 = vadd.f32 %v7446, %v7494
    %v7496 = vpop.f32.mrf.mxu0
    %v7497 = vadd.f32 %v7448, %v7496
    %7498 = vmatmul.bf16.gmra.mxu0 %v1891
    %v7499 = vpop.f32.mrf.mxu0
    %v7500 = vadd.f32 %v7451, %v7499
    %v7501 = vpop.f32.mrf.mxu0
    %v7502 = vadd.f32 %v7453, %v7501
    %7503 = vmatmul.bf16.gmra.mxu0 %v1899
    %v7504 = vpop.f32.mrf.mxu0
    %v7505 = vadd.f32 %v7456, %v7504
    %v7506 = vpop.f32.mrf.mxu0
    %v7507 = vadd.f32 %v7458, %v7506
    %7508 = vmatmul.bf16.gmra.mxu0 %v1907
    %v7509 = vpop.f32.mrf.mxu0
    %v7510 = vadd.f32 %v7461, %v7509
    %v7511 = vpop.f32.mrf.mxu0
    %v7512 = vadd.f32 %v7463, %v7511
    %7513 = vmatmul.bf16.gmra.mxu0 %v1915
    %v7514 = vpop.f32.mrf.mxu0
    %v7515 = vadd.f32 %v7466, %v7514
    %v7516 = vpop.f32.mrf.mxu0
    %v7517 = vadd.f32 %v7468, %v7516
    %7518 = vmatmul.bf16.gmra.mxu0 %v1923
    %v7519 = vpop.f32.mrf.mxu0
    %v7520 = vadd.f32 %v7471, %v7519
    %v7521 = vpop.f32.mrf.mxu0
    %v7522 = vadd.f32 %v7473, %v7521
    %7523 = vmatmul.bf16.gmra.mxu0 %v1931
    %v7524 = vpop.f32.mrf.mxu0
    %v7525 = vadd.f32 %v7476, %v7524
    %v7526 = vpop.f32.mrf.mxu0
    %v7527 = vadd.f32 %v7478, %v7526
    %7528 = vmatmul.bf16.gmra.mxu0 %v1939
    %v7529 = vpop.f32.mrf.mxu0
    %v7530 = vadd.f32 %v7481, %v7529
    %v7531 = vpop.f32.mrf.mxu0
    %v7532 = vadd.f32 %v7483, %v7531
    %7533 = vdwg.mxu0
    %7534 = vmatpush.bf16.msra.mxu0 %v4265
    %7535 = vmatpush.bf16.msra.mxu0 %v4257
    %7536 = vmatpush.bf16.msra.mxu0 %v4249
    %7537 = vmatpush.bf16.msra.mxu0 %v4241
    %7538 = vmatpush.bf16.msra.mxu0 %v4233
    %7539 = vmatpush.bf16.msra.mxu0 %v4225
    %7540 = vmatpush.bf16.msra.mxu0 %v4217
    %7541 = vmatpush.bf16.msra.mxu0 %v4209
    %7542 = vmatmul.bf16.gmra.mxu0 %v1884
    %v7543 = vpop.f32.mrf.mxu0
    %v7544 = vadd.f32 %v7495, %v7543
    %v7545 = vpop.f32.mrf.mxu0
    %v7546 = vadd.f32 %v7497, %v7545
    %7547 = vmatmul.bf16.gmra.mxu0 %v1892
    %v7548 = vpop.f32.mrf.mxu0
    %v7549 = vadd.f32 %v7500, %v7548
    %v7550 = vpop.f32.mrf.mxu0
    %v7551 = vadd.f32 %v7502, %v7550
    %7552 = vmatmul.bf16.gmra.mxu0 %v1900
    %v7553 = vpop.f32.mrf.mxu0
    %v7554 = vadd.f32 %v7505, %v7553
    %v7555 = vpop.f32.mrf.mxu0
    %v7556 = vadd.f32 %v7507, %v7555
    %7557 = vmatmul.bf16.gmra.mxu0 %v1908
    %v7558 = vpop.f32.mrf.mxu0
    %v7559 = vadd.f32 %v7510, %v7558
    %v7560 = vpop.f32.mrf.mxu0
    %v7561 = vadd.f32 %v7512, %v7560
    %7562 = vmatmul.bf16.gmra.mxu0 %v1916
    %v7563 = vpop.f32.mrf.mxu0
    %v7564 = vadd.f32 %v7515, %v7563
    %v7565 = vpop.f32.mrf.mxu0
    %v7566 = vadd.f32 %v7517, %v7565
    %7567 = vmatmul.bf16.gmra.mxu0 %v1924
    %v7568 = vpop.f32.mrf.mxu0
    %v7569 = vadd.f32 %v7520, %v7568
    %v7570 = vpop.f32.mrf.mxu0
    %v7571 = vadd.f32 %v7522, %v7570
    %7572 = vmatmul.bf16.gmra.mxu0 %v1932
    %v7573 = vpop.f32.mrf.mxu0
    %v7574 = vadd.f32 %v7525, %v7573
    %v7575 = vpop.f32.mrf.mxu0
    %v7576 = vadd.f32 %v7527, %v7575
    %7577 = vmatmul.bf16.gmra.mxu0 %v1940
    %v7578 = vpop.f32.mrf.mxu0
    %v7579 = vadd.f32 %v7530, %v7578
    %v7580 = vpop.f32.mrf.mxu0
    %v7581 = vadd.f32 %v7532, %v7580
    %7582 = vdwg.mxu0
    %7583 = vmatpush.bf16.msra.mxu0 %v4329
    %7584 = vmatpush.bf16.msra.mxu0 %v4321
    %7585 = vmatpush.bf16.msra.mxu0 %v4313
    %7586 = vmatpush.bf16.msra.mxu0 %v4305
    %7587 = vmatpush.bf16.msra.mxu0 %v4297
    %7588 = vmatpush.bf16.msra.mxu0 %v4289
    %7589 = vmatpush.bf16.msra.mxu0 %v4281
    %7590 = vmatpush.bf16.msra.mxu0 %v4273
    %7591 = vmatmul.bf16.gmra.mxu0 %v1885
    %v7592 = vpop.f32.mrf.mxu0
    %v7593 = vadd.f32 %v7544, %v7592
    %v7594 = vpop.f32.mrf.mxu0
    %v7595 = vadd.f32 %v7546, %v7594
    %7596 = vmatmul.bf16.gmra.mxu0 %v1893
    %v7597 = vpop.f32.mrf.mxu0
    %v7598 = vadd.f32 %v7549, %v7597
    %v7599 = vpop.f32.mrf.mxu0
    %v7600 = vadd.f32 %v7551, %v7599
    %7601 = vmatmul.bf16.gmra.mxu0 %v1901
    %v7602 = vpop.f32.mrf.mxu0
    %v7603 = vadd.f32 %v7554, %v7602
    %v7604 = vpop.f32.mrf.mxu0
    %v7605 = vadd.f32 %v7556, %v7604
    %7606 = vmatmul.bf16.gmra.mxu0 %v1909
    %v7607 = vpop.f32.mrf.mxu0
    %v7608 = vadd.f32 %v7559, %v7607
    %v7609 = vpop.f32.mrf.mxu0
    %v7610 = vadd.f32 %v7561, %v7609
    %7611 = vmatmul.bf16.gmra.mxu0 %v1917
    %v7612 = vpop.f32.mrf.mxu0
    %v7613 = vadd.f32 %v7564, %v7612
    %v7614 = vpop.f32.mrf.mxu0
    %v7615 = vadd.f32 %v7566, %v7614
    %7616 = vmatmul.bf16.gmra.mxu0 %v1925
    %v7617 = vpop.f32.mrf.mxu0
    %v7618 = vadd.f32 %v7569, %v7617
    %v7619 = vpop.f32.mrf.mxu0
    %v7620 = vadd.f32 %v7571, %v7619
    %7621 = vmatmul.bf16.gmra.mxu0 %v1933
    %v7622 = vpop.f32.mrf.mxu0
    %v7623 = vadd.f32 %v7574, %v7622
    %v7624 = vpop.f32.mrf.mxu0
    %v7625 = vadd.f32 %v7576, %v7624
    %7626 = vmatmul.bf16.gmra.mxu0 %v1941
    %v7627 = vpop.f32.mrf.mxu0
    %v7628 = vadd.f32 %v7579, %v7627
    %v7629 = vpop.f32.mrf.mxu0
    %v7630 = vadd.f32 %v7581, %v7629
    %7631 = vdwg.mxu0
    %7632 = vmatpush.bf16.msra.mxu0 %v4393
    %7633 = vmatpush.bf16.msra.mxu0 %v4385
    %7634 = vmatpush.bf16.msra.mxu0 %v4377
    %7635 = vmatpush.bf16.msra.mxu0 %v4369
    %7636 = vmatpush.bf16.msra.mxu0 %v4361
    %7637 = vmatpush.bf16.msra.mxu0 %v4353
    %7638 = vmatpush.bf16.msra.mxu0 %v4345
    %7639 = vmatpush.bf16.msra.mxu0 %v4337
    %7640 = vmatmul.bf16.gmra.mxu0 %v1886
    %v7641 = vpop.f32.mrf.mxu0
    %v7642 = vadd.f32 %v7593, %v7641
    %v7643 = vpop.f32.mrf.mxu0
    %v7644 = vadd.f32 %v7595, %v7643
    %7645 = vmatmul.bf16.gmra.mxu0 %v1894
    %v7646 = vpop.f32.mrf.mxu0
    %v7647 = vadd.f32 %v7598, %v7646
    %v7648 = vpop.f32.mrf.mxu0
    %v7649 = vadd.f32 %v7600, %v7648
    %7650 = vmatmul.bf16.gmra.mxu0 %v1902
    %v7651 = vpop.f32.mrf.mxu0
    %v7652 = vadd.f32 %v7603, %v7651
    %v7653 = vpop.f32.mrf.mxu0
    %v7654 = vadd.f32 %v7605, %v7653
    %7655 = vmatmul.bf16.gmra.mxu0 %v1910
    %v7656 = vpop.f32.mrf.mxu0
    %v7657 = vadd.f32 %v7608, %v7656
    %v7658 = vpop.f32.mrf.mxu0
    %v7659 = vadd.f32 %v7610, %v7658
    %7660 = vmatmul.bf16.gmra.mxu0 %v1918
    %v7661 = vpop.f32.mrf.mxu0
    %v7662 = vadd.f32 %v7613, %v7661
    %v7663 = vpop.f32.mrf.mxu0
    %v7664 = vadd.f32 %v7615, %v7663
    %7665 = vmatmul.bf16.gmra.mxu0 %v1926
    %v7666 = vpop.f32.mrf.mxu0
    %v7667 = vadd.f32 %v7618, %v7666
    %v7668 = vpop.f32.mrf.mxu0
    %v7669 = vadd.f32 %v7620, %v7668
    %7670 = vmatmul.bf16.gmra.mxu0 %v1934
    %v7671 = vpop.f32.mrf.mxu0
    %v7672 = vadd.f32 %v7623, %v7671
    %v7673 = vpop.f32.mrf.mxu0
    %v7674 = vadd.f32 %v7625, %v7673
    %7675 = vmatmul.bf16.gmra.mxu0 %v1942
    %v7676 = vpop.f32.mrf.mxu0
    %v7677 = vadd.f32 %v7628, %v7676
    %v7678 = vpop.f32.mrf.mxu0
    %v7679 = vadd.f32 %v7630, %v7678
    %7680 = vdwg.mxu0
    %7681 = vmatpush.bf16.msra.mxu0 %v4457
    %7682 = vmatpush.bf16.msra.mxu0 %v4449
    %7683 = vmatpush.bf16.msra.mxu0 %v4441
    %7684 = vmatpush.bf16.msra.mxu0 %v4433
    %7685 = vmatpush.bf16.msra.mxu0 %v4425
    %7686 = vmatpush.bf16.msra.mxu0 %v4417
    %7687 = vmatpush.bf16.msra.mxu0 %v4409
    %7688 = vmatpush.bf16.msra.mxu0 %v4401
    %7689 = vmatmul.bf16.gmra.mxu0 %v1887
    %v7690 = vpop.f32.mrf.mxu0
    %v7691 = vadd.f32 %v7642, %v7690
    %v7692 = vpop.f32.mrf.mxu0
    %v7693 = vadd.f32 %v7644, %v7692
    %7694 = vmatmul.bf16.gmra.mxu0 %v1895
    %v7695 = vpop.f32.mrf.mxu0
    %v7696 = vadd.f32 %v7647, %v7695
    %v7697 = vpop.f32.mrf.mxu0
    %v7698 = vadd.f32 %v7649, %v7697
    %7699 = vmatmul.bf16.gmra.mxu0 %v1903
    %v7700 = vpop.f32.mrf.mxu0
    %v7701 = vadd.f32 %v7652, %v7700
    %v7702 = vpop.f32.mrf.mxu0
    %v7703 = vadd.f32 %v7654, %v7702
    %7704 = vmatmul.bf16.gmra.mxu0 %v1911
    %v7705 = vpop.f32.mrf.mxu0
    %v7706 = vadd.f32 %v7657, %v7705
    %v7707 = vpop.f32.mrf.mxu0
    %v7708 = vadd.f32 %v7659, %v7707
    %7709 = vmatmul.bf16.gmra.mxu0 %v1919
    %v7710 = vpop.f32.mrf.mxu0
    %v7711 = vadd.f32 %v7662, %v7710
    %v7712 = vpop.f32.mrf.mxu0
    %v7713 = vadd.f32 %v7664, %v7712
    %7714 = vmatmul.bf16.gmra.mxu0 %v1927
    %v7715 = vpop.f32.mrf.mxu0
    %v7716 = vadd.f32 %v7667, %v7715
    %v7717 = vpop.f32.mrf.mxu0
    %v7718 = vadd.f32 %v7669, %v7717
    %7719 = vmatmul.bf16.gmra.mxu0 %v1935
    %v7720 = vpop.f32.mrf.mxu0
    %v7721 = vadd.f32 %v7672, %v7720
    %v7722 = vpop.f32.mrf.mxu0
    %v7723 = vadd.f32 %v7674, %v7722
    %7724 = vmatmul.bf16.gmra.mxu0 %v1943
    %v7725 = vpop.f32.mrf.mxu0
    %v7726 = vadd.f32 %v7677, %v7725
    %v7727 = vpop.f32.mrf.mxu0
    %v7728 = vadd.f32 %v7679, %v7727
    %7729 = vdwg.mxu0
    %7730 = vmatpush.bf16.msra.mxu0 %v4521
    %7731 = vmatpush.bf16.msra.mxu0 %v4513
    %7732 = vmatpush.bf16.msra.mxu0 %v4505
    %7733 = vmatpush.bf16.msra.mxu0 %v4497
    %7734 = vmatpush.bf16.msra.mxu0 %v4489
    %7735 = vmatpush.bf16.msra.mxu0 %v4481
    %7736 = vmatpush.bf16.msra.mxu0 %v4473
    %7737 = vmatpush.bf16.msra.mxu0 %v4465
    %7738 = vmatmul.bf16.gmra.mxu0 %v1888
    %v7739 = vpop.f32.mrf.mxu0
    %v7740 = vadd.f32 %v7691, %v7739
    %v7741 = vpop.f32.mrf.mxu0
    %v7742 = vadd.f32 %v7693, %v7741
    %7743 = vmatmul.bf16.gmra.mxu0 %v1896
    %v7744 = vpop.f32.mrf.mxu0
    %v7745 = vadd.f32 %v7696, %v7744
    %v7746 = vpop.f32.mrf.mxu0
    %v7747 = vadd.f32 %v7698, %v7746
    %7748 = vmatmul.bf16.gmra.mxu0 %v1904
    %v7749 = vpop.f32.mrf.mxu0
    %v7750 = vadd.f32 %v7701, %v7749
    %v7751 = vpop.f32.mrf.mxu0
    %v7752 = vadd.f32 %v7703, %v7751
    %7753 = vmatmul.bf16.gmra.mxu0 %v1912
    %v7754 = vpop.f32.mrf.mxu0
    %v7755 = vadd.f32 %v7706, %v7754
    %v7756 = vpop.f32.mrf.mxu0
    %v7757 = vadd.f32 %v7708, %v7756
    %7758 = vmatmul.bf16.gmra.mxu0 %v1920
    %v7759 = vpop.f32.mrf.mxu0
    %v7760 = vadd.f32 %v7711, %v7759
    %v7761 = vpop.f32.mrf.mxu0
    %v7762 = vadd.f32 %v7713, %v7761
    %7763 = vmatmul.bf16.gmra.mxu0 %v1928
    %v7764 = vpop.f32.mrf.mxu0
    %v7765 = vadd.f32 %v7716, %v7764
    %v7766 = vpop.f32.mrf.mxu0
    %v7767 = vadd.f32 %v7718, %v7766
    %7768 = vmatmul.bf16.gmra.mxu0 %v1936
    %v7769 = vpop.f32.mrf.mxu0
    %v7770 = vadd.f32 %v7721, %v7769
    %v7771 = vpop.f32.mrf.mxu0
    %v7772 = vadd.f32 %v7723, %v7771
    %7773 = vmatmul.bf16.gmra.mxu0 %v1944
    %v7774 = vpop.f32.mrf.mxu0
    %v7775 = vadd.f32 %v7726, %v7774
    %v7776 = vpop.f32.mrf.mxu0
    %v7777 = vadd.f32 %v7728, %v7776
    %7778 = vdwg.mxu0
    %7779 = vmatpush.bf16.msra.mxu0 %v4074
    %7780 = vmatpush.bf16.msra.mxu0 %v4066
    %7781 = vmatpush.bf16.msra.mxu0 %v4058
    %7782 = vmatpush.bf16.msra.mxu0 %v4050
    %7783 = vmatpush.bf16.msra.mxu0 %v4042
    %7784 = vmatpush.bf16.msra.mxu0 %v4034
    %7785 = vmatpush.bf16.msra.mxu0 %v4026
    %7786 = vmatpush.bf16.msra.mxu0 %v4018
    %7787 = vmatmul.bf16.gmra.mxu0 %v1881
    %v7788 = vpop.f32.mrf.mxu0
    %v7789 = vadd.f32 %v2466, %v7788
    %v7790 = vpop.f32.mrf.mxu0
    %v7791 = vadd.f32 %v2466, %v7790
    %7792 = vmatmul.bf16.gmra.mxu0 %v1889
    %v7793 = vpop.f32.mrf.mxu0
    %v7794 = vadd.f32 %v2466, %v7793
    %v7795 = vpop.f32.mrf.mxu0
    %v7796 = vadd.f32 %v2466, %v7795
    %7797 = vmatmul.bf16.gmra.mxu0 %v1897
    %v7798 = vpop.f32.mrf.mxu0
    %v7799 = vadd.f32 %v2466, %v7798
    %v7800 = vpop.f32.mrf.mxu0
    %v7801 = vadd.f32 %v2466, %v7800
    %7802 = vmatmul.bf16.gmra.mxu0 %v1905
    %v7803 = vpop.f32.mrf.mxu0
    %v7804 = vadd.f32 %v2466, %v7803
    %v7805 = vpop.f32.mrf.mxu0
    %v7806 = vadd.f32 %v2466, %v7805
    %7807 = vmatmul.bf16.gmra.mxu0 %v1913
    %v7808 = vpop.f32.mrf.mxu0
    %v7809 = vadd.f32 %v2466, %v7808
    %v7810 = vpop.f32.mrf.mxu0
    %v7811 = vadd.f32 %v2466, %v7810
    %7812 = vmatmul.bf16.gmra.mxu0 %v1921
    %v7813 = vpop.f32.mrf.mxu0
    %v7814 = vadd.f32 %v2466, %v7813
    %v7815 = vpop.f32.mrf.mxu0
    %v7816 = vadd.f32 %v2466, %v7815
    %7817 = vmatmul.bf16.gmra.mxu0 %v1929
    %v7818 = vpop.f32.mrf.mxu0
    %v7819 = vadd.f32 %v2466, %v7818
    %v7820 = vpop.f32.mrf.mxu0
    %v7821 = vadd.f32 %v2466, %v7820
    %7822 = vmatmul.bf16.gmra.mxu0 %v1937
    %v7823 = vpop.f32.mrf.mxu0
    %v7824 = vadd.f32 %v2466, %v7823
    %v7825 = vpop.f32.mrf.mxu0
    %v7826 = vadd.f32 %v2466, %v7825
    %7827 = vdwg.mxu0
    %7828 = vmatpush.bf16.msra.mxu0 %v4138
    %7829 = vmatpush.bf16.msra.mxu0 %v4130
    %7830 = vmatpush.bf16.msra.mxu0 %v4122
    %7831 = vmatpush.bf16.msra.mxu0 %v4114
    %7832 = vmatpush.bf16.msra.mxu0 %v4106
    %7833 = vmatpush.bf16.msra.mxu0 %v4098
    %7834 = vmatpush.bf16.msra.mxu0 %v4090
    %7835 = vmatpush.bf16.msra.mxu0 %v4082
    %7836 = vmatmul.bf16.gmra.mxu0 %v1882
    %v7837 = vpop.f32.mrf.mxu0
    %v7838 = vadd.f32 %v7789, %v7837
    %v7839 = vpop.f32.mrf.mxu0
    %v7840 = vadd.f32 %v7791, %v7839
    %7841 = vmatmul.bf16.gmra.mxu0 %v1890
    %v7842 = vpop.f32.mrf.mxu0
    %v7843 = vadd.f32 %v7794, %v7842
    %v7844 = vpop.f32.mrf.mxu0
    %v7845 = vadd.f32 %v7796, %v7844
    %7846 = vmatmul.bf16.gmra.mxu0 %v1898
    %v7847 = vpop.f32.mrf.mxu0
    %v7848 = vadd.f32 %v7799, %v7847
    %v7849 = vpop.f32.mrf.mxu0
    %v7850 = vadd.f32 %v7801, %v7849
    %7851 = vmatmul.bf16.gmra.mxu0 %v1906
    %v7852 = vpop.f32.mrf.mxu0
    %v7853 = vadd.f32 %v7804, %v7852
    %v7854 = vpop.f32.mrf.mxu0
    %v7855 = vadd.f32 %v7806, %v7854
    %7856 = vmatmul.bf16.gmra.mxu0 %v1914
    %v7857 = vpop.f32.mrf.mxu0
    %v7858 = vadd.f32 %v7809, %v7857
    %v7859 = vpop.f32.mrf.mxu0
    %v7860 = vadd.f32 %v7811, %v7859
    %7861 = vmatmul.bf16.gmra.mxu0 %v1922
    %v7862 = vpop.f32.mrf.mxu0
    %v7863 = vadd.f32 %v7814, %v7862
    %v7864 = vpop.f32.mrf.mxu0
    %v7865 = vadd.f32 %v7816, %v7864
    %7866 = vmatmul.bf16.gmra.mxu0 %v1930
    %v7867 = vpop.f32.mrf.mxu0
    %v7868 = vadd.f32 %v7819, %v7867
    %v7869 = vpop.f32.mrf.mxu0
    %v7870 = vadd.f32 %v7821, %v7869
    %7871 = vmatmul.bf16.gmra.mxu0 %v1938
    %v7872 = vpop.f32.mrf.mxu0
    %v7873 = vadd.f32 %v7824, %v7872
    %v7874 = vpop.f32.mrf.mxu0
    %v7875 = vadd.f32 %v7826, %v7874
    %7876 = vdwg.mxu0
    %7877 = vmatpush.bf16.msra.mxu0 %v4202
    %7878 = vmatpush.bf16.msra.mxu0 %v4194
    %7879 = vmatpush.bf16.msra.mxu0 %v4186
    %7880 = vmatpush.bf16.msra.mxu0 %v4178
    %7881 = vmatpush.bf16.msra.mxu0 %v4170
    %7882 = vmatpush.bf16.msra.mxu0 %v4162
    %7883 = vmatpush.bf16.msra.mxu0 %v4154
    %7884 = vmatpush.bf16.msra.mxu0 %v4146
    %7885 = vmatmul.bf16.gmra.mxu0 %v1883
    %v7886 = vpop.f32.mrf.mxu0
    %v7887 = vadd.f32 %v7838, %v7886
    %v7888 = vpop.f32.mrf.mxu0
    %v7889 = vadd.f32 %v7840, %v7888
    %7890 = vmatmul.bf16.gmra.mxu0 %v1891
    %v7891 = vpop.f32.mrf.mxu0
    %v7892 = vadd.f32 %v7843, %v7891
    %v7893 = vpop.f32.mrf.mxu0
    %v7894 = vadd.f32 %v7845, %v7893
    %7895 = vmatmul.bf16.gmra.mxu0 %v1899
    %v7896 = vpop.f32.mrf.mxu0
    %v7897 = vadd.f32 %v7848, %v7896
    %v7898 = vpop.f32.mrf.mxu0
    %v7899 = vadd.f32 %v7850, %v7898
    %7900 = vmatmul.bf16.gmra.mxu0 %v1907
    %v7901 = vpop.f32.mrf.mxu0
    %v7902 = vadd.f32 %v7853, %v7901
    %v7903 = vpop.f32.mrf.mxu0
    %v7904 = vadd.f32 %v7855, %v7903
    %7905 = vmatmul.bf16.gmra.mxu0 %v1915
    %v7906 = vpop.f32.mrf.mxu0
    %v7907 = vadd.f32 %v7858, %v7906
    %v7908 = vpop.f32.mrf.mxu0
    %v7909 = vadd.f32 %v7860, %v7908
    %7910 = vmatmul.bf16.gmra.mxu0 %v1923
    %v7911 = vpop.f32.mrf.mxu0
    %v7912 = vadd.f32 %v7863, %v7911
    %v7913 = vpop.f32.mrf.mxu0
    %v7914 = vadd.f32 %v7865, %v7913
    %7915 = vmatmul.bf16.gmra.mxu0 %v1931
    %v7916 = vpop.f32.mrf.mxu0
    %v7917 = vadd.f32 %v7868, %v7916
    %v7918 = vpop.f32.mrf.mxu0
    %v7919 = vadd.f32 %v7870, %v7918
    %7920 = vmatmul.bf16.gmra.mxu0 %v1939
    %v7921 = vpop.f32.mrf.mxu0
    %v7922 = vadd.f32 %v7873, %v7921
    %v7923 = vpop.f32.mrf.mxu0
    %v7924 = vadd.f32 %v7875, %v7923
    %7925 = vdwg.mxu0
    %7926 = vmatpush.bf16.msra.mxu0 %v4266
    %7927 = vmatpush.bf16.msra.mxu0 %v4258
    %7928 = vmatpush.bf16.msra.mxu0 %v4250
    %7929 = vmatpush.bf16.msra.mxu0 %v4242
    %7930 = vmatpush.bf16.msra.mxu0 %v4234
    %7931 = vmatpush.bf16.msra.mxu0 %v4226
    %7932 = vmatpush.bf16.msra.mxu0 %v4218
    %7933 = vmatpush.bf16.msra.mxu0 %v4210
    %7934 = vmatmul.bf16.gmra.mxu0 %v1884
    %v7935 = vpop.f32.mrf.mxu0
    %v7936 = vadd.f32 %v7887, %v7935
    %v7937 = vpop.f32.mrf.mxu0
    %v7938 = vadd.f32 %v7889, %v7937
    %7939 = vmatmul.bf16.gmra.mxu0 %v1892
    %v7940 = vpop.f32.mrf.mxu0
    %v7941 = vadd.f32 %v7892, %v7940
    %v7942 = vpop.f32.mrf.mxu0
    %v7943 = vadd.f32 %v7894, %v7942
    %7944 = vmatmul.bf16.gmra.mxu0 %v1900
    %v7945 = vpop.f32.mrf.mxu0
    %v7946 = vadd.f32 %v7897, %v7945
    %v7947 = vpop.f32.mrf.mxu0
    %v7948 = vadd.f32 %v7899, %v7947
    %7949 = vmatmul.bf16.gmra.mxu0 %v1908
    %v7950 = vpop.f32.mrf.mxu0
    %v7951 = vadd.f32 %v7902, %v7950
    %v7952 = vpop.f32.mrf.mxu0
    %v7953 = vadd.f32 %v7904, %v7952
    %7954 = vmatmul.bf16.gmra.mxu0 %v1916
    %v7955 = vpop.f32.mrf.mxu0
    %v7956 = vadd.f32 %v7907, %v7955
    %v7957 = vpop.f32.mrf.mxu0
    %v7958 = vadd.f32 %v7909, %v7957
    %7959 = vmatmul.bf16.gmra.mxu0 %v1924
    %v7960 = vpop.f32.mrf.mxu0
    %v7961 = vadd.f32 %v7912, %v7960
    %v7962 = vpop.f32.mrf.mxu0
    %v7963 = vadd.f32 %v7914, %v7962
    %7964 = vmatmul.bf16.gmra.mxu0 %v1932
    %v7965 = vpop.f32.mrf.mxu0
    %v7966 = vadd.f32 %v7917, %v7965
    %v7967 = vpop.f32.mrf.mxu0
    %v7968 = vadd.f32 %v7919, %v7967
    %7969 = vmatmul.bf16.gmra.mxu0 %v1940
    %v7970 = vpop.f32.mrf.mxu0
    %v7971 = vadd.f32 %v7922, %v7970
    %v7972 = vpop.f32.mrf.mxu0
    %v7973 = vadd.f32 %v7924, %v7972
    %7974 = vdwg.mxu0
    %7975 = vmatpush.bf16.msra.mxu0 %v4330
    %7976 = vmatpush.bf16.msra.mxu0 %v4322
    %7977 = vmatpush.bf16.msra.mxu0 %v4314
    %7978 = vmatpush.bf16.msra.mxu0 %v4306
    %7979 = vmatpush.bf16.msra.mxu0 %v4298
    %7980 = vmatpush.bf16.msra.mxu0 %v4290
    %7981 = vmatpush.bf16.msra.mxu0 %v4282
    %7982 = vmatpush.bf16.msra.mxu0 %v4274
    %7983 = vmatmul.bf16.gmra.mxu0 %v1885
    %v7984 = vpop.f32.mrf.mxu0
    %v7985 = vadd.f32 %v7936, %v7984
    %v7986 = vpop.f32.mrf.mxu0
    %v7987 = vadd.f32 %v7938, %v7986
    %7988 = vmatmul.bf16.gmra.mxu0 %v1893
    %v7989 = vpop.f32.mrf.mxu0
    %v7990 = vadd.f32 %v7941, %v7989
    %v7991 = vpop.f32.mrf.mxu0
    %v7992 = vadd.f32 %v7943, %v7991
    %7993 = vmatmul.bf16.gmra.mxu0 %v1901
    %v7994 = vpop.f32.mrf.mxu0
    %v7995 = vadd.f32 %v7946, %v7994
    %v7996 = vpop.f32.mrf.mxu0
    %v7997 = vadd.f32 %v7948, %v7996
    %7998 = vmatmul.bf16.gmra.mxu0 %v1909
    %v7999 = vpop.f32.mrf.mxu0
    %v8000 = vadd.f32 %v7951, %v7999
    %v8001 = vpop.f32.mrf.mxu0
    %v8002 = vadd.f32 %v7953, %v8001
    %8003 = vmatmul.bf16.gmra.mxu0 %v1917
    %v8004 = vpop.f32.mrf.mxu0
    %v8005 = vadd.f32 %v7956, %v8004
    %v8006 = vpop.f32.mrf.mxu0
    %v8007 = vadd.f32 %v7958, %v8006
    %8008 = vmatmul.bf16.gmra.mxu0 %v1925
    %v8009 = vpop.f32.mrf.mxu0
    %v8010 = vadd.f32 %v7961, %v8009
    %v8011 = vpop.f32.mrf.mxu0
    %v8012 = vadd.f32 %v7963, %v8011
    %8013 = vmatmul.bf16.gmra.mxu0 %v1933
    %v8014 = vpop.f32.mrf.mxu0
    %v8015 = vadd.f32 %v7966, %v8014
    %v8016 = vpop.f32.mrf.mxu0
    %v8017 = vadd.f32 %v7968, %v8016
    %8018 = vmatmul.bf16.gmra.mxu0 %v1941
    %v8019 = vpop.f32.mrf.mxu0
    %v8020 = vadd.f32 %v7971, %v8019
    %v8021 = vpop.f32.mrf.mxu0
    %v8022 = vadd.f32 %v7973, %v8021
    %8023 = vdwg.mxu0
    %8024 = vmatpush.bf16.msra.mxu0 %v4394
    %8025 = vmatpush.bf16.msra.mxu0 %v4386
    %8026 = vmatpush.bf16.msra.mxu0 %v4378
    %8027 = vmatpush.bf16.msra.mxu0 %v4370
    %8028 = vmatpush.bf16.msra.mxu0 %v4362
    %8029 = vmatpush.bf16.msra.mxu0 %v4354
    %8030 = vmatpush.bf16.msra.mxu0 %v4346
    %8031 = vmatpush.bf16.msra.mxu0 %v4338
    %8032 = vmatmul.bf16.gmra.mxu0 %v1886
    %v8033 = vpop.f32.mrf.mxu0
    %v8034 = vadd.f32 %v7985, %v8033
    %v8035 = vpop.f32.mrf.mxu0
    %v8036 = vadd.f32 %v7987, %v8035
    %8037 = vmatmul.bf16.gmra.mxu0 %v1894
    %v8038 = vpop.f32.mrf.mxu0
    %v8039 = vadd.f32 %v7990, %v8038
    %v8040 = vpop.f32.mrf.mxu0
    %v8041 = vadd.f32 %v7992, %v8040
    %8042 = vmatmul.bf16.gmra.mxu0 %v1902
    %v8043 = vpop.f32.mrf.mxu0
    %v8044 = vadd.f32 %v7995, %v8043
    %v8045 = vpop.f32.mrf.mxu0
    %v8046 = vadd.f32 %v7997, %v8045
    %8047 = vmatmul.bf16.gmra.mxu0 %v1910
    %v8048 = vpop.f32.mrf.mxu0
    %v8049 = vadd.f32 %v8000, %v8048
    %v8050 = vpop.f32.mrf.mxu0
    %v8051 = vadd.f32 %v8002, %v8050
    %8052 = vmatmul.bf16.gmra.mxu0 %v1918
    %v8053 = vpop.f32.mrf.mxu0
    %v8054 = vadd.f32 %v8005, %v8053
    %v8055 = vpop.f32.mrf.mxu0
    %v8056 = vadd.f32 %v8007, %v8055
    %8057 = vmatmul.bf16.gmra.mxu0 %v1926
    %v8058 = vpop.f32.mrf.mxu0
    %v8059 = vadd.f32 %v8010, %v8058
    %v8060 = vpop.f32.mrf.mxu0
    %v8061 = vadd.f32 %v8012, %v8060
    %8062 = vmatmul.bf16.gmra.mxu0 %v1934
    %v8063 = vpop.f32.mrf.mxu0
    %v8064 = vadd.f32 %v8015, %v8063
    %v8065 = vpop.f32.mrf.mxu0
    %v8066 = vadd.f32 %v8017, %v8065
    %8067 = vmatmul.bf16.gmra.mxu0 %v1942
    %v8068 = vpop.f32.mrf.mxu0
    %v8069 = vadd.f32 %v8020, %v8068
    %v8070 = vpop.f32.mrf.mxu0
    %v8071 = vadd.f32 %v8022, %v8070
    %8072 = vdwg.mxu0
    %8073 = vmatpush.bf16.msra.mxu0 %v4458
    %8074 = vmatpush.bf16.msra.mxu0 %v4450
    %8075 = vmatpush.bf16.msra.mxu0 %v4442
    %8076 = vmatpush.bf16.msra.mxu0 %v4434
    %8077 = vmatpush.bf16.msra.mxu0 %v4426
    %8078 = vmatpush.bf16.msra.mxu0 %v4418
    %8079 = vmatpush.bf16.msra.mxu0 %v4410
    %8080 = vmatpush.bf16.msra.mxu0 %v4402
    %8081 = vmatmul.bf16.gmra.mxu0 %v1887
    %v8082 = vpop.f32.mrf.mxu0
    %v8083 = vadd.f32 %v8034, %v8082
    %v8084 = vpop.f32.mrf.mxu0
    %v8085 = vadd.f32 %v8036, %v8084
    %8086 = vmatmul.bf16.gmra.mxu0 %v1895
    %v8087 = vpop.f32.mrf.mxu0
    %v8088 = vadd.f32 %v8039, %v8087
    %v8089 = vpop.f32.mrf.mxu0
    %v8090 = vadd.f32 %v8041, %v8089
    %8091 = vmatmul.bf16.gmra.mxu0 %v1903
    %v8092 = vpop.f32.mrf.mxu0
    %v8093 = vadd.f32 %v8044, %v8092
    %v8094 = vpop.f32.mrf.mxu0
    %v8095 = vadd.f32 %v8046, %v8094
    %8096 = vmatmul.bf16.gmra.mxu0 %v1911
    %v8097 = vpop.f32.mrf.mxu0
    %v8098 = vadd.f32 %v8049, %v8097
    %v8099 = vpop.f32.mrf.mxu0
    %v8100 = vadd.f32 %v8051, %v8099
    %8101 = vmatmul.bf16.gmra.mxu0 %v1919
    %v8102 = vpop.f32.mrf.mxu0
    %v8103 = vadd.f32 %v8054, %v8102
    %v8104 = vpop.f32.mrf.mxu0
    %v8105 = vadd.f32 %v8056, %v8104
    %8106 = vmatmul.bf16.gmra.mxu0 %v1927
    %v8107 = vpop.f32.mrf.mxu0
    %v8108 = vadd.f32 %v8059, %v8107
    %v8109 = vpop.f32.mrf.mxu0
    %v8110 = vadd.f32 %v8061, %v8109
    %8111 = vmatmul.bf16.gmra.mxu0 %v1935
    %v8112 = vpop.f32.mrf.mxu0
    %v8113 = vadd.f32 %v8064, %v8112
    %v8114 = vpop.f32.mrf.mxu0
    %v8115 = vadd.f32 %v8066, %v8114
    %8116 = vmatmul.bf16.gmra.mxu0 %v1943
    %v8117 = vpop.f32.mrf.mxu0
    %v8118 = vadd.f32 %v8069, %v8117
    %v8119 = vpop.f32.mrf.mxu0
    %v8120 = vadd.f32 %v8071, %v8119
    %8121 = vdwg.mxu0
    %8122 = vmatpush.bf16.msra.mxu0 %v4522
    %8123 = vmatpush.bf16.msra.mxu0 %v4514
    %8124 = vmatpush.bf16.msra.mxu0 %v4506
    %8125 = vmatpush.bf16.msra.mxu0 %v4498
    %8126 = vmatpush.bf16.msra.mxu0 %v4490
    %8127 = vmatpush.bf16.msra.mxu0 %v4482
    %8128 = vmatpush.bf16.msra.mxu0 %v4474
    %8129 = vmatpush.bf16.msra.mxu0 %v4466
    %8130 = vmatmul.bf16.gmra.mxu0 %v1888
    %v8131 = vpop.f32.mrf.mxu0
    %v8132 = vadd.f32 %v8083, %v8131
    %v8133 = vpop.f32.mrf.mxu0
    %v8134 = vadd.f32 %v8085, %v8133
    %8135 = vmatmul.bf16.gmra.mxu0 %v1896
    %v8136 = vpop.f32.mrf.mxu0
    %v8137 = vadd.f32 %v8088, %v8136
    %v8138 = vpop.f32.mrf.mxu0
    %v8139 = vadd.f32 %v8090, %v8138
    %8140 = vmatmul.bf16.gmra.mxu0 %v1904
    %v8141 = vpop.f32.mrf.mxu0
    %v8142 = vadd.f32 %v8093, %v8141
    %v8143 = vpop.f32.mrf.mxu0
    %v8144 = vadd.f32 %v8095, %v8143
    %8145 = vmatmul.bf16.gmra.mxu0 %v1912
    %v8146 = vpop.f32.mrf.mxu0
    %v8147 = vadd.f32 %v8098, %v8146
    %v8148 = vpop.f32.mrf.mxu0
    %v8149 = vadd.f32 %v8100, %v8148
    %8150 = vmatmul.bf16.gmra.mxu0 %v1920
    %v8151 = vpop.f32.mrf.mxu0
    %v8152 = vadd.f32 %v8103, %v8151
    %v8153 = vpop.f32.mrf.mxu0
    %v8154 = vadd.f32 %v8105, %v8153
    %8155 = vmatmul.bf16.gmra.mxu0 %v1928
    %v8156 = vpop.f32.mrf.mxu0
    %v8157 = vadd.f32 %v8108, %v8156
    %v8158 = vpop.f32.mrf.mxu0
    %v8159 = vadd.f32 %v8110, %v8158
    %8160 = vmatmul.bf16.gmra.mxu0 %v1936
    %v8161 = vpop.f32.mrf.mxu0
    %v8162 = vadd.f32 %v8113, %v8161
    %v8163 = vpop.f32.mrf.mxu0
    %v8164 = vadd.f32 %v8115, %v8163
    %8165 = vmatmul.bf16.gmra.mxu0 %v1944
    %v8166 = vpop.f32.mrf.mxu0
    %v8167 = vadd.f32 %v8118, %v8166
    %v8168 = vpop.f32.mrf.mxu0
    %v8169 = vadd.f32 %v8120, %v8168
    %8170 = vdwg.mxu0
    %v8171 = vmax.f32 %v5388, 0.0
    %v8172 = vmax.f32 %v5780, 0.0
    %v8173 = vmax.f32 %v6172, 0.0
    %v8174 = vmax.f32 %v6564, 0.0
    %v8175 = vmax.f32 %v6956, 0.0
    %v8176 = vmax.f32 %v7348, 0.0
    %v8177 = vmax.f32 %v7740, 0.0
    %v8178 = vmax.f32 %v8132, 0.0
    %v8179 = vmax.f32 %v5390, 0.0
    %v8180 = vmax.f32 %v5782, 0.0
    %v8181 = vmax.f32 %v6174, 0.0
    %v8182 = vmax.f32 %v6566, 0.0
    %v8183 = vmax.f32 %v6958, 0.0
    %v8184 = vmax.f32 %v7350, 0.0
    %v8185 = vmax.f32 %v7742, 0.0
    %v8186 = vmax.f32 %v8134, 0.0
    %v8187 = vmax.f32 %v5393, 0.0
    %v8188 = vmax.f32 %v5785, 0.0
    %v8189 = vmax.f32 %v6177, 0.0
    %v8190 = vmax.f32 %v6569, 0.0
    %v8191 = vmax.f32 %v6961, 0.0
    %v8192 = vmax.f32 %v7353, 0.0
    %v8193 = vmax.f32 %v7745, 0.0
    %v8194 = vmax.f32 %v8137, 0.0
    %v8195 = vmax.f32 %v5395, 0.0
    %v8196 = vmax.f32 %v5787, 0.0
    %v8197 = vmax.f32 %v6179, 0.0
    %v8198 = vmax.f32 %v6571, 0.0
    %v8199 = vmax.f32 %v6963, 0.0
    %v8200 = vmax.f32 %v7355, 0.0
    %v8201 = vmax.f32 %v7747, 0.0
    %v8202 = vmax.f32 %v8139, 0.0
    %v8203 = vmax.f32 %v5398, 0.0
    %v8204 = vmax.f32 %v5790, 0.0
    %v8205 = vmax.f32 %v6182, 0.0
    %v8206 = vmax.f32 %v6574, 0.0
    %v8207 = vmax.f32 %v6966, 0.0
    %v8208 = vmax.f32 %v7358, 0.0
    %v8209 = vmax.f32 %v7750, 0.0
    %v8210 = vmax.f32 %v8142, 0.0
    %v8211 = vmax.f32 %v5400, 0.0
    %v8212 = vmax.f32 %v5792, 0.0
    %v8213 = vmax.f32 %v6184, 0.0
    %v8214 = vmax.f32 %v6576, 0.0
    %v8215 = vmax.f32 %v6968, 0.0
    %v8216 = vmax.f32 %v7360, 0.0
    %v8217 = vmax.f32 %v7752, 0.0
    %v8218 = vmax.f32 %v8144, 0.0
    %v8219 = vmax.f32 %v5403, 0.0
    %v8220 = vmax.f32 %v5795, 0.0
    %v8221 = vmax.f32 %v6187, 0.0
    %v8222 = vmax.f32 %v6579, 0.0
    %v8223 = vmax.f32 %v6971, 0.0
    %v8224 = vmax.f32 %v7363, 0.0
    %v8225 = vmax.f32 %v7755, 0.0
    %v8226 = vmax.f32 %v8147, 0.0
    %v8227 = vmax.f32 %v5405, 0.0
    %v8228 = vmax.f32 %v5797, 0.0
    %v8229 = vmax.f32 %v6189, 0.0
    %v8230 = vmax.f32 %v6581, 0.0
    %v8231 = vmax.f32 %v6973, 0.0
    %v8232 = vmax.f32 %v7365, 0.0
    %v8233 = vmax.f32 %v7757, 0.0
    %v8234 = vmax.f32 %v8149, 0.0
    %v8235 = vmax.f32 %v5408, 0.0
    %v8236 = vmax.f32 %v5800, 0.0
    %v8237 = vmax.f32 %v6192, 0.0
    %v8238 = vmax.f32 %v6584, 0.0
    %v8239 = vmax.f32 %v6976, 0.0
    %v8240 = vmax.f32 %v7368, 0.0
    %v8241 = vmax.f32 %v7760, 0.0
    %v8242 = vmax.f32 %v8152, 0.0
    %v8243 = vmax.f32 %v5410, 0.0
    %v8244 = vmax.f32 %v5802, 0.0
    %v8245 = vmax.f32 %v6194, 0.0
    %v8246 = vmax.f32 %v6586, 0.0
    %v8247 = vmax.f32 %v6978, 0.0
    %v8248 = vmax.f32 %v7370, 0.0
    %v8249 = vmax.f32 %v7762, 0.0
    %v8250 = vmax.f32 %v8154, 0.0
    %v8251 = vmax.f32 %v5413, 0.0
    %v8252 = vmax.f32 %v5805, 0.0
    %v8253 = vmax.f32 %v6197, 0.0
    %v8254 = vmax.f32 %v6589, 0.0
    %v8255 = vmax.f32 %v6981, 0.0
    %v8256 = vmax.f32 %v7373, 0.0
    %v8257 = vmax.f32 %v7765, 0.0
    %v8258 = vmax.f32 %v8157, 0.0
    %v8259 = vmax.f32 %v5415, 0.0
    %v8260 = vmax.f32 %v5807, 0.0
    %v8261 = vmax.f32 %v6199, 0.0
    %v8262 = vmax.f32 %v6591, 0.0
    %v8263 = vmax.f32 %v6983, 0.0
    %v8264 = vmax.f32 %v7375, 0.0
    %v8265 = vmax.f32 %v7767, 0.0
    %v8266 = vmax.f32 %v8159, 0.0
    %v8267 = vmax.f32 %v5418, 0.0
    %v8268 = vmax.f32 %v5810, 0.0
    %v8269 = vmax.f32 %v6202, 0.0
    %v8270 = vmax.f32 %v6594, 0.0
    %v8271 = vmax.f32 %v6986, 0.0
    %v8272 = vmax.f32 %v7378, 0.0
    %v8273 = vmax.f32 %v7770, 0.0
    %v8274 = vmax.f32 %v8162, 0.0
    %v8275 = vmax.f32 %v5420, 0.0
    %v8276 = vmax.f32 %v5812, 0.0
    %v8277 = vmax.f32 %v6204, 0.0
    %v8278 = vmax.f32 %v6596, 0.0
    %v8279 = vmax.f32 %v6988, 0.0
    %v8280 = vmax.f32 %v7380, 0.0
    %v8281 = vmax.f32 %v7772, 0.0
    %v8282 = vmax.f32 %v8164, 0.0
    %v8283 = vmax.f32 %v5423, 0.0
    %v8284 = vmax.f32 %v5815, 0.0
    %v8285 = vmax.f32 %v6207, 0.0
    %v8286 = vmax.f32 %v6599, 0.0
    %v8287 = vmax.f32 %v6991, 0.0
    %v8288 = vmax.f32 %v7383, 0.0
    %v8289 = vmax.f32 %v7775, 0.0
    %v8290 = vmax.f32 %v8167, 0.0
    %v8291 = vmax.f32 %v5425, 0.0
    %v8292 = vmax.f32 %v5817, 0.0
    %v8293 = vmax.f32 %v6209, 0.0
    %v8294 = vmax.f32 %v6601, 0.0
    %v8295 = vmax.f32 %v6993, 0.0
    %v8296 = vmax.f32 %v7385, 0.0
    %v8297 = vmax.f32 %v7777, 0.0
    %v8298 = vmax.f32 %v8169, 0.0
    %v8299 = vpack.c.bf16 %v8179, %v8171
    %v8300 = vpack.c.bf16 %v8180, %v8172
    %v8301 = vpack.c.bf16 %v8181, %v8173
    %v8302 = vpack.c.bf16 %v8182, %v8174
    %v8303 = vpack.c.bf16 %v8183, %v8175
    %v8304 = vpack.c.bf16 %v8184, %v8176
    %v8305 = vpack.c.bf16 %v8185, %v8177
    %v8306 = vpack.c.bf16 %v8186, %v8178
    %v8307 = vpack.c.bf16 %v8195, %v8187
    %v8308 = vpack.c.bf16 %v8196, %v8188
    %v8309 = vpack.c.bf16 %v8197, %v8189
    %v8310 = vpack.c.bf16 %v8198, %v8190
    %v8311 = vpack.c.bf16 %v8199, %v8191
    %v8312 = vpack.c.bf16 %v8200, %v8192
    %v8313 = vpack.c.bf16 %v8201, %v8193
    %v8314 = vpack.c.bf16 %v8202, %v8194
    %v8315 = vpack.c.bf16 %v8211, %v8203
    %v8316 = vpack.c.bf16 %v8212, %v8204
    %v8317 = vpack.c.bf16 %v8213, %v8205
    %v8318 = vpack.c.bf16 %v8214, %v8206
    %v8319 = vpack.c.bf16 %v8215, %v8207
    %v8320 = vpack.c.bf16 %v8216, %v8208
    %v8321 = vpack.c.bf16 %v8217, %v8209
    %v8322 = vpack.c.bf16 %v8218, %v8210
    %v8323 = vpack.c.bf16 %v8227, %v8219
    %v8324 = vpack.c.bf16 %v8228, %v8220
    %v8325 = vpack.c.bf16 %v8229, %v8221
    %v8326 = vpack.c.bf16 %v8230, %v8222
    %v8327 = vpack.c.bf16 %v8231, %v8223
    %v8328 = vpack.c.bf16 %v8232, %v8224
    %v8329 = vpack.c.bf16 %v8233, %v8225
    %v8330 = vpack.c.bf16 %v8234, %v8226
    %v8331 = vpack.c.bf16 %v8243, %v8235
    %v8332 = vpack.c.bf16 %v8244, %v8236
    %v8333 = vpack.c.bf16 %v8245, %v8237
    %v8334 = vpack.c.bf16 %v8246, %v8238
    %v8335 = vpack.c.bf16 %v8247, %v8239
    %v8336 = vpack.c.bf16 %v8248, %v8240
    %v8337 = vpack.c.bf16 %v8249, %v8241
    %v8338 = vpack.c.bf16 %v8250, %v8242
    %v8339 = vpack.c.bf16 %v8259, %v8251
    %v8340 = vpack.c.bf16 %v8260, %v8252
    %v8341 = vpack.c.bf16 %v8261, %v8253
    %v8342 = vpack.c.bf16 %v8262, %v8254
    %v8343 = vpack.c.bf16 %v8263, %v8255
    %v8344 = vpack.c.bf16 %v8264, %v8256
    %v8345 = vpack.c.bf16 %v8265, %v8257
    %v8346 = vpack.c.bf16 %v8266, %v8258
    %v8347 = vpack.c.bf16 %v8275, %v8267
    %v8348 = vpack.c.bf16 %v8276, %v8268
    %v8349 = vpack.c.bf16 %v8277, %v8269
    %v8350 = vpack.c.bf16 %v8278, %v8270
    %v8351 = vpack.c.bf16 %v8279, %v8271
    %v8352 = vpack.c.bf16 %v8280, %v8272
    %v8353 = vpack.c.bf16 %v8281, %v8273
    %v8354 = vpack.c.bf16 %v8282, %v8274
    %v8355 = vpack.c.bf16 %v8291, %v8283
    %v8356 = vpack.c.bf16 %v8292, %v8284
    %v8357 = vpack.c.bf16 %v8293, %v8285
    %v8358 = vpack.c.bf16 %v8294, %v8286
    %v8359 = vpack.c.bf16 %v8295, %v8287
    %v8360 = vpack.c.bf16 %v8296, %v8288
    %v8361 = vpack.c.bf16 %v8297, %v8289
    %v8362 = vpack.c.bf16 %v8298, %v8290
    %v8363 = vld [vmem:[#allocation10] sm:$0xff]
    %v8364 = vld [vmem:[#allocation10 + $0x8] sm:$0xff]
    %v8365 = vld [vmem:[#allocation10 + $0x10] sm:$0xff]
    %v8366 = vld [vmem:[#allocation10 + $0x18] sm:$0xff]
    %v8367 = vld [vmem:[#allocation10 + $0x20] sm:$0xff]
    %v8368 = vld [vmem:[#allocation10 + $0x28] sm:$0xff]
    %v8369 = vld [vmem:[#allocation10 + $0x30] sm:$0xff]
    %v8370 = vld [vmem:[#allocation10 + $0x38] sm:$0xff]
    %v8371 = vld [vmem:[#allocation10 + $0x40] sm:$0xff]
    %v8372 = vld [vmem:[#allocation10 + $0x48] sm:$0xff]
    %v8373 = vld [vmem:[#allocation10 + $0x50] sm:$0xff]
    %v8374 = vld [vmem:[#allocation10 + $0x58] sm:$0xff]
    %v8375 = vld [vmem:[#allocation10 + $0x60] sm:$0xff]
    %v8376 = vld [vmem:[#allocation10 + $0x68] sm:$0xff]
    %v8377 = vld [vmem:[#allocation10 + $0x70] sm:$0xff]
    %v8378 = vld [vmem:[#allocation10 + $0x78] sm:$0xff]
    %v8379 = vld [vmem:[#allocation10 + $0x80] sm:$0xff]
    %v8380 = vld [vmem:[#allocation10 + $0x88] sm:$0xff]
    %v8381 = vld [vmem:[#allocation10 + $0x90] sm:$0xff]
    %v8382 = vld [vmem:[#allocation10 + $0x98] sm:$0xff]
    %v8383 = vld [vmem:[#allocation10 + $0xa0] sm:$0xff]
    %v8384 = vld [vmem:[#allocation10 + $0xa8] sm:$0xff]
    %v8385 = vld [vmem:[#allocation10 + $0xb0] sm:$0xff]
    %v8386 = vld [vmem:[#allocation10 + $0xb8] sm:$0xff]
    %v8387 = vld [vmem:[#allocation10 + $0xc0] sm:$0xff]
    %v8388 = vld [vmem:[#allocation10 + $0xc8] sm:$0xff]
    %v8389 = vld [vmem:[#allocation10 + $0xd0] sm:$0xff]
    %v8390 = vld [vmem:[#allocation10 + $0xd8] sm:$0xff]
    %v8391 = vld [vmem:[#allocation10 + $0xe0] sm:$0xff]
    %v8392 = vld [vmem:[#allocation10 + $0xe8] sm:$0xff]
    %v8393 = vld [vmem:[#allocation10 + $0xf0] sm:$0xff]
    %v8394 = vld [vmem:[#allocation10 + $0xf8] sm:$0xff]
    %v8395 = vld [vmem:[#allocation10 + $0x100] sm:$0xff]
    %v8396 = vld [vmem:[#allocation10 + $0x108] sm:$0xff]
    %v8397 = vld [vmem:[#allocation10 + $0x110] sm:$0xff]
    %v8398 = vld [vmem:[#allocation10 + $0x118] sm:$0xff]
    %v8399 = vld [vmem:[#allocation10 + $0x120] sm:$0xff]
    %v8400 = vld [vmem:[#allocation10 + $0x128] sm:$0xff]
    %v8401 = vld [vmem:[#allocation10 + $0x130] sm:$0xff]
    %v8402 = vld [vmem:[#allocation10 + $0x138] sm:$0xff]
    %v8403 = vld [vmem:[#allocation10 + $0x140] sm:$0xff]
    %v8404 = vld [vmem:[#allocation10 + $0x148] sm:$0xff]
    %v8405 = vld [vmem:[#allocation10 + $0x150] sm:$0xff]
    %v8406 = vld [vmem:[#allocation10 + $0x158] sm:$0xff]
    %v8407 = vld [vmem:[#allocation10 + $0x160] sm:$0xff]
    %v8408 = vld [vmem:[#allocation10 + $0x168] sm:$0xff]
    %v8409 = vld [vmem:[#allocation10 + $0x170] sm:$0xff]
    %v8410 = vld [vmem:[#allocation10 + $0x178] sm:$0xff]
    %v8411 = vld [vmem:[#allocation10 + $0x180] sm:$0xff]
    %v8412 = vld [vmem:[#allocation10 + $0x188] sm:$0xff]
    %v8413 = vld [vmem:[#allocation10 + $0x190] sm:$0xff]
    %v8414 = vld [vmem:[#allocation10 + $0x198] sm:$0xff]
    %v8415 = vld [vmem:[#allocation10 + $0x1a0] sm:$0xff]
    %v8416 = vld [vmem:[#allocation10 + $0x1a8] sm:$0xff]
    %v8417 = vld [vmem:[#allocation10 + $0x1b0] sm:$0xff]
    %v8418 = vld [vmem:[#allocation10 + $0x1b8] sm:$0xff]
    %v8419 = vld [vmem:[#allocation10 + $0x1c0] sm:$0xff]
    %v8420 = vld [vmem:[#allocation10 + $0x1c8] sm:$0xff]
    %v8421 = vld [vmem:[#allocation10 + $0x1d0] sm:$0xff]
    %v8422 = vld [vmem:[#allocation10 + $0x1d8] sm:$0xff]
    %v8423 = vld [vmem:[#allocation10 + $0x1e0] sm:$0xff]
    %v8424 = vld [vmem:[#allocation10 + $0x1e8] sm:$0xff]
    %v8425 = vld [vmem:[#allocation10 + $0x1f0] sm:$0xff]
    %v8426 = vld [vmem:[#allocation10 + $0x1f8] sm:$0xff]
    %v8427 = vld [vmem:[#allocation10 + $0x200] sm:$0xff]
    %v8428 = vld [vmem:[#allocation10 + $0x208] sm:$0xff]
    %v8429 = vld [vmem:[#allocation10 + $0x210] sm:$0xff]
    %v8430 = vld [vmem:[#allocation10 + $0x218] sm:$0xff]
    %v8431 = vld [vmem:[#allocation10 + $0x220] sm:$0xff]
    %v8432 = vld [vmem:[#allocation10 + $0x228] sm:$0xff]
    %v8433 = vld [vmem:[#allocation10 + $0x230] sm:$0xff]
    %v8434 = vld [vmem:[#allocation10 + $0x238] sm:$0xff]
    %v8435 = vld [vmem:[#allocation10 + $0x240] sm:$0xff]
    %v8436 = vld [vmem:[#allocation10 + $0x248] sm:$0xff]
    %v8437 = vld [vmem:[#allocation10 + $0x250] sm:$0xff]
    %v8438 = vld [vmem:[#allocation10 + $0x258] sm:$0xff]
    %v8439 = vld [vmem:[#allocation10 + $0x260] sm:$0xff]
    %v8440 = vld [vmem:[#allocation10 + $0x268] sm:$0xff]
    %v8441 = vld [vmem:[#allocation10 + $0x270] sm:$0xff]
    %v8442 = vld [vmem:[#allocation10 + $0x278] sm:$0xff]
    %v8443 = vld [vmem:[#allocation10 + $0x280] sm:$0xff]
    %v8444 = vld [vmem:[#allocation10 + $0x288] sm:$0xff]
    %v8445 = vld [vmem:[#allocation10 + $0x290] sm:$0xff]
    %v8446 = vld [vmem:[#allocation10 + $0x298] sm:$0xff]
    %v8447 = vld [vmem:[#allocation10 + $0x2a0] sm:$0xff]
    %v8448 = vld [vmem:[#allocation10 + $0x2a8] sm:$0xff]
    %v8449 = vld [vmem:[#allocation10 + $0x2b0] sm:$0xff]
    %v8450 = vld [vmem:[#allocation10 + $0x2b8] sm:$0xff]
    %v8451 = vld [vmem:[#allocation10 + $0x2c0] sm:$0xff]
    %v8452 = vld [vmem:[#allocation10 + $0x2c8] sm:$0xff]
    %v8453 = vld [vmem:[#allocation10 + $0x2d0] sm:$0xff]
    %v8454 = vld [vmem:[#allocation10 + $0x2d8] sm:$0xff]
    %v8455 = vld [vmem:[#allocation10 + $0x2e0] sm:$0xff]
    %v8456 = vld [vmem:[#allocation10 + $0x2e8] sm:$0xff]
    %v8457 = vld [vmem:[#allocation10 + $0x2f0] sm:$0xff]
    %v8458 = vld [vmem:[#allocation10 + $0x2f8] sm:$0xff]
    %v8459 = vld [vmem:[#allocation10 + $0x300] sm:$0xff]
    %v8460 = vld [vmem:[#allocation10 + $0x308] sm:$0xff]
    %v8461 = vld [vmem:[#allocation10 + $0x310] sm:$0xff]
    %v8462 = vld [vmem:[#allocation10 + $0x318] sm:$0xff]
    %v8463 = vld [vmem:[#allocation10 + $0x320] sm:$0xff]
    %v8464 = vld [vmem:[#allocation10 + $0x328] sm:$0xff]
    %v8465 = vld [vmem:[#allocation10 + $0x330] sm:$0xff]
    %v8466 = vld [vmem:[#allocation10 + $0x338] sm:$0xff]
    %v8467 = vld [vmem:[#allocation10 + $0x340] sm:$0xff]
    %v8468 = vld [vmem:[#allocation10 + $0x348] sm:$0xff]
    %v8469 = vld [vmem:[#allocation10 + $0x350] sm:$0xff]
    %v8470 = vld [vmem:[#allocation10 + $0x358] sm:$0xff]
    %v8471 = vld [vmem:[#allocation10 + $0x360] sm:$0xff]
    %v8472 = vld [vmem:[#allocation10 + $0x368] sm:$0xff]
    %v8473 = vld [vmem:[#allocation10 + $0x370] sm:$0xff]
    %v8474 = vld [vmem:[#allocation10 + $0x378] sm:$0xff]
    %v8475 = vld [vmem:[#allocation10 + $0x380] sm:$0xff]
    %v8476 = vld [vmem:[#allocation10 + $0x388] sm:$0xff]
    %v8477 = vld [vmem:[#allocation10 + $0x390] sm:$0xff]
    %v8478 = vld [vmem:[#allocation10 + $0x398] sm:$0xff]
    %v8479 = vld [vmem:[#allocation10 + $0x3a0] sm:$0xff]
    %v8480 = vld [vmem:[#allocation10 + $0x3a8] sm:$0xff]
    %v8481 = vld [vmem:[#allocation10 + $0x3b0] sm:$0xff]
    %v8482 = vld [vmem:[#allocation10 + $0x3b8] sm:$0xff]
    %v8483 = vld [vmem:[#allocation10 + $0x3c0] sm:$0xff]
    %v8484 = vld [vmem:[#allocation10 + $0x3c8] sm:$0xff]
    %v8485 = vld [vmem:[#allocation10 + $0x3d0] sm:$0xff]
    %v8486 = vld [vmem:[#allocation10 + $0x3d8] sm:$0xff]
    %v8487 = vld [vmem:[#allocation10 + $0x3e0] sm:$0xff]
    %v8488 = vld [vmem:[#allocation10 + $0x3e8] sm:$0xff]
    %v8489 = vld [vmem:[#allocation10 + $0x3f0] sm:$0xff]
    %v8490 = vld [vmem:[#allocation10 + $0x3f8] sm:$0xff]
    %v8491 = vld [vmem:[#allocation10 + $0x400] sm:$0xff]
    %v8492 = vld [vmem:[#allocation10 + $0x408] sm:$0xff]
    %v8493 = vld [vmem:[#allocation10 + $0x410] sm:$0xff]
    %v8494 = vld [vmem:[#allocation10 + $0x418] sm:$0xff]
    %v8495 = vld [vmem:[#allocation10 + $0x420] sm:$0xff]
    %v8496 = vld [vmem:[#allocation10 + $0x428] sm:$0xff]
    %v8497 = vld [vmem:[#allocation10 + $0x430] sm:$0xff]
    %v8498 = vld [vmem:[#allocation10 + $0x438] sm:$0xff]
    %v8499 = vld [vmem:[#allocation10 + $0x440] sm:$0xff]
    %v8500 = vld [vmem:[#allocation10 + $0x448] sm:$0xff]
    %v8501 = vld [vmem:[#allocation10 + $0x450] sm:$0xff]
    %v8502 = vld [vmem:[#allocation10 + $0x458] sm:$0xff]
    %v8503 = vld [vmem:[#allocation10 + $0x460] sm:$0xff]
    %v8504 = vld [vmem:[#allocation10 + $0x468] sm:$0xff]
    %v8505 = vld [vmem:[#allocation10 + $0x470] sm:$0xff]
    %v8506 = vld [vmem:[#allocation10 + $0x478] sm:$0xff]
    %v8507 = vld [vmem:[#allocation10 + $0x480] sm:$0xff]
    %v8508 = vld [vmem:[#allocation10 + $0x488] sm:$0xff]
    %v8509 = vld [vmem:[#allocation10 + $0x490] sm:$0xff]
    %v8510 = vld [vmem:[#allocation10 + $0x498] sm:$0xff]
    %v8511 = vld [vmem:[#allocation10 + $0x4a0] sm:$0xff]
    %v8512 = vld [vmem:[#allocation10 + $0x4a8] sm:$0xff]
    %v8513 = vld [vmem:[#allocation10 + $0x4b0] sm:$0xff]
    %v8514 = vld [vmem:[#allocation10 + $0x4b8] sm:$0xff]
    %v8515 = vld [vmem:[#allocation10 + $0x4c0] sm:$0xff]
    %v8516 = vld [vmem:[#allocation10 + $0x4c8] sm:$0xff]
    %v8517 = vld [vmem:[#allocation10 + $0x4d0] sm:$0xff]
    %v8518 = vld [vmem:[#allocation10 + $0x4d8] sm:$0xff]
    %v8519 = vld [vmem:[#allocation10 + $0x4e0] sm:$0xff]
    %v8520 = vld [vmem:[#allocation10 + $0x4e8] sm:$0xff]
    %v8521 = vld [vmem:[#allocation10 + $0x4f0] sm:$0xff]
    %v8522 = vld [vmem:[#allocation10 + $0x4f8] sm:$0xff]
    %v8523 = vld [vmem:[#allocation10 + $0x500] sm:$0xff]
    %v8524 = vld [vmem:[#allocation10 + $0x508] sm:$0xff]
    %v8525 = vld [vmem:[#allocation10 + $0x510] sm:$0xff]
    %v8526 = vld [vmem:[#allocation10 + $0x518] sm:$0xff]
    %v8527 = vld [vmem:[#allocation10 + $0x520] sm:$0xff]
    %v8528 = vld [vmem:[#allocation10 + $0x528] sm:$0xff]
    %v8529 = vld [vmem:[#allocation10 + $0x530] sm:$0xff]
    %v8530 = vld [vmem:[#allocation10 + $0x538] sm:$0xff]
    %v8531 = vld [vmem:[#allocation10 + $0x540] sm:$0xff]
    %v8532 = vld [vmem:[#allocation10 + $0x548] sm:$0xff]
    %v8533 = vld [vmem:[#allocation10 + $0x550] sm:$0xff]
    %v8534 = vld [vmem:[#allocation10 + $0x558] sm:$0xff]
    %v8535 = vld [vmem:[#allocation10 + $0x560] sm:$0xff]
    %v8536 = vld [vmem:[#allocation10 + $0x568] sm:$0xff]
    %v8537 = vld [vmem:[#allocation10 + $0x570] sm:$0xff]
    %v8538 = vld [vmem:[#allocation10 + $0x578] sm:$0xff]
    %v8539 = vld [vmem:[#allocation10 + $0x580] sm:$0xff]
    %v8540 = vld [vmem:[#allocation10 + $0x588] sm:$0xff]
    %v8541 = vld [vmem:[#allocation10 + $0x590] sm:$0xff]
    %v8542 = vld [vmem:[#allocation10 + $0x598] sm:$0xff]
    %v8543 = vld [vmem:[#allocation10 + $0x5a0] sm:$0xff]
    %v8544 = vld [vmem:[#allocation10 + $0x5a8] sm:$0xff]
    %v8545 = vld [vmem:[#allocation10 + $0x5b0] sm:$0xff]
    %v8546 = vld [vmem:[#allocation10 + $0x5b8] sm:$0xff]
    %v8547 = vld [vmem:[#allocation10 + $0x5c0] sm:$0xff]
    %v8548 = vld [vmem:[#allocation10 + $0x5c8] sm:$0xff]
    %v8549 = vld [vmem:[#allocation10 + $0x5d0] sm:$0xff]
    %v8550 = vld [vmem:[#allocation10 + $0x5d8] sm:$0xff]
    %v8551 = vld [vmem:[#allocation10 + $0x5e0] sm:$0xff]
    %v8552 = vld [vmem:[#allocation10 + $0x5e8] sm:$0xff]
    %v8553 = vld [vmem:[#allocation10 + $0x5f0] sm:$0xff]
    %v8554 = vld [vmem:[#allocation10 + $0x5f8] sm:$0xff]
    %v8555 = vld [vmem:[#allocation10 + $0x600] sm:$0xff]
    %v8556 = vld [vmem:[#allocation10 + $0x608] sm:$0xff]
    %v8557 = vld [vmem:[#allocation10 + $0x610] sm:$0xff]
    %v8558 = vld [vmem:[#allocation10 + $0x618] sm:$0xff]
    %v8559 = vld [vmem:[#allocation10 + $0x620] sm:$0xff]
    %v8560 = vld [vmem:[#allocation10 + $0x628] sm:$0xff]
    %v8561 = vld [vmem:[#allocation10 + $0x630] sm:$0xff]
    %v8562 = vld [vmem:[#allocation10 + $0x638] sm:$0xff]
    %v8563 = vld [vmem:[#allocation10 + $0x640] sm:$0xff]
    %v8564 = vld [vmem:[#allocation10 + $0x648] sm:$0xff]
    %v8565 = vld [vmem:[#allocation10 + $0x650] sm:$0xff]
    %v8566 = vld [vmem:[#allocation10 + $0x658] sm:$0xff]
    %v8567 = vld [vmem:[#allocation10 + $0x660] sm:$0xff]
    %v8568 = vld [vmem:[#allocation10 + $0x668] sm:$0xff]
    %v8569 = vld [vmem:[#allocation10 + $0x670] sm:$0xff]
    %v8570 = vld [vmem:[#allocation10 + $0x678] sm:$0xff]
    %v8571 = vld [vmem:[#allocation10 + $0x680] sm:$0xff]
    %v8572 = vld [vmem:[#allocation10 + $0x688] sm:$0xff]
    %v8573 = vld [vmem:[#allocation10 + $0x690] sm:$0xff]
    %v8574 = vld [vmem:[#allocation10 + $0x698] sm:$0xff]
    %v8575 = vld [vmem:[#allocation10 + $0x6a0] sm:$0xff]
    %v8576 = vld [vmem:[#allocation10 + $0x6a8] sm:$0xff]
    %v8577 = vld [vmem:[#allocation10 + $0x6b0] sm:$0xff]
    %v8578 = vld [vmem:[#allocation10 + $0x6b8] sm:$0xff]
    %v8579 = vld [vmem:[#allocation10 + $0x6c0] sm:$0xff]
    %v8580 = vld [vmem:[#allocation10 + $0x6c8] sm:$0xff]
    %v8581 = vld [vmem:[#allocation10 + $0x6d0] sm:$0xff]
    %v8582 = vld [vmem:[#allocation10 + $0x6d8] sm:$0xff]
    %v8583 = vld [vmem:[#allocation10 + $0x6e0] sm:$0xff]
    %v8584 = vld [vmem:[#allocation10 + $0x6e8] sm:$0xff]
    %v8585 = vld [vmem:[#allocation10 + $0x6f0] sm:$0xff]
    %v8586 = vld [vmem:[#allocation10 + $0x6f8] sm:$0xff]
    %v8587 = vld [vmem:[#allocation10 + $0x700] sm:$0xff]
    %v8588 = vld [vmem:[#allocation10 + $0x708] sm:$0xff]
    %v8589 = vld [vmem:[#allocation10 + $0x710] sm:$0xff]
    %v8590 = vld [vmem:[#allocation10 + $0x718] sm:$0xff]
    %v8591 = vld [vmem:[#allocation10 + $0x720] sm:$0xff]
    %v8592 = vld [vmem:[#allocation10 + $0x728] sm:$0xff]
    %v8593 = vld [vmem:[#allocation10 + $0x730] sm:$0xff]
    %v8594 = vld [vmem:[#allocation10 + $0x738] sm:$0xff]
    %v8595 = vld [vmem:[#allocation10 + $0x740] sm:$0xff]
    %v8596 = vld [vmem:[#allocation10 + $0x748] sm:$0xff]
    %v8597 = vld [vmem:[#allocation10 + $0x750] sm:$0xff]
    %v8598 = vld [vmem:[#allocation10 + $0x758] sm:$0xff]
    %v8599 = vld [vmem:[#allocation10 + $0x760] sm:$0xff]
    %v8600 = vld [vmem:[#allocation10 + $0x768] sm:$0xff]
    %v8601 = vld [vmem:[#allocation10 + $0x770] sm:$0xff]
    %v8602 = vld [vmem:[#allocation10 + $0x778] sm:$0xff]
    %v8603 = vld [vmem:[#allocation10 + $0x780] sm:$0xff]
    %v8604 = vld [vmem:[#allocation10 + $0x788] sm:$0xff]
    %v8605 = vld [vmem:[#allocation10 + $0x790] sm:$0xff]
    %v8606 = vld [vmem:[#allocation10 + $0x798] sm:$0xff]
    %v8607 = vld [vmem:[#allocation10 + $0x7a0] sm:$0xff]
    %v8608 = vld [vmem:[#allocation10 + $0x7a8] sm:$0xff]
    %v8609 = vld [vmem:[#allocation10 + $0x7b0] sm:$0xff]
    %v8610 = vld [vmem:[#allocation10 + $0x7b8] sm:$0xff]
    %v8611 = vld [vmem:[#allocation10 + $0x7c0] sm:$0xff]
    %v8612 = vld [vmem:[#allocation10 + $0x7c8] sm:$0xff]
    %v8613 = vld [vmem:[#allocation10 + $0x7d0] sm:$0xff]
    %v8614 = vld [vmem:[#allocation10 + $0x7d8] sm:$0xff]
    %v8615 = vld [vmem:[#allocation10 + $0x7e0] sm:$0xff]
    %v8616 = vld [vmem:[#allocation10 + $0x7e8] sm:$0xff]
    %v8617 = vld [vmem:[#allocation10 + $0x7f0] sm:$0xff]
    %v8618 = vld [vmem:[#allocation10 + $0x7f8] sm:$0xff]
    %v8619 = vld [vmem:[#allocation11] sm:$0xf]
    %v8621 = vperm.slane %v8619, 0
    %v8622 = vperm.slane %v8619, 1
    %v8623 = vperm.slane %v8619, 2
    %v8624 = vperm.slane %v8619, 3
    %v8885 = vunpack.c.l.b16 %v8363
    %v8886 = vunpack.c.h.b16 %v8363
    %v8887 = vunpack.c.l.b16 %v8364
    %v8888 = vunpack.c.h.b16 %v8364
    %v8889 = vunpack.c.l.b16 %v8365
    %v8890 = vunpack.c.h.b16 %v8365
    %v8891 = vunpack.c.l.b16 %v8366
    %v8892 = vunpack.c.h.b16 %v8366
    %v8893 = vunpack.c.l.b16 %v8367
    %v8894 = vunpack.c.h.b16 %v8367
    %v8895 = vunpack.c.l.b16 %v8368
    %v8896 = vunpack.c.h.b16 %v8368
    %v8897 = vunpack.c.l.b16 %v8369
    %v8898 = vunpack.c.h.b16 %v8369
    %v8899 = vunpack.c.l.b16 %v8370
    %v8900 = vunpack.c.h.b16 %v8370
    %v8901 = vunpack.c.l.b16 %v8371
    %v8902 = vunpack.c.h.b16 %v8371
    %v8903 = vunpack.c.l.b16 %v8372
    %v8904 = vunpack.c.h.b16 %v8372
    %v8905 = vunpack.c.l.b16 %v8373
    %v8906 = vunpack.c.h.b16 %v8373
    %v8907 = vunpack.c.l.b16 %v8374
    %v8908 = vunpack.c.h.b16 %v8374
    %v8909 = vunpack.c.l.b16 %v8375
    %v8910 = vunpack.c.h.b16 %v8375
    %v8911 = vunpack.c.l.b16 %v8376
    %v8912 = vunpack.c.h.b16 %v8376
    %v8913 = vunpack.c.l.b16 %v8377
    %v8914 = vunpack.c.h.b16 %v8377
    %v8915 = vunpack.c.l.b16 %v8378
    %v8916 = vunpack.c.h.b16 %v8378
    %v8917 = vunpack.c.l.b16 %v8379
    %v8918 = vunpack.c.h.b16 %v8379
    %v8919 = vunpack.c.l.b16 %v8380
    %v8920 = vunpack.c.h.b16 %v8380
    %v8921 = vunpack.c.l.b16 %v8381
    %v8922 = vunpack.c.h.b16 %v8381
    %v8923 = vunpack.c.l.b16 %v8382
    %v8924 = vunpack.c.h.b16 %v8382
    %v8925 = vunpack.c.l.b16 %v8383
    %v8926 = vunpack.c.h.b16 %v8383
    %v8927 = vunpack.c.l.b16 %v8384
    %v8928 = vunpack.c.h.b16 %v8384
    %v8929 = vunpack.c.l.b16 %v8385
    %v8930 = vunpack.c.h.b16 %v8385
    %v8931 = vunpack.c.l.b16 %v8386
    %v8932 = vunpack.c.h.b16 %v8386
    %v8933 = vunpack.c.l.b16 %v8387
    %v8934 = vunpack.c.h.b16 %v8387
    %v8935 = vunpack.c.l.b16 %v8388
    %v8936 = vunpack.c.h.b16 %v8388
    %v8937 = vunpack.c.l.b16 %v8389
    %v8938 = vunpack.c.h.b16 %v8389
    %v8939 = vunpack.c.l.b16 %v8390
    %v8940 = vunpack.c.h.b16 %v8390
    %v8941 = vunpack.c.l.b16 %v8391
    %v8942 = vunpack.c.h.b16 %v8391
    %v8943 = vunpack.c.l.b16 %v8392
    %v8944 = vunpack.c.h.b16 %v8392
    %v8945 = vunpack.c.l.b16 %v8393
    %v8946 = vunpack.c.h.b16 %v8393
    %v8947 = vunpack.c.l.b16 %v8394
    %v8948 = vunpack.c.h.b16 %v8394
    %v8949 = vunpack.c.l.b16 %v8395
    %v8950 = vunpack.c.h.b16 %v8395
    %v8951 = vunpack.c.l.b16 %v8396
    %v8952 = vunpack.c.h.b16 %v8396
    %v8953 = vunpack.c.l.b16 %v8397
    %v8954 = vunpack.c.h.b16 %v8397
    %v8955 = vunpack.c.l.b16 %v8398
    %v8956 = vunpack.c.h.b16 %v8398
    %v8957 = vunpack.c.l.b16 %v8399
    %v8958 = vunpack.c.h.b16 %v8399
    %v8959 = vunpack.c.l.b16 %v8400
    %v8960 = vunpack.c.h.b16 %v8400
    %v8961 = vunpack.c.l.b16 %v8401
    %v8962 = vunpack.c.h.b16 %v8401
    %v8963 = vunpack.c.l.b16 %v8402
    %v8964 = vunpack.c.h.b16 %v8402
    %v8965 = vunpack.c.l.b16 %v8403
    %v8966 = vunpack.c.h.b16 %v8403
    %v8967 = vunpack.c.l.b16 %v8404
    %v8968 = vunpack.c.h.b16 %v8404
    %v8969 = vunpack.c.l.b16 %v8405
    %v8970 = vunpack.c.h.b16 %v8405
    %v8971 = vunpack.c.l.b16 %v8406
    %v8972 = vunpack.c.h.b16 %v8406
    %v8973 = vunpack.c.l.b16 %v8407
    %v8974 = vunpack.c.h.b16 %v8407
    %v8975 = vunpack.c.l.b16 %v8408
    %v8976 = vunpack.c.h.b16 %v8408
    %v8977 = vunpack.c.l.b16 %v8409
    %v8978 = vunpack.c.h.b16 %v8409
    %v8979 = vunpack.c.l.b16 %v8410
    %v8980 = vunpack.c.h.b16 %v8410
    %v8981 = vunpack.c.l.b16 %v8411
    %v8982 = vunpack.c.h.b16 %v8411
    %v8983 = vunpack.c.l.b16 %v8412
    %v8984 = vunpack.c.h.b16 %v8412
    %v8985 = vunpack.c.l.b16 %v8413
    %v8986 = vunpack.c.h.b16 %v8413
    %v8987 = vunpack.c.l.b16 %v8414
    %v8988 = vunpack.c.h.b16 %v8414
    %v8989 = vunpack.c.l.b16 %v8415
    %v8990 = vunpack.c.h.b16 %v8415
    %v8991 = vunpack.c.l.b16 %v8416
    %v8992 = vunpack.c.h.b16 %v8416
    %v8993 = vunpack.c.l.b16 %v8417
    %v8994 = vunpack.c.h.b16 %v8417
    %v8995 = vunpack.c.l.b16 %v8418
    %v8996 = vunpack.c.h.b16 %v8418
    %v8997 = vunpack.c.l.b16 %v8419
    %v8998 = vunpack.c.h.b16 %v8419
    %v8999 = vunpack.c.l.b16 %v8420
    %v9000 = vunpack.c.h.b16 %v8420
    %v9001 = vunpack.c.l.b16 %v8421
    %v9002 = vunpack.c.h.b16 %v8421
    %v9003 = vunpack.c.l.b16 %v8422
    %v9004 = vunpack.c.h.b16 %v8422
    %v9005 = vunpack.c.l.b16 %v8423
    %v9006 = vunpack.c.h.b16 %v8423
    %v9007 = vunpack.c.l.b16 %v8424
    %v9008 = vunpack.c.h.b16 %v8424
    %v9009 = vunpack.c.l.b16 %v8425
    %v9010 = vunpack.c.h.b16 %v8425
    %v9011 = vunpack.c.l.b16 %v8426
    %v9012 = vunpack.c.h.b16 %v8426
    %v9013 = vunpack.c.l.b16 %v8427
    %v9014 = vunpack.c.h.b16 %v8427
    %v9015 = vunpack.c.l.b16 %v8428
    %v9016 = vunpack.c.h.b16 %v8428
    %v9017 = vunpack.c.l.b16 %v8429
    %v9018 = vunpack.c.h.b16 %v8429
    %v9019 = vunpack.c.l.b16 %v8430
    %v9020 = vunpack.c.h.b16 %v8430
    %v9021 = vunpack.c.l.b16 %v8431
    %v9022 = vunpack.c.h.b16 %v8431
    %v9023 = vunpack.c.l.b16 %v8432
    %v9024 = vunpack.c.h.b16 %v8432
    %v9025 = vunpack.c.l.b16 %v8433
    %v9026 = vunpack.c.h.b16 %v8433
    %v9027 = vunpack.c.l.b16 %v8434
    %v9028 = vunpack.c.h.b16 %v8434
    %v9029 = vunpack.c.l.b16 %v8435
    %v9030 = vunpack.c.h.b16 %v8435
    %v9031 = vunpack.c.l.b16 %v8436
    %v9032 = vunpack.c.h.b16 %v8436
    %v9033 = vunpack.c.l.b16 %v8437
    %v9034 = vunpack.c.h.b16 %v8437
    %v9035 = vunpack.c.l.b16 %v8438
    %v9036 = vunpack.c.h.b16 %v8438
    %v9037 = vunpack.c.l.b16 %v8439
    %v9038 = vunpack.c.h.b16 %v8439
    %v9039 = vunpack.c.l.b16 %v8440
    %v9040 = vunpack.c.h.b16 %v8440
    %v9041 = vunpack.c.l.b16 %v8441
    %v9042 = vunpack.c.h.b16 %v8441
    %v9043 = vunpack.c.l.b16 %v8442
    %v9044 = vunpack.c.h.b16 %v8442
    %v9045 = vunpack.c.l.b16 %v8443
    %v9046 = vunpack.c.h.b16 %v8443
    %v9047 = vunpack.c.l.b16 %v8444
    %v9048 = vunpack.c.h.b16 %v8444
    %v9049 = vunpack.c.l.b16 %v8445
    %v9050 = vunpack.c.h.b16 %v8445
    %v9051 = vunpack.c.l.b16 %v8446
    %v9052 = vunpack.c.h.b16 %v8446
    %v9053 = vunpack.c.l.b16 %v8447
    %v9054 = vunpack.c.h.b16 %v8447
    %v9055 = vunpack.c.l.b16 %v8448
    %v9056 = vunpack.c.h.b16 %v8448
    %v9057 = vunpack.c.l.b16 %v8449
    %v9058 = vunpack.c.h.b16 %v8449
    %v9059 = vunpack.c.l.b16 %v8450
    %v9060 = vunpack.c.h.b16 %v8450
    %v9061 = vunpack.c.l.b16 %v8451
    %v9062 = vunpack.c.h.b16 %v8451
    %v9063 = vunpack.c.l.b16 %v8452
    %v9064 = vunpack.c.h.b16 %v8452
    %v9065 = vunpack.c.l.b16 %v8453
    %v9066 = vunpack.c.h.b16 %v8453
    %v9067 = vunpack.c.l.b16 %v8454
    %v9068 = vunpack.c.h.b16 %v8454
    %v9069 = vunpack.c.l.b16 %v8455
    %v9070 = vunpack.c.h.b16 %v8455
    %v9071 = vunpack.c.l.b16 %v8456
    %v9072 = vunpack.c.h.b16 %v8456
    %v9073 = vunpack.c.l.b16 %v8457
    %v9074 = vunpack.c.h.b16 %v8457
    %v9075 = vunpack.c.l.b16 %v8458
    %v9076 = vunpack.c.h.b16 %v8458
    %v9077 = vunpack.c.l.b16 %v8459
    %v9078 = vunpack.c.h.b16 %v8459
    %v9079 = vunpack.c.l.b16 %v8460
    %v9080 = vunpack.c.h.b16 %v8460
    %v9081 = vunpack.c.l.b16 %v8461
    %v9082 = vunpack.c.h.b16 %v8461
    %v9083 = vunpack.c.l.b16 %v8462
    %v9084 = vunpack.c.h.b16 %v8462
    %v9085 = vunpack.c.l.b16 %v8463
    %v9086 = vunpack.c.h.b16 %v8463
    %v9087 = vunpack.c.l.b16 %v8464
    %v9088 = vunpack.c.h.b16 %v8464
    %v9089 = vunpack.c.l.b16 %v8465
    %v9090 = vunpack.c.h.b16 %v8465
    %v9091 = vunpack.c.l.b16 %v8466
    %v9092 = vunpack.c.h.b16 %v8466
    %v9093 = vunpack.c.l.b16 %v8467
    %v9094 = vunpack.c.h.b16 %v8467
    %v9095 = vunpack.c.l.b16 %v8468
    %v9096 = vunpack.c.h.b16 %v8468
    %v9097 = vunpack.c.l.b16 %v8469
    %v9098 = vunpack.c.h.b16 %v8469
    %v9099 = vunpack.c.l.b16 %v8470
    %v9100 = vunpack.c.h.b16 %v8470
    %v9101 = vunpack.c.l.b16 %v8471
    %v9102 = vunpack.c.h.b16 %v8471
    %v9103 = vunpack.c.l.b16 %v8472
    %v9104 = vunpack.c.h.b16 %v8472
    %v9105 = vunpack.c.l.b16 %v8473
    %v9106 = vunpack.c.h.b16 %v8473
    %v9107 = vunpack.c.l.b16 %v8474
    %v9108 = vunpack.c.h.b16 %v8474
    %v9109 = vunpack.c.l.b16 %v8475
    %v9110 = vunpack.c.h.b16 %v8475
    %v9111 = vunpack.c.l.b16 %v8476
    %v9112 = vunpack.c.h.b16 %v8476
    %v9113 = vunpack.c.l.b16 %v8477
    %v9114 = vunpack.c.h.b16 %v8477
    %v9115 = vunpack.c.l.b16 %v8478
    %v9116 = vunpack.c.h.b16 %v8478
    %v9117 = vunpack.c.l.b16 %v8479
    %v9118 = vunpack.c.h.b16 %v8479
    %v9119 = vunpack.c.l.b16 %v8480
    %v9120 = vunpack.c.h.b16 %v8480
    %v9121 = vunpack.c.l.b16 %v8481
    %v9122 = vunpack.c.h.b16 %v8481
    %v9123 = vunpack.c.l.b16 %v8482
    %v9124 = vunpack.c.h.b16 %v8482
    %v9125 = vunpack.c.l.b16 %v8483
    %v9126 = vunpack.c.h.b16 %v8483
    %v9127 = vunpack.c.l.b16 %v8484
    %v9128 = vunpack.c.h.b16 %v8484
    %v9129 = vunpack.c.l.b16 %v8485
    %v9130 = vunpack.c.h.b16 %v8485
    %v9131 = vunpack.c.l.b16 %v8486
    %v9132 = vunpack.c.h.b16 %v8486
    %v9133 = vunpack.c.l.b16 %v8487
    %v9134 = vunpack.c.h.b16 %v8487
    %v9135 = vunpack.c.l.b16 %v8488
    %v9136 = vunpack.c.h.b16 %v8488
    %v9137 = vunpack.c.l.b16 %v8489
    %v9138 = vunpack.c.h.b16 %v8489
    %v9139 = vunpack.c.l.b16 %v8490
    %v9140 = vunpack.c.h.b16 %v8490
    %v9141 = vunpack.c.l.b16 %v8491
    %v9142 = vunpack.c.h.b16 %v8491
    %v9143 = vunpack.c.l.b16 %v8492
    %v9144 = vunpack.c.h.b16 %v8492
    %v9145 = vunpack.c.l.b16 %v8493
    %v9146 = vunpack.c.h.b16 %v8493
    %v9147 = vunpack.c.l.b16 %v8494
    %v9148 = vunpack.c.h.b16 %v8494
    %v9149 = vunpack.c.l.b16 %v8495
    %v9150 = vunpack.c.h.b16 %v8495
    %v9151 = vunpack.c.l.b16 %v8496
    %v9152 = vunpack.c.h.b16 %v8496
    %v9153 = vunpack.c.l.b16 %v8497
    %v9154 = vunpack.c.h.b16 %v8497
    %v9155 = vunpack.c.l.b16 %v8498
    %v9156 = vunpack.c.h.b16 %v8498
    %v9157 = vunpack.c.l.b16 %v8499
    %v9158 = vunpack.c.h.b16 %v8499
    %v9159 = vunpack.c.l.b16 %v8500
    %v9160 = vunpack.c.h.b16 %v8500
    %v9161 = vunpack.c.l.b16 %v8501
    %v9162 = vunpack.c.h.b16 %v8501
    %v9163 = vunpack.c.l.b16 %v8502
    %v9164 = vunpack.c.h.b16 %v8502
    %v9165 = vunpack.c.l.b16 %v8503
    %v9166 = vunpack.c.h.b16 %v8503
    %v9167 = vunpack.c.l.b16 %v8504
    %v9168 = vunpack.c.h.b16 %v8504
    %v9169 = vunpack.c.l.b16 %v8505
    %v9170 = vunpack.c.h.b16 %v8505
    %v9171 = vunpack.c.l.b16 %v8506
    %v9172 = vunpack.c.h.b16 %v8506
    %v9173 = vunpack.c.l.b16 %v8507
    %v9174 = vunpack.c.h.b16 %v8507
    %v9175 = vunpack.c.l.b16 %v8508
    %v9176 = vunpack.c.h.b16 %v8508
    %v9177 = vunpack.c.l.b16 %v8509
    %v9178 = vunpack.c.h.b16 %v8509
    %v9179 = vunpack.c.l.b16 %v8510
    %v9180 = vunpack.c.h.b16 %v8510
    %v9181 = vunpack.c.l.b16 %v8511
    %v9182 = vunpack.c.h.b16 %v8511
    %v9183 = vunpack.c.l.b16 %v8512
    %v9184 = vunpack.c.h.b16 %v8512
    %v9185 = vunpack.c.l.b16 %v8513
    %v9186 = vunpack.c.h.b16 %v8513
    %v9187 = vunpack.c.l.b16 %v8514
    %v9188 = vunpack.c.h.b16 %v8514
    %v9189 = vunpack.c.l.b16 %v8515
    %v9190 = vunpack.c.h.b16 %v8515
    %v9191 = vunpack.c.l.b16 %v8516
    %v9192 = vunpack.c.h.b16 %v8516
    %v9193 = vunpack.c.l.b16 %v8517
    %v9194 = vunpack.c.h.b16 %v8517
    %v9195 = vunpack.c.l.b16 %v8518
    %v9196 = vunpack.c.h.b16 %v8518
    %v9197 = vunpack.c.l.b16 %v8519
    %v9198 = vunpack.c.h.b16 %v8519
    %v9199 = vunpack.c.l.b16 %v8520
    %v9200 = vunpack.c.h.b16 %v8520
    %v9201 = vunpack.c.l.b16 %v8521
    %v9202 = vunpack.c.h.b16 %v8521
    %v9203 = vunpack.c.l.b16 %v8522
    %v9204 = vunpack.c.h.b16 %v8522
    %v9205 = vunpack.c.l.b16 %v8523
    %v9206 = vunpack.c.h.b16 %v8523
    %v9207 = vunpack.c.l.b16 %v8524
    %v9208 = vunpack.c.h.b16 %v8524
    %v9209 = vunpack.c.l.b16 %v8525
    %v9210 = vunpack.c.h.b16 %v8525
    %v9211 = vunpack.c.l.b16 %v8526
    %v9212 = vunpack.c.h.b16 %v8526
    %v9213 = vunpack.c.l.b16 %v8527
    %v9214 = vunpack.c.h.b16 %v8527
    %v9215 = vunpack.c.l.b16 %v8528
    %v9216 = vunpack.c.h.b16 %v8528
    %v9217 = vunpack.c.l.b16 %v8529
    %v9218 = vunpack.c.h.b16 %v8529
    %v9219 = vunpack.c.l.b16 %v8530
    %v9220 = vunpack.c.h.b16 %v8530
    %v9221 = vunpack.c.l.b16 %v8531
    %v9222 = vunpack.c.h.b16 %v8531
    %v9223 = vunpack.c.l.b16 %v8532
    %v9224 = vunpack.c.h.b16 %v8532
    %v9225 = vunpack.c.l.b16 %v8533
    %v9226 = vunpack.c.h.b16 %v8533
    %v9227 = vunpack.c.l.b16 %v8534
    %v9228 = vunpack.c.h.b16 %v8534
    %v9229 = vunpack.c.l.b16 %v8535
    %v9230 = vunpack.c.h.b16 %v8535
    %v9231 = vunpack.c.l.b16 %v8536
    %v9232 = vunpack.c.h.b16 %v8536
    %v9233 = vunpack.c.l.b16 %v8537
    %v9234 = vunpack.c.h.b16 %v8537
    %v9235 = vunpack.c.l.b16 %v8538
    %v9236 = vunpack.c.h.b16 %v8538
    %v9237 = vunpack.c.l.b16 %v8539
    %v9238 = vunpack.c.h.b16 %v8539
    %v9239 = vunpack.c.l.b16 %v8540
    %v9240 = vunpack.c.h.b16 %v8540
    %v9241 = vunpack.c.l.b16 %v8541
    %v9242 = vunpack.c.h.b16 %v8541
    %v9243 = vunpack.c.l.b16 %v8542
    %v9244 = vunpack.c.h.b16 %v8542
    %v9245 = vunpack.c.l.b16 %v8543
    %v9246 = vunpack.c.h.b16 %v8543
    %v9247 = vunpack.c.l.b16 %v8544
    %v9248 = vunpack.c.h.b16 %v8544
    %v9249 = vunpack.c.l.b16 %v8545
    %v9250 = vunpack.c.h.b16 %v8545
    %v9251 = vunpack.c.l.b16 %v8546
    %v9252 = vunpack.c.h.b16 %v8546
    %v9253 = vunpack.c.l.b16 %v8547
    %v9254 = vunpack.c.h.b16 %v8547
    %v9255 = vunpack.c.l.b16 %v8548
    %v9256 = vunpack.c.h.b16 %v8548
    %v9257 = vunpack.c.l.b16 %v8549
    %v9258 = vunpack.c.h.b16 %v8549
    %v9259 = vunpack.c.l.b16 %v8550
    %v9260 = vunpack.c.h.b16 %v8550
    %v9261 = vunpack.c.l.b16 %v8551
    %v9262 = vunpack.c.h.b16 %v8551
    %v9263 = vunpack.c.l.b16 %v8552
    %v9264 = vunpack.c.h.b16 %v8552
    %v9265 = vunpack.c.l.b16 %v8553
    %v9266 = vunpack.c.h.b16 %v8553
    %v9267 = vunpack.c.l.b16 %v8554
    %v9268 = vunpack.c.h.b16 %v8554
    %v9269 = vunpack.c.l.b16 %v8555
    %v9270 = vunpack.c.h.b16 %v8555
    %v9271 = vunpack.c.l.b16 %v8556
    %v9272 = vunpack.c.h.b16 %v8556
    %v9273 = vunpack.c.l.b16 %v8557
    %v9274 = vunpack.c.h.b16 %v8557
    %v9275 = vunpack.c.l.b16 %v8558
    %v9276 = vunpack.c.h.b16 %v8558
    %v9277 = vunpack.c.l.b16 %v8559
    %v9278 = vunpack.c.h.b16 %v8559
    %v9279 = vunpack.c.l.b16 %v8560
    %v9280 = vunpack.c.h.b16 %v8560
    %v9281 = vunpack.c.l.b16 %v8561
    %v9282 = vunpack.c.h.b16 %v8561
    %v9283 = vunpack.c.l.b16 %v8562
    %v9284 = vunpack.c.h.b16 %v8562
    %v9285 = vunpack.c.l.b16 %v8563
    %v9286 = vunpack.c.h.b16 %v8563
    %v9287 = vunpack.c.l.b16 %v8564
    %v9288 = vunpack.c.h.b16 %v8564
    %v9289 = vunpack.c.l.b16 %v8565
    %v9290 = vunpack.c.h.b16 %v8565
    %v9291 = vunpack.c.l.b16 %v8566
    %v9292 = vunpack.c.h.b16 %v8566
    %v9293 = vunpack.c.l.b16 %v8567
    %v9294 = vunpack.c.h.b16 %v8567
    %v9295 = vunpack.c.l.b16 %v8568
    %v9296 = vunpack.c.h.b16 %v8568
    %v9297 = vunpack.c.l.b16 %v8569
    %v9298 = vunpack.c.h.b16 %v8569
    %v9299 = vunpack.c.l.b16 %v8570
    %v9300 = vunpack.c.h.b16 %v8570
    %v9301 = vunpack.c.l.b16 %v8571
    %v9302 = vunpack.c.h.b16 %v8571
    %v9303 = vunpack.c.l.b16 %v8572
    %v9304 = vunpack.c.h.b16 %v8572
    %v9305 = vunpack.c.l.b16 %v8573
    %v9306 = vunpack.c.h.b16 %v8573
    %v9307 = vunpack.c.l.b16 %v8574
    %v9308 = vunpack.c.h.b16 %v8574
    %v9309 = vunpack.c.l.b16 %v8575
    %v9310 = vunpack.c.h.b16 %v8575
    %v9311 = vunpack.c.l.b16 %v8576
    %v9312 = vunpack.c.h.b16 %v8576
    %v9313 = vunpack.c.l.b16 %v8577
    %v9314 = vunpack.c.h.b16 %v8577
    %v9315 = vunpack.c.l.b16 %v8578
    %v9316 = vunpack.c.h.b16 %v8578
    %v9317 = vunpack.c.l.b16 %v8579
    %v9318 = vunpack.c.h.b16 %v8579
    %v9319 = vunpack.c.l.b16 %v8580
    %v9320 = vunpack.c.h.b16 %v8580
    %v9321 = vunpack.c.l.b16 %v8581
    %v9322 = vunpack.c.h.b16 %v8581
    %v9323 = vunpack.c.l.b16 %v8582
    %v9324 = vunpack.c.h.b16 %v8582
    %v9325 = vunpack.c.l.b16 %v8583
    %v9326 = vunpack.c.h.b16 %v8583
    %v9327 = vunpack.c.l.b16 %v8584
    %v9328 = vunpack.c.h.b16 %v8584
    %v9329 = vunpack.c.l.b16 %v8585
    %v9330 = vunpack.c.h.b16 %v8585
    %v9331 = vunpack.c.l.b16 %v8586
    %v9332 = vunpack.c.h.b16 %v8586
    %v9333 = vunpack.c.l.b16 %v8587
    %v9334 = vunpack.c.h.b16 %v8587
    %v9335 = vunpack.c.l.b16 %v8588
    %v9336 = vunpack.c.h.b16 %v8588
    %v9337 = vunpack.c.l.b16 %v8589
    %v9338 = vunpack.c.h.b16 %v8589
    %v9339 = vunpack.c.l.b16 %v8590
    %v9340 = vunpack.c.h.b16 %v8590
    %v9341 = vunpack.c.l.b16 %v8591
    %v9342 = vunpack.c.h.b16 %v8591
    %v9343 = vunpack.c.l.b16 %v8592
    %v9344 = vunpack.c.h.b16 %v8592
    %v9345 = vunpack.c.l.b16 %v8593
    %v9346 = vunpack.c.h.b16 %v8593
    %v9347 = vunpack.c.l.b16 %v8594
    %v9348 = vunpack.c.h.b16 %v8594
    %v9349 = vunpack.c.l.b16 %v8595
    %v9350 = vunpack.c.h.b16 %v8595
    %v9351 = vunpack.c.l.b16 %v8596
    %v9352 = vunpack.c.h.b16 %v8596
    %v9353 = vunpack.c.l.b16 %v8597
    %v9354 = vunpack.c.h.b16 %v8597
    %v9355 = vunpack.c.l.b16 %v8598
    %v9356 = vunpack.c.h.b16 %v8598
    %v9357 = vunpack.c.l.b16 %v8599
    %v9358 = vunpack.c.h.b16 %v8599
    %v9359 = vunpack.c.l.b16 %v8600
    %v9360 = vunpack.c.h.b16 %v8600
    %v9361 = vunpack.c.l.b16 %v8601
    %v9362 = vunpack.c.h.b16 %v8601
    %v9363 = vunpack.c.l.b16 %v8602
    %v9364 = vunpack.c.h.b16 %v8602
    %v9365 = vunpack.c.l.b16 %v8603
    %v9366 = vunpack.c.h.b16 %v8603
    %v9367 = vunpack.c.l.b16 %v8604
    %v9368 = vunpack.c.h.b16 %v8604
    %v9369 = vunpack.c.l.b16 %v8605
    %v9370 = vunpack.c.h.b16 %v8605
    %v9371 = vunpack.c.l.b16 %v8606
    %v9372 = vunpack.c.h.b16 %v8606
    %v9373 = vunpack.c.l.b16 %v8607
    %v9374 = vunpack.c.h.b16 %v8607
    %v9375 = vunpack.c.l.b16 %v8608
    %v9376 = vunpack.c.h.b16 %v8608
    %v9377 = vunpack.c.l.b16 %v8609
    %v9378 = vunpack.c.h.b16 %v8609
    %v9379 = vunpack.c.l.b16 %v8610
    %v9380 = vunpack.c.h.b16 %v8610
    %v9381 = vunpack.c.l.b16 %v8611
    %v9382 = vunpack.c.h.b16 %v8611
    %v9383 = vunpack.c.l.b16 %v8612
    %v9384 = vunpack.c.h.b16 %v8612
    %v9385 = vunpack.c.l.b16 %v8613
    %v9386 = vunpack.c.h.b16 %v8613
    %v9387 = vunpack.c.l.b16 %v8614
    %v9388 = vunpack.c.h.b16 %v8614
    %v9389 = vunpack.c.l.b16 %v8615
    %v9390 = vunpack.c.h.b16 %v8615
    %v9391 = vunpack.c.l.b16 %v8616
    %v9392 = vunpack.c.h.b16 %v8616
    %v9393 = vunpack.c.l.b16 %v8617
    %v9394 = vunpack.c.h.b16 %v8617
    %v9395 = vunpack.c.l.b16 %v8618
    %v9396 = vunpack.c.h.b16 %v8618
    %v9397 = vpack.c.b16 %v8889, %v8885
    %v9398 = vpack.c.b16 %v8890, %v8886
    %v9399 = vpack.c.b16 %v8891, %v8887
    %v9400 = vpack.c.b16 %v8892, %v8888
    %v9401 = vpack.c.b16 %v8897, %v8893
    %v9402 = vpack.c.b16 %v8898, %v8894
    %v9403 = vpack.c.b16 %v8899, %v8895
    %v9404 = vpack.c.b16 %v8900, %v8896
    %v9405 = vpack.c.b16 %v8905, %v8901
    %v9406 = vpack.c.b16 %v8906, %v8902
    %v9407 = vpack.c.b16 %v8907, %v8903
    %v9408 = vpack.c.b16 %v8908, %v8904
    %v9409 = vpack.c.b16 %v8913, %v8909
    %v9410 = vpack.c.b16 %v8914, %v8910
    %v9411 = vpack.c.b16 %v8915, %v8911
    %v9412 = vpack.c.b16 %v8916, %v8912
    %v9413 = vpack.c.b16 %v8921, %v8917
    %v9414 = vpack.c.b16 %v8922, %v8918
    %v9415 = vpack.c.b16 %v8923, %v8919
    %v9416 = vpack.c.b16 %v8924, %v8920
    %v9417 = vpack.c.b16 %v8929, %v8925
    %v9418 = vpack.c.b16 %v8930, %v8926
    %v9419 = vpack.c.b16 %v8931, %v8927
    %v9420 = vpack.c.b16 %v8932, %v8928
    %v9421 = vpack.c.b16 %v8937, %v8933
    %v9422 = vpack.c.b16 %v8938, %v8934
    %v9423 = vpack.c.b16 %v8939, %v8935
    %v9424 = vpack.c.b16 %v8940, %v8936
    %v9425 = vpack.c.b16 %v8945, %v8941
    %v9426 = vpack.c.b16 %v8946, %v8942
    %v9427 = vpack.c.b16 %v8947, %v8943
    %v9428 = vpack.c.b16 %v8948, %v8944
    %v9429 = vpack.c.b16 %v8953, %v8949
    %v9430 = vpack.c.b16 %v8954, %v8950
    %v9431 = vpack.c.b16 %v8955, %v8951
    %v9432 = vpack.c.b16 %v8956, %v8952
    %v9433 = vpack.c.b16 %v8961, %v8957
    %v9434 = vpack.c.b16 %v8962, %v8958
    %v9435 = vpack.c.b16 %v8963, %v8959
    %v9436 = vpack.c.b16 %v8964, %v8960
    %v9437 = vpack.c.b16 %v8969, %v8965
    %v9438 = vpack.c.b16 %v8970, %v8966
    %v9439 = vpack.c.b16 %v8971, %v8967
    %v9440 = vpack.c.b16 %v8972, %v8968
    %v9441 = vpack.c.b16 %v8977, %v8973
    %v9442 = vpack.c.b16 %v8978, %v8974
    %v9443 = vpack.c.b16 %v8979, %v8975
    %v9444 = vpack.c.b16 %v8980, %v8976
    %v9445 = vpack.c.b16 %v8985, %v8981
    %v9446 = vpack.c.b16 %v8986, %v8982
    %v9447 = vpack.c.b16 %v8987, %v8983
    %v9448 = vpack.c.b16 %v8988, %v8984
    %v9449 = vpack.c.b16 %v8993, %v8989
    %v9450 = vpack.c.b16 %v8994, %v8990
    %v9451 = vpack.c.b16 %v8995, %v8991
    %v9452 = vpack.c.b16 %v8996, %v8992
    %v9453 = vpack.c.b16 %v9001, %v8997
    %v9454 = vpack.c.b16 %v9002, %v8998
    %v9455 = vpack.c.b16 %v9003, %v8999
    %v9456 = vpack.c.b16 %v9004, %v9000
    %v9457 = vpack.c.b16 %v9009, %v9005
    %v9458 = vpack.c.b16 %v9010, %v9006
    %v9459 = vpack.c.b16 %v9011, %v9007
    %v9460 = vpack.c.b16 %v9012, %v9008
    %v9461 = vpack.c.b16 %v9017, %v9013
    %v9462 = vpack.c.b16 %v9018, %v9014
    %v9463 = vpack.c.b16 %v9019, %v9015
    %v9464 = vpack.c.b16 %v9020, %v9016
    %v9465 = vpack.c.b16 %v9025, %v9021
    %v9466 = vpack.c.b16 %v9026, %v9022
    %v9467 = vpack.c.b16 %v9027, %v9023
    %v9468 = vpack.c.b16 %v9028, %v9024
    %v9469 = vpack.c.b16 %v9033, %v9029
    %v9470 = vpack.c.b16 %v9034, %v9030
    %v9471 = vpack.c.b16 %v9035, %v9031
    %v9472 = vpack.c.b16 %v9036, %v9032
    %v9473 = vpack.c.b16 %v9041, %v9037
    %v9474 = vpack.c.b16 %v9042, %v9038
    %v9475 = vpack.c.b16 %v9043, %v9039
    %v9476 = vpack.c.b16 %v9044, %v9040
    %v9477 = vpack.c.b16 %v9049, %v9045
    %v9478 = vpack.c.b16 %v9050, %v9046
    %v9479 = vpack.c.b16 %v9051, %v9047
    %v9480 = vpack.c.b16 %v9052, %v9048
    %v9481 = vpack.c.b16 %v9057, %v9053
    %v9482 = vpack.c.b16 %v9058, %v9054
    %v9483 = vpack.c.b16 %v9059, %v9055
    %v9484 = vpack.c.b16 %v9060, %v9056
    %v9485 = vpack.c.b16 %v9065, %v9061
    %v9486 = vpack.c.b16 %v9066, %v9062
    %v9487 = vpack.c.b16 %v9067, %v9063
    %v9488 = vpack.c.b16 %v9068, %v9064
    %v9489 = vpack.c.b16 %v9073, %v9069
    %v9490 = vpack.c.b16 %v9074, %v9070
    %v9491 = vpack.c.b16 %v9075, %v9071
    %v9492 = vpack.c.b16 %v9076, %v9072
    %v9493 = vpack.c.b16 %v9081, %v9077
    %v9494 = vpack.c.b16 %v9082, %v9078
    %v9495 = vpack.c.b16 %v9083, %v9079
    %v9496 = vpack.c.b16 %v9084, %v9080
    %v9497 = vpack.c.b16 %v9089, %v9085
    %v9498 = vpack.c.b16 %v9090, %v9086
    %v9499 = vpack.c.b16 %v9091, %v9087
    %v9500 = vpack.c.b16 %v9092, %v9088
    %v9501 = vpack.c.b16 %v9097, %v9093
    %v9502 = vpack.c.b16 %v9098, %v9094
    %v9503 = vpack.c.b16 %v9099, %v9095
    %v9504 = vpack.c.b16 %v9100, %v9096
    %v9505 = vpack.c.b16 %v9105, %v9101
    %v9506 = vpack.c.b16 %v9106, %v9102
    %v9507 = vpack.c.b16 %v9107, %v9103
    %v9508 = vpack.c.b16 %v9108, %v9104
    %v9509 = vpack.c.b16 %v9113, %v9109
    %v9510 = vpack.c.b16 %v9114, %v9110
    %v9511 = vpack.c.b16 %v9115, %v9111
    %v9512 = vpack.c.b16 %v9116, %v9112
    %v9513 = vpack.c.b16 %v9121, %v9117
    %v9514 = vpack.c.b16 %v9122, %v9118
    %v9515 = vpack.c.b16 %v9123, %v9119
    %v9516 = vpack.c.b16 %v9124, %v9120
    %v9517 = vpack.c.b16 %v9129, %v9125
    %v9518 = vpack.c.b16 %v9130, %v9126
    %v9519 = vpack.c.b16 %v9131, %v9127
    %v9520 = vpack.c.b16 %v9132, %v9128
    %v9521 = vpack.c.b16 %v9137, %v9133
    %v9522 = vpack.c.b16 %v9138, %v9134
    %v9523 = vpack.c.b16 %v9139, %v9135
    %v9524 = vpack.c.b16 %v9140, %v9136
    %v9525 = vpack.c.b16 %v9145, %v9141
    %v9526 = vpack.c.b16 %v9146, %v9142
    %v9527 = vpack.c.b16 %v9147, %v9143
    %v9528 = vpack.c.b16 %v9148, %v9144
    %v9529 = vpack.c.b16 %v9153, %v9149
    %v9530 = vpack.c.b16 %v9154, %v9150
    %v9531 = vpack.c.b16 %v9155, %v9151
    %v9532 = vpack.c.b16 %v9156, %v9152
    %v9533 = vpack.c.b16 %v9161, %v9157
    %v9534 = vpack.c.b16 %v9162, %v9158
    %v9535 = vpack.c.b16 %v9163, %v9159
    %v9536 = vpack.c.b16 %v9164, %v9160
    %v9537 = vpack.c.b16 %v9169, %v9165
    %v9538 = vpack.c.b16 %v9170, %v9166
    %v9539 = vpack.c.b16 %v9171, %v9167
    %v9540 = vpack.c.b16 %v9172, %v9168
    %v9541 = vpack.c.b16 %v9177, %v9173
    %v9542 = vpack.c.b16 %v9178, %v9174
    %v9543 = vpack.c.b16 %v9179, %v9175
    %v9544 = vpack.c.b16 %v9180, %v9176
    %v9545 = vpack.c.b16 %v9185, %v9181
    %v9546 = vpack.c.b16 %v9186, %v9182
    %v9547 = vpack.c.b16 %v9187, %v9183
    %v9548 = vpack.c.b16 %v9188, %v9184
    %v9549 = vpack.c.b16 %v9193, %v9189
    %v9550 = vpack.c.b16 %v9194, %v9190
    %v9551 = vpack.c.b16 %v9195, %v9191
    %v9552 = vpack.c.b16 %v9196, %v9192
    %v9553 = vpack.c.b16 %v9201, %v9197
    %v9554 = vpack.c.b16 %v9202, %v9198
    %v9555 = vpack.c.b16 %v9203, %v9199
    %v9556 = vpack.c.b16 %v9204, %v9200
    %v9557 = vpack.c.b16 %v9209, %v9205
    %v9558 = vpack.c.b16 %v9210, %v9206
    %v9559 = vpack.c.b16 %v9211, %v9207
    %v9560 = vpack.c.b16 %v9212, %v9208
    %v9561 = vpack.c.b16 %v9217, %v9213
    %v9562 = vpack.c.b16 %v9218, %v9214
    %v9563 = vpack.c.b16 %v9219, %v9215
    %v9564 = vpack.c.b16 %v9220, %v9216
    %v9565 = vpack.c.b16 %v9225, %v9221
    %v9566 = vpack.c.b16 %v9226, %v9222
    %v9567 = vpack.c.b16 %v9227, %v9223
    %v9568 = vpack.c.b16 %v9228, %v9224
    %v9569 = vpack.c.b16 %v9233, %v9229
    %v9570 = vpack.c.b16 %v9234, %v9230
    %v9571 = vpack.c.b16 %v9235, %v9231
    %v9572 = vpack.c.b16 %v9236, %v9232
    %v9573 = vpack.c.b16 %v9241, %v9237
    %v9574 = vpack.c.b16 %v9242, %v9238
    %v9575 = vpack.c.b16 %v9243, %v9239
    %v9576 = vpack.c.b16 %v9244, %v9240
    %v9577 = vpack.c.b16 %v9249, %v9245
    %v9578 = vpack.c.b16 %v9250, %v9246
    %v9579 = vpack.c.b16 %v9251, %v9247
    %v9580 = vpack.c.b16 %v9252, %v9248
    %v9581 = vpack.c.b16 %v9257, %v9253
    %v9582 = vpack.c.b16 %v9258, %v9254
    %v9583 = vpack.c.b16 %v9259, %v9255
    %v9584 = vpack.c.b16 %v9260, %v9256
    %v9585 = vpack.c.b16 %v9265, %v9261
    %v9586 = vpack.c.b16 %v9266, %v9262
    %v9587 = vpack.c.b16 %v9267, %v9263
    %v9588 = vpack.c.b16 %v9268, %v9264
    %v9589 = vpack.c.b16 %v9273, %v9269
    %v9590 = vpack.c.b16 %v9274, %v9270
    %v9591 = vpack.c.b16 %v9275, %v9271
    %v9592 = vpack.c.b16 %v9276, %v9272
    %v9593 = vpack.c.b16 %v9281, %v9277
    %v9594 = vpack.c.b16 %v9282, %v9278
    %v9595 = vpack.c.b16 %v9283, %v9279
    %v9596 = vpack.c.b16 %v9284, %v9280
    %v9597 = vpack.c.b16 %v9289, %v9285
    %v9598 = vpack.c.b16 %v9290, %v9286
    %v9599 = vpack.c.b16 %v9291, %v9287
    %v9600 = vpack.c.b16 %v9292, %v9288
    %v9601 = vpack.c.b16 %v9297, %v9293
    %v9602 = vpack.c.b16 %v9298, %v9294
    %v9603 = vpack.c.b16 %v9299, %v9295
    %v9604 = vpack.c.b16 %v9300, %v9296
    %v9605 = vpack.c.b16 %v9305, %v9301
    %v9606 = vpack.c.b16 %v9306, %v9302
    %v9607 = vpack.c.b16 %v9307, %v9303
    %v9608 = vpack.c.b16 %v9308, %v9304
    %v9609 = vpack.c.b16 %v9313, %v9309
    %v9610 = vpack.c.b16 %v9314, %v9310
    %v9611 = vpack.c.b16 %v9315, %v9311
    %v9612 = vpack.c.b16 %v9316, %v9312
    %v9613 = vpack.c.b16 %v9321, %v9317
    %v9614 = vpack.c.b16 %v9322, %v9318
    %v9615 = vpack.c.b16 %v9323, %v9319
    %v9616 = vpack.c.b16 %v9324, %v9320
    %v9617 = vpack.c.b16 %v9329, %v9325
    %v9618 = vpack.c.b16 %v9330, %v9326
    %v9619 = vpack.c.b16 %v9331, %v9327
    %v9620 = vpack.c.b16 %v9332, %v9328
    %v9621 = vpack.c.b16 %v9337, %v9333
    %v9622 = vpack.c.b16 %v9338, %v9334
    %v9623 = vpack.c.b16 %v9339, %v9335
    %v9624 = vpack.c.b16 %v9340, %v9336
    %v9625 = vpack.c.b16 %v9345, %v9341
    %v9626 = vpack.c.b16 %v9346, %v9342
    %v9627 = vpack.c.b16 %v9347, %v9343
    %v9628 = vpack.c.b16 %v9348, %v9344
    %v9629 = vpack.c.b16 %v9353, %v9349
    %v9630 = vpack.c.b16 %v9354, %v9350
    %v9631 = vpack.c.b16 %v9355, %v9351
    %v9632 = vpack.c.b16 %v9356, %v9352
    %v9633 = vpack.c.b16 %v9361, %v9357
    %v9634 = vpack.c.b16 %v9362, %v9358
    %v9635 = vpack.c.b16 %v9363, %v9359
    %v9636 = vpack.c.b16 %v9364, %v9360
    %v9637 = vpack.c.b16 %v9369, %v9365
    %v9638 = vpack.c.b16 %v9370, %v9366
    %v9639 = vpack.c.b16 %v9371, %v9367
    %v9640 = vpack.c.b16 %v9372, %v9368
    %v9641 = vpack.c.b16 %v9377, %v9373
    %v9642 = vpack.c.b16 %v9378, %v9374
    %v9643 = vpack.c.b16 %v9379, %v9375
    %v9644 = vpack.c.b16 %v9380, %v9376
    %v9645 = vpack.c.b16 %v9385, %v9381
    %v9646 = vpack.c.b16 %v9386, %v9382
    %v9647 = vpack.c.b16 %v9387, %v9383
    %v9648 = vpack.c.b16 %v9388, %v9384
    %v9649 = vpack.c.b16 %v9393, %v9389
    %v9650 = vpack.c.b16 %v9394, %v9390
    %v9651 = vpack.c.b16 %v9395, %v9391
    %v9652 = vpack.c.b16 %v9396, %v9392
    %9909 = vmatpush.bf16.msra.mxu0 %v9425
    %9910 = vmatpush.bf16.msra.mxu0 %v9421
    %9911 = vmatpush.bf16.msra.mxu0 %v9417
    %9912 = vmatpush.bf16.msra.mxu0 %v9413
    %9913 = vmatpush.bf16.msra.mxu0 %v9409
    %9914 = vmatpush.bf16.msra.mxu0 %v9405
    %9915 = vmatpush.bf16.msra.mxu0 %v9401
    %9916 = vmatpush.bf16.msra.mxu0 %v9397
    %9917 = vmatmul.bf16.gmra.mxu0 %v8299
    %v9918 = vpop.f32.mrf.mxu0
    %v9919 = vadd.f32 %v8621, %v9918
    %v9920 = vpop.f32.mrf.mxu0
    %v9921 = vadd.f32 %v8621, %v9920
    %9922 = vmatmul.bf16.gmra.mxu0 %v8307
    %v9923 = vpop.f32.mrf.mxu0
    %v9924 = vadd.f32 %v8621, %v9923
    %v9925 = vpop.f32.mrf.mxu0
    %v9926 = vadd.f32 %v8621, %v9925
    %9927 = vmatmul.bf16.gmra.mxu0 %v8315
    %v9928 = vpop.f32.mrf.mxu0
    %v9929 = vadd.f32 %v8621, %v9928
    %v9930 = vpop.f32.mrf.mxu0
    %v9931 = vadd.f32 %v8621, %v9930
    %9932 = vmatmul.bf16.gmra.mxu0 %v8323
    %v9933 = vpop.f32.mrf.mxu0
    %v9934 = vadd.f32 %v8621, %v9933
    %v9935 = vpop.f32.mrf.mxu0
    %v9936 = vadd.f32 %v8621, %v9935
    %9937 = vmatmul.bf16.gmra.mxu0 %v8331
    %v9938 = vpop.f32.mrf.mxu0
    %v9939 = vadd.f32 %v8621, %v9938
    %v9940 = vpop.f32.mrf.mxu0
    %v9941 = vadd.f32 %v8621, %v9940
    %9942 = vmatmul.bf16.gmra.mxu0 %v8339
    %v9943 = vpop.f32.mrf.mxu0
    %v9944 = vadd.f32 %v8621, %v9943
    %v9945 = vpop.f32.mrf.mxu0
    %v9946 = vadd.f32 %v8621, %v9945
    %9947 = vmatmul.bf16.gmra.mxu0 %v8347
    %v9948 = vpop.f32.mrf.mxu0
    %v9949 = vadd.f32 %v8621, %v9948
    %v9950 = vpop.f32.mrf.mxu0
    %v9951 = vadd.f32 %v8621, %v9950
    %9952 = vmatmul.bf16.gmra.mxu0 %v8355
    %v9953 = vpop.f32.mrf.mxu0
    %v9954 = vadd.f32 %v8621, %v9953
    %v9955 = vpop.f32.mrf.mxu0
    %v9956 = vadd.f32 %v8621, %v9955
    %9957 = vdwg.mxu0
    %9958 = vmatpush.bf16.msra.mxu0 %v9457
    %9959 = vmatpush.bf16.msra.mxu0 %v9453
    %9960 = vmatpush.bf16.msra.mxu0 %v9449
    %9961 = vmatpush.bf16.msra.mxu0 %v9445
    %9962 = vmatpush.bf16.msra.mxu0 %v9441
    %9963 = vmatpush.bf16.msra.mxu0 %v9437
    %9964 = vmatpush.bf16.msra.mxu0 %v9433
    %9965 = vmatpush.bf16.msra.mxu0 %v9429
    %9966 = vmatmul.bf16.gmra.mxu0 %v8300
    %v9967 = vpop.f32.mrf.mxu0
    %v9968 = vadd.f32 %v9919, %v9967
    %v9969 = vpop.f32.mrf.mxu0
    %v9970 = vadd.f32 %v9921, %v9969
    %9971 = vmatmul.bf16.gmra.mxu0 %v8308
    %v9972 = vpop.f32.mrf.mxu0
    %v9973 = vadd.f32 %v9924, %v9972
    %v9974 = vpop.f32.mrf.mxu0
    %v9975 = vadd.f32 %v9926, %v9974
    %9976 = vmatmul.bf16.gmra.mxu0 %v8316
    %v9977 = vpop.f32.mrf.mxu0
    %v9978 = vadd.f32 %v9929, %v9977
    %v9979 = vpop.f32.mrf.mxu0
    %v9980 = vadd.f32 %v9931, %v9979
    %9981 = vmatmul.bf16.gmra.mxu0 %v8324
    %v9982 = vpop.f32.mrf.mxu0
    %v9983 = vadd.f32 %v9934, %v9982
    %v9984 = vpop.f32.mrf.mxu0
    %v9985 = vadd.f32 %v9936, %v9984
    %9986 = vmatmul.bf16.gmra.mxu0 %v8332
    %v9987 = vpop.f32.mrf.mxu0
    %v9988 = vadd.f32 %v9939, %v9987
    %v9989 = vpop.f32.mrf.mxu0
    %v9990 = vadd.f32 %v9941, %v9989
    %9991 = vmatmul.bf16.gmra.mxu0 %v8340
    %v9992 = vpop.f32.mrf.mxu0
    %v9993 = vadd.f32 %v9944, %v9992
    %v9994 = vpop.f32.mrf.mxu0
    %v9995 = vadd.f32 %v9946, %v9994
    %9996 = vmatmul.bf16.gmra.mxu0 %v8348
    %v9997 = vpop.f32.mrf.mxu0
    %v9998 = vadd.f32 %v9949, %v9997
    %v9999 = vpop.f32.mrf.mxu0
    %v10000 = vadd.f32 %v9951, %v9999
    %10001 = vmatmul.bf16.gmra.mxu0 %v8356
    %v10002 = vpop.f32.mrf.mxu0
    %v10003 = vadd.f32 %v9954, %v10002
    %v10004 = vpop.f32.mrf.mxu0
    %v10005 = vadd.f32 %v9956, %v10004
    %10006 = vdwg.mxu0
    %10007 = vmatpush.bf16.msra.mxu0 %v9489
    %10008 = vmatpush.bf16.msra.mxu0 %v9485
    %10009 = vmatpush.bf16.msra.mxu0 %v9481
    %10010 = vmatpush.bf16.msra.mxu0 %v9477
    %10011 = vmatpush.bf16.msra.mxu0 %v9473
    %10012 = vmatpush.bf16.msra.mxu0 %v9469
    %10013 = vmatpush.bf16.msra.mxu0 %v9465
    %10014 = vmatpush.bf16.msra.mxu0 %v9461
    %10015 = vmatmul.bf16.gmra.mxu0 %v8301
    %v10016 = vpop.f32.mrf.mxu0
    %v10017 = vadd.f32 %v9968, %v10016
    %v10018 = vpop.f32.mrf.mxu0
    %v10019 = vadd.f32 %v9970, %v10018
    %10020 = vmatmul.bf16.gmra.mxu0 %v8309
    %v10021 = vpop.f32.mrf.mxu0
    %v10022 = vadd.f32 %v9973, %v10021
    %v10023 = vpop.f32.mrf.mxu0
    %v10024 = vadd.f32 %v9975, %v10023
    %10025 = vmatmul.bf16.gmra.mxu0 %v8317
    %v10026 = vpop.f32.mrf.mxu0
    %v10027 = vadd.f32 %v9978, %v10026
    %v10028 = vpop.f32.mrf.mxu0
    %v10029 = vadd.f32 %v9980, %v10028
    %10030 = vmatmul.bf16.gmra.mxu0 %v8325
    %v10031 = vpop.f32.mrf.mxu0
    %v10032 = vadd.f32 %v9983, %v10031
    %v10033 = vpop.f32.mrf.mxu0
    %v10034 = vadd.f32 %v9985, %v10033
    %10035 = vmatmul.bf16.gmra.mxu0 %v8333
    %v10036 = vpop.f32.mrf.mxu0
    %v10037 = vadd.f32 %v9988, %v10036
    %v10038 = vpop.f32.mrf.mxu0
    %v10039 = vadd.f32 %v9990, %v10038
    %10040 = vmatmul.bf16.gmra.mxu0 %v8341
    %v10041 = vpop.f32.mrf.mxu0
    %v10042 = vadd.f32 %v9993, %v10041
    %v10043 = vpop.f32.mrf.mxu0
    %v10044 = vadd.f32 %v9995, %v10043
    %10045 = vmatmul.bf16.gmra.mxu0 %v8349
    %v10046 = vpop.f32.mrf.mxu0
    %v10047 = vadd.f32 %v9998, %v10046
    %v10048 = vpop.f32.mrf.mxu0
    %v10049 = vadd.f32 %v10000, %v10048
    %10050 = vmatmul.bf16.gmra.mxu0 %v8357
    %v10051 = vpop.f32.mrf.mxu0
    %v10052 = vadd.f32 %v10003, %v10051
    %v10053 = vpop.f32.mrf.mxu0
    %v10054 = vadd.f32 %v10005, %v10053
    %10055 = vdwg.mxu0
    %10056 = vmatpush.bf16.msra.mxu0 %v9521
    %10057 = vmatpush.bf16.msra.mxu0 %v9517
    %10058 = vmatpush.bf16.msra.mxu0 %v9513
    %10059 = vmatpush.bf16.msra.mxu0 %v9509
    %10060 = vmatpush.bf16.msra.mxu0 %v9505
    %10061 = vmatpush.bf16.msra.mxu0 %v9501
    %10062 = vmatpush.bf16.msra.mxu0 %v9497
    %10063 = vmatpush.bf16.msra.mxu0 %v9493
    %10064 = vmatmul.bf16.gmra.mxu0 %v8302
    %v10065 = vpop.f32.mrf.mxu0
    %v10066 = vadd.f32 %v10017, %v10065
    %v10067 = vpop.f32.mrf.mxu0
    %v10068 = vadd.f32 %v10019, %v10067
    %10069 = vmatmul.bf16.gmra.mxu0 %v8310
    %v10070 = vpop.f32.mrf.mxu0
    %v10071 = vadd.f32 %v10022, %v10070
    %v10072 = vpop.f32.mrf.mxu0
    %v10073 = vadd.f32 %v10024, %v10072
    %10074 = vmatmul.bf16.gmra.mxu0 %v8318
    %v10075 = vpop.f32.mrf.mxu0
    %v10076 = vadd.f32 %v10027, %v10075
    %v10077 = vpop.f32.mrf.mxu0
    %v10078 = vadd.f32 %v10029, %v10077
    %10079 = vmatmul.bf16.gmra.mxu0 %v8326
    %v10080 = vpop.f32.mrf.mxu0
    %v10081 = vadd.f32 %v10032, %v10080
    %v10082 = vpop.f32.mrf.mxu0
    %v10083 = vadd.f32 %v10034, %v10082
    %10084 = vmatmul.bf16.gmra.mxu0 %v8334
    %v10085 = vpop.f32.mrf.mxu0
    %v10086 = vadd.f32 %v10037, %v10085
    %v10087 = vpop.f32.mrf.mxu0
    %v10088 = vadd.f32 %v10039, %v10087
    %10089 = vmatmul.bf16.gmra.mxu0 %v8342
    %v10090 = vpop.f32.mrf.mxu0
    %v10091 = vadd.f32 %v10042, %v10090
    %v10092 = vpop.f32.mrf.mxu0
    %v10093 = vadd.f32 %v10044, %v10092
    %10094 = vmatmul.bf16.gmra.mxu0 %v8350
    %v10095 = vpop.f32.mrf.mxu0
    %v10096 = vadd.f32 %v10047, %v10095
    %v10097 = vpop.f32.mrf.mxu0
    %v10098 = vadd.f32 %v10049, %v10097
    %10099 = vmatmul.bf16.gmra.mxu0 %v8358
    %v10100 = vpop.f32.mrf.mxu0
    %v10101 = vadd.f32 %v10052, %v10100
    %v10102 = vpop.f32.mrf.mxu0
    %v10103 = vadd.f32 %v10054, %v10102
    %10104 = vdwg.mxu0
    %10105 = vmatpush.bf16.msra.mxu0 %v9553
    %10106 = vmatpush.bf16.msra.mxu0 %v9549
    %10107 = vmatpush.bf16.msra.mxu0 %v9545
    %10108 = vmatpush.bf16.msra.mxu0 %v9541
    %10109 = vmatpush.bf16.msra.mxu0 %v9537
    %10110 = vmatpush.bf16.msra.mxu0 %v9533
    %10111 = vmatpush.bf16.msra.mxu0 %v9529
    %10112 = vmatpush.bf16.msra.mxu0 %v9525
    %10113 = vmatmul.bf16.gmra.mxu0 %v8303
    %v10114 = vpop.f32.mrf.mxu0
    %v10115 = vadd.f32 %v10066, %v10114
    %v10116 = vpop.f32.mrf.mxu0
    %v10117 = vadd.f32 %v10068, %v10116
    %10118 = vmatmul.bf16.gmra.mxu0 %v8311
    %v10119 = vpop.f32.mrf.mxu0
    %v10120 = vadd.f32 %v10071, %v10119
    %v10121 = vpop.f32.mrf.mxu0
    %v10122 = vadd.f32 %v10073, %v10121
    %10123 = vmatmul.bf16.gmra.mxu0 %v8319
    %v10124 = vpop.f32.mrf.mxu0
    %v10125 = vadd.f32 %v10076, %v10124
    %v10126 = vpop.f32.mrf.mxu0
    %v10127 = vadd.f32 %v10078, %v10126
    %10128 = vmatmul.bf16.gmra.mxu0 %v8327
    %v10129 = vpop.f32.mrf.mxu0
    %v10130 = vadd.f32 %v10081, %v10129
    %v10131 = vpop.f32.mrf.mxu0
    %v10132 = vadd.f32 %v10083, %v10131
    %10133 = vmatmul.bf16.gmra.mxu0 %v8335
    %v10134 = vpop.f32.mrf.mxu0
    %v10135 = vadd.f32 %v10086, %v10134
    %v10136 = vpop.f32.mrf.mxu0
    %v10137 = vadd.f32 %v10088, %v10136
    %10138 = vmatmul.bf16.gmra.mxu0 %v8343
    %v10139 = vpop.f32.mrf.mxu0
    %v10140 = vadd.f32 %v10091, %v10139
    %v10141 = vpop.f32.mrf.mxu0
    %v10142 = vadd.f32 %v10093, %v10141
    %10143 = vmatmul.bf16.gmra.mxu0 %v8351
    %v10144 = vpop.f32.mrf.mxu0
    %v10145 = vadd.f32 %v10096, %v10144
    %v10146 = vpop.f32.mrf.mxu0
    %v10147 = vadd.f32 %v10098, %v10146
    %10148 = vmatmul.bf16.gmra.mxu0 %v8359
    %v10149 = vpop.f32.mrf.mxu0
    %v10150 = vadd.f32 %v10101, %v10149
    %v10151 = vpop.f32.mrf.mxu0
    %v10152 = vadd.f32 %v10103, %v10151
    %10153 = vdwg.mxu0
    %10154 = vmatpush.bf16.msra.mxu0 %v9585
    %10155 = vmatpush.bf16.msra.mxu0 %v9581
    %10156 = vmatpush.bf16.msra.mxu0 %v9577
    %10157 = vmatpush.bf16.msra.mxu0 %v9573
    %10158 = vmatpush.bf16.msra.mxu0 %v9569
    %10159 = vmatpush.bf16.msra.mxu0 %v9565
    %10160 = vmatpush.bf16.msra.mxu0 %v9561
    %10161 = vmatpush.bf16.msra.mxu0 %v9557
    %10162 = vmatmul.bf16.gmra.mxu0 %v8304
    %v10163 = vpop.f32.mrf.mxu0
    %v10164 = vadd.f32 %v10115, %v10163
    %v10165 = vpop.f32.mrf.mxu0
    %v10166 = vadd.f32 %v10117, %v10165
    %10167 = vmatmul.bf16.gmra.mxu0 %v8312
    %v10168 = vpop.f32.mrf.mxu0
    %v10169 = vadd.f32 %v10120, %v10168
    %v10170 = vpop.f32.mrf.mxu0
    %v10171 = vadd.f32 %v10122, %v10170
    %10172 = vmatmul.bf16.gmra.mxu0 %v8320
    %v10173 = vpop.f32.mrf.mxu0
    %v10174 = vadd.f32 %v10125, %v10173
    %v10175 = vpop.f32.mrf.mxu0
    %v10176 = vadd.f32 %v10127, %v10175
    %10177 = vmatmul.bf16.gmra.mxu0 %v8328
    %v10178 = vpop.f32.mrf.mxu0
    %v10179 = vadd.f32 %v10130, %v10178
    %v10180 = vpop.f32.mrf.mxu0
    %v10181 = vadd.f32 %v10132, %v10180
    %10182 = vmatmul.bf16.gmra.mxu0 %v8336
    %v10183 = vpop.f32.mrf.mxu0
    %v10184 = vadd.f32 %v10135, %v10183
    %v10185 = vpop.f32.mrf.mxu0
    %v10186 = vadd.f32 %v10137, %v10185
    %10187 = vmatmul.bf16.gmra.mxu0 %v8344
    %v10188 = vpop.f32.mrf.mxu0
    %v10189 = vadd.f32 %v10140, %v10188
    %v10190 = vpop.f32.mrf.mxu0
    %v10191 = vadd.f32 %v10142, %v10190
    %10192 = vmatmul.bf16.gmra.mxu0 %v8352
    %v10193 = vpop.f32.mrf.mxu0
    %v10194 = vadd.f32 %v10145, %v10193
    %v10195 = vpop.f32.mrf.mxu0
    %v10196 = vadd.f32 %v10147, %v10195
    %10197 = vmatmul.bf16.gmra.mxu0 %v8360
    %v10198 = vpop.f32.mrf.mxu0
    %v10199 = vadd.f32 %v10150, %v10198
    %v10200 = vpop.f32.mrf.mxu0
    %v10201 = vadd.f32 %v10152, %v10200
    %10202 = vdwg.mxu0
    %10203 = vmatpush.bf16.msra.mxu0 %v9617
    %10204 = vmatpush.bf16.msra.mxu0 %v9613
    %10205 = vmatpush.bf16.msra.mxu0 %v9609
    %10206 = vmatpush.bf16.msra.mxu0 %v9605
    %10207 = vmatpush.bf16.msra.mxu0 %v9601
    %10208 = vmatpush.bf16.msra.mxu0 %v9597
    %10209 = vmatpush.bf16.msra.mxu0 %v9593
    %10210 = vmatpush.bf16.msra.mxu0 %v9589
    %10211 = vmatmul.bf16.gmra.mxu0 %v8305
    %v10212 = vpop.f32.mrf.mxu0
    %v10213 = vadd.f32 %v10164, %v10212
    %v10214 = vpop.f32.mrf.mxu0
    %v10215 = vadd.f32 %v10166, %v10214
    %10216 = vmatmul.bf16.gmra.mxu0 %v8313
    %v10217 = vpop.f32.mrf.mxu0
    %v10218 = vadd.f32 %v10169, %v10217
    %v10219 = vpop.f32.mrf.mxu0
    %v10220 = vadd.f32 %v10171, %v10219
    %10221 = vmatmul.bf16.gmra.mxu0 %v8321
    %v10222 = vpop.f32.mrf.mxu0
    %v10223 = vadd.f32 %v10174, %v10222
    %v10224 = vpop.f32.mrf.mxu0
    %v10225 = vadd.f32 %v10176, %v10224
    %10226 = vmatmul.bf16.gmra.mxu0 %v8329
    %v10227 = vpop.f32.mrf.mxu0
    %v10228 = vadd.f32 %v10179, %v10227
    %v10229 = vpop.f32.mrf.mxu0
    %v10230 = vadd.f32 %v10181, %v10229
    %10231 = vmatmul.bf16.gmra.mxu0 %v8337
    %v10232 = vpop.f32.mrf.mxu0
    %v10233 = vadd.f32 %v10184, %v10232
    %v10234 = vpop.f32.mrf.mxu0
    %v10235 = vadd.f32 %v10186, %v10234
    %10236 = vmatmul.bf16.gmra.mxu0 %v8345
    %v10237 = vpop.f32.mrf.mxu0
    %v10238 = vadd.f32 %v10189, %v10237
    %v10239 = vpop.f32.mrf.mxu0
    %v10240 = vadd.f32 %v10191, %v10239
    %10241 = vmatmul.bf16.gmra.mxu0 %v8353
    %v10242 = vpop.f32.mrf.mxu0
    %v10243 = vadd.f32 %v10194, %v10242
    %v10244 = vpop.f32.mrf.mxu0
    %v10245 = vadd.f32 %v10196, %v10244
    %10246 = vmatmul.bf16.gmra.mxu0 %v8361
    %v10247 = vpop.f32.mrf.mxu0
    %v10248 = vadd.f32 %v10199, %v10247
    %v10249 = vpop.f32.mrf.mxu0
    %v10250 = vadd.f32 %v10201, %v10249
    %10251 = vdwg.mxu0
    %10252 = vmatpush.bf16.msra.mxu0 %v9649
    %10253 = vmatpush.bf16.msra.mxu0 %v9645
    %10254 = vmatpush.bf16.msra.mxu0 %v9641
    %10255 = vmatpush.bf16.msra.mxu0 %v9637
    %10256 = vmatpush.bf16.msra.mxu0 %v9633
    %10257 = vmatpush.bf16.msra.mxu0 %v9629
    %10258 = vmatpush.bf16.msra.mxu0 %v9625
    %10259 = vmatpush.bf16.msra.mxu0 %v9621
    %10260 = vmatmul.bf16.gmra.mxu0 %v8306
    %v10261 = vpop.f32.mrf.mxu0
    %v10262 = vadd.f32 %v10213, %v10261
    %v10263 = vpop.f32.mrf.mxu0
    %v10264 = vadd.f32 %v10215, %v10263
    %10265 = vmatmul.bf16.gmra.mxu0 %v8314
    %v10266 = vpop.f32.mrf.mxu0
    %v10267 = vadd.f32 %v10218, %v10266
    %v10268 = vpop.f32.mrf.mxu0
    %v10269 = vadd.f32 %v10220, %v10268
    %10270 = vmatmul.bf16.gmra.mxu0 %v8322
    %v10271 = vpop.f32.mrf.mxu0
    %v10272 = vadd.f32 %v10223, %v10271
    %v10273 = vpop.f32.mrf.mxu0
    %v10274 = vadd.f32 %v10225, %v10273
    %10275 = vmatmul.bf16.gmra.mxu0 %v8330
    %v10276 = vpop.f32.mrf.mxu0
    %v10277 = vadd.f32 %v10228, %v10276
    %v10278 = vpop.f32.mrf.mxu0
    %v10279 = vadd.f32 %v10230, %v10278
    %10280 = vmatmul.bf16.gmra.mxu0 %v8338
    %v10281 = vpop.f32.mrf.mxu0
    %v10282 = vadd.f32 %v10233, %v10281
    %v10283 = vpop.f32.mrf.mxu0
    %v10284 = vadd.f32 %v10235, %v10283
    %10285 = vmatmul.bf16.gmra.mxu0 %v8346
    %v10286 = vpop.f32.mrf.mxu0
    %v10287 = vadd.f32 %v10238, %v10286
    %v10288 = vpop.f32.mrf.mxu0
    %v10289 = vadd.f32 %v10240, %v10288
    %10290 = vmatmul.bf16.gmra.mxu0 %v8354
    %v10291 = vpop.f32.mrf.mxu0
    %v10292 = vadd.f32 %v10243, %v10291
    %v10293 = vpop.f32.mrf.mxu0
    %v10294 = vadd.f32 %v10245, %v10293
    %10295 = vmatmul.bf16.gmra.mxu0 %v8362
    %v10296 = vpop.f32.mrf.mxu0
    %v10297 = vadd.f32 %v10248, %v10296
    %v10298 = vpop.f32.mrf.mxu0
    %v10299 = vadd.f32 %v10250, %v10298
    %10300 = vdwg.mxu0
    %10301 = vmatpush.bf16.msra.mxu0 %v9426
    %10302 = vmatpush.bf16.msra.mxu0 %v9422
    %10303 = vmatpush.bf16.msra.mxu0 %v9418
    %10304 = vmatpush.bf16.msra.mxu0 %v9414
    %10305 = vmatpush.bf16.msra.mxu0 %v9410
    %10306 = vmatpush.bf16.msra.mxu0 %v9406
    %10307 = vmatpush.bf16.msra.mxu0 %v9402
    %10308 = vmatpush.bf16.msra.mxu0 %v9398
    %10309 = vmatmul.bf16.gmra.mxu0 %v8299
    %v10310 = vpop.f32.mrf.mxu0
    %v10311 = vadd.f32 %v8622, %v10310
    %v10312 = vpop.f32.mrf.mxu0
    %v10313 = vadd.f32 %v8622, %v10312
    %10314 = vmatmul.bf16.gmra.mxu0 %v8307
    %v10315 = vpop.f32.mrf.mxu0
    %v10316 = vadd.f32 %v8622, %v10315
    %v10317 = vpop.f32.mrf.mxu0
    %v10318 = vadd.f32 %v8622, %v10317
    %10319 = vmatmul.bf16.gmra.mxu0 %v8315
    %v10320 = vpop.f32.mrf.mxu0
    %v10321 = vadd.f32 %v8622, %v10320
    %v10322 = vpop.f32.mrf.mxu0
    %v10323 = vadd.f32 %v8622, %v10322
    %10324 = vmatmul.bf16.gmra.mxu0 %v8323
    %v10325 = vpop.f32.mrf.mxu0
    %v10326 = vadd.f32 %v8622, %v10325
    %v10327 = vpop.f32.mrf.mxu0
    %v10328 = vadd.f32 %v8622, %v10327
    %10329 = vmatmul.bf16.gmra.mxu0 %v8331
    %v10330 = vpop.f32.mrf.mxu0
    %v10331 = vadd.f32 %v8622, %v10330
    %v10332 = vpop.f32.mrf.mxu0
    %v10333 = vadd.f32 %v8622, %v10332
    %10334 = vmatmul.bf16.gmra.mxu0 %v8339
    %v10335 = vpop.f32.mrf.mxu0
    %v10336 = vadd.f32 %v8622, %v10335
    %v10337 = vpop.f32.mrf.mxu0
    %v10338 = vadd.f32 %v8622, %v10337
    %10339 = vmatmul.bf16.gmra.mxu0 %v8347
    %v10340 = vpop.f32.mrf.mxu0
    %v10341 = vadd.f32 %v8622, %v10340
    %v10342 = vpop.f32.mrf.mxu0
    %v10343 = vadd.f32 %v8622, %v10342
    %10344 = vmatmul.bf16.gmra.mxu0 %v8355
    %v10345 = vpop.f32.mrf.mxu0
    %v10346 = vadd.f32 %v8622, %v10345
    %v10347 = vpop.f32.mrf.mxu0
    %v10348 = vadd.f32 %v8622, %v10347
    %10349 = vdwg.mxu0
    %10350 = vmatpush.bf16.msra.mxu0 %v9458
    %10351 = vmatpush.bf16.msra.mxu0 %v9454
    %10352 = vmatpush.bf16.msra.mxu0 %v9450
    %10353 = vmatpush.bf16.msra.mxu0 %v9446
    %10354 = vmatpush.bf16.msra.mxu0 %v9442
    %10355 = vmatpush.bf16.msra.mxu0 %v9438
    %10356 = vmatpush.bf16.msra.mxu0 %v9434
    %10357 = vmatpush.bf16.msra.mxu0 %v9430
    %10358 = vmatmul.bf16.gmra.mxu0 %v8300
    %v10359 = vpop.f32.mrf.mxu0
    %v10360 = vadd.f32 %v10311, %v10359
    %v10361 = vpop.f32.mrf.mxu0
    %v10362 = vadd.f32 %v10313, %v10361
    %10363 = vmatmul.bf16.gmra.mxu0 %v8308
    %v10364 = vpop.f32.mrf.mxu0
    %v10365 = vadd.f32 %v10316, %v10364
    %v10366 = vpop.f32.mrf.mxu0
    %v10367 = vadd.f32 %v10318, %v10366
    %10368 = vmatmul.bf16.gmra.mxu0 %v8316
    %v10369 = vpop.f32.mrf.mxu0
    %v10370 = vadd.f32 %v10321, %v10369
    %v10371 = vpop.f32.mrf.mxu0
    %v10372 = vadd.f32 %v10323, %v10371
    %10373 = vmatmul.bf16.gmra.mxu0 %v8324
    %v10374 = vpop.f32.mrf.mxu0
    %v10375 = vadd.f32 %v10326, %v10374
    %v10376 = vpop.f32.mrf.mxu0
    %v10377 = vadd.f32 %v10328, %v10376
    %10378 = vmatmul.bf16.gmra.mxu0 %v8332
    %v10379 = vpop.f32.mrf.mxu0
    %v10380 = vadd.f32 %v10331, %v10379
    %v10381 = vpop.f32.mrf.mxu0
    %v10382 = vadd.f32 %v10333, %v10381
    %10383 = vmatmul.bf16.gmra.mxu0 %v8340
    %v10384 = vpop.f32.mrf.mxu0
    %v10385 = vadd.f32 %v10336, %v10384
    %v10386 = vpop.f32.mrf.mxu0
    %v10387 = vadd.f32 %v10338, %v10386
    %10388 = vmatmul.bf16.gmra.mxu0 %v8348
    %v10389 = vpop.f32.mrf.mxu0
    %v10390 = vadd.f32 %v10341, %v10389
    %v10391 = vpop.f32.mrf.mxu0
    %v10392 = vadd.f32 %v10343, %v10391
    %10393 = vmatmul.bf16.gmra.mxu0 %v8356
    %v10394 = vpop.f32.mrf.mxu0
    %v10395 = vadd.f32 %v10346, %v10394
    %v10396 = vpop.f32.mrf.mxu0
    %v10397 = vadd.f32 %v10348, %v10396
    %10398 = vdwg.mxu0
    %10399 = vmatpush.bf16.msra.mxu0 %v9490
    %10400 = vmatpush.bf16.msra.mxu0 %v9486
    %10401 = vmatpush.bf16.msra.mxu0 %v9482
    %10402 = vmatpush.bf16.msra.mxu0 %v9478
    %10403 = vmatpush.bf16.msra.mxu0 %v9474
    %10404 = vmatpush.bf16.msra.mxu0 %v9470
    %10405 = vmatpush.bf16.msra.mxu0 %v9466
    %10406 = vmatpush.bf16.msra.mxu0 %v9462
    %10407 = vmatmul.bf16.gmra.mxu0 %v8301
    %v10408 = vpop.f32.mrf.mxu0
    %v10409 = vadd.f32 %v10360, %v10408
    %v10410 = vpop.f32.mrf.mxu0
    %v10411 = vadd.f32 %v10362, %v10410
    %10412 = vmatmul.bf16.gmra.mxu0 %v8309
    %v10413 = vpop.f32.mrf.mxu0
    %v10414 = vadd.f32 %v10365, %v10413
    %v10415 = vpop.f32.mrf.mxu0
    %v10416 = vadd.f32 %v10367, %v10415
    %10417 = vmatmul.bf16.gmra.mxu0 %v8317
    %v10418 = vpop.f32.mrf.mxu0
    %v10419 = vadd.f32 %v10370, %v10418
    %v10420 = vpop.f32.mrf.mxu0
    %v10421 = vadd.f32 %v10372, %v10420
    %10422 = vmatmul.bf16.gmra.mxu0 %v8325
    %v10423 = vpop.f32.mrf.mxu0
    %v10424 = vadd.f32 %v10375, %v10423
    %v10425 = vpop.f32.mrf.mxu0
    %v10426 = vadd.f32 %v10377, %v10425
    %10427 = vmatmul.bf16.gmra.mxu0 %v8333
    %v10428 = vpop.f32.mrf.mxu0
    %v10429 = vadd.f32 %v10380, %v10428
    %v10430 = vpop.f32.mrf.mxu0
    %v10431 = vadd.f32 %v10382, %v10430
    %10432 = vmatmul.bf16.gmra.mxu0 %v8341
    %v10433 = vpop.f32.mrf.mxu0
    %v10434 = vadd.f32 %v10385, %v10433
    %v10435 = vpop.f32.mrf.mxu0
    %v10436 = vadd.f32 %v10387, %v10435
    %10437 = vmatmul.bf16.gmra.mxu0 %v8349
    %v10438 = vpop.f32.mrf.mxu0
    %v10439 = vadd.f32 %v10390, %v10438
    %v10440 = vpop.f32.mrf.mxu0
    %v10441 = vadd.f32 %v10392, %v10440
    %10442 = vmatmul.bf16.gmra.mxu0 %v8357
    %v10443 = vpop.f32.mrf.mxu0
    %v10444 = vadd.f32 %v10395, %v10443
    %v10445 = vpop.f32.mrf.mxu0
    %v10446 = vadd.f32 %v10397, %v10445
    %10447 = vdwg.mxu0
    %10448 = vmatpush.bf16.msra.mxu0 %v9522
    %10449 = vmatpush.bf16.msra.mxu0 %v9518
    %10450 = vmatpush.bf16.msra.mxu0 %v9514
    %10451 = vmatpush.bf16.msra.mxu0 %v9510
    %10452 = vmatpush.bf16.msra.mxu0 %v9506
    %10453 = vmatpush.bf16.msra.mxu0 %v9502
    %10454 = vmatpush.bf16.msra.mxu0 %v9498
    %10455 = vmatpush.bf16.msra.mxu0 %v9494
    %10456 = vmatmul.bf16.gmra.mxu0 %v8302
    %v10457 = vpop.f32.mrf.mxu0
    %v10458 = vadd.f32 %v10409, %v10457
    %v10459 = vpop.f32.mrf.mxu0
    %v10460 = vadd.f32 %v10411, %v10459
    %10461 = vmatmul.bf16.gmra.mxu0 %v8310
    %v10462 = vpop.f32.mrf.mxu0
    %v10463 = vadd.f32 %v10414, %v10462
    %v10464 = vpop.f32.mrf.mxu0
    %v10465 = vadd.f32 %v10416, %v10464
    %10466 = vmatmul.bf16.gmra.mxu0 %v8318
    %v10467 = vpop.f32.mrf.mxu0
    %v10468 = vadd.f32 %v10419, %v10467
    %v10469 = vpop.f32.mrf.mxu0
    %v10470 = vadd.f32 %v10421, %v10469
    %10471 = vmatmul.bf16.gmra.mxu0 %v8326
    %v10472 = vpop.f32.mrf.mxu0
    %v10473 = vadd.f32 %v10424, %v10472
    %v10474 = vpop.f32.mrf.mxu0
    %v10475 = vadd.f32 %v10426, %v10474
    %10476 = vmatmul.bf16.gmra.mxu0 %v8334
    %v10477 = vpop.f32.mrf.mxu0
    %v10478 = vadd.f32 %v10429, %v10477
    %v10479 = vpop.f32.mrf.mxu0
    %v10480 = vadd.f32 %v10431, %v10479
    %10481 = vmatmul.bf16.gmra.mxu0 %v8342
    %v10482 = vpop.f32.mrf.mxu0
    %v10483 = vadd.f32 %v10434, %v10482
    %v10484 = vpop.f32.mrf.mxu0
    %v10485 = vadd.f32 %v10436, %v10484
    %10486 = vmatmul.bf16.gmra.mxu0 %v8350
    %v10487 = vpop.f32.mrf.mxu0
    %v10488 = vadd.f32 %v10439, %v10487
    %v10489 = vpop.f32.mrf.mxu0
    %v10490 = vadd.f32 %v10441, %v10489
    %10491 = vmatmul.bf16.gmra.mxu0 %v8358
    %v10492 = vpop.f32.mrf.mxu0
    %v10493 = vadd.f32 %v10444, %v10492
    %v10494 = vpop.f32.mrf.mxu0
    %v10495 = vadd.f32 %v10446, %v10494
    %10496 = vdwg.mxu0
    %10497 = vmatpush.bf16.msra.mxu0 %v9554
    %10498 = vmatpush.bf16.msra.mxu0 %v9550
    %10499 = vmatpush.bf16.msra.mxu0 %v9546
    %10500 = vmatpush.bf16.msra.mxu0 %v9542
    %10501 = vmatpush.bf16.msra.mxu0 %v9538
    %10502 = vmatpush.bf16.msra.mxu0 %v9534
    %10503 = vmatpush.bf16.msra.mxu0 %v9530
    %10504 = vmatpush.bf16.msra.mxu0 %v9526
    %10505 = vmatmul.bf16.gmra.mxu0 %v8303
    %v10506 = vpop.f32.mrf.mxu0
    %v10507 = vadd.f32 %v10458, %v10506
    %v10508 = vpop.f32.mrf.mxu0
    %v10509 = vadd.f32 %v10460, %v10508
    %10510 = vmatmul.bf16.gmra.mxu0 %v8311
    %v10511 = vpop.f32.mrf.mxu0
    %v10512 = vadd.f32 %v10463, %v10511
    %v10513 = vpop.f32.mrf.mxu0
    %v10514 = vadd.f32 %v10465, %v10513
    %10515 = vmatmul.bf16.gmra.mxu0 %v8319
    %v10516 = vpop.f32.mrf.mxu0
    %v10517 = vadd.f32 %v10468, %v10516
    %v10518 = vpop.f32.mrf.mxu0
    %v10519 = vadd.f32 %v10470, %v10518
    %10520 = vmatmul.bf16.gmra.mxu0 %v8327
    %v10521 = vpop.f32.mrf.mxu0
    %v10522 = vadd.f32 %v10473, %v10521
    %v10523 = vpop.f32.mrf.mxu0
    %v10524 = vadd.f32 %v10475, %v10523
    %10525 = vmatmul.bf16.gmra.mxu0 %v8335
    %v10526 = vpop.f32.mrf.mxu0
    %v10527 = vadd.f32 %v10478, %v10526
    %v10528 = vpop.f32.mrf.mxu0
    %v10529 = vadd.f32 %v10480, %v10528
    %10530 = vmatmul.bf16.gmra.mxu0 %v8343
    %v10531 = vpop.f32.mrf.mxu0
    %v10532 = vadd.f32 %v10483, %v10531
    %v10533 = vpop.f32.mrf.mxu0
    %v10534 = vadd.f32 %v10485, %v10533
    %10535 = vmatmul.bf16.gmra.mxu0 %v8351
    %v10536 = vpop.f32.mrf.mxu0
    %v10537 = vadd.f32 %v10488, %v10536
    %v10538 = vpop.f32.mrf.mxu0
    %v10539 = vadd.f32 %v10490, %v10538
    %10540 = vmatmul.bf16.gmra.mxu0 %v8359
    %v10541 = vpop.f32.mrf.mxu0
    %v10542 = vadd.f32 %v10493, %v10541
    %v10543 = vpop.f32.mrf.mxu0
    %v10544 = vadd.f32 %v10495, %v10543
    %10545 = vdwg.mxu0
    %10546 = vmatpush.bf16.msra.mxu0 %v9586
    %10547 = vmatpush.bf16.msra.mxu0 %v9582
    %10548 = vmatpush.bf16.msra.mxu0 %v9578
    %10549 = vmatpush.bf16.msra.mxu0 %v9574
    %10550 = vmatpush.bf16.msra.mxu0 %v9570
    %10551 = vmatpush.bf16.msra.mxu0 %v9566
    %10552 = vmatpush.bf16.msra.mxu0 %v9562
    %10553 = vmatpush.bf16.msra.mxu0 %v9558
    %10554 = vmatmul.bf16.gmra.mxu0 %v8304
    %v10555 = vpop.f32.mrf.mxu0
    %v10556 = vadd.f32 %v10507, %v10555
    %v10557 = vpop.f32.mrf.mxu0
    %v10558 = vadd.f32 %v10509, %v10557
    %10559 = vmatmul.bf16.gmra.mxu0 %v8312
    %v10560 = vpop.f32.mrf.mxu0
    %v10561 = vadd.f32 %v10512, %v10560
    %v10562 = vpop.f32.mrf.mxu0
    %v10563 = vadd.f32 %v10514, %v10562
    %10564 = vmatmul.bf16.gmra.mxu0 %v8320
    %v10565 = vpop.f32.mrf.mxu0
    %v10566 = vadd.f32 %v10517, %v10565
    %v10567 = vpop.f32.mrf.mxu0
    %v10568 = vadd.f32 %v10519, %v10567
    %10569 = vmatmul.bf16.gmra.mxu0 %v8328
    %v10570 = vpop.f32.mrf.mxu0
    %v10571 = vadd.f32 %v10522, %v10570
    %v10572 = vpop.f32.mrf.mxu0
    %v10573 = vadd.f32 %v10524, %v10572
    %10574 = vmatmul.bf16.gmra.mxu0 %v8336
    %v10575 = vpop.f32.mrf.mxu0
    %v10576 = vadd.f32 %v10527, %v10575
    %v10577 = vpop.f32.mrf.mxu0
    %v10578 = vadd.f32 %v10529, %v10577
    %10579 = vmatmul.bf16.gmra.mxu0 %v8344
    %v10580 = vpop.f32.mrf.mxu0
    %v10581 = vadd.f32 %v10532, %v10580
    %v10582 = vpop.f32.mrf.mxu0
    %v10583 = vadd.f32 %v10534, %v10582
    %10584 = vmatmul.bf16.gmra.mxu0 %v8352
    %v10585 = vpop.f32.mrf.mxu0
    %v10586 = vadd.f32 %v10537, %v10585
    %v10587 = vpop.f32.mrf.mxu0
    %v10588 = vadd.f32 %v10539, %v10587
    %10589 = vmatmul.bf16.gmra.mxu0 %v8360
    %v10590 = vpop.f32.mrf.mxu0
    %v10591 = vadd.f32 %v10542, %v10590
    %v10592 = vpop.f32.mrf.mxu0
    %v10593 = vadd.f32 %v10544, %v10592
    %10594 = vdwg.mxu0
    %10595 = vmatpush.bf16.msra.mxu0 %v9618
    %10596 = vmatpush.bf16.msra.mxu0 %v9614
    %10597 = vmatpush.bf16.msra.mxu0 %v9610
    %10598 = vmatpush.bf16.msra.mxu0 %v9606
    %10599 = vmatpush.bf16.msra.mxu0 %v9602
    %10600 = vmatpush.bf16.msra.mxu0 %v9598
    %10601 = vmatpush.bf16.msra.mxu0 %v9594
    %10602 = vmatpush.bf16.msra.mxu0 %v9590
    %10603 = vmatmul.bf16.gmra.mxu0 %v8305
    %v10604 = vpop.f32.mrf.mxu0
    %v10605 = vadd.f32 %v10556, %v10604
    %v10606 = vpop.f32.mrf.mxu0
    %v10607 = vadd.f32 %v10558, %v10606
    %10608 = vmatmul.bf16.gmra.mxu0 %v8313
    %v10609 = vpop.f32.mrf.mxu0
    %v10610 = vadd.f32 %v10561, %v10609
    %v10611 = vpop.f32.mrf.mxu0
    %v10612 = vadd.f32 %v10563, %v10611
    %10613 = vmatmul.bf16.gmra.mxu0 %v8321
    %v10614 = vpop.f32.mrf.mxu0
    %v10615 = vadd.f32 %v10566, %v10614
    %v10616 = vpop.f32.mrf.mxu0
    %v10617 = vadd.f32 %v10568, %v10616
    %10618 = vmatmul.bf16.gmra.mxu0 %v8329
    %v10619 = vpop.f32.mrf.mxu0
    %v10620 = vadd.f32 %v10571, %v10619
    %v10621 = vpop.f32.mrf.mxu0
    %v10622 = vadd.f32 %v10573, %v10621
    %10623 = vmatmul.bf16.gmra.mxu0 %v8337
    %v10624 = vpop.f32.mrf.mxu0
    %v10625 = vadd.f32 %v10576, %v10624
    %v10626 = vpop.f32.mrf.mxu0
    %v10627 = vadd.f32 %v10578, %v10626
    %10628 = vmatmul.bf16.gmra.mxu0 %v8345
    %v10629 = vpop.f32.mrf.mxu0
    %v10630 = vadd.f32 %v10581, %v10629
    %v10631 = vpop.f32.mrf.mxu0
    %v10632 = vadd.f32 %v10583, %v10631
    %10633 = vmatmul.bf16.gmra.mxu0 %v8353
    %v10634 = vpop.f32.mrf.mxu0
    %v10635 = vadd.f32 %v10586, %v10634
    %v10636 = vpop.f32.mrf.mxu0
    %v10637 = vadd.f32 %v10588, %v10636
    %10638 = vmatmul.bf16.gmra.mxu0 %v8361
    %v10639 = vpop.f32.mrf.mxu0
    %v10640 = vadd.f32 %v10591, %v10639
    %v10641 = vpop.f32.mrf.mxu0
    %v10642 = vadd.f32 %v10593, %v10641
    %10643 = vdwg.mxu0
    %10644 = vmatpush.bf16.msra.mxu0 %v9650
    %10645 = vmatpush.bf16.msra.mxu0 %v9646
    %10646 = vmatpush.bf16.msra.mxu0 %v9642
    %10647 = vmatpush.bf16.msra.mxu0 %v9638
    %10648 = vmatpush.bf16.msra.mxu0 %v9634
    %10649 = vmatpush.bf16.msra.mxu0 %v9630
    %10650 = vmatpush.bf16.msra.mxu0 %v9626
    %10651 = vmatpush.bf16.msra.mxu0 %v9622
    %10652 = vmatmul.bf16.gmra.mxu0 %v8306
    %v10653 = vpop.f32.mrf.mxu0
    %v10654 = vadd.f32 %v10605, %v10653
    %v10655 = vpop.f32.mrf.mxu0
    %v10656 = vadd.f32 %v10607, %v10655
    %10657 = vmatmul.bf16.gmra.mxu0 %v8314
    %v10658 = vpop.f32.mrf.mxu0
    %v10659 = vadd.f32 %v10610, %v10658
    %v10660 = vpop.f32.mrf.mxu0
    %v10661 = vadd.f32 %v10612, %v10660
    %10662 = vmatmul.bf16.gmra.mxu0 %v8322
    %v10663 = vpop.f32.mrf.mxu0
    %v10664 = vadd.f32 %v10615, %v10663
    %v10665 = vpop.f32.mrf.mxu0
    %v10666 = vadd.f32 %v10617, %v10665
    %10667 = vmatmul.bf16.gmra.mxu0 %v8330
    %v10668 = vpop.f32.mrf.mxu0
    %v10669 = vadd.f32 %v10620, %v10668
    %v10670 = vpop.f32.mrf.mxu0
    %v10671 = vadd.f32 %v10622, %v10670
    %10672 = vmatmul.bf16.gmra.mxu0 %v8338
    %v10673 = vpop.f32.mrf.mxu0
    %v10674 = vadd.f32 %v10625, %v10673
    %v10675 = vpop.f32.mrf.mxu0
    %v10676 = vadd.f32 %v10627, %v10675
    %10677 = vmatmul.bf16.gmra.mxu0 %v8346
    %v10678 = vpop.f32.mrf.mxu0
    %v10679 = vadd.f32 %v10630, %v10678
    %v10680 = vpop.f32.mrf.mxu0
    %v10681 = vadd.f32 %v10632, %v10680
    %10682 = vmatmul.bf16.gmra.mxu0 %v8354
    %v10683 = vpop.f32.mrf.mxu0
    %v10684 = vadd.f32 %v10635, %v10683
    %v10685 = vpop.f32.mrf.mxu0
    %v10686 = vadd.f32 %v10637, %v10685
    %10687 = vmatmul.bf16.gmra.mxu0 %v8362
    %v10688 = vpop.f32.mrf.mxu0
    %v10689 = vadd.f32 %v10640, %v10688
    %v10690 = vpop.f32.mrf.mxu0
    %v10691 = vadd.f32 %v10642, %v10690
    %10692 = vdwg.mxu0
    %10693 = vmatpush.bf16.msra.mxu0 %v9427
    %10694 = vmatpush.bf16.msra.mxu0 %v9423
    %10695 = vmatpush.bf16.msra.mxu0 %v9419
    %10696 = vmatpush.bf16.msra.mxu0 %v9415
    %10697 = vmatpush.bf16.msra.mxu0 %v9411
    %10698 = vmatpush.bf16.msra.mxu0 %v9407
    %10699 = vmatpush.bf16.msra.mxu0 %v9403
    %10700 = vmatpush.bf16.msra.mxu0 %v9399
    %10701 = vmatmul.bf16.gmra.mxu0 %v8299
    %v10702 = vpop.f32.mrf.mxu0
    %v10703 = vadd.f32 %v8623, %v10702
    %v10704 = vpop.f32.mrf.mxu0
    %v10705 = vadd.f32 %v8623, %v10704
    %10706 = vmatmul.bf16.gmra.mxu0 %v8307
    %v10707 = vpop.f32.mrf.mxu0
    %v10708 = vadd.f32 %v8623, %v10707
    %v10709 = vpop.f32.mrf.mxu0
    %v10710 = vadd.f32 %v8623, %v10709
    %10711 = vmatmul.bf16.gmra.mxu0 %v8315
    %v10712 = vpop.f32.mrf.mxu0
    %v10713 = vadd.f32 %v8623, %v10712
    %v10714 = vpop.f32.mrf.mxu0
    %v10715 = vadd.f32 %v8623, %v10714
    %10716 = vmatmul.bf16.gmra.mxu0 %v8323
    %v10717 = vpop.f32.mrf.mxu0
    %v10718 = vadd.f32 %v8623, %v10717
    %v10719 = vpop.f32.mrf.mxu0
    %v10720 = vadd.f32 %v8623, %v10719
    %10721 = vmatmul.bf16.gmra.mxu0 %v8331
    %v10722 = vpop.f32.mrf.mxu0
    %v10723 = vadd.f32 %v8623, %v10722
    %v10724 = vpop.f32.mrf.mxu0
    %v10725 = vadd.f32 %v8623, %v10724
    %10726 = vmatmul.bf16.gmra.mxu0 %v8339
    %v10727 = vpop.f32.mrf.mxu0
    %v10728 = vadd.f32 %v8623, %v10727
    %v10729 = vpop.f32.mrf.mxu0
    %v10730 = vadd.f32 %v8623, %v10729
    %10731 = vmatmul.bf16.gmra.mxu0 %v8347
    %v10732 = vpop.f32.mrf.mxu0
    %v10733 = vadd.f32 %v8623, %v10732
    %v10734 = vpop.f32.mrf.mxu0
    %v10735 = vadd.f32 %v8623, %v10734
    %10736 = vmatmul.bf16.gmra.mxu0 %v8355
    %v10737 = vpop.f32.mrf.mxu0
    %v10738 = vadd.f32 %v8623, %v10737
    %v10739 = vpop.f32.mrf.mxu0
    %v10740 = vadd.f32 %v8623, %v10739
    %10741 = vdwg.mxu0
    %10742 = vmatpush.bf16.msra.mxu0 %v9459
    %10743 = vmatpush.bf16.msra.mxu0 %v9455
    %10744 = vmatpush.bf16.msra.mxu0 %v9451
    %10745 = vmatpush.bf16.msra.mxu0 %v9447
    %10746 = vmatpush.bf16.msra.mxu0 %v9443
    %10747 = vmatpush.bf16.msra.mxu0 %v9439
    %10748 = vmatpush.bf16.msra.mxu0 %v9435
    %10749 = vmatpush.bf16.msra.mxu0 %v9431
    %10750 = vmatmul.bf16.gmra.mxu0 %v8300
    %v10751 = vpop.f32.mrf.mxu0
    %v10752 = vadd.f32 %v10703, %v10751
    %v10753 = vpop.f32.mrf.mxu0
    %v10754 = vadd.f32 %v10705, %v10753
    %10755 = vmatmul.bf16.gmra.mxu0 %v8308
    %v10756 = vpop.f32.mrf.mxu0
    %v10757 = vadd.f32 %v10708, %v10756
    %v10758 = vpop.f32.mrf.mxu0
    %v10759 = vadd.f32 %v10710, %v10758
    %10760 = vmatmul.bf16.gmra.mxu0 %v8316
    %v10761 = vpop.f32.mrf.mxu0
    %v10762 = vadd.f32 %v10713, %v10761
    %v10763 = vpop.f32.mrf.mxu0
    %v10764 = vadd.f32 %v10715, %v10763
    %10765 = vmatmul.bf16.gmra.mxu0 %v8324
    %v10766 = vpop.f32.mrf.mxu0
    %v10767 = vadd.f32 %v10718, %v10766
    %v10768 = vpop.f32.mrf.mxu0
    %v10769 = vadd.f32 %v10720, %v10768
    %10770 = vmatmul.bf16.gmra.mxu0 %v8332
    %v10771 = vpop.f32.mrf.mxu0
    %v10772 = vadd.f32 %v10723, %v10771
    %v10773 = vpop.f32.mrf.mxu0
    %v10774 = vadd.f32 %v10725, %v10773
    %10775 = vmatmul.bf16.gmra.mxu0 %v8340
    %v10776 = vpop.f32.mrf.mxu0
    %v10777 = vadd.f32 %v10728, %v10776
    %v10778 = vpop.f32.mrf.mxu0
    %v10779 = vadd.f32 %v10730, %v10778
    %10780 = vmatmul.bf16.gmra.mxu0 %v8348
    %v10781 = vpop.f32.mrf.mxu0
    %v10782 = vadd.f32 %v10733, %v10781
    %v10783 = vpop.f32.mrf.mxu0
    %v10784 = vadd.f32 %v10735, %v10783
    %10785 = vmatmul.bf16.gmra.mxu0 %v8356
    %v10786 = vpop.f32.mrf.mxu0
    %v10787 = vadd.f32 %v10738, %v10786
    %v10788 = vpop.f32.mrf.mxu0
    %v10789 = vadd.f32 %v10740, %v10788
    %10790 = vdwg.mxu0
    %10791 = vmatpush.bf16.msra.mxu0 %v9491
    %10792 = vmatpush.bf16.msra.mxu0 %v9487
    %10793 = vmatpush.bf16.msra.mxu0 %v9483
    %10794 = vmatpush.bf16.msra.mxu0 %v9479
    %10795 = vmatpush.bf16.msra.mxu0 %v9475
    %10796 = vmatpush.bf16.msra.mxu0 %v9471
    %10797 = vmatpush.bf16.msra.mxu0 %v9467
    %10798 = vmatpush.bf16.msra.mxu0 %v9463
    %10799 = vmatmul.bf16.gmra.mxu0 %v8301
    %v10800 = vpop.f32.mrf.mxu0
    %v10801 = vadd.f32 %v10752, %v10800
    %v10802 = vpop.f32.mrf.mxu0
    %v10803 = vadd.f32 %v10754, %v10802
    %10804 = vmatmul.bf16.gmra.mxu0 %v8309
    %v10805 = vpop.f32.mrf.mxu0
    %v10806 = vadd.f32 %v10757, %v10805
    %v10807 = vpop.f32.mrf.mxu0
    %v10808 = vadd.f32 %v10759, %v10807
    %10809 = vmatmul.bf16.gmra.mxu0 %v8317
    %v10810 = vpop.f32.mrf.mxu0
    %v10811 = vadd.f32 %v10762, %v10810
    %v10812 = vpop.f32.mrf.mxu0
    %v10813 = vadd.f32 %v10764, %v10812
    %10814 = vmatmul.bf16.gmra.mxu0 %v8325
    %v10815 = vpop.f32.mrf.mxu0
    %v10816 = vadd.f32 %v10767, %v10815
    %v10817 = vpop.f32.mrf.mxu0
    %v10818 = vadd.f32 %v10769, %v10817
    %10819 = vmatmul.bf16.gmra.mxu0 %v8333
    %v10820 = vpop.f32.mrf.mxu0
    %v10821 = vadd.f32 %v10772, %v10820
    %v10822 = vpop.f32.mrf.mxu0
    %v10823 = vadd.f32 %v10774, %v10822
    %10824 = vmatmul.bf16.gmra.mxu0 %v8341
    %v10825 = vpop.f32.mrf.mxu0
    %v10826 = vadd.f32 %v10777, %v10825
    %v10827 = vpop.f32.mrf.mxu0
    %v10828 = vadd.f32 %v10779, %v10827
    %10829 = vmatmul.bf16.gmra.mxu0 %v8349
    %v10830 = vpop.f32.mrf.mxu0
    %v10831 = vadd.f32 %v10782, %v10830
    %v10832 = vpop.f32.mrf.mxu0
    %v10833 = vadd.f32 %v10784, %v10832
    %10834 = vmatmul.bf16.gmra.mxu0 %v8357
    %v10835 = vpop.f32.mrf.mxu0
    %v10836 = vadd.f32 %v10787, %v10835
    %v10837 = vpop.f32.mrf.mxu0
    %v10838 = vadd.f32 %v10789, %v10837
    %10839 = vdwg.mxu0
    %10840 = vmatpush.bf16.msra.mxu0 %v9523
    %10841 = vmatpush.bf16.msra.mxu0 %v9519
    %10842 = vmatpush.bf16.msra.mxu0 %v9515
    %10843 = vmatpush.bf16.msra.mxu0 %v9511
    %10844 = vmatpush.bf16.msra.mxu0 %v9507
    %10845 = vmatpush.bf16.msra.mxu0 %v9503
    %10846 = vmatpush.bf16.msra.mxu0 %v9499
    %10847 = vmatpush.bf16.msra.mxu0 %v9495
    %10848 = vmatmul.bf16.gmra.mxu0 %v8302
    %v10849 = vpop.f32.mrf.mxu0
    %v10850 = vadd.f32 %v10801, %v10849
    %v10851 = vpop.f32.mrf.mxu0
    %v10852 = vadd.f32 %v10803, %v10851
    %10853 = vmatmul.bf16.gmra.mxu0 %v8310
    %v10854 = vpop.f32.mrf.mxu0
    %v10855 = vadd.f32 %v10806, %v10854
    %v10856 = vpop.f32.mrf.mxu0
    %v10857 = vadd.f32 %v10808, %v10856
    %10858 = vmatmul.bf16.gmra.mxu0 %v8318
    %v10859 = vpop.f32.mrf.mxu0
    %v10860 = vadd.f32 %v10811, %v10859
    %v10861 = vpop.f32.mrf.mxu0
    %v10862 = vadd.f32 %v10813, %v10861
    %10863 = vmatmul.bf16.gmra.mxu0 %v8326
    %v10864 = vpop.f32.mrf.mxu0
    %v10865 = vadd.f32 %v10816, %v10864
    %v10866 = vpop.f32.mrf.mxu0
    %v10867 = vadd.f32 %v10818, %v10866
    %10868 = vmatmul.bf16.gmra.mxu0 %v8334
    %v10869 = vpop.f32.mrf.mxu0
    %v10870 = vadd.f32 %v10821, %v10869
    %v10871 = vpop.f32.mrf.mxu0
    %v10872 = vadd.f32 %v10823, %v10871
    %10873 = vmatmul.bf16.gmra.mxu0 %v8342
    %v10874 = vpop.f32.mrf.mxu0
    %v10875 = vadd.f32 %v10826, %v10874
    %v10876 = vpop.f32.mrf.mxu0
    %v10877 = vadd.f32 %v10828, %v10876
    %10878 = vmatmul.bf16.gmra.mxu0 %v8350
    %v10879 = vpop.f32.mrf.mxu0
    %v10880 = vadd.f32 %v10831, %v10879
    %v10881 = vpop.f32.mrf.mxu0
    %v10882 = vadd.f32 %v10833, %v10881
    %10883 = vmatmul.bf16.gmra.mxu0 %v8358
    %v10884 = vpop.f32.mrf.mxu0
    %v10885 = vadd.f32 %v10836, %v10884
    %v10886 = vpop.f32.mrf.mxu0
    %v10887 = vadd.f32 %v10838, %v10886
    %10888 = vdwg.mxu0
    %10889 = vmatpush.bf16.msra.mxu0 %v9555
    %10890 = vmatpush.bf16.msra.mxu0 %v9551
    %10891 = vmatpush.bf16.msra.mxu0 %v9547
    %10892 = vmatpush.bf16.msra.mxu0 %v9543
    %10893 = vmatpush.bf16.msra.mxu0 %v9539
    %10894 = vmatpush.bf16.msra.mxu0 %v9535
    %10895 = vmatpush.bf16.msra.mxu0 %v9531
    %10896 = vmatpush.bf16.msra.mxu0 %v9527
    %10897 = vmatmul.bf16.gmra.mxu0 %v8303
    %v10898 = vpop.f32.mrf.mxu0
    %v10899 = vadd.f32 %v10850, %v10898
    %v10900 = vpop.f32.mrf.mxu0
    %v10901 = vadd.f32 %v10852, %v10900
    %10902 = vmatmul.bf16.gmra.mxu0 %v8311
    %v10903 = vpop.f32.mrf.mxu0
    %v10904 = vadd.f32 %v10855, %v10903
    %v10905 = vpop.f32.mrf.mxu0
    %v10906 = vadd.f32 %v10857, %v10905
    %10907 = vmatmul.bf16.gmra.mxu0 %v8319
    %v10908 = vpop.f32.mrf.mxu0
    %v10909 = vadd.f32 %v10860, %v10908
    %v10910 = vpop.f32.mrf.mxu0
    %v10911 = vadd.f32 %v10862, %v10910
    %10912 = vmatmul.bf16.gmra.mxu0 %v8327
    %v10913 = vpop.f32.mrf.mxu0
    %v10914 = vadd.f32 %v10865, %v10913
    %v10915 = vpop.f32.mrf.mxu0
    %v10916 = vadd.f32 %v10867, %v10915
    %10917 = vmatmul.bf16.gmra.mxu0 %v8335
    %v10918 = vpop.f32.mrf.mxu0
    %v10919 = vadd.f32 %v10870, %v10918
    %v10920 = vpop.f32.mrf.mxu0
    %v10921 = vadd.f32 %v10872, %v10920
    %10922 = vmatmul.bf16.gmra.mxu0 %v8343
    %v10923 = vpop.f32.mrf.mxu0
    %v10924 = vadd.f32 %v10875, %v10923
    %v10925 = vpop.f32.mrf.mxu0
    %v10926 = vadd.f32 %v10877, %v10925
    %10927 = vmatmul.bf16.gmra.mxu0 %v8351
    %v10928 = vpop.f32.mrf.mxu0
    %v10929 = vadd.f32 %v10880, %v10928
    %v10930 = vpop.f32.mrf.mxu0
    %v10931 = vadd.f32 %v10882, %v10930
    %10932 = vmatmul.bf16.gmra.mxu0 %v8359
    %v10933 = vpop.f32.mrf.mxu0
    %v10934 = vadd.f32 %v10885, %v10933
    %v10935 = vpop.f32.mrf.mxu0
    %v10936 = vadd.f32 %v10887, %v10935
    %10937 = vdwg.mxu0
    %10938 = vmatpush.bf16.msra.mxu0 %v9587
    %10939 = vmatpush.bf16.msra.mxu0 %v9583
    %10940 = vmatpush.bf16.msra.mxu0 %v9579
    %10941 = vmatpush.bf16.msra.mxu0 %v9575
    %10942 = vmatpush.bf16.msra.mxu0 %v9571
    %10943 = vmatpush.bf16.msra.mxu0 %v9567
    %10944 = vmatpush.bf16.msra.mxu0 %v9563
    %10945 = vmatpush.bf16.msra.mxu0 %v9559
    %10946 = vmatmul.bf16.gmra.mxu0 %v8304
    %v10947 = vpop.f32.mrf.mxu0
    %v10948 = vadd.f32 %v10899, %v10947
    %v10949 = vpop.f32.mrf.mxu0
    %v10950 = vadd.f32 %v10901, %v10949
    %10951 = vmatmul.bf16.gmra.mxu0 %v8312
    %v10952 = vpop.f32.mrf.mxu0
    %v10953 = vadd.f32 %v10904, %v10952
    %v10954 = vpop.f32.mrf.mxu0
    %v10955 = vadd.f32 %v10906, %v10954
    %10956 = vmatmul.bf16.gmra.mxu0 %v8320
    %v10957 = vpop.f32.mrf.mxu0
    %v10958 = vadd.f32 %v10909, %v10957
    %v10959 = vpop.f32.mrf.mxu0
    %v10960 = vadd.f32 %v10911, %v10959
    %10961 = vmatmul.bf16.gmra.mxu0 %v8328
    %v10962 = vpop.f32.mrf.mxu0
    %v10963 = vadd.f32 %v10914, %v10962
    %v10964 = vpop.f32.mrf.mxu0
    %v10965 = vadd.f32 %v10916, %v10964
    %10966 = vmatmul.bf16.gmra.mxu0 %v8336
    %v10967 = vpop.f32.mrf.mxu0
    %v10968 = vadd.f32 %v10919, %v10967
    %v10969 = vpop.f32.mrf.mxu0
    %v10970 = vadd.f32 %v10921, %v10969
    %10971 = vmatmul.bf16.gmra.mxu0 %v8344
    %v10972 = vpop.f32.mrf.mxu0
    %v10973 = vadd.f32 %v10924, %v10972
    %v10974 = vpop.f32.mrf.mxu0
    %v10975 = vadd.f32 %v10926, %v10974
    %10976 = vmatmul.bf16.gmra.mxu0 %v8352
    %v10977 = vpop.f32.mrf.mxu0
    %v10978 = vadd.f32 %v10929, %v10977
    %v10979 = vpop.f32.mrf.mxu0
    %v10980 = vadd.f32 %v10931, %v10979
    %10981 = vmatmul.bf16.gmra.mxu0 %v8360
    %v10982 = vpop.f32.mrf.mxu0
    %v10983 = vadd.f32 %v10934, %v10982
    %v10984 = vpop.f32.mrf.mxu0
    %v10985 = vadd.f32 %v10936, %v10984
    %10986 = vdwg.mxu0
    %10987 = vmatpush.bf16.msra.mxu0 %v9619
    %10988 = vmatpush.bf16.msra.mxu0 %v9615
    %10989 = vmatpush.bf16.msra.mxu0 %v9611
    %10990 = vmatpush.bf16.msra.mxu0 %v9607
    %10991 = vmatpush.bf16.msra.mxu0 %v9603
    %10992 = vmatpush.bf16.msra.mxu0 %v9599
    %10993 = vmatpush.bf16.msra.mxu0 %v9595
    %10994 = vmatpush.bf16.msra.mxu0 %v9591
    %10995 = vmatmul.bf16.gmra.mxu0 %v8305
    %v10996 = vpop.f32.mrf.mxu0
    %v10997 = vadd.f32 %v10948, %v10996
    %v10998 = vpop.f32.mrf.mxu0
    %v10999 = vadd.f32 %v10950, %v10998
    %11000 = vmatmul.bf16.gmra.mxu0 %v8313
    %v11001 = vpop.f32.mrf.mxu0
    %v11002 = vadd.f32 %v10953, %v11001
    %v11003 = vpop.f32.mrf.mxu0
    %v11004 = vadd.f32 %v10955, %v11003
    %11005 = vmatmul.bf16.gmra.mxu0 %v8321
    %v11006 = vpop.f32.mrf.mxu0
    %v11007 = vadd.f32 %v10958, %v11006
    %v11008 = vpop.f32.mrf.mxu0
    %v11009 = vadd.f32 %v10960, %v11008
    %11010 = vmatmul.bf16.gmra.mxu0 %v8329
    %v11011 = vpop.f32.mrf.mxu0
    %v11012 = vadd.f32 %v10963, %v11011
    %v11013 = vpop.f32.mrf.mxu0
    %v11014 = vadd.f32 %v10965, %v11013
    %11015 = vmatmul.bf16.gmra.mxu0 %v8337
    %v11016 = vpop.f32.mrf.mxu0
    %v11017 = vadd.f32 %v10968, %v11016
    %v11018 = vpop.f32.mrf.mxu0
    %v11019 = vadd.f32 %v10970, %v11018
    %11020 = vmatmul.bf16.gmra.mxu0 %v8345
    %v11021 = vpop.f32.mrf.mxu0
    %v11022 = vadd.f32 %v10973, %v11021
    %v11023 = vpop.f32.mrf.mxu0
    %v11024 = vadd.f32 %v10975, %v11023
    %11025 = vmatmul.bf16.gmra.mxu0 %v8353
    %v11026 = vpop.f32.mrf.mxu0
    %v11027 = vadd.f32 %v10978, %v11026
    %v11028 = vpop.f32.mrf.mxu0
    %v11029 = vadd.f32 %v10980, %v11028
    %11030 = vmatmul.bf16.gmra.mxu0 %v8361
    %v11031 = vpop.f32.mrf.mxu0
    %v11032 = vadd.f32 %v10983, %v11031
    %v11033 = vpop.f32.mrf.mxu0
    %v11034 = vadd.f32 %v10985, %v11033
    %11035 = vdwg.mxu0
    %11036 = vmatpush.bf16.msra.mxu0 %v9651
    %11037 = vmatpush.bf16.msra.mxu0 %v9647
    %11038 = vmatpush.bf16.msra.mxu0 %v9643
    %11039 = vmatpush.bf16.msra.mxu0 %v9639
    %11040 = vmatpush.bf16.msra.mxu0 %v9635
    %11041 = vmatpush.bf16.msra.mxu0 %v9631
    %11042 = vmatpush.bf16.msra.mxu0 %v9627
    %11043 = vmatpush.bf16.msra.mxu0 %v9623
    %11044 = vmatmul.bf16.gmra.mxu0 %v8306
    %v11045 = vpop.f32.mrf.mxu0
    %v11046 = vadd.f32 %v10997, %v11045
    %v11047 = vpop.f32.mrf.mxu0
    %v11048 = vadd.f32 %v10999, %v11047
    %11049 = vmatmul.bf16.gmra.mxu0 %v8314
    %v11050 = vpop.f32.mrf.mxu0
    %v11051 = vadd.f32 %v11002, %v11050
    %v11052 = vpop.f32.mrf.mxu0
    %v11053 = vadd.f32 %v11004, %v11052
    %11054 = vmatmul.bf16.gmra.mxu0 %v8322
    %v11055 = vpop.f32.mrf.mxu0
    %v11056 = vadd.f32 %v11007, %v11055
    %v11057 = vpop.f32.mrf.mxu0
    %v11058 = vadd.f32 %v11009, %v11057
    %11059 = vmatmul.bf16.gmra.mxu0 %v8330
    %v11060 = vpop.f32.mrf.mxu0
    %v11061 = vadd.f32 %v11012, %v11060
    %v11062 = vpop.f32.mrf.mxu0
    %v11063 = vadd.f32 %v11014, %v11062
    %11064 = vmatmul.bf16.gmra.mxu0 %v8338
    %v11065 = vpop.f32.mrf.mxu0
    %v11066 = vadd.f32 %v11017, %v11065
    %v11067 = vpop.f32.mrf.mxu0
    %v11068 = vadd.f32 %v11019, %v11067
    %11069 = vmatmul.bf16.gmra.mxu0 %v8346
    %v11070 = vpop.f32.mrf.mxu0
    %v11071 = vadd.f32 %v11022, %v11070
    %v11072 = vpop.f32.mrf.mxu0
    %v11073 = vadd.f32 %v11024, %v11072
    %11074 = vmatmul.bf16.gmra.mxu0 %v8354
    %v11075 = vpop.f32.mrf.mxu0
    %v11076 = vadd.f32 %v11027, %v11075
    %v11077 = vpop.f32.mrf.mxu0
    %v11078 = vadd.f32 %v11029, %v11077
    %11079 = vmatmul.bf16.gmra.mxu0 %v8362
    %v11080 = vpop.f32.mrf.mxu0
    %v11081 = vadd.f32 %v11032, %v11080
    %v11082 = vpop.f32.mrf.mxu0
    %v11083 = vadd.f32 %v11034, %v11082
    %11084 = vdwg.mxu0
    %11085 = vmatpush.bf16.msra.mxu0 %v9428
    %11086 = vmatpush.bf16.msra.mxu0 %v9424
    %11087 = vmatpush.bf16.msra.mxu0 %v9420
    %11088 = vmatpush.bf16.msra.mxu0 %v9416
    %11089 = vmatpush.bf16.msra.mxu0 %v9412
    %11090 = vmatpush.bf16.msra.mxu0 %v9408
    %11091 = vmatpush.bf16.msra.mxu0 %v9404
    %11092 = vmatpush.bf16.msra.mxu0 %v9400
    %11093 = vmatmul.bf16.gmra.mxu0 %v8299
    %v11094 = vpop.f32.mrf.mxu0
    %v11095 = vadd.f32 %v8624, %v11094
    %v11096 = vpop.f32.mrf.mxu0
    %v11097 = vadd.f32 %v8624, %v11096
    %11098 = vmatmul.bf16.gmra.mxu0 %v8307
    %v11099 = vpop.f32.mrf.mxu0
    %v11100 = vadd.f32 %v8624, %v11099
    %v11101 = vpop.f32.mrf.mxu0
    %v11102 = vadd.f32 %v8624, %v11101
    %11103 = vmatmul.bf16.gmra.mxu0 %v8315
    %v11104 = vpop.f32.mrf.mxu0
    %v11105 = vadd.f32 %v8624, %v11104
    %v11106 = vpop.f32.mrf.mxu0
    %v11107 = vadd.f32 %v8624, %v11106
    %11108 = vmatmul.bf16.gmra.mxu0 %v8323
    %v11109 = vpop.f32.mrf.mxu0
    %v11110 = vadd.f32 %v8624, %v11109
    %v11111 = vpop.f32.mrf.mxu0
    %v11112 = vadd.f32 %v8624, %v11111
    %11113 = vmatmul.bf16.gmra.mxu0 %v8331
    %v11114 = vpop.f32.mrf.mxu0
    %v11115 = vadd.f32 %v8624, %v11114
    %v11116 = vpop.f32.mrf.mxu0
    %v11117 = vadd.f32 %v8624, %v11116
    %11118 = vmatmul.bf16.gmra.mxu0 %v8339
    %v11119 = vpop.f32.mrf.mxu0
    %v11120 = vadd.f32 %v8624, %v11119
    %v11121 = vpop.f32.mrf.mxu0
    %v11122 = vadd.f32 %v8624, %v11121
    %11123 = vmatmul.bf16.gmra.mxu0 %v8347
    %v11124 = vpop.f32.mrf.mxu0
    %v11125 = vadd.f32 %v8624, %v11124
    %v11126 = vpop.f32.mrf.mxu0
    %v11127 = vadd.f32 %v8624, %v11126
    %11128 = vmatmul.bf16.gmra.mxu0 %v8355
    %v11129 = vpop.f32.mrf.mxu0
    %v11130 = vadd.f32 %v8624, %v11129
    %v11131 = vpop.f32.mrf.mxu0
    %v11132 = vadd.f32 %v8624, %v11131
    %11133 = vdwg.mxu0
    %11134 = vmatpush.bf16.msra.mxu0 %v9460
    %11135 = vmatpush.bf16.msra.mxu0 %v9456
    %11136 = vmatpush.bf16.msra.mxu0 %v9452
    %11137 = vmatpush.bf16.msra.mxu0 %v9448
    %11138 = vmatpush.bf16.msra.mxu0 %v9444
    %11139 = vmatpush.bf16.msra.mxu0 %v9440
    %11140 = vmatpush.bf16.msra.mxu0 %v9436
    %11141 = vmatpush.bf16.msra.mxu0 %v9432
    %11142 = vmatmul.bf16.gmra.mxu0 %v8300
    %v11143 = vpop.f32.mrf.mxu0
    %v11144 = vadd.f32 %v11095, %v11143
    %v11145 = vpop.f32.mrf.mxu0
    %v11146 = vadd.f32 %v11097, %v11145
    %11147 = vmatmul.bf16.gmra.mxu0 %v8308
    %v11148 = vpop.f32.mrf.mxu0
    %v11149 = vadd.f32 %v11100, %v11148
    %v11150 = vpop.f32.mrf.mxu0
    %v11151 = vadd.f32 %v11102, %v11150
    %11152 = vmatmul.bf16.gmra.mxu0 %v8316
    %v11153 = vpop.f32.mrf.mxu0
    %v11154 = vadd.f32 %v11105, %v11153
    %v11155 = vpop.f32.mrf.mxu0
    %v11156 = vadd.f32 %v11107, %v11155
    %11157 = vmatmul.bf16.gmra.mxu0 %v8324
    %v11158 = vpop.f32.mrf.mxu0
    %v11159 = vadd.f32 %v11110, %v11158
    %v11160 = vpop.f32.mrf.mxu0
    %v11161 = vadd.f32 %v11112, %v11160
    %11162 = vmatmul.bf16.gmra.mxu0 %v8332
    %v11163 = vpop.f32.mrf.mxu0
    %v11164 = vadd.f32 %v11115, %v11163
    %v11165 = vpop.f32.mrf.mxu0
    %v11166 = vadd.f32 %v11117, %v11165
    %11167 = vmatmul.bf16.gmra.mxu0 %v8340
    %v11168 = vpop.f32.mrf.mxu0
    %v11169 = vadd.f32 %v11120, %v11168
    %v11170 = vpop.f32.mrf.mxu0
    %v11171 = vadd.f32 %v11122, %v11170
    %11172 = vmatmul.bf16.gmra.mxu0 %v8348
    %v11173 = vpop.f32.mrf.mxu0
    %v11174 = vadd.f32 %v11125, %v11173
    %v11175 = vpop.f32.mrf.mxu0
    %v11176 = vadd.f32 %v11127, %v11175
    %11177 = vmatmul.bf16.gmra.mxu0 %v8356
    %v11178 = vpop.f32.mrf.mxu0
    %v11179 = vadd.f32 %v11130, %v11178
    %v11180 = vpop.f32.mrf.mxu0
    %v11181 = vadd.f32 %v11132, %v11180
    %11182 = vdwg.mxu0
    %11183 = vmatpush.bf16.msra.mxu0 %v9492
    %11184 = vmatpush.bf16.msra.mxu0 %v9488
    %11185 = vmatpush.bf16.msra.mxu0 %v9484
    %11186 = vmatpush.bf16.msra.mxu0 %v9480
    %11187 = vmatpush.bf16.msra.mxu0 %v9476
    %11188 = vmatpush.bf16.msra.mxu0 %v9472
    %11189 = vmatpush.bf16.msra.mxu0 %v9468
    %11190 = vmatpush.bf16.msra.mxu0 %v9464
    %11191 = vmatmul.bf16.gmra.mxu0 %v8301
    %v11192 = vpop.f32.mrf.mxu0
    %v11193 = vadd.f32 %v11144, %v11192
    %v11194 = vpop.f32.mrf.mxu0
    %v11195 = vadd.f32 %v11146, %v11194
    %11196 = vmatmul.bf16.gmra.mxu0 %v8309
    %v11197 = vpop.f32.mrf.mxu0
    %v11198 = vadd.f32 %v11149, %v11197
    %v11199 = vpop.f32.mrf.mxu0
    %v11200 = vadd.f32 %v11151, %v11199
    %11201 = vmatmul.bf16.gmra.mxu0 %v8317
    %v11202 = vpop.f32.mrf.mxu0
    %v11203 = vadd.f32 %v11154, %v11202
    %v11204 = vpop.f32.mrf.mxu0
    %v11205 = vadd.f32 %v11156, %v11204
    %11206 = vmatmul.bf16.gmra.mxu0 %v8325
    %v11207 = vpop.f32.mrf.mxu0
    %v11208 = vadd.f32 %v11159, %v11207
    %v11209 = vpop.f32.mrf.mxu0
    %v11210 = vadd.f32 %v11161, %v11209
    %11211 = vmatmul.bf16.gmra.mxu0 %v8333
    %v11212 = vpop.f32.mrf.mxu0
    %v11213 = vadd.f32 %v11164, %v11212
    %v11214 = vpop.f32.mrf.mxu0
    %v11215 = vadd.f32 %v11166, %v11214
    %11216 = vmatmul.bf16.gmra.mxu0 %v8341
    %v11217 = vpop.f32.mrf.mxu0
    %v11218 = vadd.f32 %v11169, %v11217
    %v11219 = vpop.f32.mrf.mxu0
    %v11220 = vadd.f32 %v11171, %v11219
    %11221 = vmatmul.bf16.gmra.mxu0 %v8349
    %v11222 = vpop.f32.mrf.mxu0
    %v11223 = vadd.f32 %v11174, %v11222
    %v11224 = vpop.f32.mrf.mxu0
    %v11225 = vadd.f32 %v11176, %v11224
    %11226 = vmatmul.bf16.gmra.mxu0 %v8357
    %v11227 = vpop.f32.mrf.mxu0
    %v11228 = vadd.f32 %v11179, %v11227
    %v11229 = vpop.f32.mrf.mxu0
    %v11230 = vadd.f32 %v11181, %v11229
    %11231 = vdwg.mxu0
    %11232 = vmatpush.bf16.msra.mxu0 %v9524
    %11233 = vmatpush.bf16.msra.mxu0 %v9520
    %11234 = vmatpush.bf16.msra.mxu0 %v9516
    %11235 = vmatpush.bf16.msra.mxu0 %v9512
    %11236 = vmatpush.bf16.msra.mxu0 %v9508
    %11237 = vmatpush.bf16.msra.mxu0 %v9504
    %11238 = vmatpush.bf16.msra.mxu0 %v9500
    %11239 = vmatpush.bf16.msra.mxu0 %v9496
    %11240 = vmatmul.bf16.gmra.mxu0 %v8302
    %v11241 = vpop.f32.mrf.mxu0
    %v11242 = vadd.f32 %v11193, %v11241
    %v11243 = vpop.f32.mrf.mxu0
    %v11244 = vadd.f32 %v11195, %v11243
    %11245 = vmatmul.bf16.gmra.mxu0 %v8310
    %v11246 = vpop.f32.mrf.mxu0
    %v11247 = vadd.f32 %v11198, %v11246
    %v11248 = vpop.f32.mrf.mxu0
    %v11249 = vadd.f32 %v11200, %v11248
    %11250 = vmatmul.bf16.gmra.mxu0 %v8318
    %v11251 = vpop.f32.mrf.mxu0
    %v11252 = vadd.f32 %v11203, %v11251
    %v11253 = vpop.f32.mrf.mxu0
    %v11254 = vadd.f32 %v11205, %v11253
    %11255 = vmatmul.bf16.gmra.mxu0 %v8326
    %v11256 = vpop.f32.mrf.mxu0
    %v11257 = vadd.f32 %v11208, %v11256
    %v11258 = vpop.f32.mrf.mxu0
    %v11259 = vadd.f32 %v11210, %v11258
    %11260 = vmatmul.bf16.gmra.mxu0 %v8334
    %v11261 = vpop.f32.mrf.mxu0
    %v11262 = vadd.f32 %v11213, %v11261
    %v11263 = vpop.f32.mrf.mxu0
    %v11264 = vadd.f32 %v11215, %v11263
    %11265 = vmatmul.bf16.gmra.mxu0 %v8342
    %v11266 = vpop.f32.mrf.mxu0
    %v11267 = vadd.f32 %v11218, %v11266
    %v11268 = vpop.f32.mrf.mxu0
    %v11269 = vadd.f32 %v11220, %v11268
    %11270 = vmatmul.bf16.gmra.mxu0 %v8350
    %v11271 = vpop.f32.mrf.mxu0
    %v11272 = vadd.f32 %v11223, %v11271
    %v11273 = vpop.f32.mrf.mxu0
    %v11274 = vadd.f32 %v11225, %v11273
    %11275 = vmatmul.bf16.gmra.mxu0 %v8358
    %v11276 = vpop.f32.mrf.mxu0
    %v11277 = vadd.f32 %v11228, %v11276
    %v11278 = vpop.f32.mrf.mxu0
    %v11279 = vadd.f32 %v11230, %v11278
    %11280 = vdwg.mxu0
    %11281 = vmatpush.bf16.msra.mxu0 %v9556
    %11282 = vmatpush.bf16.msra.mxu0 %v9552
    %11283 = vmatpush.bf16.msra.mxu0 %v9548
    %11284 = vmatpush.bf16.msra.mxu0 %v9544
    %11285 = vmatpush.bf16.msra.mxu0 %v9540
    %11286 = vmatpush.bf16.msra.mxu0 %v9536
    %11287 = vmatpush.bf16.msra.mxu0 %v9532
    %11288 = vmatpush.bf16.msra.mxu0 %v9528
    %11289 = vmatmul.bf16.gmra.mxu0 %v8303
    %v11290 = vpop.f32.mrf.mxu0
    %v11291 = vadd.f32 %v11242, %v11290
    %v11292 = vpop.f32.mrf.mxu0
    %v11293 = vadd.f32 %v11244, %v11292
    %11294 = vmatmul.bf16.gmra.mxu0 %v8311
    %v11295 = vpop.f32.mrf.mxu0
    %v11296 = vadd.f32 %v11247, %v11295
    %v11297 = vpop.f32.mrf.mxu0
    %v11298 = vadd.f32 %v11249, %v11297
    %11299 = vmatmul.bf16.gmra.mxu0 %v8319
    %v11300 = vpop.f32.mrf.mxu0
    %v11301 = vadd.f32 %v11252, %v11300
    %v11302 = vpop.f32.mrf.mxu0
    %v11303 = vadd.f32 %v11254, %v11302
    %11304 = vmatmul.bf16.gmra.mxu0 %v8327
    %v11305 = vpop.f32.mrf.mxu0
    %v11306 = vadd.f32 %v11257, %v11305
    %v11307 = vpop.f32.mrf.mxu0
    %v11308 = vadd.f32 %v11259, %v11307
    %11309 = vmatmul.bf16.gmra.mxu0 %v8335
    %v11310 = vpop.f32.mrf.mxu0
    %v11311 = vadd.f32 %v11262, %v11310
    %v11312 = vpop.f32.mrf.mxu0
    %v11313 = vadd.f32 %v11264, %v11312
    %11314 = vmatmul.bf16.gmra.mxu0 %v8343
    %v11315 = vpop.f32.mrf.mxu0
    %v11316 = vadd.f32 %v11267, %v11315
    %v11317 = vpop.f32.mrf.mxu0
    %v11318 = vadd.f32 %v11269, %v11317
    %11319 = vmatmul.bf16.gmra.mxu0 %v8351
    %v11320 = vpop.f32.mrf.mxu0
    %v11321 = vadd.f32 %v11272, %v11320
    %v11322 = vpop.f32.mrf.mxu0
    %v11323 = vadd.f32 %v11274, %v11322
    %11324 = vmatmul.bf16.gmra.mxu0 %v8359
    %v11325 = vpop.f32.mrf.mxu0
    %v11326 = vadd.f32 %v11277, %v11325
    %v11327 = vpop.f32.mrf.mxu0
    %v11328 = vadd.f32 %v11279, %v11327
    %11329 = vdwg.mxu0
    %11330 = vmatpush.bf16.msra.mxu0 %v9588
    %11331 = vmatpush.bf16.msra.mxu0 %v9584
    %11332 = vmatpush.bf16.msra.mxu0 %v9580
    %11333 = vmatpush.bf16.msra.mxu0 %v9576
    %11334 = vmatpush.bf16.msra.mxu0 %v9572
    %11335 = vmatpush.bf16.msra.mxu0 %v9568
    %11336 = vmatpush.bf16.msra.mxu0 %v9564
    %11337 = vmatpush.bf16.msra.mxu0 %v9560
    %11338 = vmatmul.bf16.gmra.mxu0 %v8304
    %v11339 = vpop.f32.mrf.mxu0
    %v11340 = vadd.f32 %v11291, %v11339
    %v11341 = vpop.f32.mrf.mxu0
    %v11342 = vadd.f32 %v11293, %v11341
    %11343 = vmatmul.bf16.gmra.mxu0 %v8312
    %v11344 = vpop.f32.mrf.mxu0
    %v11345 = vadd.f32 %v11296, %v11344
    %v11346 = vpop.f32.mrf.mxu0
    %v11347 = vadd.f32 %v11298, %v11346
    %11348 = vmatmul.bf16.gmra.mxu0 %v8320
    %v11349 = vpop.f32.mrf.mxu0
    %v11350 = vadd.f32 %v11301, %v11349
    %v11351 = vpop.f32.mrf.mxu0
    %v11352 = vadd.f32 %v11303, %v11351
    %11353 = vmatmul.bf16.gmra.mxu0 %v8328
    %v11354 = vpop.f32.mrf.mxu0
    %v11355 = vadd.f32 %v11306, %v11354
    %v11356 = vpop.f32.mrf.mxu0
    %v11357 = vadd.f32 %v11308, %v11356
    %11358 = vmatmul.bf16.gmra.mxu0 %v8336
    %v11359 = vpop.f32.mrf.mxu0
    %v11360 = vadd.f32 %v11311, %v11359
    %v11361 = vpop.f32.mrf.mxu0
    %v11362 = vadd.f32 %v11313, %v11361
    %11363 = vmatmul.bf16.gmra.mxu0 %v8344
    %v11364 = vpop.f32.mrf.mxu0
    %v11365 = vadd.f32 %v11316, %v11364
    %v11366 = vpop.f32.mrf.mxu0
    %v11367 = vadd.f32 %v11318, %v11366
    %11368 = vmatmul.bf16.gmra.mxu0 %v8352
    %v11369 = vpop.f32.mrf.mxu0
    %v11370 = vadd.f32 %v11321, %v11369
    %v11371 = vpop.f32.mrf.mxu0
    %v11372 = vadd.f32 %v11323, %v11371
    %11373 = vmatmul.bf16.gmra.mxu0 %v8360
    %v11374 = vpop.f32.mrf.mxu0
    %v11375 = vadd.f32 %v11326, %v11374
    %v11376 = vpop.f32.mrf.mxu0
    %v11377 = vadd.f32 %v11328, %v11376
    %11378 = vdwg.mxu0
    %11379 = vmatpush.bf16.msra.mxu0 %v9620
    %11380 = vmatpush.bf16.msra.mxu0 %v9616
    %11381 = vmatpush.bf16.msra.mxu0 %v9612
    %11382 = vmatpush.bf16.msra.mxu0 %v9608
    %11383 = vmatpush.bf16.msra.mxu0 %v9604
    %11384 = vmatpush.bf16.msra.mxu0 %v9600
    %11385 = vmatpush.bf16.msra.mxu0 %v9596
    %11386 = vmatpush.bf16.msra.mxu0 %v9592
    %11387 = vmatmul.bf16.gmra.mxu0 %v8305
    %v11388 = vpop.f32.mrf.mxu0
    %v11389 = vadd.f32 %v11340, %v11388
    %v11390 = vpop.f32.mrf.mxu0
    %v11391 = vadd.f32 %v11342, %v11390
    %11392 = vmatmul.bf16.gmra.mxu0 %v8313
    %v11393 = vpop.f32.mrf.mxu0
    %v11394 = vadd.f32 %v11345, %v11393
    %v11395 = vpop.f32.mrf.mxu0
    %v11396 = vadd.f32 %v11347, %v11395
    %11397 = vmatmul.bf16.gmra.mxu0 %v8321
    %v11398 = vpop.f32.mrf.mxu0
    %v11399 = vadd.f32 %v11350, %v11398
    %v11400 = vpop.f32.mrf.mxu0
    %v11401 = vadd.f32 %v11352, %v11400
    %11402 = vmatmul.bf16.gmra.mxu0 %v8329
    %v11403 = vpop.f32.mrf.mxu0
    %v11404 = vadd.f32 %v11355, %v11403
    %v11405 = vpop.f32.mrf.mxu0
    %v11406 = vadd.f32 %v11357, %v11405
    %11407 = vmatmul.bf16.gmra.mxu0 %v8337
    %v11408 = vpop.f32.mrf.mxu0
    %v11409 = vadd.f32 %v11360, %v11408
    %v11410 = vpop.f32.mrf.mxu0
    %v11411 = vadd.f32 %v11362, %v11410
    %11412 = vmatmul.bf16.gmra.mxu0 %v8345
    %v11413 = vpop.f32.mrf.mxu0
    %v11414 = vadd.f32 %v11365, %v11413
    %v11415 = vpop.f32.mrf.mxu0
    %v11416 = vadd.f32 %v11367, %v11415
    %11417 = vmatmul.bf16.gmra.mxu0 %v8353
    %v11418 = vpop.f32.mrf.mxu0
    %v11419 = vadd.f32 %v11370, %v11418
    %v11420 = vpop.f32.mrf.mxu0
    %v11421 = vadd.f32 %v11372, %v11420
    %11422 = vmatmul.bf16.gmra.mxu0 %v8361
    %v11423 = vpop.f32.mrf.mxu0
    %v11424 = vadd.f32 %v11375, %v11423
    %v11425 = vpop.f32.mrf.mxu0
    %v11426 = vadd.f32 %v11377, %v11425
    %11427 = vdwg.mxu0
    %11428 = vmatpush.bf16.msra.mxu0 %v9652
    %11429 = vmatpush.bf16.msra.mxu0 %v9648
    %11430 = vmatpush.bf16.msra.mxu0 %v9644
    %11431 = vmatpush.bf16.msra.mxu0 %v9640
    %11432 = vmatpush.bf16.msra.mxu0 %v9636
    %11433 = vmatpush.bf16.msra.mxu0 %v9632
    %11434 = vmatpush.bf16.msra.mxu0 %v9628
    %11435 = vmatpush.bf16.msra.mxu0 %v9624
    %11436 = vmatmul.bf16.gmra.mxu0 %v8306
    %v11437 = vpop.f32.mrf.mxu0
    %v11438 = vadd.f32 %v11389, %v11437
    %v11439 = vpop.f32.mrf.mxu0
    %v11440 = vadd.f32 %v11391, %v11439
    %11441 = vmatmul.bf16.gmra.mxu0 %v8314
    %v11442 = vpop.f32.mrf.mxu0
    %v11443 = vadd.f32 %v11394, %v11442
    %v11444 = vpop.f32.mrf.mxu0
    %v11445 = vadd.f32 %v11396, %v11444
    %11446 = vmatmul.bf16.gmra.mxu0 %v8322
    %v11447 = vpop.f32.mrf.mxu0
    %v11448 = vadd.f32 %v11399, %v11447
    %v11449 = vpop.f32.mrf.mxu0
    %v11450 = vadd.f32 %v11401, %v11449
    %11451 = vmatmul.bf16.gmra.mxu0 %v8330
    %v11452 = vpop.f32.mrf.mxu0
    %v11453 = vadd.f32 %v11404, %v11452
    %v11454 = vpop.f32.mrf.mxu0
    %v11455 = vadd.f32 %v11406, %v11454
    %11456 = vmatmul.bf16.gmra.mxu0 %v8338
    %v11457 = vpop.f32.mrf.mxu0
    %v11458 = vadd.f32 %v11409, %v11457
    %v11459 = vpop.f32.mrf.mxu0
    %v11460 = vadd.f32 %v11411, %v11459
    %11461 = vmatmul.bf16.gmra.mxu0 %v8346
    %v11462 = vpop.f32.mrf.mxu0
    %v11463 = vadd.f32 %v11414, %v11462
    %v11464 = vpop.f32.mrf.mxu0
    %v11465 = vadd.f32 %v11416, %v11464
    %11466 = vmatmul.bf16.gmra.mxu0 %v8354
    %v11467 = vpop.f32.mrf.mxu0
    %v11468 = vadd.f32 %v11419, %v11467
    %v11469 = vpop.f32.mrf.mxu0
    %v11470 = vadd.f32 %v11421, %v11469
    %11471 = vmatmul.bf16.gmra.mxu0 %v8362
    %v11472 = vpop.f32.mrf.mxu0
    %v11473 = vadd.f32 %v11424, %v11472
    %v11474 = vpop.f32.mrf.mxu0
    %v11475 = vadd.f32 %v11426, %v11474
    %11476 = vdwg.mxu0
    %v11477 = vmax.f32 %v10262, 0.0
    %v11478 = vmax.f32 %v10654, 0.0
    %v11479 = vmax.f32 %v11046, 0.0
    %v11480 = vmax.f32 %v11438, 0.0
    %v11481 = vmax.f32 %v10264, 0.0
    %v11482 = vmax.f32 %v10656, 0.0
    %v11483 = vmax.f32 %v11048, 0.0
    %v11484 = vmax.f32 %v11440, 0.0
    %v11485 = vmax.f32 %v10267, 0.0
    %v11486 = vmax.f32 %v10659, 0.0
    %v11487 = vmax.f32 %v11051, 0.0
    %v11488 = vmax.f32 %v11443, 0.0
    %v11489 = vmax.f32 %v10269, 0.0
    %v11490 = vmax.f32 %v10661, 0.0
    %v11491 = vmax.f32 %v11053, 0.0
    %v11492 = vmax.f32 %v11445, 0.0
    %v11493 = vmax.f32 %v10272, 0.0
    %v11494 = vmax.f32 %v10664, 0.0
    %v11495 = vmax.f32 %v11056, 0.0
    %v11496 = vmax.f32 %v11448, 0.0
    %v11497 = vmax.f32 %v10274, 0.0
    %v11498 = vmax.f32 %v10666, 0.0
    %v11499 = vmax.f32 %v11058, 0.0
    %v11500 = vmax.f32 %v11450, 0.0
    %v11501 = vmax.f32 %v10277, 0.0
    %v11502 = vmax.f32 %v10669, 0.0
    %v11503 = vmax.f32 %v11061, 0.0
    %v11504 = vmax.f32 %v11453, 0.0
    %v11505 = vmax.f32 %v10279, 0.0
    %v11506 = vmax.f32 %v10671, 0.0
    %v11507 = vmax.f32 %v11063, 0.0
    %v11508 = vmax.f32 %v11455, 0.0
    %v11509 = vmax.f32 %v10282, 0.0
    %v11510 = vmax.f32 %v10674, 0.0
    %v11511 = vmax.f32 %v11066, 0.0
    %v11512 = vmax.f32 %v11458, 0.0
    %v11513 = vmax.f32 %v10284, 0.0
    %v11514 = vmax.f32 %v10676, 0.0
    %v11515 = vmax.f32 %v11068, 0.0
    %v11516 = vmax.f32 %v11460, 0.0
    %v11517 = vmax.f32 %v10287, 0.0
    %v11518 = vmax.f32 %v10679, 0.0
    %v11519 = vmax.f32 %v11071, 0.0
    %v11520 = vmax.f32 %v11463, 0.0
    %v11521 = vmax.f32 %v10289, 0.0
    %v11522 = vmax.f32 %v10681, 0.0
    %v11523 = vmax.f32 %v11073, 0.0
    %v11524 = vmax.f32 %v11465, 0.0
    %v11525 = vmax.f32 %v10292, 0.0
    %v11526 = vmax.f32 %v10684, 0.0
    %v11527 = vmax.f32 %v11076, 0.0
    %v11528 = vmax.f32 %v11468, 0.0
    %v11529 = vmax.f32 %v10294, 0.0
    %v11530 = vmax.f32 %v10686, 0.0
    %v11531 = vmax.f32 %v11078, 0.0
    %v11532 = vmax.f32 %v11470, 0.0
    %v11533 = vmax.f32 %v10297, 0.0
    %v11534 = vmax.f32 %v10689, 0.0
    %v11535 = vmax.f32 %v11081, 0.0
    %v11536 = vmax.f32 %v11473, 0.0
    %v11537 = vmax.f32 %v10299, 0.0
    %v11538 = vmax.f32 %v10691, 0.0
    %v11539 = vmax.f32 %v11083, 0.0
    %v11540 = vmax.f32 %v11475, 0.0
    %v11541 = vld [vmem:[#allocation13] sm:$0xf]
    %v11543 = vperm.slane %v11541, 0
    %v11544 = vperm.slane %v11541, 1
    %v11545 = vperm.slane %v11541, 2
    %v11546 = vperm.slane %v11541, 3
    %v11551 = vmul.f32 %v11477, %v11543
    %v11552 = vmul.f32 %v11478, %v11544
    %v11553 = vmul.f32 %v11479, %v11545
    %v11554 = vmul.f32 %v11480, %v11546
    %v11555 = vmul.f32 %v11481, %v11543
    %v11556 = vmul.f32 %v11482, %v11544
    %v11557 = vmul.f32 %v11483, %v11545
    %v11558 = vmul.f32 %v11484, %v11546
    %v11559 = vmul.f32 %v11485, %v11543
    %v11560 = vmul.f32 %v11486, %v11544
    %v11561 = vmul.f32 %v11487, %v11545
    %v11562 = vmul.f32 %v11488, %v11546
    %v11563 = vmul.f32 %v11489, %v11543
    %v11564 = vmul.f32 %v11490, %v11544
    %v11565 = vmul.f32 %v11491, %v11545
    %v11566 = vmul.f32 %v11492, %v11546
    %v11567 = vmul.f32 %v11493, %v11543
    %v11568 = vmul.f32 %v11494, %v11544
    %v11569 = vmul.f32 %v11495, %v11545
    %v11570 = vmul.f32 %v11496, %v11546
    %v11571 = vmul.f32 %v11497, %v11543
    %v11572 = vmul.f32 %v11498, %v11544
    %v11573 = vmul.f32 %v11499, %v11545
    %v11574 = vmul.f32 %v11500, %v11546
    %v11575 = vmul.f32 %v11501, %v11543
    %v11576 = vmul.f32 %v11502, %v11544
    %v11577 = vmul.f32 %v11503, %v11545
    %v11578 = vmul.f32 %v11504, %v11546
    %v11579 = vmul.f32 %v11505, %v11543
    %v11580 = vmul.f32 %v11506, %v11544
    %v11581 = vmul.f32 %v11507, %v11545
    %v11582 = vmul.f32 %v11508, %v11546
    %v11583 = vmul.f32 %v11509, %v11543
    %v11584 = vmul.f32 %v11510, %v11544
    %v11585 = vmul.f32 %v11511, %v11545
    %v11586 = vmul.f32 %v11512, %v11546
    %v11587 = vmul.f32 %v11513, %v11543
    %v11588 = vmul.f32 %v11514, %v11544
    %v11589 = vmul.f32 %v11515, %v11545
    %v11590 = vmul.f32 %v11516, %v11546
    %v11591 = vmul.f32 %v11517, %v11543
    %v11592 = vmul.f32 %v11518, %v11544
    %v11593 = vmul.f32 %v11519, %v11545
    %v11594 = vmul.f32 %v11520, %v11546
    %v11595 = vmul.f32 %v11521, %v11543
    %v11596 = vmul.f32 %v11522, %v11544
    %v11597 = vmul.f32 %v11523, %v11545
    %v11598 = vmul.f32 %v11524, %v11546
    %v11599 = vmul.f32 %v11525, %v11543
    %v11600 = vmul.f32 %v11526, %v11544
    %v11601 = vmul.f32 %v11527, %v11545
    %v11602 = vmul.f32 %v11528, %v11546
    %v11603 = vmul.f32 %v11529, %v11543
    %v11604 = vmul.f32 %v11530, %v11544
    %v11605 = vmul.f32 %v11531, %v11545
    %v11606 = vmul.f32 %v11532, %v11546
    %v11607 = vmul.f32 %v11533, %v11543
    %v11608 = vmul.f32 %v11534, %v11544
    %v11609 = vmul.f32 %v11535, %v11545
    %v11610 = vmul.f32 %v11536, %v11546
    %v11611 = vmul.f32 %v11537, %v11543
    %v11612 = vmul.f32 %v11538, %v11544
    %v11613 = vmul.f32 %v11539, %v11545
    %v11614 = vmul.f32 %v11540, %v11546
    %v11615 = vadd.f32 %v11551, %v11552
    %v11616 = vadd.f32 %v11615, %v11553
    %v11617 = vadd.f32 %v11616, %v11554
    %11618 = vadd.xlane.f32.xlu0 %v11617
    %v11619 = vpop.xlane.xlu0 %11618
    %v11620 = vadd.f32 %v11555, %v11556
    %v11621 = vadd.f32 %v11620, %v11557
    %v11622 = vadd.f32 %v11621, %v11558
    %11623 = vadd.xlane.f32.xlu0 %v11622
    %v11624 = vpop.xlane.xlu0 %11623
    %v11625 = vadd.f32 %v11559, %v11560
    %v11626 = vadd.f32 %v11625, %v11561
    %v11627 = vadd.f32 %v11626, %v11562
    %11628 = vadd.xlane.f32.xlu0 %v11627
    %v11629 = vpop.xlane.xlu0 %11628
    %v11630 = vadd.f32 %v11563, %v11564
    %v11631 = vadd.f32 %v11630, %v11565
    %v11632 = vadd.f32 %v11631, %v11566
    %11633 = vadd.xlane.f32.xlu0 %v11632
    %v11634 = vpop.xlane.xlu0 %11633
    %v11635 = vadd.f32 %v11567, %v11568
    %v11636 = vadd.f32 %v11635, %v11569
    %v11637 = vadd.f32 %v11636, %v11570
    %11638 = vadd.xlane.f32.xlu0 %v11637
    %v11639 = vpop.xlane.xlu0 %11638
    %v11640 = vadd.f32 %v11571, %v11572
    %v11641 = vadd.f32 %v11640, %v11573
    %v11642 = vadd.f32 %v11641, %v11574
    %11643 = vadd.xlane.f32.xlu0 %v11642
    %v11644 = vpop.xlane.xlu0 %11643
    %v11645 = vadd.f32 %v11575, %v11576
    %v11646 = vadd.f32 %v11645, %v11577
    %v11647 = vadd.f32 %v11646, %v11578
    %11648 = vadd.xlane.f32.xlu0 %v11647
    %v11649 = vpop.xlane.xlu0 %11648
    %v11650 = vadd.f32 %v11579, %v11580
    %v11651 = vadd.f32 %v11650, %v11581
    %v11652 = vadd.f32 %v11651, %v11582
    %11653 = vadd.xlane.f32.xlu0 %v11652
    %v11654 = vpop.xlane.xlu0 %11653
    %v11655 = vadd.f32 %v11583, %v11584
    %v11656 = vadd.f32 %v11655, %v11585
    %v11657 = vadd.f32 %v11656, %v11586
    %11658 = vadd.xlane.f32.xlu0 %v11657
    %v11659 = vpop.xlane.xlu0 %11658
    %v11660 = vadd.f32 %v11587, %v11588
    %v11661 = vadd.f32 %v11660, %v11589
    %v11662 = vadd.f32 %v11661, %v11590
    %11663 = vadd.xlane.f32.xlu0 %v11662
    %v11664 = vpop.xlane.xlu0 %11663
    %v11665 = vadd.f32 %v11591, %v11592
    %v11666 = vadd.f32 %v11665, %v11593
    %v11667 = vadd.f32 %v11666, %v11594
    %11668 = vadd.xlane.f32.xlu0 %v11667
    %v11669 = vpop.xlane.xlu0 %11668
    %v11670 = vadd.f32 %v11595, %v11596
    %v11671 = vadd.f32 %v11670, %v11597
    %v11672 = vadd.f32 %v11671, %v11598
    %11673 = vadd.xlane.f32.xlu0 %v11672
    %v11674 = vpop.xlane.xlu0 %11673
    %v11675 = vadd.f32 %v11599, %v11600
    %v11676 = vadd.f32 %v11675, %v11601
    %v11677 = vadd.f32 %v11676, %v11602
    %11678 = vadd.xlane.f32.xlu0 %v11677
    %v11679 = vpop.xlane.xlu0 %11678
    %v11680 = vadd.f32 %v11603, %v11604
    %v11681 = vadd.f32 %v11680, %v11605
    %v11682 = vadd.f32 %v11681, %v11606
    %11683 = vadd.xlane.f32.xlu0 %v11682
    %v11684 = vpop.xlane.xlu0 %11683
    %v11685 = vadd.f32 %v11607, %v11608
    %v11686 = vadd.f32 %v11685, %v11609
    %v11687 = vadd.f32 %v11686, %v11610
    %11688 = vadd.xlane.f32.xlu0 %v11687
    %v11689 = vpop.xlane.xlu0 %11688
    %v11690 = vadd.f32 %v11611, %v11612
    %v11691 = vadd.f32 %v11690, %v11613
    %v11692 = vadd.f32 %v11691, %v11614
    %11693 = vadd.xlane.f32.xlu0 %v11692
    %v11694 = vpop.xlane.xlu0 %11693
    %v11695 = vld [vmem:[#allocation2] sm:$0x1]
    %11697 = vset.pattern.permute.xlu0 0
    %11698 = vperm.xlu0 %11697, %v11695
    %v11699 = vpop.permute.xlu0 %11698
    %v11701 = vperm.slane %v11699, 0
    %v11702 = vadd.f32 %v11619, %v11701
    %v11703 = vadd.f32 %v11624, %v11701
    %v11704 = vadd.f32 %v11629, %v11701
    %v11705 = vadd.f32 %v11634, %v11701
    %v11706 = vadd.f32 %v11639, %v11701
    %v11707 = vadd.f32 %v11644, %v11701
    %v11708 = vadd.f32 %v11649, %v11701
    %v11709 = vadd.f32 %v11654, %v11701
    %v11710 = vadd.f32 %v11659, %v11701
    %v11711 = vadd.f32 %v11664, %v11701
    %v11712 = vadd.f32 %v11669, %v11701
    %v11713 = vadd.f32 %v11674, %v11701
    %v11714 = vadd.f32 %v11679, %v11701
    %v11715 = vadd.f32 %v11684, %v11701
    %v11716 = vadd.f32 %v11689, %v11701
    %v11717 = vadd.f32 %v11694, %v11701
    %v11734 = vlaneseq
    %v11735 = vand.u32 %v11734, 127
    %v11736 = vperm.slane %v11702, %v11735
    %v11737 = vadd.s32 %v11735, 4294967288
    %v11738 = vperm.slane %v11703, %v11737
    %vm11739 = vcmask 130112
    %v11740 = vsel %vm11739, %v11738, %v11736
    %v11741 = vadd.s32 %v11735, 4294967280
    %v11742 = vperm.slane %v11704, %v11741
    %vm11743 = vcmask 195712
    %v11744 = vsel %vm11743, %v11742, %v11740
    %v11745 = vadd.s32 %v11735, 4294967272
    %v11746 = vperm.slane %v11705, %v11745
    %vm11747 = vcmask 261312
    %v11748 = vsel %vm11747, %v11746, %v11744
    %v11749 = vadd.s32 %v11735, 4294967264
    %v11750 = vperm.slane %v11706, %v11749
    %vm11751 = vcmask 326912
    %v11752 = vsel %vm11751, %v11750, %v11748
    %v11753 = vadd.s32 %v11735, 4294967256
    %v11754 = vperm.slane %v11707, %v11753
    %vm11755 = vcmask 392512
    %v11756 = vsel %vm11755, %v11754, %v11752
    %v11757 = vadd.s32 %v11735, 4294967248
    %v11758 = vperm.slane %v11708, %v11757
    %vm11759 = vcmask 458112
    %v11760 = vsel %vm11759, %v11758, %v11756
    %v11761 = vadd.s32 %v11735, 4294967240
    %v11762 = vperm.slane %v11709, %v11761
    %vm11763 = vcmask 523712
    %v11764 = vsel %vm11763, %v11762, %v11760
    %v11765 = vadd.s32 %v11735, 4294967232
    %v11766 = vperm.slane %v11710, %v11765
    %vm11767 = vcmask 589312
    %v11768 = vsel %vm11767, %v11766, %v11764
    %v11769 = vadd.s32 %v11735, 4294967224
    %v11770 = vperm.slane %v11711, %v11769
    %vm11771 = vcmask 654912
    %v11772 = vsel %vm11771, %v11770, %v11768
    %v11773 = vadd.s32 %v11735, 4294967216
    %v11774 = vperm.slane %v11712, %v11773
    %vm11775 = vcmask 720512
    %v11776 = vsel %vm11775, %v11774, %v11772
    %v11777 = vadd.s32 %v11735, 4294967208
    %v11778 = vperm.slane %v11713, %v11777
    %vm11779 = vcmask 786112
    %v11780 = vsel %vm11779, %v11778, %v11776
    %v11781 = vadd.s32 %v11735, 4294967200
    %v11782 = vperm.slane %v11714, %v11781
    %vm11783 = vcmask 851712
    %v11784 = vsel %vm11783, %v11782, %v11780
    %v11785 = vadd.s32 %v11735, 4294967192
    %v11786 = vperm.slane %v11715, %v11785
    %vm11787 = vcmask 917312
    %v11788 = vsel %vm11787, %v11786, %v11784
    %v11789 = vadd.s32 %v11735, 4294967184
    %v11790 = vperm.slane %v11716, %v11789
    %vm11791 = vcmask 982912
    %v11792 = vsel %vm11791, %v11790, %v11788
    %v11793 = vadd.s32 %v11735, 4294967176
    %v11794 = vperm.slane %v11717, %v11793
    %vm11795 = vcmask 1048512
    %v11796 = vsel %vm11795, %v11794, %v11792
    %11798 = vst [vmem:[%s9] sm:$0x1] %v11796
    // Predicated region
    $region66: #{_forward_impl.1} parent=1 // pred_check
      _
    $region67: #{_forward_impl.1} parent=1 // pred_check_branch
      %11800 = sbr.rel (0) target = $region69
    $region68: #{_forward_impl.1} parent=1 // pred_region
      _
    $region69: #{_forward_impl.1} parent=1 // pred_fallthru
      _
    // Predicated region
    $region70: #{_forward_impl.1} parent=1 // pred_check
      _
    $region71: #{_forward_impl.1} parent=1 // pred_check_branch
      %11802 = sbr.rel (0) target = $region73
    $region72: #{_forward_impl.1} parent=1 // pred_region
      _
    $region73: #{_forward_impl.1} parent=1 // pred_fallthru
      _
    %11803 = vsyncpa [#allocation4], 1
    %11804 = vsyncpa [#allocation6], 1
    %11805 = vsyncpa [#allocation9], 1
    %11806 = vsyncpa [#allocation12], 1

</llo_original>
